<compile_context>
chip_gen: v7x
topology: tpu7x:2x2x1
jax: 0.10.0
libtpu: 0.0.40
codegen_flags: <defaults>
</compile_context>

<pallas_src>
import functools

import jax
import jax.numpy as jnp
from jax.experimental import pallas as pl
from jax.experimental.pallas import tpu as pltpu

BN_EPS = 1e-5
ACT_DTYPE = jnp.bfloat16   # inter-kernel activations + matmul operands
W_DTYPE = jnp.bfloat16     # matmul weights (scale/shift/bias stay f32)
VMEM_LIMIT = 48 * 1024 * 1024


def _mosaic():
    return pltpu.CompilerParams(dimension_semantics=("parallel",),
                                vmem_limit_bytes=VMEM_LIMIT)


# --------------------------------------------------------------------------------------
# Kernel 1: conv1 (k=5, pad=2) + BN1 + ReLU — 5 taps packed into one K=5*F matmul
# --------------------------------------------------------------------------------------
def _conv1_kernel(x_ref, w_ref, sc_ref, sh_ref, o_ref, pad_ref, im_ref, *, T, K, pad, F):
    # zero only the halo rows (interior is fully overwritten every step)
    pad_ref[pl.ds(0, pad), :] = jnp.zeros((pad, F), jnp.float32)
    pad_ref[pl.ds(T + pad, pad), :] = jnp.zeros((pad, F), jnp.float32)
    pad_ref[pl.ds(pad, T), :] = x_ref[0].astype(jnp.float32)

    # im2col: pack the K shifted taps side by side -> one deep-contraction matmul
    for k in range(K):
        im_ref[:, k * F:(k + 1) * F] = pad_ref[pl.ds(k, T), :].astype(im_ref.dtype)

    acc = jnp.dot(im_ref[...], w_ref[...], preferred_element_type=jnp.float32)
    y = acc * sc_ref[...] + sh_ref[...]
    o_ref[...] = jnp.maximum(y, 0.0)[None].astype(o_ref.dtype)


def conv1_bn_relu(x, p):
    B, T, F = x.shape
    KF, C = p["conv1_w"].shape
    K = KF // F
    pad = (K - 1) // 2
    kern = functools.partial(_conv1_kernel, T=T, K=K, pad=pad, F=F)
    return pl.pallas_call(
        kern,
        out_shape=jax.ShapeDtypeStruct((B, T, C), ACT_DTYPE),
        grid=(B,),
        in_specs=[
            pl.BlockSpec((1, T, F), lambda b: (b, 0, 0)),
            pl.BlockSpec((KF, C), lambda b: (0, 0)),
            pl.BlockSpec((1, C), lambda b: (0, 0)),
            pl.BlockSpec((1, C), lambda b: (0, 0)),
        ],
        out_specs=pl.BlockSpec((1, T, C), lambda b: (b, 0, 0)),
        scratch_shapes=[pltpu.VMEM((T + 2 * pad, F), jnp.float32),   # zero-halo (f32: no
                        pltpu.VMEM((T, KF), ACT_DTYPE)],             #  bf16 relayout), im2col
        compiler_params=_mosaic(),
    )(x, p["conv1_w"], p["conv1_scale"], p["conv1_shift"])


# --------------------------------------------------------------------------------------
# Kernel 2: fully fused TDNN layer. Input is the running residual sum; outputs are the
# layer output y and (optionally) the new running sum x + y.
# --------------------------------------------------------------------------------------
def _make_tdnn_layer_kernel(dilation, T, C, sub, emit_sum):
    d = dilation

    def kernel(*args):
        (x_ref, bw_ref, bsc_ref, bsh_ref,
         w1_ref, b1_ref, w2_ref, b2_ref,
         ow_ref, osc_ref, osh_ref) = args[:11]
        if emit_sum:
            y_ref, s_ref = args[11:13]
            pad_ref, im_ref, xc_ref = args[13:]
        else:
            y_ref = args[11]
            pad_ref, im_ref, xc_ref = args[12:]

        # zero only the 2*d halo rows; interior rows are overwritten per block
        pad_ref[pl.ds(0, d), :] = jnp.zeros((d, sub), jnp.float32)
        pad_ref[pl.ds(T + d, d), :] = jnp.zeros((d, sub), jnp.float32)

        x = x_ref[0].astype(jnp.float32)                 # (T, C) running residual sum

        # Res2 chain (scale=8): out[0]=split[0]; block i processes split[i] + out[i-1].
        # Each block: one (T,3*sub)@(3*sub,sub) matmul (taps packed), output written
        # straight into the xc scratch at column offset i*sub (no concat).
        xc_ref[:, 0:sub] = x[:, 0:sub].astype(xc_ref.dtype)
        prev = None
        for i in range(1, 8):
            inp = x[:, i * sub:(i + 1) * sub]
            if i > 1:
                inp = inp + prev
            pad_ref[pl.ds(d, T), :] = inp
            for k in range(3):
                im_ref[:, k * sub:(k + 1) * sub] = (
                    pad_ref[pl.ds(k * d, T), :].astype(im_ref.dtype))
            acc = jnp.dot(im_ref[...], bw_ref[i - 1],
                          preferred_element_type=jnp.float32)
            prev = jnp.maximum(acc * bsc_ref[i - 1] + bsh_ref[i - 1], 0.0)
            xc_ref[:, i * sub:(i + 1) * sub] = prev.astype(xc_ref.dtype)

        # Squeeze-and-Excitation (mean over time, FC-ReLU-FC-sigmoid, rescale)
        xc = xc_ref[...]                                 # (T, C) bf16, VMEM-resident
        m = jnp.mean(xc.astype(jnp.float32), axis=0, keepdims=True)     # (1, C)
        h = jnp.maximum(jnp.dot(m.astype(W_DTYPE), w1_ref[...],
                                preferred_element_type=jnp.float32) + b1_ref[...], 0.0)
        s = jax.nn.sigmoid(jnp.dot(h.astype(W_DTYPE), w2_ref[...],
                                   preferred_element_type=jnp.float32) + b2_ref[...])

        # out_conv (1x1, bias folded into shift) + TDNNLayer BN + ReLU
        xse = (xc * s).astype(W_DTYPE)
        y = jnp.dot(xse, ow_ref[...], preferred_element_type=jnp.float32)
        y = jnp.maximum(y * osc_ref[...] + osh_ref[...], 0.0)
        y_ref[...] = y[None].astype(y_ref.dtype)
        if emit_sum:
            s_ref[...] = (x + y)[None].astype(s_ref.dtype)   # carry residual sum in HBM

    return kernel


def tdnn_layer(x_sum, lp, dilation, emit_sum):
    """x_sum: (B, T, C) running residual sum.  Returns y or (y, x_sum + y)."""
    B, T, C = x_sum.shape
    sub = C // 8
    Bn = lp["se_w1"].shape[1]
    kern = _make_tdnn_layer_kernel(dilation, T, C, sub, emit_sum)
    act_spec = pl.BlockSpec((1, T, C), lambda b: (b, 0, 0))

    def full(shape):
        return pl.BlockSpec(shape, lambda b, _s=shape: (0,) * len(_s))

    y_shape = jax.ShapeDtypeStruct((B, T, C), ACT_DTYPE)
    out_shape = (y_shape, y_shape) if emit_sum else y_shape
    out_specs = (act_spec, act_spec) if emit_sum else act_spec

    return pl.pallas_call(
        kern,
        out_shape=out_shape,
        grid=(B,),
        in_specs=[act_spec,
                  full((7, 3 * sub, sub)),     # 7 blocks, 3 taps packed along contraction
                  full((7, 1, sub)),           # per-block folded BN scale
                  full((7, 1, sub)),           # per-block folded BN shift (+ conv bias)
                  full((C, Bn)), full((1, Bn)),
                  full((Bn, C)), full((1, C)),
                  full((C, C)), full((1, C)), full((1, C))],
        out_specs=out_specs,
        scratch_shapes=[pltpu.VMEM((T + 2 * dilation, sub), jnp.float32),  # zero-halo
                        pltpu.VMEM((T, 3 * sub), ACT_DTYPE),               # packed taps
                        pltpu.VMEM((T, C), ACT_DTYPE)],                    # Res2 concat
        compiler_params=_mosaic(),
    )(x_sum,
      lp["blocks_w"], lp["blocks_scale"], lp["blocks_shift"],
      lp["se_w1"], lp["se_b1"], lp["se_w2"], lp["se_b2"],
      lp["out_w"], lp["out_scale"], lp["out_shift"])


# --------------------------------------------------------------------------------------
# Kernel 3: fused conv2(1x1 on [x1|x2|x3]) + ReLU + attentive stats pooling + head
#           (bn2 -> fc -> bn3).  The (B,T,3C) concat never exists in HBM.
# --------------------------------------------------------------------------------------
def _tail_kernel(x1_ref, x2_ref, x3_ref,
                 w2a_ref, w2b_ref, w2c_ref, cb_ref,
                 wtx_ref, wtm_ref, wts_ref, bt_ref,
                 wa1_ref, ba1_ref, wa2_ref, ba2_ref,
                 bn2s_m_ref, bn2h_m_ref, bn2s_s_ref, bn2h_s_ref,
                 fcw_m_ref, fcw_s_ref, fcb_ref, bn3s_ref, bn3h_ref,
                 o_ref, *, T):
    f32 = jnp.float32
    # conv2: 1x1 conv over concat([x1,x2,x3]) == sum of per-source matmuls
    xc = (jnp.dot(x1_ref[0], w2a_ref[...], preferred_element_type=f32)
          + jnp.dot(x2_ref[0], w2b_ref[...], preferred_element_type=f32)
          + jnp.dot(x3_ref[0], w2c_ref[...], preferred_element_type=f32)
          + cb_ref[...])
    xc = jnp.maximum(xc, 0.0)                                       # (T, 3C) f32

    # attentive statistics pooling
    mean = jnp.mean(xc, axis=0, keepdims=True)                      # (1, 3C)
    var = jnp.sum((xc - mean) ** 2, axis=0, keepdims=True) * (1.0 / max(T - 1, 1))
    std = jnp.maximum(jnp.sqrt(var), 1e-5)

    xb = xc.astype(W_DTYPE)
    h = (jnp.dot(xb, wtx_ref[...], preferred_element_type=f32)
         + jnp.dot(mean.astype(W_DTYPE), wtm_ref[...], preferred_element_type=f32)
         + jnp.dot(std.astype(W_DTYPE), wts_ref[...], preferred_element_type=f32)
         + bt_ref[...])
    h = jnp.maximum(h, 0.0)                                         # (T, H)
    a = jnp.tanh(jnp.dot(h.astype(W_DTYPE), wa1_ref[...],
                         preferred_element_type=f32) + ba1_ref[...])
    logits = jnp.dot(a.astype(W_DTYPE), wa2_ref[...],
                     preferred_element_type=f32) + ba2_ref[...]     # (T, 3C)
    logits = logits - jnp.max(logits, axis=0, keepdims=True)
    e = jnp.exp(logits)
    attn = e * (1.0 / jnp.sum(e, axis=0, keepdims=True))            # exact softmax

    wmean = jnp.sum(xc * attn, axis=0, keepdims=True)               # (1, 3C)
    wsq = jnp.sum(xc * xc * attn, axis=0, keepdims=True)
    wstd = jnp.sqrt(jnp.maximum(wsq - wmean * wmean, 1e-5))

    # head: bn2 -> fc -> bn3, pooled vector kept split as [mean | std]
    pm = wmean * bn2s_m_ref[...] + bn2h_m_ref[...]
    ps = wstd * bn2s_s_ref[...] + bn2h_s_ref[...]
    y = (jnp.dot(pm.astype(W_DTYPE), fcw_m_ref[...], preferred_element_type=f32)
         + jnp.dot(ps.astype(W_DTYPE), fcw_s_ref[...], preferred_element_type=f32)
         + fcb_ref[...])
    y = y * bn3s_ref[...] + bn3h_ref[...]
    o_ref[...] = y[None].astype(o_ref.dtype)                        # (1, 1, E)


def conv2_pool_head(x1, x2, x3, p):
    B, T, C = x1.shape
    C3 = 3 * C
    H = p["wt_x"].shape[1]
    E = p["fc_w_m"].shape[1]
    kern = functools.partial(_tail_kernel, T=T)
    act_spec = pl.BlockSpec((1, T, C), lambda b: (b, 0, 0))

    def full(shape):
        return pl.BlockSpec(shape, lambda b, _s=shape: (0,) * len(_s))

    out = pl.pallas_call(
        kern,
        out_shape=jax.ShapeDtypeStruct((B, 1, E), jnp.float32),
        grid=(B,),
        in_specs=[act_spec, act_spec, act_spec,
                  full((C, C3)), full((C, C3)), full((C, C3)), full((1, C3)),
                  full((C3, H)), full((C3, H)), full((C3, H)), full((1, H)),
                  full((H, H)), full((1, H)), full((H, C3)), full((1, C3)),
                  full((1, C3)), full((1, C3)), full((1, C3)), full((1, C3)),
                  full((C3, E)), full((C3, E)), full((1, E)),
                  full((1, E)), full((1, E))],
        out_specs=pl.BlockSpec((1, 1, E), lambda b: (b, 0, 0)),
        compiler_params=_mosaic(),
    )(x1, x2, x3,
      p["w2_a"], p["w2_b"], p["w2_c"], p["conv2_b"],
      p["wt_x"], p["wt_m"], p["wt_s"], p["bt"],
      p["wa1"], p["ba1"], p["wa2"], p["ba2"],
      p["bn2_scale_m"], p["bn2_shift_m"], p["bn2_scale_s"], p["bn2_shift_s"],
      p["fc_w_m"], p["fc_w_s"], p["fc_b"],
      p["bn3_scale"], p["bn3_shift"])
    return out.reshape(B, E)


# --------------------------------------------------------------------------------------
# Parameter construction (deterministic, synthetic; BN folded into scale/shift)
# --------------------------------------------------------------------------------------
def _bn_fold(gamma, beta, rm, rv, bias=None):
    s = gamma / jnp.sqrt(rv + BN_EPS)
    shift = beta - rm * s
    if bias is not None:
        shift = shift + bias * s
    return s, shift


def init_params(key, input_size, channels, hidden, bottleneck, emb):
    keys = iter(jax.random.split(key, 512))

    def w(shape, s=0.1):
        return jax.random.normal(next(keys), shape, jnp.float32) * s

    def bn(c):
        gamma = 1.0 + 0.1 * jax.random.normal(next(keys), (c,), jnp.float32)
        beta = 0.1 * jax.random.normal(next(keys), (c,), jnp.float32)
        rm = 0.1 * jax.random.normal(next(keys), (c,), jnp.float32)
        rv = 1.0 + 0.1 * jnp.abs(jax.random.normal(next(keys), (c,), jnp.float32))
        return gamma, beta, rm, rv

    C, C3 = channels, 3 * channels
    sub = channels // 8
    params = {}

    # conv1 (k=5) + bn1 folded (conv bias folded into shift); taps packed along K
    conv1_w = w((5, input_size, C))
    conv1_b = w((C,), 0.05)
    sc, sh = _bn_fold(*bn(C), bias=conv1_b)
    params["conv1_w"] = conv1_w.reshape(5 * input_size, C).astype(W_DTYPE)
    params["conv1_scale"] = sc.reshape(1, C)
    params["conv1_shift"] = sh.reshape(1, C)

    def make_layer():
        bws, bscs, bshs = [], [], []
        for _ in range(7):                         # scale - 1 blocks
            bw = w((3, sub, sub))                  # (tap, in, out)
            bb = w((sub,), 0.05)
            s_, h_ = _bn_fold(*bn(sub), bias=bb)
            bws.append(bw.reshape(3 * sub, sub))   # taps packed along contraction
            bscs.append(s_.reshape(1, sub))
            bshs.append(h_.reshape(1, sub))
        lp = {
            "blocks_w": jnp.stack(bws, axis=0).astype(W_DTYPE),     # (7, 3*sub, sub)
            "blocks_scale": jnp.stack(bscs, axis=0),                # (7, 1, sub)
            "blocks_shift": jnp.stack(bshs, axis=0),
            "se_w1": w((C, bottleneck)).astype(W_DTYPE),
            "se_b1": w((bottleneck,), 0.05).reshape(1, bottleneck),
            "se_w2": w((bottleneck, C)).astype(W_DTYPE),
            "se_b2": w((C,), 0.05).reshape(1, C),
        }
        out_w = w((C, C))
        out_b = w((C,), 0.05)
        s_, h_ = _bn_fold(*bn(C), bias=out_b)       # out_conv bias + TDNNLayer BN folded
        lp["out_w"] = out_w.astype(W_DTYPE)
        lp["out_scale"] = s_.reshape(1, C)
        lp["out_shift"] = h_.reshape(1, C)
        return lp

    params["layer1"] = make_layer()
    params["layer2"] = make_layer()
    params["layer3"] = make_layer()

    # tail: conv2 (1x1 on 3C, weight split by source), ASP, head
    tail = {}
    w2 = w((C3, C3))
    tail["w2_a"] = w2[:C].astype(W_DTYPE)
    tail["w2_b"] = w2[C:2 * C].astype(W_DTYPE)
    tail["w2_c"] = w2[2 * C:].astype(W_DTYPE)
    tail["conv2_b"] = w((C3,), 0.05).reshape(1, C3)

    wt = w((3 * C3, hidden))
    tail["wt_x"] = wt[:C3].astype(W_DTYPE)
    tail["wt_m"] = wt[C3:2 * C3].astype(W_DTYPE)
    tail["wt_s"] = wt[2 * C3:].astype(W_DTYPE)
    tail["bt"] = w((hidden,), 0.05).reshape(1, hidden)
    tail["wa1"] = w((hidden, hidden)).astype(W_DTYPE)
    tail["ba1"] = w((hidden,), 0.05).reshape(1, hidden)
    tail["wa2"] = w((hidden, C3)).astype(W_DTYPE)
    tail["ba2"] = w((C3,), 0.05).reshape(1, C3)

    bn2_s, bn2_h = _bn_fold(*bn(2 * C3))
    tail["bn2_scale_m"] = bn2_s[:C3].reshape(1, C3)
    tail["bn2_scale_s"] = bn2_s[C3:].reshape(1, C3)
    tail["bn2_shift_m"] = bn2_h[:C3].reshape(1, C3)
    tail["bn2_shift_s"] = bn2_h[C3:].reshape(1, C3)
    fc_w = w((2 * C3, emb))
    tail["fc_w_m"] = fc_w[:C3].astype(W_DTYPE)
    tail["fc_w_s"] = fc_w[C3:].astype(W_DTYPE)
    tail["fc_b"] = w((emb,), 0.05).reshape(1, emb)
    bn3_s, bn3_h = _bn_fold(*bn(emb))
    tail["bn3_scale"] = bn3_s.reshape(1, emb)
    tail["bn3_shift"] = bn3_h.reshape(1, emb)
    params["tail"] = tail
    return params


# --------------------------------------------------------------------------------------
# Model forward: 5 pallas_calls, running residual sum carried between layers
# --------------------------------------------------------------------------------------
def ecapa_forward(x_bct, params):
    """x_bct: (B, feat_dim, T) — same layout as the PyTorch module input."""
    x = jnp.transpose(x_bct, (0, 2, 1)).astype(ACT_DTYPE)           # (B, T, F)

    h = conv1_bn_relu(x, params)
    x1, s1 = tdnn_layer(h, params["layer1"], dilation=2, emit_sum=True)   # s1 = h+x1
    x2, s2 = tdnn_layer(s1, params["layer2"], dilation=3, emit_sum=True)  # s2 = h+x1+x2
    x3 = tdnn_layer(s2, params["layer3"], dilation=4, emit_sum=False)

    return conv2_pool_head(x1, x2, x3, params["tail"])               # (B, emb)


# --------------------------------------------------------------------------------------
if __name__ == "__main__":
    # small config consistent with the module (input_size=32, channels=64, emb_size=32;
    # ASP hidden and SE bottleneck reduced from their 128 defaults for the small test)
    B, FEAT, T = 2, 32, 16
    CHANNELS, HIDDEN, BOTTLENECK, EMB = 64, 32, 32, 32

    key = jax.random.PRNGKey(0)
    pkey, xkey = jax.random.split(key)
    params = init_params(pkey, FEAT, CHANNELS, HIDDEN, BOTTLENECK, EMB)
    x = jax.random.normal(xkey, (B, FEAT, T), jnp.float32)           # torch-style (B, C, T)

    out = jax.jit(ecapa_forward)(x, params)
    out = jax.block_until_ready(out)
    assert out.shape == (B, EMB), out.shape
    assert bool(jnp.all(jnp.isfinite(out)))
    print("KERNEL_OK")
</pallas_src>

<mosaic_0001>
module attributes {stable_mosaic.version = 11 : i64} {
  func.func @_conv1_kernel(%arg0: i32, %arg1: memref<1x16x32xbf16, #tpu.memory_space<vmem>>, %arg2: memref<160x64xbf16, #tpu.memory_space<vmem>>, %arg3: memref<1x64xf32, #tpu.memory_space<vmem>>, %arg4: memref<1x64xf32, #tpu.memory_space<vmem>>, %arg5: memref<1x16x64xbf16, #tpu.memory_space<vmem>>, %arg6: memref<20x32xf32, #tpu.memory_space<vmem>>, %arg7: memref<16x160xbf16, #tpu.memory_space<vmem>>) attributes {dimension_semantics = [#tpu.dimension_semantics<parallel>], iteration_bounds = array<i64: 2>, scalar_prefetch = 0 : i64, scratch_operands = 2 : i64, tpu.core_type = #tpu.core_type<tc>, window_params = [{transform_indices = @transform_0, window_bounds = array<i64: 1, 16, 32>}, {pipeline_mode = #tpu.pipeline_mode<synchronous>, transform_indices = @transform_1, window_bounds = array<i64: 160, 64>}, {pipeline_mode = #tpu.pipeline_mode<synchronous>, transform_indices = @transform_2, window_bounds = array<i64: 1, 64>}, {pipeline_mode = #tpu.pipeline_mode<synchronous>, transform_indices = @transform_3, window_bounds = array<i64: 1, 64>}, {transform_indices = @transform_4, window_bounds = array<i64: 1, 16, 64>}]} {
    %cst = arith.constant 0.000000e+00 : f32
    %0 = vector.broadcast %cst : f32 to vector<2x32xf32>
    %c0 = arith.constant 0 : index
    %c0_0 = arith.constant 0 : index
    %1 = vector.load %arg6[%c0, %c0_0] : memref<20x32xf32, #tpu.memory_space<vmem>>, vector<2x32xf32>
    tpu.vector_store %arg6[%c0, %c0_0], %0 {strides = array<i32>} : memref<20x32xf32, #tpu.memory_space<vmem>>, vector<2x32xf32>,
    %cst_1 = arith.constant 0.000000e+00 : f32
    %2 = vector.broadcast %cst_1 : f32 to vector<2x32xf32>
    %c18 = arith.constant 18 : index
    %c0_2 = arith.constant 0 : index
    %3 = vector.load %arg6[%c18, %c0_2] : memref<20x32xf32, #tpu.memory_space<vmem>>, vector<2x32xf32>
    tpu.vector_store %arg6[%c18, %c0_2], %2 {strides = array<i32>} : memref<20x32xf32, #tpu.memory_space<vmem>>, vector<2x32xf32>,
    %c0_3 = arith.constant 0 : index
    %c0_4 = arith.constant 0 : index
    %c0_5 = arith.constant 0 : index
    %4 = vector.load %arg1[%c0_3, %c0_4, %c0_5] : memref<1x16x32xbf16, #tpu.memory_space<vmem>>, vector<1x16x32xbf16>
    %5 = vector.shape_cast %4 : vector<1x16x32xbf16> to vector<16x32xbf16>
    %6 = arith.extf %5 : vector<16x32xbf16> to vector<16x32xf32>
    %c2 = arith.constant 2 : index
    %c0_6 = arith.constant 0 : index
    %7 = vector.load %arg6[%c2, %c0_6] : memref<20x32xf32, #tpu.memory_space<vmem>>, vector<16x32xf32>
    tpu.vector_store %arg6[%c2, %c0_6], %6 {strides = array<i32>} : memref<20x32xf32, #tpu.memory_space<vmem>>, vector<16x32xf32>,
    %c0_7 = arith.constant 0 : index
    %c0_8 = arith.constant 0 : index
    %8 = vector.load %arg6[%c0_7, %c0_8] : memref<20x32xf32, #tpu.memory_space<vmem>>, vector<16x32xf32>
    %9 = arith.truncf %8 : vector<16x32xf32> to vector<16x32xbf16>
    %c0_9 = arith.constant 0 : index
    %c0_10 = arith.constant 0 : index
    %10 = vector.load %arg7[%c0_9, %c0_10] : memref<16x160xbf16, #tpu.memory_space<vmem>>, vector<16x32xbf16>
    tpu.vector_store %arg7[%c0_9, %c0_10], %9 {strides = array<i32>} : memref<16x160xbf16, #tpu.memory_space<vmem>>, vector<16x32xbf16>,
    %c1 = arith.constant 1 : index
    %c0_11 = arith.constant 0 : index
    %11 = vector.load %arg6[%c1, %c0_11] : memref<20x32xf32, #tpu.memory_space<vmem>>, vector<16x32xf32>
    %12 = arith.truncf %11 : vector<16x32xf32> to vector<16x32xbf16>
    %c0_12 = arith.constant 0 : index
    %c32 = arith.constant 32 : index
    %13 = vector.load %arg7[%c0_12, %c32] : memref<16x160xbf16, #tpu.memory_space<vmem>>, vector<16x32xbf16>
    tpu.vector_store %arg7[%c0_12, %c32], %12 {strides = array<i32>} : memref<16x160xbf16, #tpu.memory_space<vmem>>, vector<16x32xbf16>,
    %c2_13 = arith.constant 2 : index
    %c0_14 = arith.constant 0 : index
    %14 = vector.load %arg6[%c2_13, %c0_14] : memref<20x32xf32, #tpu.memory_space<vmem>>, vector<16x32xf32>
    %15 = arith.truncf %14 : vector<16x32xf32> to vector<16x32xbf16>
    %c0_15 = arith.constant 0 : index
    %c64 = arith.constant 64 : index
    %16 = vector.load %arg7[%c0_15, %c64] : memref<16x160xbf16, #tpu.memory_space<vmem>>, vector<16x32xbf16>
    tpu.vector_store %arg7[%c0_15, %c64], %15 {strides = array<i32>} : memref<16x160xbf16, #tpu.memory_space<vmem>>, vector<16x32xbf16>,
    %c3 = arith.constant 3 : index
    %c0_16 = arith.constant 0 : index
    %17 = vector.load %arg6[%c3, %c0_16] : memref<20x32xf32, #tpu.memory_space<vmem>>, vector<16x32xf32>
    %18 = arith.truncf %17 : vector<16x32xf32> to vector<16x32xbf16>
    %c0_17 = arith.constant 0 : index
    %c96 = arith.constant 96 : index
    %19 = vector.load %arg7[%c0_17, %c96] : memref<16x160xbf16, #tpu.memory_space<vmem>>, vector<16x32xbf16>
    tpu.vector_store %arg7[%c0_17, %c96], %18 {strides = array<i32>} : memref<16x160xbf16, #tpu.memory_space<vmem>>, vector<16x32xbf16>,
    %c4 = arith.constant 4 : index
    %c0_18 = arith.constant 0 : index
    %20 = vector.load %arg6[%c4, %c0_18] : memref<20x32xf32, #tpu.memory_space<vmem>>, vector<16x32xf32>
    %21 = arith.truncf %20 : vector<16x32xf32> to vector<16x32xbf16>
    %c0_19 = arith.constant 0 : index
    %c128 = arith.constant 128 : index
    %22 = vector.load %arg7[%c0_19, %c128] : memref<16x160xbf16, #tpu.memory_space<vmem>>, vector<16x32xbf16>
    tpu.vector_store %arg7[%c0_19, %c128], %21 {strides = array<i32>} : memref<16x160xbf16, #tpu.memory_space<vmem>>, vector<16x32xbf16>,
    %c0_20 = arith.constant 0 : index
    %c0_21 = arith.constant 0 : index
    %23 = vector.load %arg7[%c0_20, %c0_21] : memref<16x160xbf16, #tpu.memory_space<vmem>>, vector<16x160xbf16>
    %c0_22 = arith.constant 0 : index
    %c0_23 = arith.constant 0 : index
    %24 = vector.load %arg2[%c0_22, %c0_23] : memref<160x64xbf16, #tpu.memory_space<vmem>>, vector<160x64xbf16>
    %cst_24 = arith.constant dense<0.000000e+00> : vector<16x64xf32>
    %25 = tpu.matmul %23, %24, %cst_24 {dimension_numbers = #tpu.dot_dimension_numbers<[1], [0], [0], [1], [0, 0, 1, 1], [], []>} : vector<16x160xbf16>, vector<160x64xbf16>, vector<16x64xf32> -> vector<16x64xf32>
    %c0_25 = arith.constant 0 : index
    %c0_26 = arith.constant 0 : index
    %26 = vector.load %arg3[%c0_25, %c0_26] : memref<1x64xf32, #tpu.memory_space<vmem>>, vector<1x64xf32>
    %27 = vector.broadcast %26 : vector<1x64xf32> to vector<16x64xf32>
    %28 = arith.mulf %25, %27 : vector<16x64xf32>
    %c0_27 = arith.constant 0 : index
    %c0_28 = arith.constant 0 : index
    %29 = vector.load %arg4[%c0_27, %c0_28] : memref<1x64xf32, #tpu.memory_space<vmem>>, vector<1x64xf32>
    %30 = vector.broadcast %29 : vector<1x64xf32> to vector<16x64xf32>
    %31 = arith.addf %28, %30 : vector<16x64xf32>
    %cst_29 = arith.constant 0.000000e+00 : f32
    %32 = vector.broadcast %cst_29 : f32 to vector<16x64xf32>
    %33 = arith.maximumf %31, %32 : vector<16x64xf32>
    %34 = vector.shape_cast %33 : vector<16x64xf32> to vector<1x16x64xf32>
    %35 = arith.truncf %34 : vector<1x16x64xf32> to vector<1x16x64xbf16>
    %c0_30 = arith.constant 0 : index
    %c0_31 = arith.constant 0 : index
    %c0_32 = arith.constant 0 : index
    %36 = vector.load %arg5[%c0_30, %c0_31, %c0_32] : memref<1x16x64xbf16, #tpu.memory_space<vmem>>, vector<1x16x64xbf16>
    tpu.vector_store %arg5[%c0_30, %c0_31, %c0_32], %35 {strides = array<i32>} : memref<1x16x64xbf16, #tpu.memory_space<vmem>>, vector<1x16x64xbf16>,
    return
  }
  func.func @transform_0(%arg0: i32) -> (i32, i32, i32) {
    %c0_i32 = arith.constant 0 : i32
    %c0_i32_0 = arith.constant 0 : i32
    %c0_i32_1 = arith.constant 0 : i32
    return %arg0, %c0_i32, %c0_i32_0 : i32, i32, i32
  }
  func.func @transform_1(%arg0: i32) -> (i32, i32) {
    %c0_i32 = arith.constant 0 : i32
    %c0_i32_0 = arith.constant 0 : i32
    %c0_i32_1 = arith.constant 0 : i32
    return %c0_i32, %c0_i32_0 : i32, i32
  }
  func.func @transform_2(%arg0: i32) -> (i32, i32) {
    %c0_i32 = arith.constant 0 : i32
    %c0_i32_0 = arith.constant 0 : i32
    %c0_i32_1 = arith.constant 0 : i32
    return %c0_i32, %c0_i32_0 : i32, i32
  }
  func.func @transform_3(%arg0: i32) -> (i32, i32) {
    %c0_i32 = arith.constant 0 : i32
    %c0_i32_0 = arith.constant 0 : i32
    %c0_i32_1 = arith.constant 0 : i32
    return %c0_i32, %c0_i32_0 : i32, i32
  }
  func.func @transform_4(%arg0: i32) -> (i32, i32, i32) {
    %c0_i32 = arith.constant 0 : i32
    %c0_i32_0 = arith.constant 0 : i32
    %c0_i32_1 = arith.constant 0 : i32
    return %arg0, %c0_i32, %c0_i32_0 : i32, i32, i32
  }
}

module attributes {stable_mosaic.version = 11 : i64} {
  func.func @kernel(%arg0: i32, %arg1: memref<1x16x64xbf16, #tpu.memory_space<vmem>>, %arg2: memref<7x24x8xbf16, #tpu.memory_space<vmem>>, %arg3: memref<7x1x8xf32, #tpu.memory_space<vmem>>, %arg4: memref<7x1x8xf32, #tpu.memory_space<vmem>>, %arg5: memref<64x32xbf16, #tpu.memory_space<vmem>>, %arg6: memref<1x32xf32, #tpu.memory_space<vmem>>, %arg7: memref<32x64xbf16, #tpu.memory_space<vmem>>, %arg8: memref<1x64xf32, #tpu.memory_space<vmem>>, %arg9: memref<64x64xbf16, #tpu.memory_space<vmem>>, %arg10: memref<1x64xf32, #tpu.memory_space<vmem>>, %arg11: memref<1x64xf32, #tpu.memory_space<vmem>>, %arg12: memref<1x16x64xbf16, #tpu.memory_space<vmem>>, %arg13: memref<24x8xf32, #tpu.memory_space<vmem>>, %arg14: memref<16x24xbf16, #tpu.memory_space<vmem>>, %arg15: memref<16x64xbf16, #tpu.memory_space<vmem>>) attributes {dimension_semantics = [#tpu.dimension_semantics<parallel>], iteration_bounds = array<i64: 2>, scalar_prefetch = 0 : i64, scratch_operands = 3 : i64, tpu.core_type = #tpu.core_type<tc>, window_params = [{transform_indices = @transform_0, window_bounds = array<i64: 1, 16, 64>}, {pipeline_mode = #tpu.pipeline_mode<synchronous>, transform_indices = @transform_1, window_bounds = array<i64: 7, 24, 8>}, {pipeline_mode = #tpu.pipeline_mode<synchronous>, transform_indices = @transform_2, window_bounds = array<i64: 7, 1, 8>}, {pipeline_mode = #tpu.pipeline_mode<synchronous>, transform_indices = @transform_3, window_bounds = array<i64: 7, 1, 8>}, {pipeline_mode = #tpu.pipeline_mode<synchronous>, transform_indices = @transform_4, window_bounds = array<i64: 64, 32>}, {pipeline_mode = #tpu.pipeline_mode<synchronous>, transform_indices = @transform_5, window_bounds = array<i64: 1, 32>}, {pipeline_mode = #tpu.pipeline_mode<synchronous>, transform_indices = @transform_6, window_bounds = array<i64: 32, 64>}, {pipeline_mode = #tpu.pipeline_mode<synchronous>, transform_indices = @transform_7, window_bounds = array<i64: 1, 64>}, {pipeline_mode = #tpu.pipeline_mode<synchronous>, transform_indices = @transform_8, window_bounds = array<i64: 64, 64>}, {pipeline_mode = #tpu.pipeline_mode<synchronous>, transform_indices = @transform_9, window_bounds = array<i64: 1, 64>}, {pipeline_mode = #tpu.pipeline_mode<synchronous>, transform_indices = @transform_10, window_bounds = array<i64: 1, 64>}, {transform_indices = @transform_11, window_bounds = array<i64: 1, 16, 64>}]} {
    %cst = arith.constant 0.000000e+00 : f32
    %0 = vector.broadcast %cst : f32 to vector<4x8xf32>
    %c0 = arith.constant 0 : index
    %c0_0 = arith.constant 0 : index
    %1 = vector.load %arg13[%c0, %c0_0] : memref<24x8xf32, #tpu.memory_space<vmem>>, vector<4x8xf32>
    tpu.vector_store %arg13[%c0, %c0_0], %0 {strides = array<i32>} : memref<24x8xf32, #tpu.memory_space<vmem>>, vector<4x8xf32>,
    %cst_1 = arith.constant 0.000000e+00 : f32
    %2 = vector.broadcast %cst_1 : f32 to vector<4x8xf32>
    %c20 = arith.constant 20 : index
    %c0_2 = arith.constant 0 : index
    %3 = vector.load %arg13[%c20, %c0_2] : memref<24x8xf32, #tpu.memory_space<vmem>>, vector<4x8xf32>
    tpu.vector_store %arg13[%c20, %c0_2], %2 {strides = array<i32>} : memref<24x8xf32, #tpu.memory_space<vmem>>, vector<4x8xf32>,
    %c0_3 = arith.constant 0 : index
    %c0_4 = arith.constant 0 : index
    %c0_5 = arith.constant 0 : index
    %4 = vector.load %arg1[%c0_3, %c0_4, %c0_5] : memref<1x16x64xbf16, #tpu.memory_space<vmem>>, vector<1x16x64xbf16>
    %5 = vector.shape_cast %4 : vector<1x16x64xbf16> to vector<16x64xbf16>
    %6 = arith.extf %5 : vector<16x64xbf16> to vector<16x64xf32>
    %7 = vector.extract_strided_slice %6 {offsets = [0, 0], sizes = [16, 8], strides = [1, 1]} : vector<16x64xf32> to vector<16x8xf32>
    %8 = arith.truncf %7 : vector<16x8xf32> to vector<16x8xbf16>
    %c0_6 = arith.constant 0 : index
    %c0_7 = arith.constant 0 : index
    %9 = vector.load %arg15[%c0_6, %c0_7] : memref<16x64xbf16, #tpu.memory_space<vmem>>, vector<16x8xbf16>
    tpu.vector_store %arg15[%c0_6, %c0_7], %8 {strides = array<i32>} : memref<16x64xbf16, #tpu.memory_space<vmem>>, vector<16x8xbf16>,
    %10 = vector.extract_strided_slice %6 {offsets = [0, 8], sizes = [16, 8], strides = [1, 1]} : vector<16x64xf32> to vector<16x8xf32>
    %c4 = arith.constant 4 : index
    %c0_8 = arith.constant 0 : index
    %11 = vector.load %arg13[%c4, %c0_8] : memref<24x8xf32, #tpu.memory_space<vmem>>, vector<16x8xf32>
    tpu.vector_store %arg13[%c4, %c0_8], %10 {strides = array<i32>} : memref<24x8xf32, #tpu.memory_space<vmem>>, vector<16x8xf32>,
    %c0_9 = arith.constant 0 : index
    %c0_10 = arith.constant 0 : index
    %12 = vector.load %arg13[%c0_9, %c0_10] : memref<24x8xf32, #tpu.memory_space<vmem>>, vector<16x8xf32>
    %13 = arith.truncf %12 : vector<16x8xf32> to vector<16x8xbf16>
    %c0_11 = arith.constant 0 : index
    %c0_12 = arith.constant 0 : index
    %14 = vector.load %arg14[%c0_11, %c0_12] : memref<16x24xbf16, #tpu.memory_space<vmem>>, vector<16x8xbf16>
    tpu.vector_store %arg14[%c0_11, %c0_12], %13 {strides = array<i32>} : memref<16x24xbf16, #tpu.memory_space<vmem>>, vector<16x8xbf16>,
    %c4_13 = arith.constant 4 : index
    %c0_14 = arith.constant 0 : index
    %15 = vector.load %arg13[%c4_13, %c0_14] : memref<24x8xf32, #tpu.memory_space<vmem>>, vector<16x8xf32>
    %16 = arith.truncf %15 : vector<16x8xf32> to vector<16x8xbf16>
    %c0_15 = arith.constant 0 : index
    %c8 = arith.constant 8 : index
    %17 = vector.load %arg14[%c0_15, %c8] : memref<16x24xbf16, #tpu.memory_space<vmem>>, vector<16x8xbf16>
    tpu.vector_store %arg14[%c0_15, %c8], %16 {strides = array<i32>} : memref<16x24xbf16, #tpu.memory_space<vmem>>, vector<16x8xbf16>,
    %c8_16 = arith.constant 8 : index
    %c0_17 = arith.constant 0 : index
    %18 = vector.load %arg13[%c8_16, %c0_17] : memref<24x8xf32, #tpu.memory_space<vmem>>, vector<16x8xf32>
    %19 = arith.truncf %18 : vector<16x8xf32> to vector<16x8xbf16>
    %c0_18 = arith.constant 0 : index
    %c16 = arith.constant 16 : index
    %20 = vector.load %arg14[%c0_18, %c16] : memref<16x24xbf16, #tpu.memory_space<vmem>>, vector<16x8xbf16>
    tpu.vector_store %arg14[%c0_18, %c16], %19 {strides = array<i32>} : memref<16x24xbf16, #tpu.memory_space<vmem>>, vector<16x8xbf16>,
    %c0_19 = arith.constant 0 : index
    %c0_20 = arith.constant 0 : index
    %21 = vector.load %arg14[%c0_19, %c0_20] : memref<16x24xbf16, #tpu.memory_space<vmem>>, vector<16x24xbf16>
    %c0_21 = arith.constant 0 : index
    %c0_22 = arith.constant 0 : index
    %c0_23 = arith.constant 0 : index
    %22 = vector.load %arg2[%c0_21, %c0_22, %c0_23] : memref<7x24x8xbf16, #tpu.memory_space<vmem>>, vector<1x24x8xbf16>
    %23 = vector.shape_cast %22 : vector<1x24x8xbf16> to vector<24x8xbf16>
    %cst_24 = arith.constant dense<0.000000e+00> : vector<16x8xf32>
    %24 = tpu.matmul %21, %23, %cst_24 {dimension_numbers = #tpu.dot_dimension_numbers<[1], [0], [0], [1], [0, 0, 1, 1], [], []>} : vector<16x24xbf16>, vector<24x8xbf16>, vector<16x8xf32> -> vector<16x8xf32>
    %c0_25 = arith.constant 0 : index
    %c0_26 = arith.constant 0 : index
    %c0_27 = arith.constant 0 : index
    %25 = vector.load %arg3[%c0_25, %c0_26, %c0_27] : memref<7x1x8xf32, #tpu.memory_space<vmem>>, vector<1x1x8xf32>
    %26 = vector.shape_cast %25 : vector<1x1x8xf32> to vector<1x8xf32>
    %27 = vector.broadcast %26 : vector<1x8xf32> to vector<16x8xf32>
    %28 = arith.mulf %24, %27 : vector<16x8xf32>
    %c0_28 = arith.constant 0 : index
    %c0_29 = arith.constant 0 : index
    %c0_30 = arith.constant 0 : index
    %29 = vector.load %arg4[%c0_28, %c0_29, %c0_30] : memref<7x1x8xf32, #tpu.memory_space<vmem>>, vector<1x1x8xf32>
    %30 = vector.shape_cast %29 : vector<1x1x8xf32> to vector<1x8xf32>
    %31 = vector.broadcast %30 : vector<1x8xf32> to vector<16x8xf32>
    %32 = arith.addf %28, %31 : vector<16x8xf32>
    %cst_31 = arith.constant 0.000000e+00 : f32
    %33 = vector.broadcast %cst_31 : f32 to vector<16x8xf32>
    %34 = arith.maximumf %32, %33 : vector<16x8xf32>
    %35 = arith.truncf %34 : vector<16x8xf32> to vector<16x8xbf16>
    %c0_32 = arith.constant 0 : index
    %c8_33 = arith.constant 8 : index
    %36 = vector.load %arg15[%c0_32, %c8_33] : memref<16x64xbf16, #tpu.memory_space<vmem>>, vector<16x8xbf16>
    tpu.vector_store %arg15[%c0_32, %c8_33], %35 {strides = array<i32>} : memref<16x64xbf16, #tpu.memory_space<vmem>>, vector<16x8xbf16>,
    %37 = vector.extract_strided_slice %6 {offsets = [0, 16], sizes = [16, 8], strides = [1, 1]} : vector<16x64xf32> to vector<16x8xf32>
    %38 = arith.addf %37, %34 : vector<16x8xf32>
    %c4_34 = arith.constant 4 : index
    %c0_35 = arith.constant 0 : index
    %39 = vector.load %arg13[%c4_34, %c0_35] : memref<24x8xf32, #tpu.memory_space<vmem>>, vector<16x8xf32>
    tpu.vector_store %arg13[%c4_34, %c0_35], %38 {strides = array<i32>} : memref<24x8xf32, #tpu.memory_space<vmem>>, vector<16x8xf32>,
    %c0_36 = arith.constant 0 : index
    %c0_37 = arith.constant 0 : index
    %40 = vector.load %arg13[%c0_36, %c0_37] : memref<24x8xf32, #tpu.memory_space<vmem>>, vector<16x8xf32>
    %41 = arith.truncf %40 : vector<16x8xf32> to vector<16x8xbf16>
    %c0_38 = arith.constant 0 : index
    %c0_39 = arith.constant 0 : index
    %42 = vector.load %arg14[%c0_38, %c0_39] : memref<16x24xbf16, #tpu.memory_space<vmem>>, vector<16x8xbf16>
    tpu.vector_store %arg14[%c0_38, %c0_39], %41 {strides = array<i32>} : memref<16x24xbf16, #tpu.memory_space<vmem>>, vector<16x8xbf16>,
    %c4_40 = arith.constant 4 : index
    %c0_41 = arith.constant 0 : index
    %43 = vector.load %arg13[%c4_40, %c0_41] : memref<24x8xf32, #tpu.memory_space<vmem>>, vector<16x8xf32>
    %44 = arith.truncf %43 : vector<16x8xf32> to vector<16x8xbf16>
    %c0_42 = arith.constant 0 : index
    %c8_43 = arith.constant 8 : index
    %45 = vector.load %arg14[%c0_42, %c8_43] : memref<16x24xbf16, #tpu.memory_space<vmem>>, vector<16x8xbf16>
    tpu.vector_store %arg14[%c0_42, %c8_43], %44 {strides = array<i32>} : memref<16x24xbf16, #tpu.memory_space<vmem>>, vector<16x8xbf16>,
    %c8_44 = arith.constant 8 : index
    %c0_45 = arith.constant 0 : index
    %46 = vector.load %arg13[%c8_44, %c0_45] : memref<24x8xf32, #tpu.memory_space<vmem>>, vector<16x8xf32>
    %47 = arith.truncf %46 : vector<16x8xf32> to vector<16x8xbf16>
    %c0_46 = arith.constant 0 : index
    %c16_47 = arith.constant 16 : index
    %48 = vector.load %arg14[%c0_46, %c16_47] : memref<16x24xbf16, #tpu.memory_space<vmem>>, vector<16x8xbf16>
    tpu.vector_store %arg14[%c0_46, %c16_47], %47 {strides = array<i32>} : memref<16x24xbf16, #tpu.memory_space<vmem>>, vector<16x8xbf16>,
    %c0_48 = arith.constant 0 : index
    %c0_49 = arith.constant 0 : index
    %49 = vector.load %arg14[%c0_48, %c0_49] : memref<16x24xbf16, #tpu.memory_space<vmem>>, vector<16x24xbf16>
    %c1 = arith.constant 1 : index
    %c0_50 = arith.constant 0 : index
    %c0_51 = arith.constant 0 : index
    %50 = vector.load %arg2[%c1, %c0_50, %c0_51] : memref<7x24x8xbf16, #tpu.memory_space<vmem>>, vector<1x24x8xbf16>
    %51 = vector.shape_cast %50 : vector<1x24x8xbf16> to vector<24x8xbf16>
    %cst_52 = arith.constant dense<0.000000e+00> : vector<16x8xf32>
    %52 = tpu.matmul %49, %51, %cst_52 {dimension_numbers = #tpu.dot_dimension_numbers<[1], [0], [0], [1], [0, 0, 1, 1], [], []>} : vector<16x24xbf16>, vector<24x8xbf16>, vector<16x8xf32> -> vector<16x8xf32>
    %c1_53 = arith.constant 1 : index
    %c0_54 = arith.constant 0 : index
    %c0_55 = arith.constant 0 : index
    %53 = vector.load %arg3[%c1_53, %c0_54, %c0_55] : memref<7x1x8xf32, #tpu.memory_space<vmem>>, vector<1x1x8xf32>
    %54 = vector.shape_cast %53 : vector<1x1x8xf32> to vector<1x8xf32>
    %55 = vector.broadcast %54 : vector<1x8xf32> to vector<16x8xf32>
    %56 = arith.mulf %52, %55 : vector<16x8xf32>
    %c1_56 = arith.constant 1 : index
    %c0_57 = arith.constant 0 : index
    %c0_58 = arith.constant 0 : index
    %57 = vector.load %arg4[%c1_56, %c0_57, %c0_58] : memref<7x1x8xf32, #tpu.memory_space<vmem>>, vector<1x1x8xf32>
    %58 = vector.shape_cast %57 : vector<1x1x8xf32> to vector<1x8xf32>
    %59 = vector.broadcast %58 : vector<1x8xf32> to vector<16x8xf32>
    %60 = arith.addf %56, %59 : vector<16x8xf32>
    %cst_59 = arith.constant 0.000000e+00 : f32
    %61 = vector.broadcast %cst_59 : f32 to vector<16x8xf32>
    %62 = arith.maximumf %60, %61 : vector<16x8xf32>
    %63 = arith.truncf %62 : vector<16x8xf32> to vector<16x8xbf16>
    %c0_60 = arith.constant 0 : index
    %c16_61 = arith.constant 16 : index
    %64 = vector.load %arg15[%c0_60, %c16_61] : memref<16x64xbf16, #tpu.memory_space<vmem>>, vector<16x8xbf16>
    tpu.vector_store %arg15[%c0_60, %c16_61], %63 {strides = array<i32>} : memref<16x64xbf16, #tpu.memory_space<vmem>>, vector<16x8xbf16>,
    %65 = vector.extract_strided_slice %6 {offsets = [0, 24], sizes = [16, 8], strides = [1, 1]} : vector<16x64xf32> to vector<16x8xf32>
    %66 = arith.addf %65, %62 : vector<16x8xf32>
    %c4_62 = arith.constant 4 : index
    %c0_63 = arith.constant 0 : index
    %67 = vector.load %arg13[%c4_62, %c0_63] : memref<24x8xf32, #tpu.memory_space<vmem>>, vector<16x8xf32>
    tpu.vector_store %arg13[%c4_62, %c0_63], %66 {strides = array<i32>} : memref<24x8xf32, #tpu.memory_space<vmem>>, vector<16x8xf32>,
    %c0_64 = arith.constant 0 : index
    %c0_65 = arith.constant 0 : index
    %68 = vector.load %arg13[%c0_64, %c0_65] : memref<24x8xf32, #tpu.memory_space<vmem>>, vector<16x8xf32>
    %69 = arith.truncf %68 : vector<16x8xf32> to vector<16x8xbf16>
    %c0_66 = arith.constant 0 : index
    %c0_67 = arith.constant 0 : index
    %70 = vector.load %arg14[%c0_66, %c0_67] : memref<16x24xbf16, #tpu.memory_space<vmem>>, vector<16x8xbf16>
    tpu.vector_store %arg14[%c0_66, %c0_67], %69 {strides = array<i32>} : memref<16x24xbf16, #tpu.memory_space<vmem>>, vector<16x8xbf16>,
    %c4_68 = arith.constant 4 : index
    %c0_69 = arith.constant 0 : index
    %71 = vector.load %arg13[%c4_68, %c0_69] : memref<24x8xf32, #tpu.memory_space<vmem>>, vector<16x8xf32>
    %72 = arith.truncf %71 : vector<16x8xf32> to vector<16x8xbf16>
    %c0_70 = arith.constant 0 : index
    %c8_71 = arith.constant 8 : index
    %73 = vector.load %arg14[%c0_70, %c8_71] : memref<16x24xbf16, #tpu.memory_space<vmem>>, vector<16x8xbf16>
    tpu.vector_store %arg14[%c0_70, %c8_71], %72 {strides = array<i32>} : memref<16x24xbf16, #tpu.memory_space<vmem>>, vector<16x8xbf16>,
    %c8_72 = arith.constant 8 : index
    %c0_73 = arith.constant 0 : index
    %74 = vector.load %arg13[%c8_72, %c0_73] : memref<24x8xf32, #tpu.memory_space<vmem>>, vector<16x8xf32>
    %75 = arith.truncf %74 : vector<16x8xf32> to vector<16x8xbf16>
    %c0_74 = arith.constant 0 : index
    %c16_75 = arith.constant 16 : index
    %76 = vector.load %arg14[%c0_74, %c16_75] : memref<16x24xbf16, #tpu.memory_space<vmem>>, vector<16x8xbf16>
    tpu.vector_store %arg14[%c0_74, %c16_75], %75 {strides = array<i32>} : memref<16x24xbf16, #tpu.memory_space<vmem>>, vector<16x8xbf16>,
    %c0_76 = arith.constant 0 : index
    %c0_77 = arith.constant 0 : index
    %77 = vector.load %arg14[%c0_76, %c0_77] : memref<16x24xbf16, #tpu.memory_space<vmem>>, vector<16x24xbf16>
    %c2 = arith.constant 2 : index
    %c0_78 = arith.constant 0 : index
    %c0_79 = arith.constant 0 : index
    %78 = vector.load %arg2[%c2, %c0_78, %c0_79] : memref<7x24x8xbf16, #tpu.memory_space<vmem>>, vector<1x24x8xbf16>
    %79 = vector.shape_cast %78 : vector<1x24x8xbf16> to vector<24x8xbf16>
    %cst_80 = arith.constant dense<0.000000e+00> : vector<16x8xf32>
    %80 = tpu.matmul %77, %79, %cst_80 {dimension_numbers = #tpu.dot_dimension_numbers<[1], [0], [0], [1], [0, 0, 1, 1], [], []>} : vector<16x24xbf16>, vector<24x8xbf16>, vector<16x8xf32> -> vector<16x8xf32>
    %c2_81 = arith.constant 2 : index
    %c0_82 = arith.constant 0 : index
    %c0_83 = arith.constant 0 : index
    %81 = vector.load %arg3[%c2_81, %c0_82, %c0_83] : memref<7x1x8xf32, #tpu.memory_space<vmem>>, vector<1x1x8xf32>
    %82 = vector.shape_cast %81 : vector<1x1x8xf32> to vector<1x8xf32>
    %83 = vector.broadcast %82 : vector<1x8xf32> to vector<16x8xf32>
    %84 = arith.mulf %80, %83 : vector<16x8xf32>
    %c2_84 = arith.constant 2 : index
    %c0_85 = arith.constant 0 : index
    %c0_86 = arith.constant 0 : index
    %85 = vector.load %arg4[%c2_84, %c0_85, %c0_86] : memref<7x1x8xf32, #tpu.memory_space<vmem>>, vector<1x1x8xf32>
    %86 = vector.shape_cast %85 : vector<1x1x8xf32> to vector<1x8xf32>
    %87 = vector.broadcast %86 : vector<1x8xf32> to vector<16x8xf32>
    %88 = arith.addf %84, %87 : vector<16x8xf32>
    %cst_87 = arith.constant 0.000000e+00 : f32
    %89 = vector.broadcast %cst_87 : f32 to vector<16x8xf32>
    %90 = arith.maximumf %88, %89 : vector<16x8xf32>
    %91 = arith.truncf %90 : vector<16x8xf32> to vector<16x8xbf16>
    %c0_88 = arith.constant 0 : index
    %c24 = arith.constant 24 : index
    %92 = vector.load %arg15[%c0_88, %c24] : memref<16x64xbf16, #tpu.memory_space<vmem>>, vector<16x8xbf16>
    tpu.vector_store %arg15[%c0_88, %c24], %91 {strides = array<i32>} : memref<16x64xbf16, #tpu.memory_space<vmem>>, vector<16x8xbf16>,
    %93 = vector.extract_strided_slice %6 {offsets = [0, 32], sizes = [16, 8], strides = [1, 1]} : vector<16x64xf32> to vector<16x8xf32>
    %94 = arith.addf %93, %90 : vector<16x8xf32>
    %c4_89 = arith.constant 4 : index
    %c0_90 = arith.constant 0 : index
    %95 = vector.load %arg13[%c4_89, %c0_90] : memref<24x8xf32, #tpu.memory_space<vmem>>, vector<16x8xf32>
    tpu.vector_store %arg13[%c4_89, %c0_90], %94 {strides = array<i32>} : memref<24x8xf32, #tpu.memory_space<vmem>>, vector<16x8xf32>,
    %c0_91 = arith.constant 0 : index
    %c0_92 = arith.constant 0 : index
    %96 = vector.load %arg13[%c0_91, %c0_92] : memref<24x8xf32, #tpu.memory_space<vmem>>, vector<16x8xf32>
    %97 = arith.truncf %96 : vector<16x8xf32> to vector<16x8xbf16>
    %c0_93 = arith.constant 0 : index
    %c0_94 = arith.constant 0 : index
    %98 = vector.load %arg14[%c0_93, %c0_94] : memref<16x24xbf16, #tpu.memory_space<vmem>>, vector<16x8xbf16>
    tpu.vector_store %arg14[%c0_93, %c0_94], %97 {strides = array<i32>} : memref<16x24xbf16, #tpu.memory_space<vmem>>, vector<16x8xbf16>,
    %c4_95 = arith.constant 4 : index
    %c0_96 = arith.constant 0 : index
    %99 = vector.load %arg13[%c4_95, %c0_96] : memref<24x8xf32, #tpu.memory_space<vmem>>, vector<16x8xf32>
    %100 = arith.truncf %99 : vector<16x8xf32> to vector<16x8xbf16>
    %c0_97 = arith.constant 0 : index
    %c8_98 = arith.constant 8 : index
    %101 = vector.load %arg14[%c0_97, %c8_98] : memref<16x24xbf16, #tpu.memory_space<vmem>>, vector<16x8xbf16>
    tpu.vector_store %arg14[%c0_97, %c8_98], %100 {strides = array<i32>} : memref<16x24xbf16, #tpu.memory_space<vmem>>, vector<16x8xbf16>,
    %c8_99 = arith.constant 8 : index
    %c0_100 = arith.constant 0 : index
    %102 = vector.load %arg13[%c8_99, %c0_100] : memref<24x8xf32, #tpu.memory_space<vmem>>, vector<16x8xf32>
    %103 = arith.truncf %102 : vector<16x8xf32> to vector<16x8xbf16>
    %c0_101 = arith.constant 0 : index
    %c16_102 = arith.constant 16 : index
    %104 = vector.load %arg14[%c0_101, %c16_102] : memref<16x24xbf16, #tpu.memory_space<vmem>>, vector<16x8xbf16>
    tpu.vector_store %arg14[%c0_101, %c16_102], %103 {strides = array<i32>} : memref<16x24xbf16, #tpu.memory_space<vmem>>, vector<16x8xbf16>,
    %c0_103 = arith.constant 0 : index
    %c0_104 = arith.constant 0 : index
    %105 = vector.load %arg14[%c0_103, %c0_104] : memref<16x24xbf16, #tpu.memory_space<vmem>>, vector<16x24xbf16>
    %c3 = arith.constant 3 : index
    %c0_105 = arith.constant 0 : index
    %c0_106 = arith.constant 0 : index
    %106 = vector.load %arg2[%c3, %c0_105, %c0_106] : memref<7x24x8xbf16, #tpu.memory_space<vmem>>, vector<1x24x8xbf16>
    %107 = vector.shape_cast %106 : vector<1x24x8xbf16> to vector<24x8xbf16>
    %cst_107 = arith.constant dense<0.000000e+00> : vector<16x8xf32>
    %108 = tpu.matmul %105, %107, %cst_107 {dimension_numbers = #tpu.dot_dimension_numbers<[1], [0], [0], [1], [0, 0, 1, 1], [], []>} : vector<16x24xbf16>, vector<24x8xbf16>, vector<16x8xf32> -> vector<16x8xf32>
    %c3_108 = arith.constant 3 : index
    %c0_109 = arith.constant 0 : index
    %c0_110 = arith.constant 0 : index
    %109 = vector.load %arg3[%c3_108, %c0_109, %c0_110] : memref<7x1x8xf32, #tpu.memory_space<vmem>>, vector<1x1x8xf32>
    %110 = vector.shape_cast %109 : vector<1x1x8xf32> to vector<1x8xf32>
    %111 = vector.broadcast %110 : vector<1x8xf32> to vector<16x8xf32>
    %112 = arith.mulf %108, %111 : vector<16x8xf32>
    %c3_111 = arith.constant 3 : index
    %c0_112 = arith.constant 0 : index
    %c0_113 = arith.constant 0 : index
    %113 = vector.load %arg4[%c3_111, %c0_112, %c0_113] : memref<7x1x8xf32, #tpu.memory_space<vmem>>, vector<1x1x8xf32>
    %114 = vector.shape_cast %113 : vector<1x1x8xf32> to vector<1x8xf32>
    %115 = vector.broadcast %114 : vector<1x8xf32> to vector<16x8xf32>
    %116 = arith.addf %112, %115 : vector<16x8xf32>
    %cst_114 = arith.constant 0.000000e+00 : f32
    %117 = vector.broadcast %cst_114 : f32 to vector<16x8xf32>
    %118 = arith.maximumf %116, %117 : vector<16x8xf32>
    %119 = arith.truncf %118 : vector<16x8xf32> to vector<16x8xbf16>
    %c0_115 = arith.constant 0 : index
    %c32 = arith.constant 32 : index
    %120 = vector.load %arg15[%c0_115, %c32] : memref<16x64xbf16, #tpu.memory_space<vmem>>, vector<16x8xbf16>
    tpu.vector_store %arg15[%c0_115, %c32], %119 {strides = array<i32>} : memref<16x64xbf16, #tpu.memory_space<vmem>>, vector<16x8xbf16>,
    %121 = vector.extract_strided_slice %6 {offsets = [0, 40], sizes = [16, 8], strides = [1, 1]} : vector<16x64xf32> to vector<16x8xf32>
    %122 = arith.addf %121, %118 : vector<16x8xf32>
    %c4_116 = arith.constant 4 : index
    %c0_117 = arith.constant 0 : index
    %123 = vector.load %arg13[%c4_116, %c0_117] : memref<24x8xf32, #tpu.memory_space<vmem>>, vector<16x8xf32>
    tpu.vector_store %arg13[%c4_116, %c0_117], %122 {strides = array<i32>} : memref<24x8xf32, #tpu.memory_space<vmem>>, vector<16x8xf32>,
    %c0_118 = arith.constant 0 : index
    %c0_119 = arith.constant 0 : index
    %124 = vector.load %arg13[%c0_118, %c0_119] : memref<24x8xf32, #tpu.memory_space<vmem>>, vector<16x8xf32>
    %125 = arith.truncf %124 : vector<16x8xf32> to vector<16x8xbf16>
    %c0_120 = arith.constant 0 : index
    %c0_121 = arith.constant 0 : index
    %126 = vector.load %arg14[%c0_120, %c0_121] : memref<16x24xbf16, #tpu.memory_space<vmem>>, vector<16x8xbf16>
    tpu.vector_store %arg14[%c0_120, %c0_121], %125 {strides = array<i32>} : memref<16x24xbf16, #tpu.memory_space<vmem>>, vector<16x8xbf16>,
    %c4_122 = arith.constant 4 : index
    %c0_123 = arith.constant 0 : index
    %127 = vector.load %arg13[%c4_122, %c0_123] : memref<24x8xf32, #tpu.memory_space<vmem>>, vector<16x8xf32>
    %128 = arith.truncf %127 : vector<16x8xf32> to vector<16x8xbf16>
    %c0_124 = arith.constant 0 : index
    %c8_125 = arith.constant 8 : index
    %129 = vector.load %arg14[%c0_124, %c8_125] : memref<16x24xbf16, #tpu.memory_space<vmem>>, vector<16x8xbf16>
    tpu.vector_store %arg14[%c0_124, %c8_125], %128 {strides = array<i32>} : memref<16x24xbf16, #tpu.memory_space<vmem>>, vector<16x8xbf16>,
    %c8_126 = arith.constant 8 : index
    %c0_127 = arith.constant 0 : index
    %130 = vector.load %arg13[%c8_126, %c0_127] : memref<24x8xf32, #tpu.memory_space<vmem>>, vector<16x8xf32>
    %131 = arith.truncf %130 : vector<16x8xf32> to vector<16x8xbf16>
    %c0_128 = arith.constant 0 : index
    %c16_129 = arith.constant 16 : index
    %132 = vector.load %arg14[%c0_128, %c16_129] : memref<16x24xbf16, #tpu.memory_space<vmem>>, vector<16x8xbf16>
    tpu.vector_store %arg14[%c0_128, %c16_129], %131 {strides = array<i32>} : memref<16x24xbf16, #tpu.memory_space<vmem>>, vector<16x8xbf16>,
    %c0_130 = arith.constant 0 : index
    %c0_131 = arith.constant 0 : index
    %133 = vector.load %arg14[%c0_130, %c0_131] : memref<16x24xbf16, #tpu.memory_space<vmem>>, vector<16x24xbf16>
    %c4_132 = arith.constant 4 : index
    %c0_133 = arith.constant 0 : index
    %c0_134 = arith.constant 0 : index
    %134 = vector.load %arg2[%c4_132, %c0_133, %c0_134] : memref<7x24x8xbf16, #tpu.memory_space<vmem>>, vector<1x24x8xbf16>
    %135 = vector.shape_cast %134 : vector<1x24x8xbf16> to vector<24x8xbf16>
    %cst_135 = arith.constant dense<0.000000e+00> : vector<16x8xf32>
    %136 = tpu.matmul %133, %135, %cst_135 {dimension_numbers = #tpu.dot_dimension_numbers<[1], [0], [0], [1], [0, 0, 1, 1], [], []>} : vector<16x24xbf16>, vector<24x8xbf16>, vector<16x8xf32> -> vector<16x8xf32>
    %c4_136 = arith.constant 4 : index
    %c0_137 = arith.constant 0 : index
    %c0_138 = arith.constant 0 : index
    %137 = vector.load %arg3[%c4_136, %c0_137, %c0_138] : memref<7x1x8xf32, #tpu.memory_space<vmem>>, vector<1x1x8xf32>
    %138 = vector.shape_cast %137 : vector<1x1x8xf32> to vector<1x8xf32>
    %139 = vector.broadcast %138 : vector<1x8xf32> to vector<16x8xf32>
    %140 = arith.mulf %136, %139 : vector<16x8xf32>
    %c4_139 = arith.constant 4 : index
    %c0_140 = arith.constant 0 : index
    %c0_141 = arith.constant 0 : index
    %141 = vector.load %arg4[%c4_139, %c0_140, %c0_141] : memref<7x1x8xf32, #tpu.memory_space<vmem>>, vector<1x1x8xf32>
    %142 = vector.shape_cast %141 : vector<1x1x8xf32> to vector<1x8xf32>
    %143 = vector.broadcast %142 : vector<1x8xf32> to vector<16x8xf32>
    %144 = arith.addf %140, %143 : vector<16x8xf32>
    %cst_142 = arith.constant 0.000000e+00 : f32
    %145 = vector.broadcast %cst_142 : f32 to vector<16x8xf32>
    %146 = arith.maximumf %144, %145 : vector<16x8xf32>
    %147 = arith.truncf %146 : vector<16x8xf32> to vector<16x8xbf16>
    %c0_143 = arith.constant 0 : index
    %c40 = arith.constant 40 : index
    %148 = vector.load %arg15[%c0_143, %c40] : memref<16x64xbf16, #tpu.memory_space<vmem>>, vector<16x8xbf16>
    tpu.vector_store %arg15[%c0_143, %c40], %147 {strides = array<i32>} : memref<16x64xbf16, #tpu.memory_space<vmem>>, vector<16x8xbf16>,
    %149 = vector.extract_strided_slice %6 {offsets = [0, 48], sizes = [16, 8], strides = [1, 1]} : vector<16x64xf32> to vector<16x8xf32>
    %150 = arith.addf %149, %146 : vector<16x8xf32>
    %c4_144 = arith.constant 4 : index
    %c0_145 = arith.constant 0 : index
    %151 = vector.load %arg13[%c4_144, %c0_145] : memref<24x8xf32, #tpu.memory_space<vmem>>, vector<16x8xf32>
    tpu.vector_store %arg13[%c4_144, %c0_145], %150 {strides = array<i32>} : memref<24x8xf32, #tpu.memory_space<vmem>>, vector<16x8xf32>,
    %c0_146 = arith.constant 0 : index
    %c0_147 = arith.constant 0 : index
    %152 = vector.load %arg13[%c0_146, %c0_147] : memref<24x8xf32, #tpu.memory_space<vmem>>, vector<16x8xf32>
    %153 = arith.truncf %152 : vector<16x8xf32> to vector<16x8xbf16>
    %c0_148 = arith.constant 0 : index
    %c0_149 = arith.constant 0 : index
    %154 = vector.load %arg14[%c0_148, %c0_149] : memref<16x24xbf16, #tpu.memory_space<vmem>>, vector<16x8xbf16>
    tpu.vector_store %arg14[%c0_148, %c0_149], %153 {strides = array<i32>} : memref<16x24xbf16, #tpu.memory_space<vmem>>, vector<16x8xbf16>,
    %c4_150 = arith.constant 4 : index
    %c0_151 = arith.constant 0 : index
    %155 = vector.load %arg13[%c4_150, %c0_151] : memref<24x8xf32, #tpu.memory_space<vmem>>, vector<16x8xf32>
    %156 = arith.truncf %155 : vector<16x8xf32> to vector<16x8xbf16>
    %c0_152 = arith.constant 0 : index
    %c8_153 = arith.constant 8 : index
    %157 = vector.load %arg14[%c0_152, %c8_153] : memref<16x24xbf16, #tpu.memory_space<vmem>>, vector<16x8xbf16>
    tpu.vector_store %arg14[%c0_152, %c8_153], %156 {strides = array<i32>} : memref<16x24xbf16, #tpu.memory_space<vmem>>, vector<16x8xbf16>,
    %c8_154 = arith.constant 8 : index
    %c0_155 = arith.constant 0 : index
    %158 = vector.load %arg13[%c8_154, %c0_155] : memref<24x8xf32, #tpu.memory_space<vmem>>, vector<16x8xf32>
    %159 = arith.truncf %158 : vector<16x8xf32> to vector<16x8xbf16>
    %c0_156 = arith.constant 0 : index
    %c16_157 = arith.constant 16 : index
    %160 = vector.load %arg14[%c0_156, %c16_157] : memref<16x24xbf16, #tpu.memory_space<vmem>>, vector<16x8xbf16>
    tpu.vector_store %arg14[%c0_156, %c16_157], %159 {strides = array<i32>} : memref<16x24xbf16, #tpu.memory_space<vmem>>, vector<16x8xbf16>,
    %c0_158 = arith.constant 0 : index
    %c0_159 = arith.constant 0 : index
    %161 = vector.load %arg14[%c0_158, %c0_159] : memref<16x24xbf16, #tpu.memory_space<vmem>>, vector<16x24xbf16>
    %c5 = arith.constant 5 : index
    %c0_160 = arith.constant 0 : index
    %c0_161 = arith.constant 0 : index
    %162 = vector.load %arg2[%c5, %c0_160, %c0_161] : memref<7x24x8xbf16, #tpu.memory_space<vmem>>, vector<1x24x8xbf16>
    %163 = vector.shape_cast %162 : vector<1x24x8xbf16> to vector<24x8xbf16>
    %cst_162 = arith.constant dense<0.000000e+00> : vector<16x8xf32>
    %164 = tpu.matmul %161, %163, %cst_162 {dimension_numbers = #tpu.dot_dimension_numbers<[1], [0], [0], [1], [0, 0, 1, 1], [], []>} : vector<16x24xbf16>, vector<24x8xbf16>, vector<16x8xf32> -> vector<16x8xf32>
    %c5_163 = arith.constant 5 : index
    %c0_164 = arith.constant 0 : index
    %c0_165 = arith.constant 0 : index
    %165 = vector.load %arg3[%c5_163, %c0_164, %c0_165] : memref<7x1x8xf32, #tpu.memory_space<vmem>>, vector<1x1x8xf32>
    %166 = vector.shape_cast %165 : vector<1x1x8xf32> to vector<1x8xf32>
    %167 = vector.broadcast %166 : vector<1x8xf32> to vector<16x8xf32>
    %168 = arith.mulf %164, %167 : vector<16x8xf32>
    %c5_166 = arith.constant 5 : index
    %c0_167 = arith.constant 0 : index
    %c0_168 = arith.constant 0 : index
    %169 = vector.load %arg4[%c5_166, %c0_167, %c0_168] : memref<7x1x8xf32, #tpu.memory_space<vmem>>, vector<1x1x8xf32>
    %170 = vector.shape_cast %169 : vector<1x1x8xf32> to vector<1x8xf32>
    %171 = vector.broadcast %170 : vector<1x8xf32> to vector<16x8xf32>
    %172 = arith.addf %168, %171 : vector<16x8xf32>
    %cst_169 = arith.constant 0.000000e+00 : f32
    %173 = vector.broadcast %cst_169 : f32 to vector<16x8xf32>
    %174 = arith.maximumf %172, %173 : vector<16x8xf32>
    %175 = arith.truncf %174 : vector<16x8xf32> to vector<16x8xbf16>
    %c0_170 = arith.constant 0 : index
    %c48 = arith.constant 48 : index
    %176 = vector.load %arg15[%c0_170, %c48] : memref<16x64xbf16, #tpu.memory_space<vmem>>, vector<16x8xbf16>
    tpu.vector_store %arg15[%c0_170, %c48], %175 {strides = array<i32>} : memref<16x64xbf16, #tpu.memory_space<vmem>>, vector<16x8xbf16>,
    %177 = vector.extract_strided_slice %6 {offsets = [0, 56], sizes = [16, 8], strides = [1, 1]} : vector<16x64xf32> to vector<16x8xf32>
    %178 = arith.addf %177, %174 : vector<16x8xf32>
    %c4_171 = arith.constant 4 : index
    %c0_172 = arith.constant 0 : index
    %179 = vector.load %arg13[%c4_171, %c0_172] : memref<24x8xf32, #tpu.memory_space<vmem>>, vector<16x8xf32>
    tpu.vector_store %arg13[%c4_171, %c0_172], %178 {strides = array<i32>} : memref<24x8xf32, #tpu.memory_space<vmem>>, vector<16x8xf32>,
    %c0_173 = arith.constant 0 : index
    %c0_174 = arith.constant 0 : index
    %180 = vector.load %arg13[%c0_173, %c0_174] : memref<24x8xf32, #tpu.memory_space<vmem>>, vector<16x8xf32>
    %181 = arith.truncf %180 : vector<16x8xf32> to vector<16x8xbf16>
    %c0_175 = arith.constant 0 : index
    %c0_176 = arith.constant 0 : index
    %182 = vector.load %arg14[%c0_175, %c0_176] : memref<16x24xbf16, #tpu.memory_space<vmem>>, vector<16x8xbf16>
    tpu.vector_store %arg14[%c0_175, %c0_176], %181 {strides = array<i32>} : memref<16x24xbf16, #tpu.memory_space<vmem>>, vector<16x8xbf16>,
    %c4_177 = arith.constant 4 : index
    %c0_178 = arith.constant 0 : index
    %183 = vector.load %arg13[%c4_177, %c0_178] : memref<24x8xf32, #tpu.memory_space<vmem>>, vector<16x8xf32>
    %184 = arith.truncf %183 : vector<16x8xf32> to vector<16x8xbf16>
    %c0_179 = arith.constant 0 : index
    %c8_180 = arith.constant 8 : index
    %185 = vector.load %arg14[%c0_179, %c8_180] : memref<16x24xbf16, #tpu.memory_space<vmem>>, vector<16x8xbf16>
    tpu.vector_store %arg14[%c0_179, %c8_180], %184 {strides = array<i32>} : memref<16x24xbf16, #tpu.memory_space<vmem>>, vector<16x8xbf16>,
    %c8_181 = arith.constant 8 : index
    %c0_182 = arith.constant 0 : index
    %186 = vector.load %arg13[%c8_181, %c0_182] : memref<24x8xf32, #tpu.memory_space<vmem>>, vector<16x8xf32>
    %187 = arith.truncf %186 : vector<16x8xf32> to vector<16x8xbf16>
    %c0_183 = arith.constant 0 : index
    %c16_184 = arith.constant 16 : index
    %188 = vector.load %arg14[%c0_183, %c16_184] : memref<16x24xbf16, #tpu.memory_space<vmem>>, vector<16x8xbf16>
    tpu.vector_store %arg14[%c0_183, %c16_184], %187 {strides = array<i32>} : memref<16x24xbf16, #tpu.memory_space<vmem>>, vector<16x8xbf16>,
    %c0_185 = arith.constant 0 : index
    %c0_186 = arith.constant 0 : index
    %189 = vector.load %arg14[%c0_185, %c0_186] : memref<16x24xbf16, #tpu.memory_space<vmem>>, vector<16x24xbf16>
    %c6 = arith.constant 6 : index
    %c0_187 = arith.constant 0 : index
    %c0_188 = arith.constant 0 : index
    %190 = vector.load %arg2[%c6, %c0_187, %c0_188] : memref<7x24x8xbf16, #tpu.memory_space<vmem>>, vector<1x24x8xbf16>
    %191 = vector.shape_cast %190 : vector<1x24x8xbf16> to vector<24x8xbf16>
    %cst_189 = arith.constant dense<0.000000e+00> : vector<16x8xf32>
    %192 = tpu.matmul %189, %191, %cst_189 {dimension_numbers = #tpu.dot_dimension_numbers<[1], [0], [0], [1], [0, 0, 1, 1], [], []>} : vector<16x24xbf16>, vector<24x8xbf16>, vector<16x8xf32> -> vector<16x8xf32>
    %c6_190 = arith.constant 6 : index
    %c0_191 = arith.constant 0 : index
    %c0_192 = arith.constant 0 : index
    %193 = vector.load %arg3[%c6_190, %c0_191, %c0_192] : memref<7x1x8xf32, #tpu.memory_space<vmem>>, vector<1x1x8xf32>
    %194 = vector.shape_cast %193 : vector<1x1x8xf32> to vector<1x8xf32>
    %195 = vector.broadcast %194 : vector<1x8xf32> to vector<16x8xf32>
    %196 = arith.mulf %192, %195 : vector<16x8xf32>
    %c6_193 = arith.constant 6 : index
    %c0_194 = arith.constant 0 : index
    %c0_195 = arith.constant 0 : index
    %197 = vector.load %arg4[%c6_193, %c0_194, %c0_195] : memref<7x1x8xf32, #tpu.memory_space<vmem>>, vector<1x1x8xf32>
    %198 = vector.shape_cast %197 : vector<1x1x8xf32> to vector<1x8xf32>
    %199 = vector.broadcast %198 : vector<1x8xf32> to vector<16x8xf32>
    %200 = arith.addf %196, %199 : vector<16x8xf32>
    %cst_196 = arith.constant 0.000000e+00 : f32
    %201 = vector.broadcast %cst_196 : f32 to vector<16x8xf32>
    %202 = arith.maximumf %200, %201 : vector<16x8xf32>
    %203 = arith.truncf %202 : vector<16x8xf32> to vector<16x8xbf16>
    %c0_197 = arith.constant 0 : index
    %c56 = arith.constant 56 : index
    %204 = vector.load %arg15[%c0_197, %c56] : memref<16x64xbf16, #tpu.memory_space<vmem>>, vector<16x8xbf16>
    tpu.vector_store %arg15[%c0_197, %c56], %203 {strides = array<i32>} : memref<16x64xbf16, #tpu.memory_space<vmem>>, vector<16x8xbf16>,
    %c0_198 = arith.constant 0 : index
    %c0_199 = arith.constant 0 : index
    %205 = vector.load %arg15[%c0_198, %c0_199] : memref<16x64xbf16, #tpu.memory_space<vmem>>, vector<16x64xbf16>
    %206 = arith.extf %205 : vector<16x64xbf16> to vector<16x64xf32>
    %cst_200 = arith.constant dense<0.000000e+00> : vector<64xf32>
    %207 = vector.multi_reduction <add>, %206, %cst_200 [0] : vector<16x64xf32> to vector<64xf32>
    %208 = vector.shape_cast %207 : vector<64xf32> to vector<1x64xf32>
    %cst_201 = arith.constant 1.600000e+01 : f32
    %209 = vector.broadcast %cst_201 : f32 to vector<1x64xf32>
    %210 = arith.divf %208, %209 : vector<1x64xf32>
    %211 = arith.truncf %210 : vector<1x64xf32> to vector<1x64xbf16>
    %c0_202 = arith.constant 0 : index
    %c0_203 = arith.constant 0 : index
    %212 = vector.load %arg5[%c0_202, %c0_203] : memref<64x32xbf16, #tpu.memory_space<vmem>>, vector<64x32xbf16>
    %cst_204 = arith.constant dense<0.000000e+00> : vector<1x32xf32>
    %213 = tpu.matmul %211, %212, %cst_204 {dimension_numbers = #tpu.dot_dimension_numbers<[1], [0], [0], [1], [0, 0, 1, 1], [], []>} : vector<1x64xbf16>, vector<64x32xbf16>, vector<1x32xf32> -> vector<1x32xf32>
    %c0_205 = arith.constant 0 : index
    %c0_206 = arith.constant 0 : index
    %214 = vector.load %arg6[%c0_205, %c0_206] : memref<1x32xf32, #tpu.memory_space<vmem>>, vector<1x32xf32>
    %215 = arith.addf %213, %214 : vector<1x32xf32>
    %cst_207 = arith.constant 0.000000e+00 : f32
    %216 = vector.broadcast %cst_207 : f32 to vector<1x32xf32>
    %217 = arith.maximumf %215, %216 : vector<1x32xf32>
    %218 = arith.truncf %217 : vector<1x32xf32> to vector<1x32xbf16>
    %c0_208 = arith.constant 0 : index
    %c0_209 = arith.constant 0 : index
    %219 = vector.load %arg7[%c0_208, %c0_209] : memref<32x64xbf16, #tpu.memory_space<vmem>>, vector<32x64xbf16>
    %cst_210 = arith.constant dense<0.000000e+00> : vector<1x64xf32>
    %220 = tpu.matmul %218, %219, %cst_210 {dimension_numbers = #tpu.dot_dimension_numbers<[1], [0], [0], [1], [0, 0, 1, 1], [], []>} : vector<1x32xbf16>, vector<32x64xbf16>, vector<1x64xf32> -> vector<1x64xf32>
    %c0_211 = arith.constant 0 : index
    %c0_212 = arith.constant 0 : index
    %221 = vector.load %arg8[%c0_211, %c0_212] : memref<1x64xf32, #tpu.memory_space<vmem>>, vector<1x64xf32>
    %222 = arith.addf %220, %221 : vector<1x64xf32>
    %223 = arith.negf %222 : vector<1x64xf32>
    %224 = math.exp %223 : vector<1x64xf32>
    %cst_213 = arith.constant 1.000000e+00 : f32
    %225 = vector.broadcast %cst_213 : f32 to vector<1x64xf32>
    %226 = arith.addf %225, %224 : vector<1x64xf32>
    %227 = arith.divf %225, %226 : vector<1x64xf32>
    %228 = arith.extf %205 : vector<16x64xbf16> to vector<16x64xf32>
    %229 = vector.broadcast %227 : vector<1x64xf32> to vector<16x64xf32>
    %230 = arith.mulf %228, %229 : vector<16x64xf32>
    %231 = arith.truncf %230 : vector<16x64xf32> to vector<16x64xbf16>
    %c0_214 = arith.constant 0 : index
    %c0_215 = arith.constant 0 : index
    %232 = vector.load %arg9[%c0_214, %c0_215] : memref<64x64xbf16, #tpu.memory_space<vmem>>, vector<64x64xbf16>
    %cst_216 = arith.constant dense<0.000000e+00> : vector<16x64xf32>
    %233 = tpu.matmul %231, %232, %cst_216 {dimension_numbers = #tpu.dot_dimension_numbers<[1], [0], [0], [1], [0, 0, 1, 1], [], []>} : vector<16x64xbf16>, vector<64x64xbf16>, vector<16x64xf32> -> vector<16x64xf32>
    %c0_217 = arith.constant 0 : index
    %c0_218 = arith.constant 0 : index
    %234 = vector.load %arg10[%c0_217, %c0_218] : memref<1x64xf32, #tpu.memory_space<vmem>>, vector<1x64xf32>
    %235 = vector.broadcast %234 : vector<1x64xf32> to vector<16x64xf32>
    %236 = arith.mulf %233, %235 : vector<16x64xf32>
    %c0_219 = arith.constant 0 : index
    %c0_220 = arith.constant 0 : index
    %237 = vector.load %arg11[%c0_219, %c0_220] : memref<1x64xf32, #tpu.memory_space<vmem>>, vector<1x64xf32>
    %238 = vector.broadcast %237 : vector<1x64xf32> to vector<16x64xf32>
    %239 = arith.addf %236, %238 : vector<16x64xf32>
    %cst_221 = arith.constant 0.000000e+00 : f32
    %240 = vector.broadcast %cst_221 : f32 to vector<16x64xf32>
    %241 = arith.maximumf %239, %240 : vector<16x64xf32>
    %242 = vector.shape_cast %241 : vector<16x64xf32> to vector<1x16x64xf32>
    %243 = arith.truncf %242 : vector<1x16x64xf32> to vector<1x16x64xbf16>
    %c0_222 = arith.constant 0 : index
    %c0_223 = arith.constant 0 : index
    %c0_224 = arith.constant 0 : index
    %244 = vector.load %arg12[%c0_222, %c0_223, %c0_224] : memref<1x16x64xbf16, #tpu.memory_space<vmem>>, vector<1x16x64xbf16>
    tpu.vector_store %arg12[%c0_222, %c0_223, %c0_224], %243 {strides = array<i32>} : memref<1x16x64xbf16, #tpu.memory_space<vmem>>, vector<1x16x64xbf16>,
    return
  }
  func.func @transform_0(%arg0: i32) -> (i32, i32, i32) {
    %c0_i32 = arith.constant 0 : i32
    %c0_i32_0 = arith.constant 0 : i32
    %c0_i32_1 = arith.constant 0 : i32
    return %arg0, %c0_i32, %c0_i32_0 : i32, i32, i32
  }
  func.func @transform_1(%arg0: i32) -> (i32, i32, i32) {
    %c0_i32 = arith.constant 0 : i32
    %c0_i32_0 = arith.constant 0 : i32
    %c0_i32_1 = arith.constant 0 : i32
    %c0_i32_2 = arith.constant 0 : i32
    return %c0_i32, %c0_i32_0, %c0_i32_1 : i32, i32, i32
  }
  func.func @transform_2(%arg0: i32) -> (i32, i32, i32) {
    %c0_i32 = arith.constant 0 : i32
    %c0_i32_0 = arith.constant 0 : i32
    %c0_i32_1 = arith.constant 0 : i32
    %c0_i32_2 = arith.constant 0 : i32
    return %c0_i32, %c0_i32_0, %c0_i32_1 : i32, i32, i32
  }
  func.func @transform_3(%arg0: i32) -> (i32, i32, i32) {
    %c0_i32 = arith.constant 0 : i32
    %c0_i32_0 = arith.constant 0 : i32
    %c0_i32_1 = arith.constant 0 : i32
    %c0_i32_2 = arith.constant 0 : i32
    return %c0_i32, %c0_i32_0, %c0_i32_1 : i32, i32, i32
  }
  func.func @transform_4(%arg0: i32) -> (i32, i32) {
    %c0_i32 = arith.constant 0 : i32
    %c0_i32_0 = arith.constant 0 : i32
    %c0_i32_1 = arith.constant 0 : i32
    return %c0_i32, %c0_i32_0 : i32, i32
  }
  func.func @transform_5(%arg0: i32) -> (i32, i32) {
    %c0_i32 = arith.constant 0 : i32
    %c0_i32_0 = arith.constant 0 : i32
    %c0_i32_1 = arith.constant 0 : i32
    return %c0_i32, %c0_i32_0 : i32, i32
  }
  func.func @transform_6(%arg0: i32) -> (i32, i32) {
    %c0_i32 = arith.constant 0 : i32
    %c0_i32_0 = arith.constant 0 : i32
    %c0_i32_1 = arith.constant 0 : i32
    return %c0_i32, %c0_i32_0 : i32, i32
  }
  func.func @transform_7(%arg0: i32) -> (i32, i32) {
    %c0_i32 = arith.constant 0 : i32
    %c0_i32_0 = arith.constant 0 : i32
    %c0_i32_1 = arith.constant 0 : i32
    return %c0_i32, %c0_i32_0 : i32, i32
  }
  func.func @transform_8(%arg0: i32) -> (i32, i32) {
    %c0_i32 = arith.constant 0 : i32
    %c0_i32_0 = arith.constant 0 : i32
    %c0_i32_1 = arith.constant 0 : i32
    return %c0_i32, %c0_i32_0 : i32, i32
  }
  func.func @transform_9(%arg0: i32) -> (i32, i32) {
    %c0_i32 = arith.constant 0 : i32
    %c0_i32_0 = arith.constant 0 : i32
    %c0_i32_1 = arith.constant 0 : i32
    return %c0_i32, %c0_i32_0 : i32, i32
  }
  func.func @transform_10(%arg0: i32) -> (i32, i32) {
    %c0_i32 = arith.constant 0 : i32
    %c0_i32_0 = arith.constant 0 : i32
    %c0_i32_1 = arith.constant 0 : i32
    return %c0_i32, %c0_i32_0 : i32, i32
  }
  func.func @transform_11(%arg0: i32) -> (i32, i32, i32) {
    %c0_i32 = arith.constant 0 : i32
    %c0_i32_0 = arith.constant 0 : i32
    %c0_i32_1 = arith.constant 0 : i32
    return %arg0, %c0_i32, %c0_i32_0 : i32, i32, i32
  }
}

module attributes {stable_mosaic.version = 11 : i64} {
  func.func @kernel(%arg0: i32, %arg1: memref<1x16x64xbf16, #tpu.memory_space<vmem>>, %arg2: memref<7x24x8xbf16, #tpu.memory_space<vmem>>, %arg3: memref<7x1x8xf32, #tpu.memory_space<vmem>>, %arg4: memref<7x1x8xf32, #tpu.memory_space<vmem>>, %arg5: memref<64x32xbf16, #tpu.memory_space<vmem>>, %arg6: memref<1x32xf32, #tpu.memory_space<vmem>>, %arg7: memref<32x64xbf16, #tpu.memory_space<vmem>>, %arg8: memref<1x64xf32, #tpu.memory_space<vmem>>, %arg9: memref<64x64xbf16, #tpu.memory_space<vmem>>, %arg10: memref<1x64xf32, #tpu.memory_space<vmem>>, %arg11: memref<1x64xf32, #tpu.memory_space<vmem>>, %arg12: memref<1x16x64xbf16, #tpu.memory_space<vmem>>, %arg13: memref<1x16x64xbf16, #tpu.memory_space<vmem>>, %arg14: memref<20x8xf32, #tpu.memory_space<vmem>>, %arg15: memref<16x24xbf16, #tpu.memory_space<vmem>>, %arg16: memref<16x64xbf16, #tpu.memory_space<vmem>>) attributes {dimension_semantics = [#tpu.dimension_semantics<parallel>], iteration_bounds = array<i64: 2>, scalar_prefetch = 0 : i64, scratch_operands = 3 : i64, tpu.core_type = #tpu.core_type<tc>, window_params = [{transform_indices = @transform_0, window_bounds = array<i64: 1, 16, 64>}, {pipeline_mode = #tpu.pipeline_mode<synchronous>, transform_indices = @transform_1, window_bounds = array<i64: 7, 24, 8>}, {pipeline_mode = #tpu.pipeline_mode<synchronous>, transform_indices = @transform_2, window_bounds = array<i64: 7, 1, 8>}, {pipeline_mode = #tpu.pipeline_mode<synchronous>, transform_indices = @transform_3, window_bounds = array<i64: 7, 1, 8>}, {pipeline_mode = #tpu.pipeline_mode<synchronous>, transform_indices = @transform_4, window_bounds = array<i64: 64, 32>}, {pipeline_mode = #tpu.pipeline_mode<synchronous>, transform_indices = @transform_5, window_bounds = array<i64: 1, 32>}, {pipeline_mode = #tpu.pipeline_mode<synchronous>, transform_indices = @transform_6, window_bounds = array<i64: 32, 64>}, {pipeline_mode = #tpu.pipeline_mode<synchronous>, transform_indices = @transform_7, window_bounds = array<i64: 1, 64>}, {pipeline_mode = #tpu.pipeline_mode<synchronous>, transform_indices = @transform_8, window_bounds = array<i64: 64, 64>}, {pipeline_mode = #tpu.pipeline_mode<synchronous>, transform_indices = @transform_9, window_bounds = array<i64: 1, 64>}, {pipeline_mode = #tpu.pipeline_mode<synchronous>, transform_indices = @transform_10, window_bounds = array<i64: 1, 64>}, {transform_indices = @transform_11, window_bounds = array<i64: 1, 16, 64>}, {transform_indices = @transform_12, window_bounds = array<i64: 1, 16, 64>}]} {
    %cst = arith.constant 0.000000e+00 : f32
    %0 = vector.broadcast %cst : f32 to vector<2x8xf32>
    %c0 = arith.constant 0 : index
    %c0_0 = arith.constant 0 : index
    %1 = vector.load %arg14[%c0, %c0_0] : memref<20x8xf32, #tpu.memory_space<vmem>>, vector<2x8xf32>
    tpu.vector_store %arg14[%c0, %c0_0], %0 {strides = array<i32>} : memref<20x8xf32, #tpu.memory_space<vmem>>, vector<2x8xf32>,
    %cst_1 = arith.constant 0.000000e+00 : f32
    %2 = vector.broadcast %cst_1 : f32 to vector<2x8xf32>
    %c18 = arith.constant 18 : index
    %c0_2 = arith.constant 0 : index
    %3 = vector.load %arg14[%c18, %c0_2] : memref<20x8xf32, #tpu.memory_space<vmem>>, vector<2x8xf32>
    tpu.vector_store %arg14[%c18, %c0_2], %2 {strides = array<i32>} : memref<20x8xf32, #tpu.memory_space<vmem>>, vector<2x8xf32>,
    %c0_3 = arith.constant 0 : index
    %c0_4 = arith.constant 0 : index
    %c0_5 = arith.constant 0 : index
    %4 = vector.load %arg1[%c0_3, %c0_4, %c0_5] : memref<1x16x64xbf16, #tpu.memory_space<vmem>>, vector<1x16x64xbf16>
    %5 = vector.shape_cast %4 : vector<1x16x64xbf16> to vector<16x64xbf16>
    %6 = arith.extf %5 : vector<16x64xbf16> to vector<16x64xf32>
    %7 = vector.extract_strided_slice %6 {offsets = [0, 0], sizes = [16, 8], strides = [1, 1]} : vector<16x64xf32> to vector<16x8xf32>
    %8 = arith.truncf %7 : vector<16x8xf32> to vector<16x8xbf16>
    %c0_6 = arith.constant 0 : index
    %c0_7 = arith.constant 0 : index
    %9 = vector.load %arg16[%c0_6, %c0_7] : memref<16x64xbf16, #tpu.memory_space<vmem>>, vector<16x8xbf16>
    tpu.vector_store %arg16[%c0_6, %c0_7], %8 {strides = array<i32>} : memref<16x64xbf16, #tpu.memory_space<vmem>>, vector<16x8xbf16>,
    %10 = vector.extract_strided_slice %6 {offsets = [0, 8], sizes = [16, 8], strides = [1, 1]} : vector<16x64xf32> to vector<16x8xf32>
    %c2 = arith.constant 2 : index
    %c0_8 = arith.constant 0 : index
    %11 = vector.load %arg14[%c2, %c0_8] : memref<20x8xf32, #tpu.memory_space<vmem>>, vector<16x8xf32>
    tpu.vector_store %arg14[%c2, %c0_8], %10 {strides = array<i32>} : memref<20x8xf32, #tpu.memory_space<vmem>>, vector<16x8xf32>,
    %c0_9 = arith.constant 0 : index
    %c0_10 = arith.constant 0 : index
    %12 = vector.load %arg14[%c0_9, %c0_10] : memref<20x8xf32, #tpu.memory_space<vmem>>, vector<16x8xf32>
    %13 = arith.truncf %12 : vector<16x8xf32> to vector<16x8xbf16>
    %c0_11 = arith.constant 0 : index
    %c0_12 = arith.constant 0 : index
    %14 = vector.load %arg15[%c0_11, %c0_12] : memref<16x24xbf16, #tpu.memory_space<vmem>>, vector<16x8xbf16>
    tpu.vector_store %arg15[%c0_11, %c0_12], %13 {strides = array<i32>} : memref<16x24xbf16, #tpu.memory_space<vmem>>, vector<16x8xbf16>,
    %c2_13 = arith.constant 2 : index
    %c0_14 = arith.constant 0 : index
    %15 = vector.load %arg14[%c2_13, %c0_14] : memref<20x8xf32, #tpu.memory_space<vmem>>, vector<16x8xf32>
    %16 = arith.truncf %15 : vector<16x8xf32> to vector<16x8xbf16>
    %c0_15 = arith.constant 0 : index
    %c8 = arith.constant 8 : index
    %17 = vector.load %arg15[%c0_15, %c8] : memref<16x24xbf16, #tpu.memory_space<vmem>>, vector<16x8xbf16>
    tpu.vector_store %arg15[%c0_15, %c8], %16 {strides = array<i32>} : memref<16x24xbf16, #tpu.memory_space<vmem>>, vector<16x8xbf16>,
    %c4 = arith.constant 4 : index
    %c0_16 = arith.constant 0 : index
    %18 = vector.load %arg14[%c4, %c0_16] : memref<20x8xf32, #tpu.memory_space<vmem>>, vector<16x8xf32>
    %19 = arith.truncf %18 : vector<16x8xf32> to vector<16x8xbf16>
    %c0_17 = arith.constant 0 : index
    %c16 = arith.constant 16 : index
    %20 = vector.load %arg15[%c0_17, %c16] : memref<16x24xbf16, #tpu.memory_space<vmem>>, vector<16x8xbf16>
    tpu.vector_store %arg15[%c0_17, %c16], %19 {strides = array<i32>} : memref<16x24xbf16, #tpu.memory_space<vmem>>, vector<16x8xbf16>,
    %c0_18 = arith.constant 0 : index
    %c0_19 = arith.constant 0 : index
    %21 = vector.load %arg15[%c0_18, %c0_19] : memref<16x24xbf16, #tpu.memory_space<vmem>>, vector<16x24xbf16>
    %c0_20 = arith.constant 0 : index
    %c0_21 = arith.constant 0 : index
    %c0_22 = arith.constant 0 : index
    %22 = vector.load %arg2[%c0_20, %c0_21, %c0_22] : memref<7x24x8xbf16, #tpu.memory_space<vmem>>, vector<1x24x8xbf16>
    %23 = vector.shape_cast %22 : vector<1x24x8xbf16> to vector<24x8xbf16>
    %cst_23 = arith.constant dense<0.000000e+00> : vector<16x8xf32>
    %24 = tpu.matmul %21, %23, %cst_23 {dimension_numbers = #tpu.dot_dimension_numbers<[1], [0], [0], [1], [0, 0, 1, 1], [], []>} : vector<16x24xbf16>, vector<24x8xbf16>, vector<16x8xf32> -> vector<16x8xf32>
    %c0_24 = arith.constant 0 : index
    %c0_25 = arith.constant 0 : index
    %c0_26 = arith.constant 0 : index
    %25 = vector.load %arg3[%c0_24, %c0_25, %c0_26] : memref<7x1x8xf32, #tpu.memory_space<vmem>>, vector<1x1x8xf32>
    %26 = vector.shape_cast %25 : vector<1x1x8xf32> to vector<1x8xf32>
    %27 = vector.broadcast %26 : vector<1x8xf32> to vector<16x8xf32>
    %28 = arith.mulf %24, %27 : vector<16x8xf32>
    %c0_27 = arith.constant 0 : index
    %c0_28 = arith.constant 0 : index
    %c0_29 = arith.constant 0 : index
    %29 = vector.load %arg4[%c0_27, %c0_28, %c0_29] : memref<7x1x8xf32, #tpu.memory_space<vmem>>, vector<1x1x8xf32>
    %30 = vector.shape_cast %29 : vector<1x1x8xf32> to vector<1x8xf32>
    %31 = vector.broadcast %30 : vector<1x8xf32> to vector<16x8xf32>
    %32 = arith.addf %28, %31 : vector<16x8xf32>
    %cst_30 = arith.constant 0.000000e+00 : f32
    %33 = vector.broadcast %cst_30 : f32 to vector<16x8xf32>
    %34 = arith.maximumf %32, %33 : vector<16x8xf32>
    %35 = arith.truncf %34 : vector<16x8xf32> to vector<16x8xbf16>
    %c0_31 = arith.constant 0 : index
    %c8_32 = arith.constant 8 : index
    %36 = vector.load %arg16[%c0_31, %c8_32] : memref<16x64xbf16, #tpu.memory_space<vmem>>, vector<16x8xbf16>
    tpu.vector_store %arg16[%c0_31, %c8_32], %35 {strides = array<i32>} : memref<16x64xbf16, #tpu.memory_space<vmem>>, vector<16x8xbf16>,
    %37 = vector.extract_strided_slice %6 {offsets = [0, 16], sizes = [16, 8], strides = [1, 1]} : vector<16x64xf32> to vector<16x8xf32>
    %38 = arith.addf %37, %34 : vector<16x8xf32>
    %c2_33 = arith.constant 2 : index
    %c0_34 = arith.constant 0 : index
    %39 = vector.load %arg14[%c2_33, %c0_34] : memref<20x8xf32, #tpu.memory_space<vmem>>, vector<16x8xf32>
    tpu.vector_store %arg14[%c2_33, %c0_34], %38 {strides = array<i32>} : memref<20x8xf32, #tpu.memory_space<vmem>>, vector<16x8xf32>,
    %c0_35 = arith.constant 0 : index
    %c0_36 = arith.constant 0 : index
    %40 = vector.load %arg14[%c0_35, %c0_36] : memref<20x8xf32, #tpu.memory_space<vmem>>, vector<16x8xf32>
    %41 = arith.truncf %40 : vector<16x8xf32> to vector<16x8xbf16>
    %c0_37 = arith.constant 0 : index
    %c0_38 = arith.constant 0 : index
    %42 = vector.load %arg15[%c0_37, %c0_38] : memref<16x24xbf16, #tpu.memory_space<vmem>>, vector<16x8xbf16>
    tpu.vector_store %arg15[%c0_37, %c0_38], %41 {strides = array<i32>} : memref<16x24xbf16, #tpu.memory_space<vmem>>, vector<16x8xbf16>,
    %c2_39 = arith.constant 2 : index
    %c0_40 = arith.constant 0 : index
    %43 = vector.load %arg14[%c2_39, %c0_40] : memref<20x8xf32, #tpu.memory_space<vmem>>, vector<16x8xf32>
    %44 = arith.truncf %43 : vector<16x8xf32> to vector<16x8xbf16>
    %c0_41 = arith.constant 0 : index
    %c8_42 = arith.constant 8 : index
    %45 = vector.load %arg15[%c0_41, %c8_42] : memref<16x24xbf16, #tpu.memory_space<vmem>>, vector<16x8xbf16>
    tpu.vector_store %arg15[%c0_41, %c8_42], %44 {strides = array<i32>} : memref<16x24xbf16, #tpu.memory_space<vmem>>, vector<16x8xbf16>,
    %c4_43 = arith.constant 4 : index
    %c0_44 = arith.constant 0 : index
    %46 = vector.load %arg14[%c4_43, %c0_44] : memref<20x8xf32, #tpu.memory_space<vmem>>, vector<16x8xf32>
    %47 = arith.truncf %46 : vector<16x8xf32> to vector<16x8xbf16>
    %c0_45 = arith.constant 0 : index
    %c16_46 = arith.constant 16 : index
    %48 = vector.load %arg15[%c0_45, %c16_46] : memref<16x24xbf16, #tpu.memory_space<vmem>>, vector<16x8xbf16>
    tpu.vector_store %arg15[%c0_45, %c16_46], %47 {strides = array<i32>} : memref<16x24xbf16, #tpu.memory_space<vmem>>, vector<16x8xbf16>,
    %c0_47 = arith.constant 0 : index
    %c0_48 = arith.constant 0 : index
    %49 = vector.load %arg15[%c0_47, %c0_48] : memref<16x24xbf16, #tpu.memory_space<vmem>>, vector<16x24xbf16>
    %c1 = arith.constant 1 : index
    %c0_49 = arith.constant 0 : index
    %c0_50 = arith.constant 0 : index
    %50 = vector.load %arg2[%c1, %c0_49, %c0_50] : memref<7x24x8xbf16, #tpu.memory_space<vmem>>, vector<1x24x8xbf16>
    %51 = vector.shape_cast %50 : vector<1x24x8xbf16> to vector<24x8xbf16>
    %cst_51 = arith.constant dense<0.000000e+00> : vector<16x8xf32>
    %52 = tpu.matmul %49, %51, %cst_51 {dimension_numbers = #tpu.dot_dimension_numbers<[1], [0], [0], [1], [0, 0, 1, 1], [], []>} : vector<16x24xbf16>, vector<24x8xbf16>, vector<16x8xf32> -> vector<16x8xf32>
    %c1_52 = arith.constant 1 : index
    %c0_53 = arith.constant 0 : index
    %c0_54 = arith.constant 0 : index
    %53 = vector.load %arg3[%c1_52, %c0_53, %c0_54] : memref<7x1x8xf32, #tpu.memory_space<vmem>>, vector<1x1x8xf32>
    %54 = vector.shape_cast %53 : vector<1x1x8xf32> to vector<1x8xf32>
    %55 = vector.broadcast %54 : vector<1x8xf32> to vector<16x8xf32>
    %56 = arith.mulf %52, %55 : vector<16x8xf32>
    %c1_55 = arith.constant 1 : index
    %c0_56 = arith.constant 0 : index
    %c0_57 = arith.constant 0 : index
    %57 = vector.load %arg4[%c1_55, %c0_56, %c0_57] : memref<7x1x8xf32, #tpu.memory_space<vmem>>, vector<1x1x8xf32>
    %58 = vector.shape_cast %57 : vector<1x1x8xf32> to vector<1x8xf32>
    %59 = vector.broadcast %58 : vector<1x8xf32> to vector<16x8xf32>
    %60 = arith.addf %56, %59 : vector<16x8xf32>
    %cst_58 = arith.constant 0.000000e+00 : f32
    %61 = vector.broadcast %cst_58 : f32 to vector<16x8xf32>
    %62 = arith.maximumf %60, %61 : vector<16x8xf32>
    %63 = arith.truncf %62 : vector<16x8xf32> to vector<16x8xbf16>
    %c0_59 = arith.constant 0 : index
    %c16_60 = arith.constant 16 : index
    %64 = vector.load %arg16[%c0_59, %c16_60] : memref<16x64xbf16, #tpu.memory_space<vmem>>, vector<16x8xbf16>
    tpu.vector_store %arg16[%c0_59, %c16_60], %63 {strides = array<i32>} : memref<16x64xbf16, #tpu.memory_space<vmem>>, vector<16x8xbf16>,
    %65 = vector.extract_strided_slice %6 {offsets = [0, 24], sizes = [16, 8], strides = [1, 1]} : vector<16x64xf32> to vector<16x8xf32>
    %66 = arith.addf %65, %62 : vector<16x8xf32>
    %c2_61 = arith.constant 2 : index
    %c0_62 = arith.constant 0 : index
    %67 = vector.load %arg14[%c2_61, %c0_62] : memref<20x8xf32, #tpu.memory_space<vmem>>, vector<16x8xf32>
    tpu.vector_store %arg14[%c2_61, %c0_62], %66 {strides = array<i32>} : memref<20x8xf32, #tpu.memory_space<vmem>>, vector<16x8xf32>,
    %c0_63 = arith.constant 0 : index
    %c0_64 = arith.constant 0 : index
    %68 = vector.load %arg14[%c0_63, %c0_64] : memref<20x8xf32, #tpu.memory_space<vmem>>, vector<16x8xf32>
    %69 = arith.truncf %68 : vector<16x8xf32> to vector<16x8xbf16>
    %c0_65 = arith.constant 0 : index
    %c0_66 = arith.constant 0 : index
    %70 = vector.load %arg15[%c0_65, %c0_66] : memref<16x24xbf16, #tpu.memory_space<vmem>>, vector<16x8xbf16>
    tpu.vector_store %arg15[%c0_65, %c0_66], %69 {strides = array<i32>} : memref<16x24xbf16, #tpu.memory_space<vmem>>, vector<16x8xbf16>,
    %c2_67 = arith.constant 2 : index
    %c0_68 = arith.constant 0 : index
    %71 = vector.load %arg14[%c2_67, %c0_68] : memref<20x8xf32, #tpu.memory_space<vmem>>, vector<16x8xf32>
    %72 = arith.truncf %71 : vector<16x8xf32> to vector<16x8xbf16>
    %c0_69 = arith.constant 0 : index
    %c8_70 = arith.constant 8 : index
    %73 = vector.load %arg15[%c0_69, %c8_70] : memref<16x24xbf16, #tpu.memory_space<vmem>>, vector<16x8xbf16>
    tpu.vector_store %arg15[%c0_69, %c8_70], %72 {strides = array<i32>} : memref<16x24xbf16, #tpu.memory_space<vmem>>, vector<16x8xbf16>,
    %c4_71 = arith.constant 4 : index
    %c0_72 = arith.constant 0 : index
    %74 = vector.load %arg14[%c4_71, %c0_72] : memref<20x8xf32, #tpu.memory_space<vmem>>, vector<16x8xf32>
    %75 = arith.truncf %74 : vector<16x8xf32> to vector<16x8xbf16>
    %c0_73 = arith.constant 0 : index
    %c16_74 = arith.constant 16 : index
    %76 = vector.load %arg15[%c0_73, %c16_74] : memref<16x24xbf16, #tpu.memory_space<vmem>>, vector<16x8xbf16>
    tpu.vector_store %arg15[%c0_73, %c16_74], %75 {strides = array<i32>} : memref<16x24xbf16, #tpu.memory_space<vmem>>, vector<16x8xbf16>,
    %c0_75 = arith.constant 0 : index
    %c0_76 = arith.constant 0 : index
    %77 = vector.load %arg15[%c0_75, %c0_76] : memref<16x24xbf16, #tpu.memory_space<vmem>>, vector<16x24xbf16>
    %c2_77 = arith.constant 2 : index
    %c0_78 = arith.constant 0 : index
    %c0_79 = arith.constant 0 : index
    %78 = vector.load %arg2[%c2_77, %c0_78, %c0_79] : memref<7x24x8xbf16, #tpu.memory_space<vmem>>, vector<1x24x8xbf16>
    %79 = vector.shape_cast %78 : vector<1x24x8xbf16> to vector<24x8xbf16>
    %cst_80 = arith.constant dense<0.000000e+00> : vector<16x8xf32>
    %80 = tpu.matmul %77, %79, %cst_80 {dimension_numbers = #tpu.dot_dimension_numbers<[1], [0], [0], [1], [0, 0, 1, 1], [], []>} : vector<16x24xbf16>, vector<24x8xbf16>, vector<16x8xf32> -> vector<16x8xf32>
    %c2_81 = arith.constant 2 : index
    %c0_82 = arith.constant 0 : index
    %c0_83 = arith.constant 0 : index
    %81 = vector.load %arg3[%c2_81, %c0_82, %c0_83] : memref<7x1x8xf32, #tpu.memory_space<vmem>>, vector<1x1x8xf32>
    %82 = vector.shape_cast %81 : vector<1x1x8xf32> to vector<1x8xf32>
    %83 = vector.broadcast %82 : vector<1x8xf32> to vector<16x8xf32>
    %84 = arith.mulf %80, %83 : vector<16x8xf32>
    %c2_84 = arith.constant 2 : index
    %c0_85 = arith.constant 0 : index
    %c0_86 = arith.constant 0 : index
    %85 = vector.load %arg4[%c2_84, %c0_85, %c0_86] : memref<7x1x8xf32, #tpu.memory_space<vmem>>, vector<1x1x8xf32>
    %86 = vector.shape_cast %85 : vector<1x1x8xf32> to vector<1x8xf32>
    %87 = vector.broadcast %86 : vector<1x8xf32> to vector<16x8xf32>
    %88 = arith.addf %84, %87 : vector<16x8xf32>
    %cst_87 = arith.constant 0.000000e+00 : f32
    %89 = vector.broadcast %cst_87 : f32 to vector<16x8xf32>
    %90 = arith.maximumf %88, %89 : vector<16x8xf32>
    %91 = arith.truncf %90 : vector<16x8xf32> to vector<16x8xbf16>
    %c0_88 = arith.constant 0 : index
    %c24 = arith.constant 24 : index
    %92 = vector.load %arg16[%c0_88, %c24] : memref<16x64xbf16, #tpu.memory_space<vmem>>, vector<16x8xbf16>
    tpu.vector_store %arg16[%c0_88, %c24], %91 {strides = array<i32>} : memref<16x64xbf16, #tpu.memory_space<vmem>>, vector<16x8xbf16>,
    %93 = vector.extract_strided_slice %6 {offsets = [0, 32], sizes = [16, 8], strides = [1, 1]} : vector<16x64xf32> to vector<16x8xf32>
    %94 = arith.addf %93, %90 : vector<16x8xf32>
    %c2_89 = arith.constant 2 : index
    %c0_90 = arith.constant 0 : index
    %95 = vector.load %arg14[%c2_89, %c0_90] : memref<20x8xf32, #tpu.memory_space<vmem>>, vector<16x8xf32>
    tpu.vector_store %arg14[%c2_89, %c0_90], %94 {strides = array<i32>} : memref<20x8xf32, #tpu.memory_space<vmem>>, vector<16x8xf32>,
    %c0_91 = arith.constant 0 : index
    %c0_92 = arith.constant 0 : index
    %96 = vector.load %arg14[%c0_91, %c0_92] : memref<20x8xf32, #tpu.memory_space<vmem>>, vector<16x8xf32>
    %97 = arith.truncf %96 : vector<16x8xf32> to vector<16x8xbf16>
    %c0_93 = arith.constant 0 : index
    %c0_94 = arith.constant 0 : index
    %98 = vector.load %arg15[%c0_93, %c0_94] : memref<16x24xbf16, #tpu.memory_space<vmem>>, vector<16x8xbf16>
    tpu.vector_store %arg15[%c0_93, %c0_94], %97 {strides = array<i32>} : memref<16x24xbf16, #tpu.memory_space<vmem>>, vector<16x8xbf16>,
    %c2_95 = arith.constant 2 : index
    %c0_96 = arith.constant 0 : index
    %99 = vector.load %arg14[%c2_95, %c0_96] : memref<20x8xf32, #tpu.memory_space<vmem>>, vector<16x8xf32>
    %100 = arith.truncf %99 : vector<16x8xf32> to vector<16x8xbf16>
    %c0_97 = arith.constant 0 : index
    %c8_98 = arith.constant 8 : index
    %101 = vector.load %arg15[%c0_97, %c8_98] : memref<16x24xbf16, #tpu.memory_space<vmem>>, vector<16x8xbf16>
    tpu.vector_store %arg15[%c0_97, %c8_98], %100 {strides = array<i32>} : memref<16x24xbf16, #tpu.memory_space<vmem>>, vector<16x8xbf16>,
    %c4_99 = arith.constant 4 : index
    %c0_100 = arith.constant 0 : index
    %102 = vector.load %arg14[%c4_99, %c0_100] : memref<20x8xf32, #tpu.memory_space<vmem>>, vector<16x8xf32>
    %103 = arith.truncf %102 : vector<16x8xf32> to vector<16x8xbf16>
    %c0_101 = arith.constant 0 : index
    %c16_102 = arith.constant 16 : index
    %104 = vector.load %arg15[%c0_101, %c16_102] : memref<16x24xbf16, #tpu.memory_space<vmem>>, vector<16x8xbf16>
    tpu.vector_store %arg15[%c0_101, %c16_102], %103 {strides = array<i32>} : memref<16x24xbf16, #tpu.memory_space<vmem>>, vector<16x8xbf16>,
    %c0_103 = arith.constant 0 : index
    %c0_104 = arith.constant 0 : index
    %105 = vector.load %arg15[%c0_103, %c0_104] : memref<16x24xbf16, #tpu.memory_space<vmem>>, vector<16x24xbf16>
    %c3 = arith.constant 3 : index
    %c0_105 = arith.constant 0 : index
    %c0_106 = arith.constant 0 : index
    %106 = vector.load %arg2[%c3, %c0_105, %c0_106] : memref<7x24x8xbf16, #tpu.memory_space<vmem>>, vector<1x24x8xbf16>
    %107 = vector.shape_cast %106 : vector<1x24x8xbf16> to vector<24x8xbf16>
    %cst_107 = arith.constant dense<0.000000e+00> : vector<16x8xf32>
    %108 = tpu.matmul %105, %107, %cst_107 {dimension_numbers = #tpu.dot_dimension_numbers<[1], [0], [0], [1], [0, 0, 1, 1], [], []>} : vector<16x24xbf16>, vector<24x8xbf16>, vector<16x8xf32> -> vector<16x8xf32>
    %c3_108 = arith.constant 3 : index
    %c0_109 = arith.constant 0 : index
    %c0_110 = arith.constant 0 : index
    %109 = vector.load %arg3[%c3_108, %c0_109, %c0_110] : memref<7x1x8xf32, #tpu.memory_space<vmem>>, vector<1x1x8xf32>
    %110 = vector.shape_cast %109 : vector<1x1x8xf32> to vector<1x8xf32>
    %111 = vector.broadcast %110 : vector<1x8xf32> to vector<16x8xf32>
    %112 = arith.mulf %108, %111 : vector<16x8xf32>
    %c3_111 = arith.constant 3 : index
    %c0_112 = arith.constant 0 : index
    %c0_113 = arith.constant 0 : index
    %113 = vector.load %arg4[%c3_111, %c0_112, %c0_113] : memref<7x1x8xf32, #tpu.memory_space<vmem>>, vector<1x1x8xf32>
    %114 = vector.shape_cast %113 : vector<1x1x8xf32> to vector<1x8xf32>
    %115 = vector.broadcast %114 : vector<1x8xf32> to vector<16x8xf32>
    %116 = arith.addf %112, %115 : vector<16x8xf32>
    %cst_114 = arith.constant 0.000000e+00 : f32
    %117 = vector.broadcast %cst_114 : f32 to vector<16x8xf32>
    %118 = arith.maximumf %116, %117 : vector<16x8xf32>
    %119 = arith.truncf %118 : vector<16x8xf32> to vector<16x8xbf16>
    %c0_115 = arith.constant 0 : index
    %c32 = arith.constant 32 : index
    %120 = vector.load %arg16[%c0_115, %c32] : memref<16x64xbf16, #tpu.memory_space<vmem>>, vector<16x8xbf16>
    tpu.vector_store %arg16[%c0_115, %c32], %119 {strides = array<i32>} : memref<16x64xbf16, #tpu.memory_space<vmem>>, vector<16x8xbf16>,
    %121 = vector.extract_strided_slice %6 {offsets = [0, 40], sizes = [16, 8], strides = [1, 1]} : vector<16x64xf32> to vector<16x8xf32>
    %122 = arith.addf %121, %118 : vector<16x8xf32>
    %c2_116 = arith.constant 2 : index
    %c0_117 = arith.constant 0 : index
    %123 = vector.load %arg14[%c2_116, %c0_117] : memref<20x8xf32, #tpu.memory_space<vmem>>, vector<16x8xf32>
    tpu.vector_store %arg14[%c2_116, %c0_117], %122 {strides = array<i32>} : memref<20x8xf32, #tpu.memory_space<vmem>>, vector<16x8xf32>,
    %c0_118 = arith.constant 0 : index
    %c0_119 = arith.constant 0 : index
    %124 = vector.load %arg14[%c0_118, %c0_119] : memref<20x8xf32, #tpu.memory_space<vmem>>, vector<16x8xf32>
    %125 = arith.truncf %124 : vector<16x8xf32> to vector<16x8xbf16>
    %c0_120 = arith.constant 0 : index
    %c0_121 = arith.constant 0 : index
    %126 = vector.load %arg15[%c0_120, %c0_121] : memref<16x24xbf16, #tpu.memory_space<vmem>>, vector<16x8xbf16>
    tpu.vector_store %arg15[%c0_120, %c0_121], %125 {strides = array<i32>} : memref<16x24xbf16, #tpu.memory_space<vmem>>, vector<16x8xbf16>,
    %c2_122 = arith.constant 2 : index
    %c0_123 = arith.constant 0 : index
    %127 = vector.load %arg14[%c2_122, %c0_123] : memref<20x8xf32, #tpu.memory_space<vmem>>, vector<16x8xf32>
    %128 = arith.truncf %127 : vector<16x8xf32> to vector<16x8xbf16>
    %c0_124 = arith.constant 0 : index
    %c8_125 = arith.constant 8 : index
    %129 = vector.load %arg15[%c0_124, %c8_125] : memref<16x24xbf16, #tpu.memory_space<vmem>>, vector<16x8xbf16>
    tpu.vector_store %arg15[%c0_124, %c8_125], %128 {strides = array<i32>} : memref<16x24xbf16, #tpu.memory_space<vmem>>, vector<16x8xbf16>,
    %c4_126 = arith.constant 4 : index
    %c0_127 = arith.constant 0 : index
    %130 = vector.load %arg14[%c4_126, %c0_127] : memref<20x8xf32, #tpu.memory_space<vmem>>, vector<16x8xf32>
    %131 = arith.truncf %130 : vector<16x8xf32> to vector<16x8xbf16>
    %c0_128 = arith.constant 0 : index
    %c16_129 = arith.constant 16 : index
    %132 = vector.load %arg15[%c0_128, %c16_129] : memref<16x24xbf16, #tpu.memory_space<vmem>>, vector<16x8xbf16>
    tpu.vector_store %arg15[%c0_128, %c16_129], %131 {strides = array<i32>} : memref<16x24xbf16, #tpu.memory_space<vmem>>, vector<16x8xbf16>,
    %c0_130 = arith.constant 0 : index
    %c0_131 = arith.constant 0 : index
    %133 = vector.load %arg15[%c0_130, %c0_131] : memref<16x24xbf16, #tpu.memory_space<vmem>>, vector<16x24xbf16>
    %c4_132 = arith.constant 4 : index
    %c0_133 = arith.constant 0 : index
    %c0_134 = arith.constant 0 : index
    %134 = vector.load %arg2[%c4_132, %c0_133, %c0_134] : memref<7x24x8xbf16, #tpu.memory_space<vmem>>, vector<1x24x8xbf16>
    %135 = vector.shape_cast %134 : vector<1x24x8xbf16> to vector<24x8xbf16>
    %cst_135 = arith.constant dense<0.000000e+00> : vector<16x8xf32>
    %136 = tpu.matmul %133, %135, %cst_135 {dimension_numbers = #tpu.dot_dimension_numbers<[1], [0], [0], [1], [0, 0, 1, 1], [], []>} : vector<16x24xbf16>, vector<24x8xbf16>, vector<16x8xf32> -> vector<16x8xf32>
    %c4_136 = arith.constant 4 : index
    %c0_137 = arith.constant 0 : index
    %c0_138 = arith.constant 0 : index
    %137 = vector.load %arg3[%c4_136, %c0_137, %c0_138] : memref<7x1x8xf32, #tpu.memory_space<vmem>>, vector<1x1x8xf32>
    %138 = vector.shape_cast %137 : vector<1x1x8xf32> to vector<1x8xf32>
    %139 = vector.broadcast %138 : vector<1x8xf32> to vector<16x8xf32>
    %140 = arith.mulf %136, %139 : vector<16x8xf32>
    %c4_139 = arith.constant 4 : index
    %c0_140 = arith.constant 0 : index
    %c0_141 = arith.constant 0 : index
    %141 = vector.load %arg4[%c4_139, %c0_140, %c0_141] : memref<7x1x8xf32, #tpu.memory_space<vmem>>, vector<1x1x8xf32>
    %142 = vector.shape_cast %141 : vector<1x1x8xf32> to vector<1x8xf32>
    %143 = vector.broadcast %142 : vector<1x8xf32> to vector<16x8xf32>
    %144 = arith.addf %140, %143 : vector<16x8xf32>
    %cst_142 = arith.constant 0.000000e+00 : f32
    %145 = vector.broadcast %cst_142 : f32 to vector<16x8xf32>
    %146 = arith.maximumf %144, %145 : vector<16x8xf32>
    %147 = arith.truncf %146 : vector<16x8xf32> to vector<16x8xbf16>
    %c0_143 = arith.constant 0 : index
    %c40 = arith.constant 40 : index
    %148 = vector.load %arg16[%c0_143, %c40] : memref<16x64xbf16, #tpu.memory_space<vmem>>, vector<16x8xbf16>
    tpu.vector_store %arg16[%c0_143, %c40], %147 {strides = array<i32>} : memref<16x64xbf16, #tpu.memory_space<vmem>>, vector<16x8xbf16>,
    %149 = vector.extract_strided_slice %6 {offsets = [0, 48], sizes = [16, 8], strides = [1, 1]} : vector<16x64xf32> to vector<16x8xf32>
    %150 = arith.addf %149, %146 : vector<16x8xf32>
    %c2_144 = arith.constant 2 : index
    %c0_145 = arith.constant 0 : index
    %151 = vector.load %arg14[%c2_144, %c0_145] : memref<20x8xf32, #tpu.memory_space<vmem>>, vector<16x8xf32>
    tpu.vector_store %arg14[%c2_144, %c0_145], %150 {strides = array<i32>} : memref<20x8xf32, #tpu.memory_space<vmem>>, vector<16x8xf32>,
    %c0_146 = arith.constant 0 : index
    %c0_147 = arith.constant 0 : index
    %152 = vector.load %arg14[%c0_146, %c0_147] : memref<20x8xf32, #tpu.memory_space<vmem>>, vector<16x8xf32>
    %153 = arith.truncf %152 : vector<16x8xf32> to vector<16x8xbf16>
    %c0_148 = arith.constant 0 : index
    %c0_149 = arith.constant 0 : index
    %154 = vector.load %arg15[%c0_148, %c0_149] : memref<16x24xbf16, #tpu.memory_space<vmem>>, vector<16x8xbf16>
    tpu.vector_store %arg15[%c0_148, %c0_149], %153 {strides = array<i32>} : memref<16x24xbf16, #tpu.memory_space<vmem>>, vector<16x8xbf16>,
    %c2_150 = arith.constant 2 : index
    %c0_151 = arith.constant 0 : index
    %155 = vector.load %arg14[%c2_150, %c0_151] : memref<20x8xf32, #tpu.memory_space<vmem>>, vector<16x8xf32>
    %156 = arith.truncf %155 : vector<16x8xf32> to vector<16x8xbf16>
    %c0_152 = arith.constant 0 : index
    %c8_153 = arith.constant 8 : index
    %157 = vector.load %arg15[%c0_152, %c8_153] : memref<16x24xbf16, #tpu.memory_space<vmem>>, vector<16x8xbf16>
    tpu.vector_store %arg15[%c0_152, %c8_153], %156 {strides = array<i32>} : memref<16x24xbf16, #tpu.memory_space<vmem>>, vector<16x8xbf16>,
    %c4_154 = arith.constant 4 : index
    %c0_155 = arith.constant 0 : index
    %158 = vector.load %arg14[%c4_154, %c0_155] : memref<20x8xf32, #tpu.memory_space<vmem>>, vector<16x8xf32>
    %159 = arith.truncf %158 : vector<16x8xf32> to vector<16x8xbf16>
    %c0_156 = arith.constant 0 : index
    %c16_157 = arith.constant 16 : index
    %160 = vector.load %arg15[%c0_156, %c16_157] : memref<16x24xbf16, #tpu.memory_space<vmem>>, vector<16x8xbf16>
    tpu.vector_store %arg15[%c0_156, %c16_157], %159 {strides = array<i32>} : memref<16x24xbf16, #tpu.memory_space<vmem>>, vector<16x8xbf16>,
    %c0_158 = arith.constant 0 : index
    %c0_159 = arith.constant 0 : index
    %161 = vector.load %arg15[%c0_158, %c0_159] : memref<16x24xbf16, #tpu.memory_space<vmem>>, vector<16x24xbf16>
    %c5 = arith.constant 5 : index
    %c0_160 = arith.constant 0 : index
    %c0_161 = arith.constant 0 : index
    %162 = vector.load %arg2[%c5, %c0_160, %c0_161] : memref<7x24x8xbf16, #tpu.memory_space<vmem>>, vector<1x24x8xbf16>
    %163 = vector.shape_cast %162 : vector<1x24x8xbf16> to vector<24x8xbf16>
    %cst_162 = arith.constant dense<0.000000e+00> : vector<16x8xf32>
    %164 = tpu.matmul %161, %163, %cst_162 {dimension_numbers = #tpu.dot_dimension_numbers<[1], [0], [0], [1], [0, 0, 1, 1], [], []>} : vector<16x24xbf16>, vector<24x8xbf16>, vector<16x8xf32> -> vector<16x8xf32>
    %c5_163 = arith.constant 5 : index
    %c0_164 = arith.constant 0 : index
    %c0_165 = arith.constant 0 : index
    %165 = vector.load %arg3[%c5_163, %c0_164, %c0_165] : memref<7x1x8xf32, #tpu.memory_space<vmem>>, vector<1x1x8xf32>
    %166 = vector.shape_cast %165 : vector<1x1x8xf32> to vector<1x8xf32>
    %167 = vector.broadcast %166 : vector<1x8xf32> to vector<16x8xf32>
    %168 = arith.mulf %164, %167 : vector<16x8xf32>
    %c5_166 = arith.constant 5 : index
    %c0_167 = arith.constant 0 : index
    %c0_168 = arith.constant 0 : index
    %169 = vector.load %arg4[%c5_166, %c0_167, %c0_168] : memref<7x1x8xf32, #tpu.memory_space<vmem>>, vector<1x1x8xf32>
    %170 = vector.shape_cast %169 : vector<1x1x8xf32> to vector<1x8xf32>
    %171 = vector.broadcast %170 : vector<1x8xf32> to vector<16x8xf32>
    %172 = arith.addf %168, %171 : vector<16x8xf32>
    %cst_169 = arith.constant 0.000000e+00 : f32
    %173 = vector.broadcast %cst_169 : f32 to vector<16x8xf32>
    %174 = arith.maximumf %172, %173 : vector<16x8xf32>
    %175 = arith.truncf %174 : vector<16x8xf32> to vector<16x8xbf16>
    %c0_170 = arith.constant 0 : index
    %c48 = arith.constant 48 : index
    %176 = vector.load %arg16[%c0_170, %c48] : memref<16x64xbf16, #tpu.memory_space<vmem>>, vector<16x8xbf16>
    tpu.vector_store %arg16[%c0_170, %c48], %175 {strides = array<i32>} : memref<16x64xbf16, #tpu.memory_space<vmem>>, vector<16x8xbf16>,
    %177 = vector.extract_strided_slice %6 {offsets = [0, 56], sizes = [16, 8], strides = [1, 1]} : vector<16x64xf32> to vector<16x8xf32>
    %178 = arith.addf %177, %174 : vector<16x8xf32>
    %c2_171 = arith.constant 2 : index
    %c0_172 = arith.constant 0 : index
    %179 = vector.load %arg14[%c2_171, %c0_172] : memref<20x8xf32, #tpu.memory_space<vmem>>, vector<16x8xf32>
    tpu.vector_store %arg14[%c2_171, %c0_172], %178 {strides = array<i32>} : memref<20x8xf32, #tpu.memory_space<vmem>>, vector<16x8xf32>,
    %c0_173 = arith.constant 0 : index
    %c0_174 = arith.constant 0 : index
    %180 = vector.load %arg14[%c0_173, %c0_174] : memref<20x8xf32, #tpu.memory_space<vmem>>, vector<16x8xf32>
    %181 = arith.truncf %180 : vector<16x8xf32> to vector<16x8xbf16>
    %c0_175 = arith.constant 0 : index
    %c0_176 = arith.constant 0 : index
    %182 = vector.load %arg15[%c0_175, %c0_176] : memref<16x24xbf16, #tpu.memory_space<vmem>>, vector<16x8xbf16>
    tpu.vector_store %arg15[%c0_175, %c0_176], %181 {strides = array<i32>} : memref<16x24xbf16, #tpu.memory_space<vmem>>, vector<16x8xbf16>,
    %c2_177 = arith.constant 2 : index
    %c0_178 = arith.constant 0 : index
    %183 = vector.load %arg14[%c2_177, %c0_178] : memref<20x8xf32, #tpu.memory_space<vmem>>, vector<16x8xf32>
    %184 = arith.truncf %183 : vector<16x8xf32> to vector<16x8xbf16>
    %c0_179 = arith.constant 0 : index
    %c8_180 = arith.constant 8 : index
    %185 = vector.load %arg15[%c0_179, %c8_180] : memref<16x24xbf16, #tpu.memory_space<vmem>>, vector<16x8xbf16>
    tpu.vector_store %arg15[%c0_179, %c8_180], %184 {strides = array<i32>} : memref<16x24xbf16, #tpu.memory_space<vmem>>, vector<16x8xbf16>,
    %c4_181 = arith.constant 4 : index
    %c0_182 = arith.constant 0 : index
    %186 = vector.load %arg14[%c4_181, %c0_182] : memref<20x8xf32, #tpu.memory_space<vmem>>, vector<16x8xf32>
    %187 = arith.truncf %186 : vector<16x8xf32> to vector<16x8xbf16>
    %c0_183 = arith.constant 0 : index
    %c16_184 = arith.constant 16 : index
    %188 = vector.load %arg15[%c0_183, %c16_184] : memref<16x24xbf16, #tpu.memory_space<vmem>>, vector<16x8xbf16>
    tpu.vector_store %arg15[%c0_183, %c16_184], %187 {strides = array<i32>} : memref<16x24xbf16, #tpu.memory_space<vmem>>, vector<16x8xbf16>,
    %c0_185 = arith.constant 0 : index
    %c0_186 = arith.constant 0 : index
    %189 = vector.load %arg15[%c0_185, %c0_186] : memref<16x24xbf16, #tpu.memory_space<vmem>>, vector<16x24xbf16>
    %c6 = arith.constant 6 : index
    %c0_187 = arith.constant 0 : index
    %c0_188 = arith.constant 0 : index
    %190 = vector.load %arg2[%c6, %c0_187, %c0_188] : memref<7x24x8xbf16, #tpu.memory_space<vmem>>, vector<1x24x8xbf16>
    %191 = vector.shape_cast %190 : vector<1x24x8xbf16> to vector<24x8xbf16>
    %cst_189 = arith.constant dense<0.000000e+00> : vector<16x8xf32>
    %192 = tpu.matmul %189, %191, %cst_189 {dimension_numbers = #tpu.dot_dimension_numbers<[1], [0], [0], [1], [0, 0, 1, 1], [], []>} : vector<16x24xbf16>, vector<24x8xbf16>, vector<16x8xf32> -> vector<16x8xf32>
    %c6_190 = arith.constant 6 : index
    %c0_191 = arith.constant 0 : index
    %c0_192 = arith.constant 0 : index
    %193 = vector.load %arg3[%c6_190, %c0_191, %c0_192] : memref<7x1x8xf32, #tpu.memory_space<vmem>>, vector<1x1x8xf32>
    %194 = vector.shape_cast %193 : vector<1x1x8xf32> to vector<1x8xf32>
    %195 = vector.broadcast %194 : vector<1x8xf32> to vector<16x8xf32>
    %196 = arith.mulf %192, %195 : vector<16x8xf32>
    %c6_193 = arith.constant 6 : index
    %c0_194 = arith.constant 0 : index
    %c0_195 = arith.constant 0 : index
    %197 = vector.load %arg4[%c6_193, %c0_194, %c0_195] : memref<7x1x8xf32, #tpu.memory_space<vmem>>, vector<1x1x8xf32>
    %198 = vector.shape_cast %197 : vector<1x1x8xf32> to vector<1x8xf32>
    %199 = vector.broadcast %198 : vector<1x8xf32> to vector<16x8xf32>
    %200 = arith.addf %196, %199 : vector<16x8xf32>
    %cst_196 = arith.constant 0.000000e+00 : f32
    %201 = vector.broadcast %cst_196 : f32 to vector<16x8xf32>
    %202 = arith.maximumf %200, %201 : vector<16x8xf32>
    %203 = arith.truncf %202 : vector<16x8xf32> to vector<16x8xbf16>
    %c0_197 = arith.constant 0 : index
    %c56 = arith.constant 56 : index
    %204 = vector.load %arg16[%c0_197, %c56] : memref<16x64xbf16, #tpu.memory_space<vmem>>, vector<16x8xbf16>
    tpu.vector_store %arg16[%c0_197, %c56], %203 {strides = array<i32>} : memref<16x64xbf16, #tpu.memory_space<vmem>>, vector<16x8xbf16>,
    %c0_198 = arith.constant 0 : index
    %c0_199 = arith.constant 0 : index
    %205 = vector.load %arg16[%c0_198, %c0_199] : memref<16x64xbf16, #tpu.memory_space<vmem>>, vector<16x64xbf16>
    %206 = arith.extf %205 : vector<16x64xbf16> to vector<16x64xf32>
    %cst_200 = arith.constant dense<0.000000e+00> : vector<64xf32>
    %207 = vector.multi_reduction <add>, %206, %cst_200 [0] : vector<16x64xf32> to vector<64xf32>
    %208 = vector.shape_cast %207 : vector<64xf32> to vector<1x64xf32>
    %cst_201 = arith.constant 1.600000e+01 : f32
    %209 = vector.broadcast %cst_201 : f32 to vector<1x64xf32>
    %210 = arith.divf %208, %209 : vector<1x64xf32>
    %211 = arith.truncf %210 : vector<1x64xf32> to vector<1x64xbf16>
    %c0_202 = arith.constant 0 : index
    %c0_203 = arith.constant 0 : index
    %212 = vector.load %arg5[%c0_202, %c0_203] : memref<64x32xbf16, #tpu.memory_space<vmem>>, vector<64x32xbf16>
    %cst_204 = arith.constant dense<0.000000e+00> : vector<1x32xf32>
    %213 = tpu.matmul %211, %212, %cst_204 {dimension_numbers = #tpu.dot_dimension_numbers<[1], [0], [0], [1], [0, 0, 1, 1], [], []>} : vector<1x64xbf16>, vector<64x32xbf16>, vector<1x32xf32> -> vector<1x32xf32>
    %c0_205 = arith.constant 0 : index
    %c0_206 = arith.constant 0 : index
    %214 = vector.load %arg6[%c0_205, %c0_206] : memref<1x32xf32, #tpu.memory_space<vmem>>, vector<1x32xf32>
    %215 = arith.addf %213, %214 : vector<1x32xf32>
    %cst_207 = arith.constant 0.000000e+00 : f32
    %216 = vector.broadcast %cst_207 : f32 to vector<1x32xf32>
    %217 = arith.maximumf %215, %216 : vector<1x32xf32>
    %218 = arith.truncf %217 : vector<1x32xf32> to vector<1x32xbf16>
    %c0_208 = arith.constant 0 : index
    %c0_209 = arith.constant 0 : index
    %219 = vector.load %arg7[%c0_208, %c0_209] : memref<32x64xbf16, #tpu.memory_space<vmem>>, vector<32x64xbf16>
    %cst_210 = arith.constant dense<0.000000e+00> : vector<1x64xf32>
    %220 = tpu.matmul %218, %219, %cst_210 {dimension_numbers = #tpu.dot_dimension_numbers<[1], [0], [0], [1], [0, 0, 1, 1], [], []>} : vector<1x32xbf16>, vector<32x64xbf16>, vector<1x64xf32> -> vector<1x64xf32>
    %c0_211 = arith.constant 0 : index
    %c0_212 = arith.constant 0 : index
    %221 = vector.load %arg8[%c0_211, %c0_212] : memref<1x64xf32, #tpu.memory_space<vmem>>, vector<1x64xf32>
    %222 = arith.addf %220, %221 : vector<1x64xf32>
    %223 = arith.negf %222 : vector<1x64xf32>
    %224 = math.exp %223 : vector<1x64xf32>
    %cst_213 = arith.constant 1.000000e+00 : f32
    %225 = vector.broadcast %cst_213 : f32 to vector<1x64xf32>
    %226 = arith.addf %225, %224 : vector<1x64xf32>
    %227 = arith.divf %225, %226 : vector<1x64xf32>
    %228 = arith.extf %205 : vector<16x64xbf16> to vector<16x64xf32>
    %229 = vector.broadcast %227 : vector<1x64xf32> to vector<16x64xf32>
    %230 = arith.mulf %228, %229 : vector<16x64xf32>
    %231 = arith.truncf %230 : vector<16x64xf32> to vector<16x64xbf16>
    %c0_214 = arith.constant 0 : index
    %c0_215 = arith.constant 0 : index
    %232 = vector.load %arg9[%c0_214, %c0_215] : memref<64x64xbf16, #tpu.memory_space<vmem>>, vector<64x64xbf16>
    %cst_216 = arith.constant dense<0.000000e+00> : vector<16x64xf32>
    %233 = tpu.matmul %231, %232, %cst_216 {dimension_numbers = #tpu.dot_dimension_numbers<[1], [0], [0], [1], [0, 0, 1, 1], [], []>} : vector<16x64xbf16>, vector<64x64xbf16>, vector<16x64xf32> -> vector<16x64xf32>
    %c0_217 = arith.constant 0 : index
    %c0_218 = arith.constant 0 : index
    %234 = vector.load %arg10[%c0_217, %c0_218] : memref<1x64xf32, #tpu.memory_space<vmem>>, vector<1x64xf32>
    %235 = vector.broadcast %234 : vector<1x64xf32> to vector<16x64xf32>
    %236 = arith.mulf %233, %235 : vector<16x64xf32>
    %c0_219 = arith.constant 0 : index
    %c0_220 = arith.constant 0 : index
    %237 = vector.load %arg11[%c0_219, %c0_220] : memref<1x64xf32, #tpu.memory_space<vmem>>, vector<1x64xf32>
    %238 = vector.broadcast %237 : vector<1x64xf32> to vector<16x64xf32>
    %239 = arith.addf %236, %238 : vector<16x64xf32>
    %cst_221 = arith.constant 0.000000e+00 : f32
    %240 = vector.broadcast %cst_221 : f32 to vector<16x64xf32>
    %241 = arith.maximumf %239, %240 : vector<16x64xf32>
    %242 = vector.shape_cast %241 : vector<16x64xf32> to vector<1x16x64xf32>
    %243 = arith.truncf %242 : vector<1x16x64xf32> to vector<1x16x64xbf16>
    %c0_222 = arith.constant 0 : index
    %c0_223 = arith.constant 0 : index
    %c0_224 = arith.constant 0 : index
    %244 = vector.load %arg12[%c0_222, %c0_223, %c0_224] : memref<1x16x64xbf16, #tpu.memory_space<vmem>>, vector<1x16x64xbf16>
    tpu.vector_store %arg12[%c0_222, %c0_223, %c0_224], %243 {strides = array<i32>} : memref<1x16x64xbf16, #tpu.memory_space<vmem>>, vector<1x16x64xbf16>,
    %245 = arith.addf %6, %241 : vector<16x64xf32>
    %246 = vector.shape_cast %245 : vector<16x64xf32> to vector<1x16x64xf32>
    %247 = arith.truncf %246 : vector<1x16x64xf32> to vector<1x16x64xbf16>
    %c0_225 = arith.constant 0 : index
    %c0_226 = arith.constant 0 : index
    %c0_227 = arith.constant 0 : index
    %248 = vector.load %arg13[%c0_225, %c0_226, %c0_227] : memref<1x16x64xbf16, #tpu.memory_space<vmem>>, vector<1x16x64xbf16>
    tpu.vector_store %arg13[%c0_225, %c0_226, %c0_227], %247 {strides = array<i32>} : memref<1x16x64xbf16, #tpu.memory_space<vmem>>, vector<1x16x64xbf16>,
    return
  }
  func.func @transform_0(%arg0: i32) -> (i32, i32, i32) {
    %c0_i32 = arith.constant 0 : i32
    %c0_i32_0 = arith.constant 0 : i32
    %c0_i32_1 = arith.constant 0 : i32
    return %arg0, %c0_i32, %c0_i32_0 : i32, i32, i32
  }
  func.func @transform_1(%arg0: i32) -> (i32, i32, i32) {
    %c0_i32 = arith.constant 0 : i32
    %c0_i32_0 = arith.constant 0 : i32
    %c0_i32_1 = arith.constant 0 : i32
    %c0_i32_2 = arith.constant 0 : i32
    return %c0_i32, %c0_i32_0, %c0_i32_1 : i32, i32, i32
  }
  func.func @transform_2(%arg0: i32) -> (i32, i32, i32) {
    %c0_i32 = arith.constant 0 : i32
    %c0_i32_0 = arith.constant 0 : i32
    %c0_i32_1 = arith.constant 0 : i32
    %c0_i32_2 = arith.constant 0 : i32
    return %c0_i32, %c0_i32_0, %c0_i32_1 : i32, i32, i32
  }
  func.func @transform_3(%arg0: i32) -> (i32, i32, i32) {
    %c0_i32 = arith.constant 0 : i32
    %c0_i32_0 = arith.constant 0 : i32
    %c0_i32_1 = arith.constant 0 : i32
    %c0_i32_2 = arith.constant 0 : i32
    return %c0_i32, %c0_i32_0, %c0_i32_1 : i32, i32, i32
  }
  func.func @transform_4(%arg0: i32) -> (i32, i32) {
    %c0_i32 = arith.constant 0 : i32
    %c0_i32_0 = arith.constant 0 : i32
    %c0_i32_1 = arith.constant 0 : i32
    return %c0_i32, %c0_i32_0 : i32, i32
  }
  func.func @transform_5(%arg0: i32) -> (i32, i32) {
    %c0_i32 = arith.constant 0 : i32
    %c0_i32_0 = arith.constant 0 : i32
    %c0_i32_1 = arith.constant 0 : i32
    return %c0_i32, %c0_i32_0 : i32, i32
  }
  func.func @transform_6(%arg0: i32) -> (i32, i32) {
    %c0_i32 = arith.constant 0 : i32
    %c0_i32_0 = arith.constant 0 : i32
    %c0_i32_1 = arith.constant 0 : i32
    return %c0_i32, %c0_i32_0 : i32, i32
  }
  func.func @transform_7(%arg0: i32) -> (i32, i32) {
    %c0_i32 = arith.constant 0 : i32
    %c0_i32_0 = arith.constant 0 : i32
    %c0_i32_1 = arith.constant 0 : i32
    return %c0_i32, %c0_i32_0 : i32, i32
  }
  func.func @transform_8(%arg0: i32) -> (i32, i32) {
    %c0_i32 = arith.constant 0 : i32
    %c0_i32_0 = arith.constant 0 : i32
    %c0_i32_1 = arith.constant 0 : i32
    return %c0_i32, %c0_i32_0 : i32, i32
  }
  func.func @transform_9(%arg0: i32) -> (i32, i32) {
    %c0_i32 = arith.constant 0 : i32
    %c0_i32_0 = arith.constant 0 : i32
    %c0_i32_1 = arith.constant 0 : i32
    return %c0_i32, %c0_i32_0 : i32, i32
  }
  func.func @transform_10(%arg0: i32) -> (i32, i32) {
    %c0_i32 = arith.constant 0 : i32
    %c0_i32_0 = arith.constant 0 : i32
    %c0_i32_1 = arith.constant 0 : i32
    return %c0_i32, %c0_i32_0 : i32, i32
  }
  func.func @transform_11(%arg0: i32) -> (i32, i32, i32) {
    %c0_i32 = arith.constant 0 : i32
    %c0_i32_0 = arith.constant 0 : i32
    %c0_i32_1 = arith.constant 0 : i32
    return %arg0, %c0_i32, %c0_i32_0 : i32, i32, i32
  }
  func.func @transform_12(%arg0: i32) -> (i32, i32, i32) {
    %c0_i32 = arith.constant 0 : i32
    %c0_i32_0 = arith.constant 0 : i32
    %c0_i32_1 = arith.constant 0 : i32
    return %arg0, %c0_i32, %c0_i32_0 : i32, i32, i32
  }
}

module attributes {stable_mosaic.version = 11 : i64} {
  func.func @kernel(%arg0: i32, %arg1: memref<1x16x64xbf16, #tpu.memory_space<vmem>>, %arg2: memref<7x24x8xbf16, #tpu.memory_space<vmem>>, %arg3: memref<7x1x8xf32, #tpu.memory_space<vmem>>, %arg4: memref<7x1x8xf32, #tpu.memory_space<vmem>>, %arg5: memref<64x32xbf16, #tpu.memory_space<vmem>>, %arg6: memref<1x32xf32, #tpu.memory_space<vmem>>, %arg7: memref<32x64xbf16, #tpu.memory_space<vmem>>, %arg8: memref<1x64xf32, #tpu.memory_space<vmem>>, %arg9: memref<64x64xbf16, #tpu.memory_space<vmem>>, %arg10: memref<1x64xf32, #tpu.memory_space<vmem>>, %arg11: memref<1x64xf32, #tpu.memory_space<vmem>>, %arg12: memref<1x16x64xbf16, #tpu.memory_space<vmem>>, %arg13: memref<1x16x64xbf16, #tpu.memory_space<vmem>>, %arg14: memref<22x8xf32, #tpu.memory_space<vmem>>, %arg15: memref<16x24xbf16, #tpu.memory_space<vmem>>, %arg16: memref<16x64xbf16, #tpu.memory_space<vmem>>) attributes {dimension_semantics = [#tpu.dimension_semantics<parallel>], iteration_bounds = array<i64: 2>, scalar_prefetch = 0 : i64, scratch_operands = 3 : i64, tpu.core_type = #tpu.core_type<tc>, window_params = [{transform_indices = @transform_0, window_bounds = array<i64: 1, 16, 64>}, {pipeline_mode = #tpu.pipeline_mode<synchronous>, transform_indices = @transform_1, window_bounds = array<i64: 7, 24, 8>}, {pipeline_mode = #tpu.pipeline_mode<synchronous>, transform_indices = @transform_2, window_bounds = array<i64: 7, 1, 8>}, {pipeline_mode = #tpu.pipeline_mode<synchronous>, transform_indices = @transform_3, window_bounds = array<i64: 7, 1, 8>}, {pipeline_mode = #tpu.pipeline_mode<synchronous>, transform_indices = @transform_4, window_bounds = array<i64: 64, 32>}, {pipeline_mode = #tpu.pipeline_mode<synchronous>, transform_indices = @transform_5, window_bounds = array<i64: 1, 32>}, {pipeline_mode = #tpu.pipeline_mode<synchronous>, transform_indices = @transform_6, window_bounds = array<i64: 32, 64>}, {pipeline_mode = #tpu.pipeline_mode<synchronous>, transform_indices = @transform_7, window_bounds = array<i64: 1, 64>}, {pipeline_mode = #tpu.pipeline_mode<synchronous>, transform_indices = @transform_8, window_bounds = array<i64: 64, 64>}, {pipeline_mode = #tpu.pipeline_mode<synchronous>, transform_indices = @transform_9, window_bounds = array<i64: 1, 64>}, {pipeline_mode = #tpu.pipeline_mode<synchronous>, transform_indices = @transform_10, window_bounds = array<i64: 1, 64>}, {transform_indices = @transform_11, window_bounds = array<i64: 1, 16, 64>}, {transform_indices = @transform_12, window_bounds = array<i64: 1, 16, 64>}]} {
    %cst = arith.constant 0.000000e+00 : f32
    %0 = vector.broadcast %cst : f32 to vector<3x8xf32>
    %c0 = arith.constant 0 : index
    %c0_0 = arith.constant 0 : index
    %1 = vector.load %arg14[%c0, %c0_0] : memref<22x8xf32, #tpu.memory_space<vmem>>, vector<3x8xf32>
    tpu.vector_store %arg14[%c0, %c0_0], %0 {strides = array<i32>} : memref<22x8xf32, #tpu.memory_space<vmem>>, vector<3x8xf32>,
    %cst_1 = arith.constant 0.000000e+00 : f32
    %2 = vector.broadcast %cst_1 : f32 to vector<3x8xf32>
    %c19 = arith.constant 19 : index
    %c0_2 = arith.constant 0 : index
    %3 = vector.load %arg14[%c19, %c0_2] : memref<22x8xf32, #tpu.memory_space<vmem>>, vector<3x8xf32>
    tpu.vector_store %arg14[%c19, %c0_2], %2 {strides = array<i32>} : memref<22x8xf32, #tpu.memory_space<vmem>>, vector<3x8xf32>,
    %c0_3 = arith.constant 0 : index
    %c0_4 = arith.constant 0 : index
    %c0_5 = arith.constant 0 : index
    %4 = vector.load %arg1[%c0_3, %c0_4, %c0_5] : memref<1x16x64xbf16, #tpu.memory_space<vmem>>, vector<1x16x64xbf16>
    %5 = vector.shape_cast %4 : vector<1x16x64xbf16> to vector<16x64xbf16>
    %6 = arith.extf %5 : vector<16x64xbf16> to vector<16x64xf32>
    %7 = vector.extract_strided_slice %6 {offsets = [0, 0], sizes = [16, 8], strides = [1, 1]} : vector<16x64xf32> to vector<16x8xf32>
    %8 = arith.truncf %7 : vector<16x8xf32> to vector<16x8xbf16>
    %c0_6 = arith.constant 0 : index
    %c0_7 = arith.constant 0 : index
    %9 = vector.load %arg16[%c0_6, %c0_7] : memref<16x64xbf16, #tpu.memory_space<vmem>>, vector<16x8xbf16>
    tpu.vector_store %arg16[%c0_6, %c0_7], %8 {strides = array<i32>} : memref<16x64xbf16, #tpu.memory_space<vmem>>, vector<16x8xbf16>,
    %10 = vector.extract_strided_slice %6 {offsets = [0, 8], sizes = [16, 8], strides = [1, 1]} : vector<16x64xf32> to vector<16x8xf32>
    %c3 = arith.constant 3 : index
    %c0_8 = arith.constant 0 : index
    %11 = vector.load %arg14[%c3, %c0_8] : memref<22x8xf32, #tpu.memory_space<vmem>>, vector<16x8xf32>
    tpu.vector_store %arg14[%c3, %c0_8], %10 {strides = array<i32>} : memref<22x8xf32, #tpu.memory_space<vmem>>, vector<16x8xf32>,
    %c0_9 = arith.constant 0 : index
    %c0_10 = arith.constant 0 : index
    %12 = vector.load %arg14[%c0_9, %c0_10] : memref<22x8xf32, #tpu.memory_space<vmem>>, vector<16x8xf32>
    %13 = arith.truncf %12 : vector<16x8xf32> to vector<16x8xbf16>
    %c0_11 = arith.constant 0 : index
    %c0_12 = arith.constant 0 : index
    %14 = vector.load %arg15[%c0_11, %c0_12] : memref<16x24xbf16, #tpu.memory_space<vmem>>, vector<16x8xbf16>
    tpu.vector_store %arg15[%c0_11, %c0_12], %13 {strides = array<i32>} : memref<16x24xbf16, #tpu.memory_space<vmem>>, vector<16x8xbf16>,
    %c3_13 = arith.constant 3 : index
    %c0_14 = arith.constant 0 : index
    %15 = vector.load %arg14[%c3_13, %c0_14] : memref<22x8xf32, #tpu.memory_space<vmem>>, vector<16x8xf32>
    %16 = arith.truncf %15 : vector<16x8xf32> to vector<16x8xbf16>
    %c0_15 = arith.constant 0 : index
    %c8 = arith.constant 8 : index
    %17 = vector.load %arg15[%c0_15, %c8] : memref<16x24xbf16, #tpu.memory_space<vmem>>, vector<16x8xbf16>
    tpu.vector_store %arg15[%c0_15, %c8], %16 {strides = array<i32>} : memref<16x24xbf16, #tpu.memory_space<vmem>>, vector<16x8xbf16>,
    %c6 = arith.constant 6 : index
    %c0_16 = arith.constant 0 : index
    %18 = vector.load %arg14[%c6, %c0_16] : memref<22x8xf32, #tpu.memory_space<vmem>>, vector<16x8xf32>
    %19 = arith.truncf %18 : vector<16x8xf32> to vector<16x8xbf16>
    %c0_17 = arith.constant 0 : index
    %c16 = arith.constant 16 : index
    %20 = vector.load %arg15[%c0_17, %c16] : memref<16x24xbf16, #tpu.memory_space<vmem>>, vector<16x8xbf16>
    tpu.vector_store %arg15[%c0_17, %c16], %19 {strides = array<i32>} : memref<16x24xbf16, #tpu.memory_space<vmem>>, vector<16x8xbf16>,
    %c0_18 = arith.constant 0 : index
    %c0_19 = arith.constant 0 : index
    %21 = vector.load %arg15[%c0_18, %c0_19] : memref<16x24xbf16, #tpu.memory_space<vmem>>, vector<16x24xbf16>
    %c0_20 = arith.constant 0 : index
    %c0_21 = arith.constant 0 : index
    %c0_22 = arith.constant 0 : index
    %22 = vector.load %arg2[%c0_20, %c0_21, %c0_22] : memref<7x24x8xbf16, #tpu.memory_space<vmem>>, vector<1x24x8xbf16>
    %23 = vector.shape_cast %22 : vector<1x24x8xbf16> to vector<24x8xbf16>
    %cst_23 = arith.constant dense<0.000000e+00> : vector<16x8xf32>
    %24 = tpu.matmul %21, %23, %cst_23 {dimension_numbers = #tpu.dot_dimension_numbers<[1], [0], [0], [1], [0, 0, 1, 1], [], []>} : vector<16x24xbf16>, vector<24x8xbf16>, vector<16x8xf32> -> vector<16x8xf32>
    %c0_24 = arith.constant 0 : index
    %c0_25 = arith.constant 0 : index
    %c0_26 = arith.constant 0 : index
    %25 = vector.load %arg3[%c0_24, %c0_25, %c0_26] : memref<7x1x8xf32, #tpu.memory_space<vmem>>, vector<1x1x8xf32>
    %26 = vector.shape_cast %25 : vector<1x1x8xf32> to vector<1x8xf32>
    %27 = vector.broadcast %26 : vector<1x8xf32> to vector<16x8xf32>
    %28 = arith.mulf %24, %27 : vector<16x8xf32>
    %c0_27 = arith.constant 0 : index
    %c0_28 = arith.constant 0 : index
    %c0_29 = arith.constant 0 : index
    %29 = vector.load %arg4[%c0_27, %c0_28, %c0_29] : memref<7x1x8xf32, #tpu.memory_space<vmem>>, vector<1x1x8xf32>
    %30 = vector.shape_cast %29 : vector<1x1x8xf32> to vector<1x8xf32>
    %31 = vector.broadcast %30 : vector<1x8xf32> to vector<16x8xf32>
    %32 = arith.addf %28, %31 : vector<16x8xf32>
    %cst_30 = arith.constant 0.000000e+00 : f32
    %33 = vector.broadcast %cst_30 : f32 to vector<16x8xf32>
    %34 = arith.maximumf %32, %33 : vector<16x8xf32>
    %35 = arith.truncf %34 : vector<16x8xf32> to vector<16x8xbf16>
    %c0_31 = arith.constant 0 : index
    %c8_32 = arith.constant 8 : index
    %36 = vector.load %arg16[%c0_31, %c8_32] : memref<16x64xbf16, #tpu.memory_space<vmem>>, vector<16x8xbf16>
    tpu.vector_store %arg16[%c0_31, %c8_32], %35 {strides = array<i32>} : memref<16x64xbf16, #tpu.memory_space<vmem>>, vector<16x8xbf16>,
    %37 = vector.extract_strided_slice %6 {offsets = [0, 16], sizes = [16, 8], strides = [1, 1]} : vector<16x64xf32> to vector<16x8xf32>
    %38 = arith.addf %37, %34 : vector<16x8xf32>
    %c3_33 = arith.constant 3 : index
    %c0_34 = arith.constant 0 : index
    %39 = vector.load %arg14[%c3_33, %c0_34] : memref<22x8xf32, #tpu.memory_space<vmem>>, vector<16x8xf32>
    tpu.vector_store %arg14[%c3_33, %c0_34], %38 {strides = array<i32>} : memref<22x8xf32, #tpu.memory_space<vmem>>, vector<16x8xf32>,
    %c0_35 = arith.constant 0 : index
    %c0_36 = arith.constant 0 : index
    %40 = vector.load %arg14[%c0_35, %c0_36] : memref<22x8xf32, #tpu.memory_space<vmem>>, vector<16x8xf32>
    %41 = arith.truncf %40 : vector<16x8xf32> to vector<16x8xbf16>
    %c0_37 = arith.constant 0 : index
    %c0_38 = arith.constant 0 : index
    %42 = vector.load %arg15[%c0_37, %c0_38] : memref<16x24xbf16, #tpu.memory_space<vmem>>, vector<16x8xbf16>
    tpu.vector_store %arg15[%c0_37, %c0_38], %41 {strides = array<i32>} : memref<16x24xbf16, #tpu.memory_space<vmem>>, vector<16x8xbf16>,
    %c3_39 = arith.constant 3 : index
    %c0_40 = arith.constant 0 : index
    %43 = vector.load %arg14[%c3_39, %c0_40] : memref<22x8xf32, #tpu.memory_space<vmem>>, vector<16x8xf32>
    %44 = arith.truncf %43 : vector<16x8xf32> to vector<16x8xbf16>
    %c0_41 = arith.constant 0 : index
    %c8_42 = arith.constant 8 : index
    %45 = vector.load %arg15[%c0_41, %c8_42] : memref<16x24xbf16, #tpu.memory_space<vmem>>, vector<16x8xbf16>
    tpu.vector_store %arg15[%c0_41, %c8_42], %44 {strides = array<i32>} : memref<16x24xbf16, #tpu.memory_space<vmem>>, vector<16x8xbf16>,
    %c6_43 = arith.constant 6 : index
    %c0_44 = arith.constant 0 : index
    %46 = vector.load %arg14[%c6_43, %c0_44] : memref<22x8xf32, #tpu.memory_space<vmem>>, vector<16x8xf32>
    %47 = arith.truncf %46 : vector<16x8xf32> to vector<16x8xbf16>
    %c0_45 = arith.constant 0 : index
    %c16_46 = arith.constant 16 : index
    %48 = vector.load %arg15[%c0_45, %c16_46] : memref<16x24xbf16, #tpu.memory_space<vmem>>, vector<16x8xbf16>
    tpu.vector_store %arg15[%c0_45, %c16_46], %47 {strides = array<i32>} : memref<16x24xbf16, #tpu.memory_space<vmem>>, vector<16x8xbf16>,
    %c0_47 = arith.constant 0 : index
    %c0_48 = arith.constant 0 : index
    %49 = vector.load %arg15[%c0_47, %c0_48] : memref<16x24xbf16, #tpu.memory_space<vmem>>, vector<16x24xbf16>
    %c1 = arith.constant 1 : index
    %c0_49 = arith.constant 0 : index
    %c0_50 = arith.constant 0 : index
    %50 = vector.load %arg2[%c1, %c0_49, %c0_50] : memref<7x24x8xbf16, #tpu.memory_space<vmem>>, vector<1x24x8xbf16>
    %51 = vector.shape_cast %50 : vector<1x24x8xbf16> to vector<24x8xbf16>
    %cst_51 = arith.constant dense<0.000000e+00> : vector<16x8xf32>
    %52 = tpu.matmul %49, %51, %cst_51 {dimension_numbers = #tpu.dot_dimension_numbers<[1], [0], [0], [1], [0, 0, 1, 1], [], []>} : vector<16x24xbf16>, vector<24x8xbf16>, vector<16x8xf32> -> vector<16x8xf32>
    %c1_52 = arith.constant 1 : index
    %c0_53 = arith.constant 0 : index
    %c0_54 = arith.constant 0 : index
    %53 = vector.load %arg3[%c1_52, %c0_53, %c0_54] : memref<7x1x8xf32, #tpu.memory_space<vmem>>, vector<1x1x8xf32>
    %54 = vector.shape_cast %53 : vector<1x1x8xf32> to vector<1x8xf32>
    %55 = vector.broadcast %54 : vector<1x8xf32> to vector<16x8xf32>
    %56 = arith.mulf %52, %55 : vector<16x8xf32>
    %c1_55 = arith.constant 1 : index
    %c0_56 = arith.constant 0 : index
    %c0_57 = arith.constant 0 : index
    %57 = vector.load %arg4[%c1_55, %c0_56, %c0_57] : memref<7x1x8xf32, #tpu.memory_space<vmem>>, vector<1x1x8xf32>
    %58 = vector.shape_cast %57 : vector<1x1x8xf32> to vector<1x8xf32>
    %59 = vector.broadcast %58 : vector<1x8xf32> to vector<16x8xf32>
    %60 = arith.addf %56, %59 : vector<16x8xf32>
    %cst_58 = arith.constant 0.000000e+00 : f32
    %61 = vector.broadcast %cst_58 : f32 to vector<16x8xf32>
    %62 = arith.maximumf %60, %61 : vector<16x8xf32>
    %63 = arith.truncf %62 : vector<16x8xf32> to vector<16x8xbf16>
    %c0_59 = arith.constant 0 : index
    %c16_60 = arith.constant 16 : index
    %64 = vector.load %arg16[%c0_59, %c16_60] : memref<16x64xbf16, #tpu.memory_space<vmem>>, vector<16x8xbf16>
    tpu.vector_store %arg16[%c0_59, %c16_60], %63 {strides = array<i32>} : memref<16x64xbf16, #tpu.memory_space<vmem>>, vector<16x8xbf16>,
    %65 = vector.extract_strided_slice %6 {offsets = [0, 24], sizes = [16, 8], strides = [1, 1]} : vector<16x64xf32> to vector<16x8xf32>
    %66 = arith.addf %65, %62 : vector<16x8xf32>
    %c3_61 = arith.constant 3 : index
    %c0_62 = arith.constant 0 : index
    %67 = vector.load %arg14[%c3_61, %c0_62] : memref<22x8xf32, #tpu.memory_space<vmem>>, vector<16x8xf32>
    tpu.vector_store %arg14[%c3_61, %c0_62], %66 {strides = array<i32>} : memref<22x8xf32, #tpu.memory_space<vmem>>, vector<16x8xf32>,
    %c0_63 = arith.constant 0 : index
    %c0_64 = arith.constant 0 : index
    %68 = vector.load %arg14[%c0_63, %c0_64] : memref<22x8xf32, #tpu.memory_space<vmem>>, vector<16x8xf32>
    %69 = arith.truncf %68 : vector<16x8xf32> to vector<16x8xbf16>
    %c0_65 = arith.constant 0 : index
    %c0_66 = arith.constant 0 : index
    %70 = vector.load %arg15[%c0_65, %c0_66] : memref<16x24xbf16, #tpu.memory_space<vmem>>, vector<16x8xbf16>
    tpu.vector_store %arg15[%c0_65, %c0_66], %69 {strides = array<i32>} : memref<16x24xbf16, #tpu.memory_space<vmem>>, vector<16x8xbf16>,
    %c3_67 = arith.constant 3 : index
    %c0_68 = arith.constant 0 : index
    %71 = vector.load %arg14[%c3_67, %c0_68] : memref<22x8xf32, #tpu.memory_space<vmem>>, vector<16x8xf32>
    %72 = arith.truncf %71 : vector<16x8xf32> to vector<16x8xbf16>
    %c0_69 = arith.constant 0 : index
    %c8_70 = arith.constant 8 : index
    %73 = vector.load %arg15[%c0_69, %c8_70] : memref<16x24xbf16, #tpu.memory_space<vmem>>, vector<16x8xbf16>
    tpu.vector_store %arg15[%c0_69, %c8_70], %72 {strides = array<i32>} : memref<16x24xbf16, #tpu.memory_space<vmem>>, vector<16x8xbf16>,
    %c6_71 = arith.constant 6 : index
    %c0_72 = arith.constant 0 : index
    %74 = vector.load %arg14[%c6_71, %c0_72] : memref<22x8xf32, #tpu.memory_space<vmem>>, vector<16x8xf32>
    %75 = arith.truncf %74 : vector<16x8xf32> to vector<16x8xbf16>
    %c0_73 = arith.constant 0 : index
    %c16_74 = arith.constant 16 : index
    %76 = vector.load %arg15[%c0_73, %c16_74] : memref<16x24xbf16, #tpu.memory_space<vmem>>, vector<16x8xbf16>
    tpu.vector_store %arg15[%c0_73, %c16_74], %75 {strides = array<i32>} : memref<16x24xbf16, #tpu.memory_space<vmem>>, vector<16x8xbf16>,
    %c0_75 = arith.constant 0 : index
    %c0_76 = arith.constant 0 : index
    %77 = vector.load %arg15[%c0_75, %c0_76] : memref<16x24xbf16, #tpu.memory_space<vmem>>, vector<16x24xbf16>
    %c2 = arith.constant 2 : index
    %c0_77 = arith.constant 0 : index
    %c0_78 = arith.constant 0 : index
    %78 = vector.load %arg2[%c2, %c0_77, %c0_78] : memref<7x24x8xbf16, #tpu.memory_space<vmem>>, vector<1x24x8xbf16>
    %79 = vector.shape_cast %78 : vector<1x24x8xbf16> to vector<24x8xbf16>
    %cst_79 = arith.constant dense<0.000000e+00> : vector<16x8xf32>
    %80 = tpu.matmul %77, %79, %cst_79 {dimension_numbers = #tpu.dot_dimension_numbers<[1], [0], [0], [1], [0, 0, 1, 1], [], []>} : vector<16x24xbf16>, vector<24x8xbf16>, vector<16x8xf32> -> vector<16x8xf32>
    %c2_80 = arith.constant 2 : index
    %c0_81 = arith.constant 0 : index
    %c0_82 = arith.constant 0 : index
    %81 = vector.load %arg3[%c2_80, %c0_81, %c0_82] : memref<7x1x8xf32, #tpu.memory_space<vmem>>, vector<1x1x8xf32>
    %82 = vector.shape_cast %81 : vector<1x1x8xf32> to vector<1x8xf32>
    %83 = vector.broadcast %82 : vector<1x8xf32> to vector<16x8xf32>
    %84 = arith.mulf %80, %83 : vector<16x8xf32>
    %c2_83 = arith.constant 2 : index
    %c0_84 = arith.constant 0 : index
    %c0_85 = arith.constant 0 : index
    %85 = vector.load %arg4[%c2_83, %c0_84, %c0_85] : memref<7x1x8xf32, #tpu.memory_space<vmem>>, vector<1x1x8xf32>
    %86 = vector.shape_cast %85 : vector<1x1x8xf32> to vector<1x8xf32>
    %87 = vector.broadcast %86 : vector<1x8xf32> to vector<16x8xf32>
    %88 = arith.addf %84, %87 : vector<16x8xf32>
    %cst_86 = arith.constant 0.000000e+00 : f32
    %89 = vector.broadcast %cst_86 : f32 to vector<16x8xf32>
    %90 = arith.maximumf %88, %89 : vector<16x8xf32>
    %91 = arith.truncf %90 : vector<16x8xf32> to vector<16x8xbf16>
    %c0_87 = arith.constant 0 : index
    %c24 = arith.constant 24 : index
    %92 = vector.load %arg16[%c0_87, %c24] : memref<16x64xbf16, #tpu.memory_space<vmem>>, vector<16x8xbf16>
    tpu.vector_store %arg16[%c0_87, %c24], %91 {strides = array<i32>} : memref<16x64xbf16, #tpu.memory_space<vmem>>, vector<16x8xbf16>,
    %93 = vector.extract_strided_slice %6 {offsets = [0, 32], sizes = [16, 8], strides = [1, 1]} : vector<16x64xf32> to vector<16x8xf32>
    %94 = arith.addf %93, %90 : vector<16x8xf32>
    %c3_88 = arith.constant 3 : index
    %c0_89 = arith.constant 0 : index
    %95 = vector.load %arg14[%c3_88, %c0_89] : memref<22x8xf32, #tpu.memory_space<vmem>>, vector<16x8xf32>
    tpu.vector_store %arg14[%c3_88, %c0_89], %94 {strides = array<i32>} : memref<22x8xf32, #tpu.memory_space<vmem>>, vector<16x8xf32>,
    %c0_90 = arith.constant 0 : index
    %c0_91 = arith.constant 0 : index
    %96 = vector.load %arg14[%c0_90, %c0_91] : memref<22x8xf32, #tpu.memory_space<vmem>>, vector<16x8xf32>
    %97 = arith.truncf %96 : vector<16x8xf32> to vector<16x8xbf16>
    %c0_92 = arith.constant 0 : index
    %c0_93 = arith.constant 0 : index
    %98 = vector.load %arg15[%c0_92, %c0_93] : memref<16x24xbf16, #tpu.memory_space<vmem>>, vector<16x8xbf16>
    tpu.vector_store %arg15[%c0_92, %c0_93], %97 {strides = array<i32>} : memref<16x24xbf16, #tpu.memory_space<vmem>>, vector<16x8xbf16>,
    %c3_94 = arith.constant 3 : index
    %c0_95 = arith.constant 0 : index
    %99 = vector.load %arg14[%c3_94, %c0_95] : memref<22x8xf32, #tpu.memory_space<vmem>>, vector<16x8xf32>
    %100 = arith.truncf %99 : vector<16x8xf32> to vector<16x8xbf16>
    %c0_96 = arith.constant 0 : index
    %c8_97 = arith.constant 8 : index
    %101 = vector.load %arg15[%c0_96, %c8_97] : memref<16x24xbf16, #tpu.memory_space<vmem>>, vector<16x8xbf16>
    tpu.vector_store %arg15[%c0_96, %c8_97], %100 {strides = array<i32>} : memref<16x24xbf16, #tpu.memory_space<vmem>>, vector<16x8xbf16>,
    %c6_98 = arith.constant 6 : index
    %c0_99 = arith.constant 0 : index
    %102 = vector.load %arg14[%c6_98, %c0_99] : memref<22x8xf32, #tpu.memory_space<vmem>>, vector<16x8xf32>
    %103 = arith.truncf %102 : vector<16x8xf32> to vector<16x8xbf16>
    %c0_100 = arith.constant 0 : index
    %c16_101 = arith.constant 16 : index
    %104 = vector.load %arg15[%c0_100, %c16_101] : memref<16x24xbf16, #tpu.memory_space<vmem>>, vector<16x8xbf16>
    tpu.vector_store %arg15[%c0_100, %c16_101], %103 {strides = array<i32>} : memref<16x24xbf16, #tpu.memory_space<vmem>>, vector<16x8xbf16>,
    %c0_102 = arith.constant 0 : index
    %c0_103 = arith.constant 0 : index
    %105 = vector.load %arg15[%c0_102, %c0_103] : memref<16x24xbf16, #tpu.memory_space<vmem>>, vector<16x24xbf16>
    %c3_104 = arith.constant 3 : index
    %c0_105 = arith.constant 0 : index
    %c0_106 = arith.constant 0 : index
    %106 = vector.load %arg2[%c3_104, %c0_105, %c0_106] : memref<7x24x8xbf16, #tpu.memory_space<vmem>>, vector<1x24x8xbf16>
    %107 = vector.shape_cast %106 : vector<1x24x8xbf16> to vector<24x8xbf16>
    %cst_107 = arith.constant dense<0.000000e+00> : vector<16x8xf32>
    %108 = tpu.matmul %105, %107, %cst_107 {dimension_numbers = #tpu.dot_dimension_numbers<[1], [0], [0], [1], [0, 0, 1, 1], [], []>} : vector<16x24xbf16>, vector<24x8xbf16>, vector<16x8xf32> -> vector<16x8xf32>
    %c3_108 = arith.constant 3 : index
    %c0_109 = arith.constant 0 : index
    %c0_110 = arith.constant 0 : index
    %109 = vector.load %arg3[%c3_108, %c0_109, %c0_110] : memref<7x1x8xf32, #tpu.memory_space<vmem>>, vector<1x1x8xf32>
    %110 = vector.shape_cast %109 : vector<1x1x8xf32> to vector<1x8xf32>
    %111 = vector.broadcast %110 : vector<1x8xf32> to vector<16x8xf32>
    %112 = arith.mulf %108, %111 : vector<16x8xf32>
    %c3_111 = arith.constant 3 : index
    %c0_112 = arith.constant 0 : index
    %c0_113 = arith.constant 0 : index
    %113 = vector.load %arg4[%c3_111, %c0_112, %c0_113] : memref<7x1x8xf32, #tpu.memory_space<vmem>>, vector<1x1x8xf32>
    %114 = vector.shape_cast %113 : vector<1x1x8xf32> to vector<1x8xf32>
    %115 = vector.broadcast %114 : vector<1x8xf32> to vector<16x8xf32>
    %116 = arith.addf %112, %115 : vector<16x8xf32>
    %cst_114 = arith.constant 0.000000e+00 : f32
    %117 = vector.broadcast %cst_114 : f32 to vector<16x8xf32>
    %118 = arith.maximumf %116, %117 : vector<16x8xf32>
    %119 = arith.truncf %118 : vector<16x8xf32> to vector<16x8xbf16>
    %c0_115 = arith.constant 0 : index
    %c32 = arith.constant 32 : index
    %120 = vector.load %arg16[%c0_115, %c32] : memref<16x64xbf16, #tpu.memory_space<vmem>>, vector<16x8xbf16>
    tpu.vector_store %arg16[%c0_115, %c32], %119 {strides = array<i32>} : memref<16x64xbf16, #tpu.memory_space<vmem>>, vector<16x8xbf16>,
    %121 = vector.extract_strided_slice %6 {offsets = [0, 40], sizes = [16, 8], strides = [1, 1]} : vector<16x64xf32> to vector<16x8xf32>
    %122 = arith.addf %121, %118 : vector<16x8xf32>
    %c3_116 = arith.constant 3 : index
    %c0_117 = arith.constant 0 : index
    %123 = vector.load %arg14[%c3_116, %c0_117] : memref<22x8xf32, #tpu.memory_space<vmem>>, vector<16x8xf32>
    tpu.vector_store %arg14[%c3_116, %c0_117], %122 {strides = array<i32>} : memref<22x8xf32, #tpu.memory_space<vmem>>, vector<16x8xf32>,
    %c0_118 = arith.constant 0 : index
    %c0_119 = arith.constant 0 : index
    %124 = vector.load %arg14[%c0_118, %c0_119] : memref<22x8xf32, #tpu.memory_space<vmem>>, vector<16x8xf32>
    %125 = arith.truncf %124 : vector<16x8xf32> to vector<16x8xbf16>
    %c0_120 = arith.constant 0 : index
    %c0_121 = arith.constant 0 : index
    %126 = vector.load %arg15[%c0_120, %c0_121] : memref<16x24xbf16, #tpu.memory_space<vmem>>, vector<16x8xbf16>
    tpu.vector_store %arg15[%c0_120, %c0_121], %125 {strides = array<i32>} : memref<16x24xbf16, #tpu.memory_space<vmem>>, vector<16x8xbf16>,
    %c3_122 = arith.constant 3 : index
    %c0_123 = arith.constant 0 : index
    %127 = vector.load %arg14[%c3_122, %c0_123] : memref<22x8xf32, #tpu.memory_space<vmem>>, vector<16x8xf32>
    %128 = arith.truncf %127 : vector<16x8xf32> to vector<16x8xbf16>
    %c0_124 = arith.constant 0 : index
    %c8_125 = arith.constant 8 : index
    %129 = vector.load %arg15[%c0_124, %c8_125] : memref<16x24xbf16, #tpu.memory_space<vmem>>, vector<16x8xbf16>
    tpu.vector_store %arg15[%c0_124, %c8_125], %128 {strides = array<i32>} : memref<16x24xbf16, #tpu.memory_space<vmem>>, vector<16x8xbf16>,
    %c6_126 = arith.constant 6 : index
    %c0_127 = arith.constant 0 : index
    %130 = vector.load %arg14[%c6_126, %c0_127] : memref<22x8xf32, #tpu.memory_space<vmem>>, vector<16x8xf32>
    %131 = arith.truncf %130 : vector<16x8xf32> to vector<16x8xbf16>
    %c0_128 = arith.constant 0 : index
    %c16_129 = arith.constant 16 : index
    %132 = vector.load %arg15[%c0_128, %c16_129] : memref<16x24xbf16, #tpu.memory_space<vmem>>, vector<16x8xbf16>
    tpu.vector_store %arg15[%c0_128, %c16_129], %131 {strides = array<i32>} : memref<16x24xbf16, #tpu.memory_space<vmem>>, vector<16x8xbf16>,
    %c0_130 = arith.constant 0 : index
    %c0_131 = arith.constant 0 : index
    %133 = vector.load %arg15[%c0_130, %c0_131] : memref<16x24xbf16, #tpu.memory_space<vmem>>, vector<16x24xbf16>
    %c4 = arith.constant 4 : index
    %c0_132 = arith.constant 0 : index
    %c0_133 = arith.constant 0 : index
    %134 = vector.load %arg2[%c4, %c0_132, %c0_133] : memref<7x24x8xbf16, #tpu.memory_space<vmem>>, vector<1x24x8xbf16>
    %135 = vector.shape_cast %134 : vector<1x24x8xbf16> to vector<24x8xbf16>
    %cst_134 = arith.constant dense<0.000000e+00> : vector<16x8xf32>
    %136 = tpu.matmul %133, %135, %cst_134 {dimension_numbers = #tpu.dot_dimension_numbers<[1], [0], [0], [1], [0, 0, 1, 1], [], []>} : vector<16x24xbf16>, vector<24x8xbf16>, vector<16x8xf32> -> vector<16x8xf32>
    %c4_135 = arith.constant 4 : index
    %c0_136 = arith.constant 0 : index
    %c0_137 = arith.constant 0 : index
    %137 = vector.load %arg3[%c4_135, %c0_136, %c0_137] : memref<7x1x8xf32, #tpu.memory_space<vmem>>, vector<1x1x8xf32>
    %138 = vector.shape_cast %137 : vector<1x1x8xf32> to vector<1x8xf32>
    %139 = vector.broadcast %138 : vector<1x8xf32> to vector<16x8xf32>
    %140 = arith.mulf %136, %139 : vector<16x8xf32>
    %c4_138 = arith.constant 4 : index
    %c0_139 = arith.constant 0 : index
    %c0_140 = arith.constant 0 : index
    %141 = vector.load %arg4[%c4_138, %c0_139, %c0_140] : memref<7x1x8xf32, #tpu.memory_space<vmem>>, vector<1x1x8xf32>
    %142 = vector.shape_cast %141 : vector<1x1x8xf32> to vector<1x8xf32>
    %143 = vector.broadcast %142 : vector<1x8xf32> to vector<16x8xf32>
    %144 = arith.addf %140, %143 : vector<16x8xf32>
    %cst_141 = arith.constant 0.000000e+00 : f32
    %145 = vector.broadcast %cst_141 : f32 to vector<16x8xf32>
    %146 = arith.maximumf %144, %145 : vector<16x8xf32>
    %147 = arith.truncf %146 : vector<16x8xf32> to vector<16x8xbf16>
    %c0_142 = arith.constant 0 : index
    %c40 = arith.constant 40 : index
    %148 = vector.load %arg16[%c0_142, %c40] : memref<16x64xbf16, #tpu.memory_space<vmem>>, vector<16x8xbf16>
    tpu.vector_store %arg16[%c0_142, %c40], %147 {strides = array<i32>} : memref<16x64xbf16, #tpu.memory_space<vmem>>, vector<16x8xbf16>,
    %149 = vector.extract_strided_slice %6 {offsets = [0, 48], sizes = [16, 8], strides = [1, 1]} : vector<16x64xf32> to vector<16x8xf32>
    %150 = arith.addf %149, %146 : vector<16x8xf32>
    %c3_143 = arith.constant 3 : index
    %c0_144 = arith.constant 0 : index
    %151 = vector.load %arg14[%c3_143, %c0_144] : memref<22x8xf32, #tpu.memory_space<vmem>>, vector<16x8xf32>
    tpu.vector_store %arg14[%c3_143, %c0_144], %150 {strides = array<i32>} : memref<22x8xf32, #tpu.memory_space<vmem>>, vector<16x8xf32>,
    %c0_145 = arith.constant 0 : index
    %c0_146 = arith.constant 0 : index
    %152 = vector.load %arg14[%c0_145, %c0_146] : memref<22x8xf32, #tpu.memory_space<vmem>>, vector<16x8xf32>
    %153 = arith.truncf %152 : vector<16x8xf32> to vector<16x8xbf16>
    %c0_147 = arith.constant 0 : index
    %c0_148 = arith.constant 0 : index
    %154 = vector.load %arg15[%c0_147, %c0_148] : memref<16x24xbf16, #tpu.memory_space<vmem>>, vector<16x8xbf16>
    tpu.vector_store %arg15[%c0_147, %c0_148], %153 {strides = array<i32>} : memref<16x24xbf16, #tpu.memory_space<vmem>>, vector<16x8xbf16>,
    %c3_149 = arith.constant 3 : index
    %c0_150 = arith.constant 0 : index
    %155 = vector.load %arg14[%c3_149, %c0_150] : memref<22x8xf32, #tpu.memory_space<vmem>>, vector<16x8xf32>
    %156 = arith.truncf %155 : vector<16x8xf32> to vector<16x8xbf16>
    %c0_151 = arith.constant 0 : index
    %c8_152 = arith.constant 8 : index
    %157 = vector.load %arg15[%c0_151, %c8_152] : memref<16x24xbf16, #tpu.memory_space<vmem>>, vector<16x8xbf16>
    tpu.vector_store %arg15[%c0_151, %c8_152], %156 {strides = array<i32>} : memref<16x24xbf16, #tpu.memory_space<vmem>>, vector<16x8xbf16>,
    %c6_153 = arith.constant 6 : index
    %c0_154 = arith.constant 0 : index
    %158 = vector.load %arg14[%c6_153, %c0_154] : memref<22x8xf32, #tpu.memory_space<vmem>>, vector<16x8xf32>
    %159 = arith.truncf %158 : vector<16x8xf32> to vector<16x8xbf16>
    %c0_155 = arith.constant 0 : index
    %c16_156 = arith.constant 16 : index
    %160 = vector.load %arg15[%c0_155, %c16_156] : memref<16x24xbf16, #tpu.memory_space<vmem>>, vector<16x8xbf16>
    tpu.vector_store %arg15[%c0_155, %c16_156], %159 {strides = array<i32>} : memref<16x24xbf16, #tpu.memory_space<vmem>>, vector<16x8xbf16>,
    %c0_157 = arith.constant 0 : index
    %c0_158 = arith.constant 0 : index
    %161 = vector.load %arg15[%c0_157, %c0_158] : memref<16x24xbf16, #tpu.memory_space<vmem>>, vector<16x24xbf16>
    %c5 = arith.constant 5 : index
    %c0_159 = arith.constant 0 : index
    %c0_160 = arith.constant 0 : index
    %162 = vector.load %arg2[%c5, %c0_159, %c0_160] : memref<7x24x8xbf16, #tpu.memory_space<vmem>>, vector<1x24x8xbf16>
    %163 = vector.shape_cast %162 : vector<1x24x8xbf16> to vector<24x8xbf16>
    %cst_161 = arith.constant dense<0.000000e+00> : vector<16x8xf32>
    %164 = tpu.matmul %161, %163, %cst_161 {dimension_numbers = #tpu.dot_dimension_numbers<[1], [0], [0], [1], [0, 0, 1, 1], [], []>} : vector<16x24xbf16>, vector<24x8xbf16>, vector<16x8xf32> -> vector<16x8xf32>
    %c5_162 = arith.constant 5 : index
    %c0_163 = arith.constant 0 : index
    %c0_164 = arith.constant 0 : index
    %165 = vector.load %arg3[%c5_162, %c0_163, %c0_164] : memref<7x1x8xf32, #tpu.memory_space<vmem>>, vector<1x1x8xf32>
    %166 = vector.shape_cast %165 : vector<1x1x8xf32> to vector<1x8xf32>
    %167 = vector.broadcast %166 : vector<1x8xf32> to vector<16x8xf32>
    %168 = arith.mulf %164, %167 : vector<16x8xf32>
    %c5_165 = arith.constant 5 : index
    %c0_166 = arith.constant 0 : index
    %c0_167 = arith.constant 0 : index
    %169 = vector.load %arg4[%c5_165, %c0_166, %c0_167] : memref<7x1x8xf32, #tpu.memory_space<vmem>>, vector<1x1x8xf32>
    %170 = vector.shape_cast %169 : vector<1x1x8xf32> to vector<1x8xf32>
    %171 = vector.broadcast %170 : vector<1x8xf32> to vector<16x8xf32>
    %172 = arith.addf %168, %171 : vector<16x8xf32>
    %cst_168 = arith.constant 0.000000e+00 : f32
    %173 = vector.broadcast %cst_168 : f32 to vector<16x8xf32>
    %174 = arith.maximumf %172, %173 : vector<16x8xf32>
    %175 = arith.truncf %174 : vector<16x8xf32> to vector<16x8xbf16>
    %c0_169 = arith.constant 0 : index
    %c48 = arith.constant 48 : index
    %176 = vector.load %arg16[%c0_169, %c48] : memref<16x64xbf16, #tpu.memory_space<vmem>>, vector<16x8xbf16>
    tpu.vector_store %arg16[%c0_169, %c48], %175 {strides = array<i32>} : memref<16x64xbf16, #tpu.memory_space<vmem>>, vector<16x8xbf16>,
    %177 = vector.extract_strided_slice %6 {offsets = [0, 56], sizes = [16, 8], strides = [1, 1]} : vector<16x64xf32> to vector<16x8xf32>
    %178 = arith.addf %177, %174 : vector<16x8xf32>
    %c3_170 = arith.constant 3 : index
    %c0_171 = arith.constant 0 : index
    %179 = vector.load %arg14[%c3_170, %c0_171] : memref<22x8xf32, #tpu.memory_space<vmem>>, vector<16x8xf32>
    tpu.vector_store %arg14[%c3_170, %c0_171], %178 {strides = array<i32>} : memref<22x8xf32, #tpu.memory_space<vmem>>, vector<16x8xf32>,
    %c0_172 = arith.constant 0 : index
    %c0_173 = arith.constant 0 : index
    %180 = vector.load %arg14[%c0_172, %c0_173] : memref<22x8xf32, #tpu.memory_space<vmem>>, vector<16x8xf32>
    %181 = arith.truncf %180 : vector<16x8xf32> to vector<16x8xbf16>
    %c0_174 = arith.constant 0 : index
    %c0_175 = arith.constant 0 : index
    %182 = vector.load %arg15[%c0_174, %c0_175] : memref<16x24xbf16, #tpu.memory_space<vmem>>, vector<16x8xbf16>
    tpu.vector_store %arg15[%c0_174, %c0_175], %181 {strides = array<i32>} : memref<16x24xbf16, #tpu.memory_space<vmem>>, vector<16x8xbf16>,
    %c3_176 = arith.constant 3 : index
    %c0_177 = arith.constant 0 : index
    %183 = vector.load %arg14[%c3_176, %c0_177] : memref<22x8xf32, #tpu.memory_space<vmem>>, vector<16x8xf32>
    %184 = arith.truncf %183 : vector<16x8xf32> to vector<16x8xbf16>
    %c0_178 = arith.constant 0 : index
    %c8_179 = arith.constant 8 : index
    %185 = vector.load %arg15[%c0_178, %c8_179] : memref<16x24xbf16, #tpu.memory_space<vmem>>, vector<16x8xbf16>
    tpu.vector_store %arg15[%c0_178, %c8_179], %184 {strides = array<i32>} : memref<16x24xbf16, #tpu.memory_space<vmem>>, vector<16x8xbf16>,
    %c6_180 = arith.constant 6 : index
    %c0_181 = arith.constant 0 : index
    %186 = vector.load %arg14[%c6_180, %c0_181] : memref<22x8xf32, #tpu.memory_space<vmem>>, vector<16x8xf32>
    %187 = arith.truncf %186 : vector<16x8xf32> to vector<16x8xbf16>
    %c0_182 = arith.constant 0 : index
    %c16_183 = arith.constant 16 : index
    %188 = vector.load %arg15[%c0_182, %c16_183] : memref<16x24xbf16, #tpu.memory_space<vmem>>, vector<16x8xbf16>
    tpu.vector_store %arg15[%c0_182, %c16_183], %187 {strides = array<i32>} : memref<16x24xbf16, #tpu.memory_space<vmem>>, vector<16x8xbf16>,
    %c0_184 = arith.constant 0 : index
    %c0_185 = arith.constant 0 : index
    %189 = vector.load %arg15[%c0_184, %c0_185] : memref<16x24xbf16, #tpu.memory_space<vmem>>, vector<16x24xbf16>
    %c6_186 = arith.constant 6 : index
    %c0_187 = arith.constant 0 : index
    %c0_188 = arith.constant 0 : index
    %190 = vector.load %arg2[%c6_186, %c0_187, %c0_188] : memref<7x24x8xbf16, #tpu.memory_space<vmem>>, vector<1x24x8xbf16>
    %191 = vector.shape_cast %190 : vector<1x24x8xbf16> to vector<24x8xbf16>
    %cst_189 = arith.constant dense<0.000000e+00> : vector<16x8xf32>
    %192 = tpu.matmul %189, %191, %cst_189 {dimension_numbers = #tpu.dot_dimension_numbers<[1], [0], [0], [1], [0, 0, 1, 1], [], []>} : vector<16x24xbf16>, vector<24x8xbf16>, vector<16x8xf32> -> vector<16x8xf32>
    %c6_190 = arith.constant 6 : index
    %c0_191 = arith.constant 0 : index
    %c0_192 = arith.constant 0 : index
    %193 = vector.load %arg3[%c6_190, %c0_191, %c0_192] : memref<7x1x8xf32, #tpu.memory_space<vmem>>, vector<1x1x8xf32>
    %194 = vector.shape_cast %193 : vector<1x1x8xf32> to vector<1x8xf32>
    %195 = vector.broadcast %194 : vector<1x8xf32> to vector<16x8xf32>
    %196 = arith.mulf %192, %195 : vector<16x8xf32>
    %c6_193 = arith.constant 6 : index
    %c0_194 = arith.constant 0 : index
    %c0_195 = arith.constant 0 : index
    %197 = vector.load %arg4[%c6_193, %c0_194, %c0_195] : memref<7x1x8xf32, #tpu.memory_space<vmem>>, vector<1x1x8xf32>
    %198 = vector.shape_cast %197 : vector<1x1x8xf32> to vector<1x8xf32>
    %199 = vector.broadcast %198 : vector<1x8xf32> to vector<16x8xf32>
    %200 = arith.addf %196, %199 : vector<16x8xf32>
    %cst_196 = arith.constant 0.000000e+00 : f32
    %201 = vector.broadcast %cst_196 : f32 to vector<16x8xf32>
    %202 = arith.maximumf %200, %201 : vector<16x8xf32>
    %203 = arith.truncf %202 : vector<16x8xf32> to vector<16x8xbf16>
    %c0_197 = arith.constant 0 : index
    %c56 = arith.constant 56 : index
    %204 = vector.load %arg16[%c0_197, %c56] : memref<16x64xbf16, #tpu.memory_space<vmem>>, vector<16x8xbf16>
    tpu.vector_store %arg16[%c0_197, %c56], %203 {strides = array<i32>} : memref<16x64xbf16, #tpu.memory_space<vmem>>, vector<16x8xbf16>,
    %c0_198 = arith.constant 0 : index
    %c0_199 = arith.constant 0 : index
    %205 = vector.load %arg16[%c0_198, %c0_199] : memref<16x64xbf16, #tpu.memory_space<vmem>>, vector<16x64xbf16>
    %206 = arith.extf %205 : vector<16x64xbf16> to vector<16x64xf32>
    %cst_200 = arith.constant dense<0.000000e+00> : vector<64xf32>
    %207 = vector.multi_reduction <add>, %206, %cst_200 [0] : vector<16x64xf32> to vector<64xf32>
    %208 = vector.shape_cast %207 : vector<64xf32> to vector<1x64xf32>
    %cst_201 = arith.constant 1.600000e+01 : f32
    %209 = vector.broadcast %cst_201 : f32 to vector<1x64xf32>
    %210 = arith.divf %208, %209 : vector<1x64xf32>
    %211 = arith.truncf %210 : vector<1x64xf32> to vector<1x64xbf16>
    %c0_202 = arith.constant 0 : index
    %c0_203 = arith.constant 0 : index
    %212 = vector.load %arg5[%c0_202, %c0_203] : memref<64x32xbf16, #tpu.memory_space<vmem>>, vector<64x32xbf16>
    %cst_204 = arith.constant dense<0.000000e+00> : vector<1x32xf32>
    %213 = tpu.matmul %211, %212, %cst_204 {dimension_numbers = #tpu.dot_dimension_numbers<[1], [0], [0], [1], [0, 0, 1, 1], [], []>} : vector<1x64xbf16>, vector<64x32xbf16>, vector<1x32xf32> -> vector<1x32xf32>
    %c0_205 = arith.constant 0 : index
    %c0_206 = arith.constant 0 : index
    %214 = vector.load %arg6[%c0_205, %c0_206] : memref<1x32xf32, #tpu.memory_space<vmem>>, vector<1x32xf32>
    %215 = arith.addf %213, %214 : vector<1x32xf32>
    %cst_207 = arith.constant 0.000000e+00 : f32
    %216 = vector.broadcast %cst_207 : f32 to vector<1x32xf32>
    %217 = arith.maximumf %215, %216 : vector<1x32xf32>
    %218 = arith.truncf %217 : vector<1x32xf32> to vector<1x32xbf16>
    %c0_208 = arith.constant 0 : index
    %c0_209 = arith.constant 0 : index
    %219 = vector.load %arg7[%c0_208, %c0_209] : memref<32x64xbf16, #tpu.memory_space<vmem>>, vector<32x64xbf16>
    %cst_210 = arith.constant dense<0.000000e+00> : vector<1x64xf32>
    %220 = tpu.matmul %218, %219, %cst_210 {dimension_numbers = #tpu.dot_dimension_numbers<[1], [0], [0], [1], [0, 0, 1, 1], [], []>} : vector<1x32xbf16>, vector<32x64xbf16>, vector<1x64xf32> -> vector<1x64xf32>
    %c0_211 = arith.constant 0 : index
    %c0_212 = arith.constant 0 : index
    %221 = vector.load %arg8[%c0_211, %c0_212] : memref<1x64xf32, #tpu.memory_space<vmem>>, vector<1x64xf32>
    %222 = arith.addf %220, %221 : vector<1x64xf32>
    %223 = arith.negf %222 : vector<1x64xf32>
    %224 = math.exp %223 : vector<1x64xf32>
    %cst_213 = arith.constant 1.000000e+00 : f32
    %225 = vector.broadcast %cst_213 : f32 to vector<1x64xf32>
    %226 = arith.addf %225, %224 : vector<1x64xf32>
    %227 = arith.divf %225, %226 : vector<1x64xf32>
    %228 = arith.extf %205 : vector<16x64xbf16> to vector<16x64xf32>
    %229 = vector.broadcast %227 : vector<1x64xf32> to vector<16x64xf32>
    %230 = arith.mulf %228, %229 : vector<16x64xf32>
    %231 = arith.truncf %230 : vector<16x64xf32> to vector<16x64xbf16>
    %c0_214 = arith.constant 0 : index
    %c0_215 = arith.constant 0 : index
    %232 = vector.load %arg9[%c0_214, %c0_215] : memref<64x64xbf16, #tpu.memory_space<vmem>>, vector<64x64xbf16>
    %cst_216 = arith.constant dense<0.000000e+00> : vector<16x64xf32>
    %233 = tpu.matmul %231, %232, %cst_216 {dimension_numbers = #tpu.dot_dimension_numbers<[1], [0], [0], [1], [0, 0, 1, 1], [], []>} : vector<16x64xbf16>, vector<64x64xbf16>, vector<16x64xf32> -> vector<16x64xf32>
    %c0_217 = arith.constant 0 : index
    %c0_218 = arith.constant 0 : index
    %234 = vector.load %arg10[%c0_217, %c0_218] : memref<1x64xf32, #tpu.memory_space<vmem>>, vector<1x64xf32>
    %235 = vector.broadcast %234 : vector<1x64xf32> to vector<16x64xf32>
    %236 = arith.mulf %233, %235 : vector<16x64xf32>
    %c0_219 = arith.constant 0 : index
    %c0_220 = arith.constant 0 : index
    %237 = vector.load %arg11[%c0_219, %c0_220] : memref<1x64xf32, #tpu.memory_space<vmem>>, vector<1x64xf32>
    %238 = vector.broadcast %237 : vector<1x64xf32> to vector<16x64xf32>
    %239 = arith.addf %236, %238 : vector<16x64xf32>
    %cst_221 = arith.constant 0.000000e+00 : f32
    %240 = vector.broadcast %cst_221 : f32 to vector<16x64xf32>
    %241 = arith.maximumf %239, %240 : vector<16x64xf32>
    %242 = vector.shape_cast %241 : vector<16x64xf32> to vector<1x16x64xf32>
    %243 = arith.truncf %242 : vector<1x16x64xf32> to vector<1x16x64xbf16>
    %c0_222 = arith.constant 0 : index
    %c0_223 = arith.constant 0 : index
    %c0_224 = arith.constant 0 : index
    %244 = vector.load %arg12[%c0_222, %c0_223, %c0_224] : memref<1x16x64xbf16, #tpu.memory_space<vmem>>, vector<1x16x64xbf16>
    tpu.vector_store %arg12[%c0_222, %c0_223, %c0_224], %243 {strides = array<i32>} : memref<1x16x64xbf16, #tpu.memory_space<vmem>>, vector<1x16x64xbf16>,
    %245 = arith.addf %6, %241 : vector<16x64xf32>
    %246 = vector.shape_cast %245 : vector<16x64xf32> to vector<1x16x64xf32>
    %247 = arith.truncf %246 : vector<1x16x64xf32> to vector<1x16x64xbf16>
    %c0_225 = arith.constant 0 : index
    %c0_226 = arith.constant 0 : index
    %c0_227 = arith.constant 0 : index
    %248 = vector.load %arg13[%c0_225, %c0_226, %c0_227] : memref<1x16x64xbf16, #tpu.memory_space<vmem>>, vector<1x16x64xbf16>
    tpu.vector_store %arg13[%c0_225, %c0_226, %c0_227], %247 {strides = array<i32>} : memref<1x16x64xbf16, #tpu.memory_space<vmem>>, vector<1x16x64xbf16>,
    return
  }
  func.func @transform_0(%arg0: i32) -> (i32, i32, i32) {
    %c0_i32 = arith.constant 0 : i32
    %c0_i32_0 = arith.constant 0 : i32
    %c0_i32_1 = arith.constant 0 : i32
    return %arg0, %c0_i32, %c0_i32_0 : i32, i32, i32
  }
  func.func @transform_1(%arg0: i32) -> (i32, i32, i32) {
    %c0_i32 = arith.constant 0 : i32
    %c0_i32_0 = arith.constant 0 : i32
    %c0_i32_1 = arith.constant 0 : i32
    %c0_i32_2 = arith.constant 0 : i32
    return %c0_i32, %c0_i32_0, %c0_i32_1 : i32, i32, i32
  }
  func.func @transform_2(%arg0: i32) -> (i32, i32, i32) {
    %c0_i32 = arith.constant 0 : i32
    %c0_i32_0 = arith.constant 0 : i32
    %c0_i32_1 = arith.constant 0 : i32
    %c0_i32_2 = arith.constant 0 : i32
    return %c0_i32, %c0_i32_0, %c0_i32_1 : i32, i32, i32
  }
  func.func @transform_3(%arg0: i32) -> (i32, i32, i32) {
    %c0_i32 = arith.constant 0 : i32
    %c0_i32_0 = arith.constant 0 : i32
    %c0_i32_1 = arith.constant 0 : i32
    %c0_i32_2 = arith.constant 0 : i32
    return %c0_i32, %c0_i32_0, %c0_i32_1 : i32, i32, i32
  }
  func.func @transform_4(%arg0: i32) -> (i32, i32) {
    %c0_i32 = arith.constant 0 : i32
    %c0_i32_0 = arith.constant 0 : i32
    %c0_i32_1 = arith.constant 0 : i32
    return %c0_i32, %c0_i32_0 : i32, i32
  }
  func.func @transform_5(%arg0: i32) -> (i32, i32) {
    %c0_i32 = arith.constant 0 : i32
    %c0_i32_0 = arith.constant 0 : i32
    %c0_i32_1 = arith.constant 0 : i32
    return %c0_i32, %c0_i32_0 : i32, i32
  }
  func.func @transform_6(%arg0: i32) -> (i32, i32) {
    %c0_i32 = arith.constant 0 : i32
    %c0_i32_0 = arith.constant 0 : i32
    %c0_i32_1 = arith.constant 0 : i32
    return %c0_i32, %c0_i32_0 : i32, i32
  }
  func.func @transform_7(%arg0: i32) -> (i32, i32) {
    %c0_i32 = arith.constant 0 : i32
    %c0_i32_0 = arith.constant 0 : i32
    %c0_i32_1 = arith.constant 0 : i32
    return %c0_i32, %c0_i32_0 : i32, i32
  }
  func.func @transform_8(%arg0: i32) -> (i32, i32) {
    %c0_i32 = arith.constant 0 : i32
    %c0_i32_0 = arith.constant 0 : i32
    %c0_i32_1 = arith.constant 0 : i32
    return %c0_i32, %c0_i32_0 : i32, i32
  }
  func.func @transform_9(%arg0: i32) -> (i32, i32) {
    %c0_i32 = arith.constant 0 : i32
    %c0_i32_0 = arith.constant 0 : i32
    %c0_i32_1 = arith.constant 0 : i32
    return %c0_i32, %c0_i32_0 : i32, i32
  }
  func.func @transform_10(%arg0: i32) -> (i32, i32) {
    %c0_i32 = arith.constant 0 : i32
    %c0_i32_0 = arith.constant 0 : i32
    %c0_i32_1 = arith.constant 0 : i32
    return %c0_i32, %c0_i32_0 : i32, i32
  }
  func.func @transform_11(%arg0: i32) -> (i32, i32, i32) {
    %c0_i32 = arith.constant 0 : i32
    %c0_i32_0 = arith.constant 0 : i32
    %c0_i32_1 = arith.constant 0 : i32
    return %arg0, %c0_i32, %c0_i32_0 : i32, i32, i32
  }
  func.func @transform_12(%arg0: i32) -> (i32, i32, i32) {
    %c0_i32 = arith.constant 0 : i32
    %c0_i32_0 = arith.constant 0 : i32
    %c0_i32_1 = arith.constant 0 : i32
    return %arg0, %c0_i32, %c0_i32_0 : i32, i32, i32
  }
}

module attributes {stable_mosaic.version = 11 : i64} {
  func.func @_tail_kernel(%arg0: i32, %arg1: memref<1x16x64xbf16, #tpu.memory_space<vmem>>, %arg2: memref<1x16x64xbf16, #tpu.memory_space<vmem>>, %arg3: memref<1x16x64xbf16, #tpu.memory_space<vmem>>, %arg4: memref<64x192xbf16, #tpu.memory_space<vmem>>, %arg5: memref<64x192xbf16, #tpu.memory_space<vmem>>, %arg6: memref<64x192xbf16, #tpu.memory_space<vmem>>, %arg7: memref<1x192xf32, #tpu.memory_space<vmem>>, %arg8: memref<192x32xbf16, #tpu.memory_space<vmem>>, %arg9: memref<192x32xbf16, #tpu.memory_space<vmem>>, %arg10: memref<192x32xbf16, #tpu.memory_space<vmem>>, %arg11: memref<1x32xf32, #tpu.memory_space<vmem>>, %arg12: memref<32x32xbf16, #tpu.memory_space<vmem>>, %arg13: memref<1x32xf32, #tpu.memory_space<vmem>>, %arg14: memref<32x192xbf16, #tpu.memory_space<vmem>>, %arg15: memref<1x192xf32, #tpu.memory_space<vmem>>, %arg16: memref<1x192xf32, #tpu.memory_space<vmem>>, %arg17: memref<1x192xf32, #tpu.memory_space<vmem>>, %arg18: memref<1x192xf32, #tpu.memory_space<vmem>>, %arg19: memref<1x192xf32, #tpu.memory_space<vmem>>, %arg20: memref<192x32xbf16, #tpu.memory_space<vmem>>, %arg21: memref<192x32xbf16, #tpu.memory_space<vmem>>, %arg22: memref<1x32xf32, #tpu.memory_space<vmem>>, %arg23: memref<1x32xf32, #tpu.memory_space<vmem>>, %arg24: memref<1x32xf32, #tpu.memory_space<vmem>>, %arg25: memref<1x1x32xf32, #tpu.memory_space<vmem>>) attributes {dimension_semantics = [#tpu.dimension_semantics<parallel>], iteration_bounds = array<i64: 2>, scalar_prefetch = 0 : i64, scratch_operands = 0 : i64, tpu.core_type = #tpu.core_type<tc>, window_params = [{transform_indices = @transform_0, window_bounds = array<i64: 1, 16, 64>}, {transform_indices = @transform_1, window_bounds = array<i64: 1, 16, 64>}, {transform_indices = @transform_2, window_bounds = array<i64: 1, 16, 64>}, {pipeline_mode = #tpu.pipeline_mode<synchronous>, transform_indices = @transform_3, window_bounds = array<i64: 64, 192>}, {pipeline_mode = #tpu.pipeline_mode<synchronous>, transform_indices = @transform_4, window_bounds = array<i64: 64, 192>}, {pipeline_mode = #tpu.pipeline_mode<synchronous>, transform_indices = @transform_5, window_bounds = array<i64: 64, 192>}, {pipeline_mode = #tpu.pipeline_mode<synchronous>, transform_indices = @transform_6, window_bounds = array<i64: 1, 192>}, {pipeline_mode = #tpu.pipeline_mode<synchronous>, transform_indices = @transform_7, window_bounds = array<i64: 192, 32>}, {pipeline_mode = #tpu.pipeline_mode<synchronous>, transform_indices = @transform_8, window_bounds = array<i64: 192, 32>}, {pipeline_mode = #tpu.pipeline_mode<synchronous>, transform_indices = @transform_9, window_bounds = array<i64: 192, 32>}, {pipeline_mode = #tpu.pipeline_mode<synchronous>, transform_indices = @transform_10, window_bounds = array<i64: 1, 32>}, {pipeline_mode = #tpu.pipeline_mode<synchronous>, transform_indices = @transform_11, window_bounds = array<i64: 32, 32>}, {pipeline_mode = #tpu.pipeline_mode<synchronous>, transform_indices = @transform_12, window_bounds = array<i64: 1, 32>}, {pipeline_mode = #tpu.pipeline_mode<synchronous>, transform_indices = @transform_13, window_bounds = array<i64: 32, 192>}, {pipeline_mode = #tpu.pipeline_mode<synchronous>, transform_indices = @transform_14, window_bounds = array<i64: 1, 192>}, {pipeline_mode = #tpu.pipeline_mode<synchronous>, transform_indices = @transform_15, window_bounds = array<i64: 1, 192>}, {pipeline_mode = #tpu.pipeline_mode<synchronous>, transform_indices = @transform_16, window_bounds = array<i64: 1, 192>}, {pipeline_mode = #tpu.pipeline_mode<synchronous>, transform_indices = @transform_17, window_bounds = array<i64: 1, 192>}, {pipeline_mode = #tpu.pipeline_mode<synchronous>, transform_indices = @transform_18, window_bounds = array<i64: 1, 192>}, {pipeline_mode = #tpu.pipeline_mode<synchronous>, transform_indices = @transform_19, window_bounds = array<i64: 192, 32>}, {pipeline_mode = #tpu.pipeline_mode<synchronous>, transform_indices = @transform_20, window_bounds = array<i64: 192, 32>}, {pipeline_mode = #tpu.pipeline_mode<synchronous>, transform_indices = @transform_21, window_bounds = array<i64: 1, 32>}, {pipeline_mode = #tpu.pipeline_mode<synchronous>, transform_indices = @transform_22, window_bounds = array<i64: 1, 32>}, {pipeline_mode = #tpu.pipeline_mode<synchronous>, transform_indices = @transform_23, window_bounds = array<i64: 1, 32>}, {transform_indices = @transform_24, window_bounds = array<i64: 1, 1, 32>}]} {
    %c0 = arith.constant 0 : index
    %c0_0 = arith.constant 0 : index
    %c0_1 = arith.constant 0 : index
    %0 = vector.load %arg1[%c0, %c0_0, %c0_1] : memref<1x16x64xbf16, #tpu.memory_space<vmem>>, vector<1x16x64xbf16>
    %1 = vector.shape_cast %0 : vector<1x16x64xbf16> to vector<16x64xbf16>
    %c0_2 = arith.constant 0 : index
    %c0_3 = arith.constant 0 : index
    %2 = vector.load %arg4[%c0_2, %c0_3] : memref<64x192xbf16, #tpu.memory_space<vmem>>, vector<64x192xbf16>
    %cst = arith.constant dense<0.000000e+00> : vector<16x192xf32>
    %3 = tpu.matmul %1, %2, %cst {dimension_numbers = #tpu.dot_dimension_numbers<[1], [0], [0], [1], [0, 0, 1, 1], [], []>} : vector<16x64xbf16>, vector<64x192xbf16>, vector<16x192xf32> -> vector<16x192xf32>
    %c0_4 = arith.constant 0 : index
    %c0_5 = arith.constant 0 : index
    %c0_6 = arith.constant 0 : index
    %4 = vector.load %arg2[%c0_4, %c0_5, %c0_6] : memref<1x16x64xbf16, #tpu.memory_space<vmem>>, vector<1x16x64xbf16>
    %5 = vector.shape_cast %4 : vector<1x16x64xbf16> to vector<16x64xbf16>
    %c0_7 = arith.constant 0 : index
    %c0_8 = arith.constant 0 : index
    %6 = vector.load %arg5[%c0_7, %c0_8] : memref<64x192xbf16, #tpu.memory_space<vmem>>, vector<64x192xbf16>
    %cst_9 = arith.constant dense<0.000000e+00> : vector<16x192xf32>
    %7 = tpu.matmul %5, %6, %cst_9 {dimension_numbers = #tpu.dot_dimension_numbers<[1], [0], [0], [1], [0, 0, 1, 1], [], []>} : vector<16x64xbf16>, vector<64x192xbf16>, vector<16x192xf32> -> vector<16x192xf32>
    %8 = arith.addf %3, %7 : vector<16x192xf32>
    %c0_10 = arith.constant 0 : index
    %c0_11 = arith.constant 0 : index
    %c0_12 = arith.constant 0 : index
    %9 = vector.load %arg3[%c0_10, %c0_11, %c0_12] : memref<1x16x64xbf16, #tpu.memory_space<vmem>>, vector<1x16x64xbf16>
    %10 = vector.shape_cast %9 : vector<1x16x64xbf16> to vector<16x64xbf16>
    %c0_13 = arith.constant 0 : index
    %c0_14 = arith.constant 0 : index
    %11 = vector.load %arg6[%c0_13, %c0_14] : memref<64x192xbf16, #tpu.memory_space<vmem>>, vector<64x192xbf16>
    %cst_15 = arith.constant dense<0.000000e+00> : vector<16x192xf32>
    %12 = tpu.matmul %10, %11, %cst_15 {dimension_numbers = #tpu.dot_dimension_numbers<[1], [0], [0], [1], [0, 0, 1, 1], [], []>} : vector<16x64xbf16>, vector<64x192xbf16>, vector<16x192xf32> -> vector<16x192xf32>
    %13 = arith.addf %8, %12 : vector<16x192xf32>
    %c0_16 = arith.constant 0 : index
    %c0_17 = arith.constant 0 : index
    %14 = vector.load %arg7[%c0_16, %c0_17] : memref<1x192xf32, #tpu.memory_space<vmem>>, vector<1x192xf32>
    %15 = vector.broadcast %14 : vector<1x192xf32> to vector<16x192xf32>
    %16 = arith.addf %13, %15 : vector<16x192xf32>
    %cst_18 = arith.constant 0.000000e+00 : f32
    %17 = vector.broadcast %cst_18 : f32 to vector<16x192xf32>
    %18 = arith.maximumf %16, %17 : vector<16x192xf32>
    %cst_19 = arith.constant dense<0.000000e+00> : vector<192xf32>
    %19 = vector.multi_reduction <add>, %18, %cst_19 [0] : vector<16x192xf32> to vector<192xf32>
    %20 = vector.shape_cast %19 : vector<192xf32> to vector<1x192xf32>
    %cst_20 = arith.constant 1.600000e+01 : f32
    %21 = vector.broadcast %cst_20 : f32 to vector<1x192xf32>
    %22 = arith.divf %20, %21 : vector<1x192xf32>
    %23 = vector.broadcast %22 : vector<1x192xf32> to vector<16x192xf32>
    %24 = arith.subf %18, %23 : vector<16x192xf32>
    %25 = arith.mulf %24, %24 : vector<16x192xf32>
    %cst_21 = arith.constant dense<0.000000e+00> : vector<192xf32>
    %26 = vector.multi_reduction <add>, %25, %cst_21 [0] : vector<16x192xf32> to vector<192xf32>
    %27 = vector.shape_cast %26 : vector<192xf32> to vector<1x192xf32>
    %cst_22 = arith.constant 0.0666666701 : f32
    %28 = vector.broadcast %cst_22 : f32 to vector<1x192xf32>
    %29 = arith.mulf %27, %28 : vector<1x192xf32>
    %30 = math.sqrt %29 : vector<1x192xf32>
    %cst_23 = arith.constant 9.99999974E-6 : f32
    %31 = vector.broadcast %cst_23 : f32 to vector<1x192xf32>
    %32 = arith.maximumf %30, %31 : vector<1x192xf32>
    %33 = arith.truncf %18 : vector<16x192xf32> to vector<16x192xbf16>
    %c0_24 = arith.constant 0 : index
    %c0_25 = arith.constant 0 : index
    %34 = vector.load %arg8[%c0_24, %c0_25] : memref<192x32xbf16, #tpu.memory_space<vmem>>, vector<192x32xbf16>
    %cst_26 = arith.constant dense<0.000000e+00> : vector<16x32xf32>
    %35 = tpu.matmul %33, %34, %cst_26 {dimension_numbers = #tpu.dot_dimension_numbers<[1], [0], [0], [1], [0, 0, 1, 1], [], []>} : vector<16x192xbf16>, vector<192x32xbf16>, vector<16x32xf32> -> vector<16x32xf32>
    %36 = arith.truncf %22 : vector<1x192xf32> to vector<1x192xbf16>
    %c0_27 = arith.constant 0 : index
    %c0_28 = arith.constant 0 : index
    %37 = vector.load %arg9[%c0_27, %c0_28] : memref<192x32xbf16, #tpu.memory_space<vmem>>, vector<192x32xbf16>
    %cst_29 = arith.constant dense<0.000000e+00> : vector<1x32xf32>
    %38 = tpu.matmul %36, %37, %cst_29 {dimension_numbers = #tpu.dot_dimension_numbers<[1], [0], [0], [1], [0, 0, 1, 1], [], []>} : vector<1x192xbf16>, vector<192x32xbf16>, vector<1x32xf32> -> vector<1x32xf32>
    %39 = vector.broadcast %38 : vector<1x32xf32> to vector<16x32xf32>
    %40 = arith.addf %35, %39 : vector<16x32xf32>
    %41 = arith.truncf %32 : vector<1x192xf32> to vector<1x192xbf16>
    %c0_30 = arith.constant 0 : index
    %c0_31 = arith.constant 0 : index
    %42 = vector.load %arg10[%c0_30, %c0_31] : memref<192x32xbf16, #tpu.memory_space<vmem>>, vector<192x32xbf16>
    %cst_32 = arith.constant dense<0.000000e+00> : vector<1x32xf32>
    %43 = tpu.matmul %41, %42, %cst_32 {dimension_numbers = #tpu.dot_dimension_numbers<[1], [0], [0], [1], [0, 0, 1, 1], [], []>} : vector<1x192xbf16>, vector<192x32xbf16>, vector<1x32xf32> -> vector<1x32xf32>
    %44 = vector.broadcast %43 : vector<1x32xf32> to vector<16x32xf32>
    %45 = arith.addf %40, %44 : vector<16x32xf32>
    %c0_33 = arith.constant 0 : index
    %c0_34 = arith.constant 0 : index
    %46 = vector.load %arg11[%c0_33, %c0_34] : memref<1x32xf32, #tpu.memory_space<vmem>>, vector<1x32xf32>
    %47 = vector.broadcast %46 : vector<1x32xf32> to vector<16x32xf32>
    %48 = arith.addf %45, %47 : vector<16x32xf32>
    %cst_35 = arith.constant 0.000000e+00 : f32
    %49 = vector.broadcast %cst_35 : f32 to vector<16x32xf32>
    %50 = arith.maximumf %48, %49 : vector<16x32xf32>
    %51 = arith.truncf %50 : vector<16x32xf32> to vector<16x32xbf16>
    %c0_36 = arith.constant 0 : index
    %c0_37 = arith.constant 0 : index
    %52 = vector.load %arg12[%c0_36, %c0_37] : memref<32x32xbf16, #tpu.memory_space<vmem>>, vector<32x32xbf16>
    %cst_38 = arith.constant dense<0.000000e+00> : vector<16x32xf32>
    %53 = tpu.matmul %51, %52, %cst_38 {dimension_numbers = #tpu.dot_dimension_numbers<[1], [0], [0], [1], [0, 0, 1, 1], [], []>} : vector<16x32xbf16>, vector<32x32xbf16>, vector<16x32xf32> -> vector<16x32xf32>
    %c0_39 = arith.constant 0 : index
    %c0_40 = arith.constant 0 : index
    %54 = vector.load %arg13[%c0_39, %c0_40] : memref<1x32xf32, #tpu.memory_space<vmem>>, vector<1x32xf32>
    %55 = vector.broadcast %54 : vector<1x32xf32> to vector<16x32xf32>
    %56 = arith.addf %53, %55 : vector<16x32xf32>
    %57 = math.tanh %56 : vector<16x32xf32>
    %58 = arith.truncf %57 : vector<16x32xf32> to vector<16x32xbf16>
    %c0_41 = arith.constant 0 : index
    %c0_42 = arith.constant 0 : index
    %59 = vector.load %arg14[%c0_41, %c0_42] : memref<32x192xbf16, #tpu.memory_space<vmem>>, vector<32x192xbf16>
    %cst_43 = arith.constant dense<0.000000e+00> : vector<16x192xf32>
    %60 = tpu.matmul %58, %59, %cst_43 {dimension_numbers = #tpu.dot_dimension_numbers<[1], [0], [0], [1], [0, 0, 1, 1], [], []>} : vector<16x32xbf16>, vector<32x192xbf16>, vector<16x192xf32> -> vector<16x192xf32>
    %c0_44 = arith.constant 0 : index
    %c0_45 = arith.constant 0 : index
    %61 = vector.load %arg15[%c0_44, %c0_45] : memref<1x192xf32, #tpu.memory_space<vmem>>, vector<1x192xf32>
    %62 = vector.broadcast %61 : vector<1x192xf32> to vector<16x192xf32>
    %63 = arith.addf %60, %62 : vector<16x192xf32>
    %cst_46 = arith.constant dense<0xFF800000> : vector<192xf32>
    %64 = vector.multi_reduction <maximumf>, %63, %cst_46 [0] : vector<16x192xf32> to vector<192xf32>
    %65 = vector.shape_cast %64 : vector<192xf32> to vector<1x192xf32>
    %66 = vector.broadcast %65 : vector<1x192xf32> to vector<16x192xf32>
    %67 = arith.subf %63, %66 : vector<16x192xf32>
    %68 = math.exp %67 : vector<16x192xf32>
    %cst_47 = arith.constant dense<0.000000e+00> : vector<192xf32>
    %69 = vector.multi_reduction <add>, %68, %cst_47 [0] : vector<16x192xf32> to vector<192xf32>
    %70 = vector.shape_cast %69 : vector<192xf32> to vector<1x192xf32>
    %cst_48 = arith.constant 1.000000e+00 : f32
    %71 = vector.broadcast %cst_48 : f32 to vector<1x192xf32>
    %72 = arith.divf %71, %70 : vector<1x192xf32>
    %73 = vector.broadcast %72 : vector<1x192xf32> to vector<16x192xf32>
    %74 = arith.mulf %68, %73 : vector<16x192xf32>
    %75 = arith.mulf %18, %74 : vector<16x192xf32>
    %cst_49 = arith.constant dense<0.000000e+00> : vector<192xf32>
    %76 = vector.multi_reduction <add>, %75, %cst_49 [0] : vector<16x192xf32> to vector<192xf32>
    %77 = vector.shape_cast %76 : vector<192xf32> to vector<1x192xf32>
    %78 = arith.mulf %18, %18 : vector<16x192xf32>
    %79 = arith.mulf %78, %74 : vector<16x192xf32>
    %cst_50 = arith.constant dense<0.000000e+00> : vector<192xf32>
    %80 = vector.multi_reduction <add>, %79, %cst_50 [0] : vector<16x192xf32> to vector<192xf32>
    %81 = vector.shape_cast %80 : vector<192xf32> to vector<1x192xf32>
    %82 = arith.mulf %77, %77 : vector<1x192xf32>
    %83 = arith.subf %81, %82 : vector<1x192xf32>
    %cst_51 = arith.constant 9.99999974E-6 : f32
    %84 = vector.broadcast %cst_51 : f32 to vector<1x192xf32>
    %85 = arith.maximumf %83, %84 : vector<1x192xf32>
    %86 = math.sqrt %85 : vector<1x192xf32>
    %c0_52 = arith.constant 0 : index
    %c0_53 = arith.constant 0 : index
    %87 = vector.load %arg16[%c0_52, %c0_53] : memref<1x192xf32, #tpu.memory_space<vmem>>, vector<1x192xf32>
    %88 = arith.mulf %77, %87 : vector<1x192xf32>
    %c0_54 = arith.constant 0 : index
    %c0_55 = arith.constant 0 : index
    %89 = vector.load %arg17[%c0_54, %c0_55] : memref<1x192xf32, #tpu.memory_space<vmem>>, vector<1x192xf32>
    %90 = arith.addf %88, %89 : vector<1x192xf32>
    %c0_56 = arith.constant 0 : index
    %c0_57 = arith.constant 0 : index
    %91 = vector.load %arg18[%c0_56, %c0_57] : memref<1x192xf32, #tpu.memory_space<vmem>>, vector<1x192xf32>
    %92 = arith.mulf %86, %91 : vector<1x192xf32>
    %c0_58 = arith.constant 0 : index
    %c0_59 = arith.constant 0 : index
    %93 = vector.load %arg19[%c0_58, %c0_59] : memref<1x192xf32, #tpu.memory_space<vmem>>, vector<1x192xf32>
    %94 = arith.addf %92, %93 : vector<1x192xf32>
    %95 = arith.truncf %90 : vector<1x192xf32> to vector<1x192xbf16>
    %c0_60 = arith.constant 0 : index
    %c0_61 = arith.constant 0 : index
    %96 = vector.load %arg20[%c0_60, %c0_61] : memref<192x32xbf16, #tpu.memory_space<vmem>>, vector<192x32xbf16>
    %cst_62 = arith.constant dense<0.000000e+00> : vector<1x32xf32>
    %97 = tpu.matmul %95, %96, %cst_62 {dimension_numbers = #tpu.dot_dimension_numbers<[1], [0], [0], [1], [0, 0, 1, 1], [], []>} : vector<1x192xbf16>, vector<192x32xbf16>, vector<1x32xf32> -> vector<1x32xf32>
    %98 = arith.truncf %94 : vector<1x192xf32> to vector<1x192xbf16>
    %c0_63 = arith.constant 0 : index
    %c0_64 = arith.constant 0 : index
    %99 = vector.load %arg21[%c0_63, %c0_64] : memref<192x32xbf16, #tpu.memory_space<vmem>>, vector<192x32xbf16>
    %cst_65 = arith.constant dense<0.000000e+00> : vector<1x32xf32>
    %100 = tpu.matmul %98, %99, %cst_65 {dimension_numbers = #tpu.dot_dimension_numbers<[1], [0], [0], [1], [0, 0, 1, 1], [], []>} : vector<1x192xbf16>, vector<192x32xbf16>, vector<1x32xf32> -> vector<1x32xf32>
    %101 = arith.addf %97, %100 : vector<1x32xf32>
    %c0_66 = arith.constant 0 : index
    %c0_67 = arith.constant 0 : index
    %102 = vector.load %arg22[%c0_66, %c0_67] : memref<1x32xf32, #tpu.memory_space<vmem>>, vector<1x32xf32>
    %103 = arith.addf %101, %102 : vector<1x32xf32>
    %c0_68 = arith.constant 0 : index
    %c0_69 = arith.constant 0 : index
    %104 = vector.load %arg23[%c0_68, %c0_69] : memref<1x32xf32, #tpu.memory_space<vmem>>, vector<1x32xf32>
    %105 = arith.mulf %103, %104 : vector<1x32xf32>
    %c0_70 = arith.constant 0 : index
    %c0_71 = arith.constant 0 : index
    %106 = vector.load %arg24[%c0_70, %c0_71] : memref<1x32xf32, #tpu.memory_space<vmem>>, vector<1x32xf32>
    %107 = arith.addf %105, %106 : vector<1x32xf32>
    %108 = vector.shape_cast %107 : vector<1x32xf32> to vector<1x1x32xf32>
    %c0_72 = arith.constant 0 : index
    %c0_73 = arith.constant 0 : index
    %c0_74 = arith.constant 0 : index
    %109 = vector.load %arg25[%c0_72, %c0_73, %c0_74] : memref<1x1x32xf32, #tpu.memory_space<vmem>>, vector<1x1x32xf32>
    tpu.vector_store %arg25[%c0_72, %c0_73, %c0_74], %108 {strides = array<i32>} : memref<1x1x32xf32, #tpu.memory_space<vmem>>, vector<1x1x32xf32>,
    return
  }
  func.func @transform_0(%arg0: i32) -> (i32, i32, i32) {
    %c0_i32 = arith.constant 0 : i32
    %c0_i32_0 = arith.constant 0 : i32
    %c0_i32_1 = arith.constant 0 : i32
    return %arg0, %c0_i32, %c0_i32_0 : i32, i32, i32
  }
  func.func @transform_1(%arg0: i32) -> (i32, i32, i32) {
    %c0_i32 = arith.constant 0 : i32
    %c0_i32_0 = arith.constant 0 : i32
    %c0_i32_1 = arith.constant 0 : i32
    return %arg0, %c0_i32, %c0_i32_0 : i32, i32, i32
  }
  func.func @transform_2(%arg0: i32) -> (i32, i32, i32) {
    %c0_i32 = arith.constant 0 : i32
    %c0_i32_0 = arith.constant 0 : i32
    %c0_i32_1 = arith.constant 0 : i32
    return %arg0, %c0_i32, %c0_i32_0 : i32, i32, i32
  }
  func.func @transform_3(%arg0: i32) -> (i32, i32) {
    %c0_i32 = arith.constant 0 : i32
    %c0_i32_0 = arith.constant 0 : i32
    %c0_i32_1 = arith.constant 0 : i32
    return %c0_i32, %c0_i32_0 : i32, i32
  }
  func.func @transform_4(%arg0: i32) -> (i32, i32) {
    %c0_i32 = arith.constant 0 : i32
    %c0_i32_0 = arith.constant 0 : i32
    %c0_i32_1 = arith.constant 0 : i32
    return %c0_i32, %c0_i32_0 : i32, i32
  }
  func.func @transform_5(%arg0: i32) -> (i32, i32) {
    %c0_i32 = arith.constant 0 : i32
    %c0_i32_0 = arith.constant 0 : i32
    %c0_i32_1 = arith.constant 0 : i32
    return %c0_i32, %c0_i32_0 : i32, i32
  }
  func.func @transform_6(%arg0: i32) -> (i32, i32) {
    %c0_i32 = arith.constant 0 : i32
    %c0_i32_0 = arith.constant 0 : i32
    %c0_i32_1 = arith.constant 0 : i32
    return %c0_i32, %c0_i32_0 : i32, i32
  }
  func.func @transform_7(%arg0: i32) -> (i32, i32) {
    %c0_i32 = arith.constant 0 : i32
    %c0_i32_0 = arith.constant 0 : i32
    %c0_i32_1 = arith.constant 0 : i32
    return %c0_i32, %c0_i32_0 : i32, i32
  }
  func.func @transform_8(%arg0: i32) -> (i32, i32) {
    %c0_i32 = arith.constant 0 : i32
    %c0_i32_0 = arith.constant 0 : i32
    %c0_i32_1 = arith.constant 0 : i32
    return %c0_i32, %c0_i32_0 : i32, i32
  }
  func.func @transform_9(%arg0: i32) -> (i32, i32) {
    %c0_i32 = arith.constant 0 : i32
    %c0_i32_0 = arith.constant 0 : i32
    %c0_i32_1 = arith.constant 0 : i32
    return %c0_i32, %c0_i32_0 : i32, i32
  }
  func.func @transform_10(%arg0: i32) -> (i32, i32) {
    %c0_i32 = arith.constant 0 : i32
    %c0_i32_0 = arith.constant 0 : i32
    %c0_i32_1 = arith.constant 0 : i32
    return %c0_i32, %c0_i32_0 : i32, i32
  }
  func.func @transform_11(%arg0: i32) -> (i32, i32) {
    %c0_i32 = arith.constant 0 : i32
    %c0_i32_0 = arith.constant 0 : i32
    %c0_i32_1 = arith.constant 0 : i32
    return %c0_i32, %c0_i32_0 : i32, i32
  }
  func.func @transform_12(%arg0: i32) -> (i32, i32) {
    %c0_i32 = arith.constant 0 : i32
    %c0_i32_0 = arith.constant 0 : i32
    %c0_i32_1 = arith.constant 0 : i32
    return %c0_i32, %c0_i32_0 : i32, i32
  }
  func.func @transform_13(%arg0: i32) -> (i32, i32) {
    %c0_i32 = arith.constant 0 : i32
    %c0_i32_0 = arith.constant 0 : i32
    %c0_i32_1 = arith.constant 0 : i32
    return %c0_i32, %c0_i32_0 : i32, i32
  }
  func.func @transform_14(%arg0: i32) -> (i32, i32) {
    %c0_i32 = arith.constant 0 : i32
    %c0_i32_0 = arith.constant 0 : i32
    %c0_i32_1 = arith.constant 0 : i32
    return %c0_i32, %c0_i32_0 : i32, i32
  }
  func.func @transform_15(%arg0: i32) -> (i32, i32) {
    %c0_i32 = arith.constant 0 : i32
    %c0_i32_0 = arith.constant 0 : i32
    %c0_i32_1 = arith.constant 0 : i32
    return %c0_i32, %c0_i32_0 : i32, i32
  }
  func.func @transform_16(%arg0: i32) -> (i32, i32) {
    %c0_i32 = arith.constant 0 : i32
    %c0_i32_0 = arith.constant 0 : i32
    %c0_i32_1 = arith.constant 0 : i32
    return %c0_i32, %c0_i32_0 : i32, i32
  }
  func.func @transform_17(%arg0: i32) -> (i32, i32) {
    %c0_i32 = arith.constant 0 : i32
    %c0_i32_0 = arith.constant 0 : i32
    %c0_i32_1 = arith.constant 0 : i32
    return %c0_i32, %c0_i32_0 : i32, i32
  }
  func.func @transform_18(%arg0: i32) -> (i32, i32) {
    %c0_i32 = arith.constant 0 : i32
    %c0_i32_0 = arith.constant 0 : i32
    %c0_i32_1 = arith.constant 0 : i32
    return %c0_i32, %c0_i32_0 : i32, i32
  }
  func.func @transform_19(%arg0: i32) -> (i32, i32) {
    %c0_i32 = arith.constant 0 : i32
    %c0_i32_0 = arith.constant 0 : i32
    %c0_i32_1 = arith.constant 0 : i32
    return %c0_i32, %c0_i32_0 : i32, i32
  }
  func.func @transform_20(%arg0: i32) -> (i32, i32) {
    %c0_i32 = arith.constant 0 : i32
    %c0_i32_0 = arith.constant 0 : i32
    %c0_i32_1 = arith.constant 0 : i32
    return %c0_i32, %c0_i32_0 : i32, i32
  }
  func.func @transform_21(%arg0: i32) -> (i32, i32) {
    %c0_i32 = arith.constant 0 : i32
    %c0_i32_0 = arith.constant 0 : i32
    %c0_i32_1 = arith.constant 0 : i32
    return %c0_i32, %c0_i32_0 : i32, i32
  }
  func.func @transform_22(%arg0: i32) -> (i32, i32) {
    %c0_i32 = arith.constant 0 : i32
    %c0_i32_0 = arith.constant 0 : i32
    %c0_i32_1 = arith.constant 0 : i32
    return %c0_i32, %c0_i32_0 : i32, i32
  }
  func.func @transform_23(%arg0: i32) -> (i32, i32) {
    %c0_i32 = arith.constant 0 : i32
    %c0_i32_0 = arith.constant 0 : i32
    %c0_i32_1 = arith.constant 0 : i32
    return %c0_i32, %c0_i32_0 : i32, i32
  }
  func.func @transform_24(%arg0: i32) -> (i32, i32, i32) {
    %c0_i32 = arith.constant 0 : i32
    %c0_i32_0 = arith.constant 0 : i32
    %c0_i32_1 = arith.constant 0 : i32
    return %arg0, %c0_i32, %c0_i32_0 : i32, i32, i32
  }
}

</mosaic_0001>

<llo_original>
// kernel: ecapa_forward.5
$region0: #{ecapa_forward.5}
  #allocation0 [shape = 'u32[]', space=smem, size = 0x4, offset = 0x4, fixed_abs, tag = 'smem constant byte address 0x4 - core index']
  #allocation1 [shape = 'u32[144,128]{1,0:T(1,128)}', space=vmem, size = 0x12000, scoped, tag = 'internal scratch']
  #allocation2 [shape = 'f32[20,32]{1,0:T(8,128)}', space=vmem, size = 0x3000, scoped, tag = 'scratch operand']
  #allocation3 [shape = 'bf16[16,160]{1,0:T(16,128)(2,1)}', space=vmem, size = 0x2000, scoped, tag = 'scratch operand']
  %s0 = inlined_call_operand.vmem [shape: bf16[2,16,32], index: 0, kind: input, shape index: {}]
  %s1 = inlined_call_operand.vmem [shape: bf16[160,64], index: 1, kind: input, shape index: {}]
  %s2 = inlined_call_operand.vmem [shape: f32[1,64], index: 2, kind: input, shape index: {}]
  %s3 = inlined_call_operand.vmem [shape: f32[1,64], index: 3, kind: input, shape index: {}]
  %s4 = inlined_call_operand.vmem [shape: bf16[2,16,64], index: 4, kind: output, shape index: {}]
  %s5 = sld [smem:[#allocation0]]
  $region49: #{ecapa_forward.5} parent=0
    _
  %s7 = ssub.s32 1, %s5
  %s8 = scalar_select 0, %s7, %s5
  loop: start=0, step=1, limit=4
  $region2: #{ecapa_forward.5} parent=0 // loop_pre_header
    _
  $region3: #{ecapa_forward.5} parent=0 // loop_header
    %s10 = sphi 0, %s14
    %p11 = scmp.ge.s32.totalorder %s10, 4
    %s20 = sphi 0, %s22
    %s23 = sphi 0, %s20
    %s24 = sphi 0, %s23
    %s40 = sphi 0, %s24
    %s44 = sphi 0, %s44
    %s46 = sphi 0, %s44
    %s47 = sphi 0, %s46
    %s61 = sphi 0, %s47
    %s65 = sphi 0, %s65
    %s67 = sphi 0, %s65
    %s68 = sphi 0, %s67
    %s82 = sphi 0, %s68
    %s86 = sphi 0, %s86
    %s88 = sphi 0, %s86
    %s89 = sphi 0, %s88
    %s103 = sphi 0, %s89
    %s109 = sphi 0, %s111
    %s112 = sphi 0, %s109
    %s113 = sphi 0, %s112
    %s129 = sphi 0, %s113
  $region4: #{ecapa_forward.5} parent=0 // loop_header_branch
    %13 = sbr.rel (%p11) target = $region8
  $region5: #{ecapa_forward.5} parent=0 // loop_body
    %s15 = ssub.s32 %s10, 1
    %s16 = ssub.s32 %s10, 2
    %s17 = sadd.s32 %s10, 1
    %s18 = ssub.s32 %s10, %s17
    %p19 = scmp.eq.s32.totalorder %s18, 0
    %s21 = sadd.s32 %s20, 1
    %s22 = scalar_select %p19, %s20, %s21
    %p25 = pneg %p19
    %p26 = scmp.eq.s32.totalorder %s10, 1
    %p27 = por %p25, %p26
    %p28 = scmp.ne.s32.totalorder %s20, %s23
    %p29 = scmp.eq.s32.totalorder %s10, 0
    %p30 = por %p28, %p29
    %p31 = scmp.ne.s32.totalorder %s20, %s23
    %p32 = scmp.eq.s32.totalorder %s15, 1
    %p33 = por %p31, %p32
    %p34 = scmp.ne.s32.totalorder %s23, %s24
    %p35 = scmp.eq.s32.totalorder %s15, 0
    %p36 = por %p34, %p35
    %p37 = scmp.ne.s32.totalorder %s23, %s24
    %p38 = scmp.eq.s32.totalorder %s16, 1
    %p39 = por %p37, %p38
    %p41 = scmp.ne.s32.totalorder %s24, %s40
    %p42 = scmp.eq.s32.totalorder %s16, 0
    %p43 = por %p41, %p42
    %s45 = sadd.s32 %s44, 1
    %p48 = scmp.eq.s32.totalorder %s10, 1
    %p49 = scmp.ne.s32.totalorder %s44, %s46
    %p50 = scmp.eq.s32.totalorder %s10, 0
    %p51 = por %p49, %p50
    %p52 = scmp.ne.s32.totalorder %s44, %s46
    %p53 = scmp.eq.s32.totalorder %s15, 1
    %p54 = por %p52, %p53
    %p55 = scmp.ne.s32.totalorder %s46, %s47
    %p56 = scmp.eq.s32.totalorder %s15, 0
    %p57 = por %p55, %p56
    %p58 = scmp.ne.s32.totalorder %s46, %s47
    %p59 = scmp.eq.s32.totalorder %s16, 1
    %p60 = por %p58, %p59
    %p62 = scmp.ne.s32.totalorder %s47, %s61
    %p63 = scmp.eq.s32.totalorder %s16, 0
    %p64 = por %p62, %p63
    %s66 = sadd.s32 %s65, 1
    %p69 = scmp.eq.s32.totalorder %s10, 1
    %p70 = scmp.ne.s32.totalorder %s65, %s67
    %p71 = scmp.eq.s32.totalorder %s10, 0
    %p72 = por %p70, %p71
    %p73 = scmp.ne.s32.totalorder %s65, %s67
    %p74 = scmp.eq.s32.totalorder %s15, 1
    %p75 = por %p73, %p74
    %p76 = scmp.ne.s32.totalorder %s67, %s68
    %p77 = scmp.eq.s32.totalorder %s15, 0
    %p78 = por %p76, %p77
    %p79 = scmp.ne.s32.totalorder %s67, %s68
    %p80 = scmp.eq.s32.totalorder %s16, 1
    %p81 = por %p79, %p80
    %p83 = scmp.ne.s32.totalorder %s68, %s82
    %p84 = scmp.eq.s32.totalorder %s16, 0
    %p85 = por %p83, %p84
    %s87 = sadd.s32 %s86, 1
    %p90 = scmp.eq.s32.totalorder %s10, 1
    %p91 = scmp.ne.s32.totalorder %s86, %s88
    %p92 = scmp.eq.s32.totalorder %s10, 0
    %p93 = por %p91, %p92
    %p94 = scmp.ne.s32.totalorder %s86, %s88
    %p95 = scmp.eq.s32.totalorder %s15, 1
    %p96 = por %p94, %p95
    %p97 = scmp.ne.s32.totalorder %s88, %s89
    %p98 = scmp.eq.s32.totalorder %s15, 0
    %p99 = por %p97, %p98
    %p100 = scmp.ne.s32.totalorder %s88, %s89
    %p101 = scmp.eq.s32.totalorder %s16, 1
    %p102 = por %p100, %p101
    %p104 = scmp.ne.s32.totalorder %s89, %s103
    %p105 = scmp.eq.s32.totalorder %s16, 0
    %p106 = por %p104, %p105
    %s107 = ssub.s32 %s10, %s17
    %p108 = scmp.eq.s32.totalorder %s107, 0
    %s110 = sadd.s32 %s109, 1
    %s111 = scalar_select %p108, %s109, %s110
    %p114 = pneg %p108
    %p115 = scmp.eq.s32.totalorder %s10, 1
    %p116 = por %p114, %p115
    %p117 = scmp.ne.s32.totalorder %s109, %s112
    %p118 = scmp.eq.s32.totalorder %s10, 0
    %p119 = por %p117, %p118
    %p120 = scmp.ne.s32.totalorder %s109, %s112
    %p121 = scmp.eq.s32.totalorder %s15, 1
    %p122 = por %p120, %p121
    %p123 = scmp.ne.s32.totalorder %s112, %s113
    %p124 = scmp.eq.s32.totalorder %s15, 0
    %p125 = por %p123, %p124
    %p126 = scmp.ne.s32.totalorder %s112, %s113
    %p127 = scmp.eq.s32.totalorder %s16, 1
    %p128 = por %p126, %p127
    %p130 = scmp.ne.s32.totalorder %s113, %s129
    %p131 = scmp.eq.s32.totalorder %s16, 0
    %p132 = por %p130, %p131
    %p133 = scmp.le.s32.totalorder 1, %s10
    %p134 = scmp.lt.s32.totalorder %s10, 3
    %p135 = pnand %p133, %p134
    %p136 = pneg %p135
    // Predicated region
    $region9: #{ecapa_forward.5} parent=5 // pred_check
      _
    $region10: #{ecapa_forward.5} parent=5 // pred_check_branch
      %138 = sbr.rel (%p135) target = $region12
    $region11: #{ecapa_forward.5} parent=5 // pred_region
      %s139 = ssub.s32 %s10, 1
      // Predicated region
      $region13: #{ecapa_forward.5} parent=11 // pred_check
        %p140 = pneg %p57
      $region14: #{ecapa_forward.5} parent=11 // pred_check_branch
        %142 = sbr.rel (%p140) target = $region16
      $region15: #{ecapa_forward.5} parent=11 // pred_region
        _
      $region16: #{ecapa_forward.5} parent=11 // pred_fallthru
        _
      // Predicated region
      $region17: #{ecapa_forward.5} parent=11 // pred_check
        %p143 = pneg %p78
      $region18: #{ecapa_forward.5} parent=11 // pred_check_branch
        %145 = sbr.rel (%p143) target = $region20
      $region19: #{ecapa_forward.5} parent=11 // pred_region
        _
      $region20: #{ecapa_forward.5} parent=11 // pred_fallthru
        _
      // Predicated region
      $region21: #{ecapa_forward.5} parent=11 // pred_check
        %p146 = pneg %p99
      $region22: #{ecapa_forward.5} parent=11 // pred_check_branch
        %148 = sbr.rel (%p146) target = $region24
      $region23: #{ecapa_forward.5} parent=11 // pred_region
        _
      $region24: #{ecapa_forward.5} parent=11 // pred_fallthru
        _
    $region12: #{ecapa_forward.5} parent=5 // pred_fallthru
      _
    %p149 = scmp.lt.s32.totalorder %s10, 2
    // Predicated region
    $region25: #{ecapa_forward.5} parent=5 // pred_check
      %p150 = pneg %p149
    $region26: #{ecapa_forward.5} parent=5 // pred_check_branch
      %152 = sbr.rel (%p150) target = $region28
    $region27: #{ecapa_forward.5} parent=5 // pred_region
      // Predicated region
      $region29: #{ecapa_forward.5} parent=27 // pred_check
        %p153 = pneg %p30
      $region30: #{ecapa_forward.5} parent=27 // pred_check_branch
        %155 = sbr.rel (%p153) target = $region32
      $region31: #{ecapa_forward.5} parent=27 // pred_region
        %p156 = scmp.lt.s32.totalorder %s10, 1
        %s157 = scalar_select %p156, %s10, 1
        %s158 = smul.addr %s157, 2
        %s159 = smul.addr %s158, 4
        %s160 = scalar_lea.vmem %s0, %s159
      $region32: #{ecapa_forward.5} parent=27 // pred_fallthru
        _
    $region28: #{ecapa_forward.5} parent=5 // pred_fallthru
      _
    %p161 = scmp.le.s32.totalorder 1, %s10
    %p162 = scmp.lt.s32.totalorder %s10, 3
    %p163 = pnand %p161, %p162
    %p164 = pneg %p163
    // Predicated region
    $region33: #{ecapa_forward.5} parent=5 // pred_check
      _
    $region34: #{ecapa_forward.5} parent=5 // pred_check_branch
      %166 = sbr.rel (%p163) target = $region36
    $region35: #{ecapa_forward.5} parent=5 // pred_region
      %s167 = ssub.s32 %s10, 1
      %p168 = scmp.lt.s32.totalorder %s15, 1
      %s169 = scalar_select %p168, %s15, 1
      %s170 = smul.addr %s169, 2
      %s171 = smul.addr %s170, 4
      %s172 = scalar_lea.vmem %s0, %s171
      %p173 = pneg %p36
      %p174 = pneg %p33
      %p175 = pneg %p57
      %p176 = pneg %p54
      %p177 = pneg %p78
      %p178 = pneg %p75
      %p179 = pneg %p99
      %p180 = pneg %p96
      %p181 = pneg %p125
      %p182 = pneg %p122
      %p183 = scmp.lt.s32.totalorder %s15, 1
      %s184 = scalar_select %p183, %s15, 1
      %s185 = smul.addr %s184, 2
      %s186 = smul.addr %s185, 4
      %s187 = scalar_lea.vmem %s4, %s186
      %p188 = scmp.lt.s32.totalorder %s15, 1
      %s189 = scalar_select %p188, %s15, 1
      %s190 = smul.addr %s189, 2
      %s191 = smul.addr %s190, 4
      %s192 = scalar_lea.vmem %s0, %s191
      %p193 = scmp.lt.s32.totalorder %s15, 1
      %s194 = scalar_select %p193, %s15, 1
      %s195 = smul.addr %s194, 2
      %s196 = smul.addr %s195, 4
      %s197 = scalar_lea.vmem %s4, %s196
      %vm199 = vcmask 254976
      %200 = vst.msk [vmem:[#allocation2] sm:$0x3] %vm199, 0.0
      %201 = vst.msk [vmem:[#allocation2 + $0x12] sm:$0x3] %vm199, 0.0
      %v202 = vld [vmem:[%s192] sm:$0xf]
      %v203 = vld [vmem:[%s192 + $0x4] sm:$0xf]
      %v204 = vunpack.c.l.bf16 %v202
      %v205 = vunpack.c.l.bf16 %v203
      %vm206 = vcmask 261120
      %207 = vst.msk [vmem:[#allocation2 + $0x2] sm:$0xff] %vm206, %v204
      %208 = vst.msk [vmem:[#allocation2 + $0xa] sm:$0xff] %vm206, %v205
      %v209 = vld [vmem:[#allocation2] sm:$0xff]
      %v210 = vld [vmem:[#allocation2 + $0x8] sm:$0xff]
      %v211 = vpack.c.bf16 %v210, %v209
      %212 = vst.msk [vmem:[#allocation3] sm:$0xff] %vm206, %v211
      %v213 = vld [vmem:[#allocation2 + $0x1] sm:$0xff]
      %v214 = vld [vmem:[#allocation2 + $0x9] sm:$0xff]
      %v215 = vpack.c.bf16 %v214, %v213
      %217 = vrot.lane.b32.xlu0 %v215, 32
      %v218 = vpop.permute.xlu0 %217
      %vm220 = vcmask 523520
      %221 = vst.msk [vmem:[#allocation3] sm:$0xff] %vm220, %v218
      %v222 = vld [vmem:[#allocation2 + $0x2] sm:$0xff]
      %v223 = vld [vmem:[#allocation2 + $0xa] sm:$0xff]
      %v224 = vpack.c.bf16 %v223, %v222
      %226 = vrot.lane.b32.xlu0 %v224, 64
      %v227 = vpop.permute.xlu0 %226
      %vm229 = vcmask 785920
      %230 = vst.msk [vmem:[#allocation3] sm:$0xff] %vm229, %v227
      %v231 = vld [vmem:[#allocation2 + $0x3] sm:$0xff]
      %v232 = vld [vmem:[#allocation2 + $0xb] sm:$0xff]
      %v233 = vpack.c.bf16 %v232, %v231
      %235 = vrot.lane.b32.xlu0 %v233, 96
      %v236 = vpop.permute.xlu0 %235
      %vm238 = vcmask 1048320
      %239 = vst.msk [vmem:[#allocation3] sm:$0xff] %vm238, %v236
      %v240 = vld [vmem:[#allocation2 + $0x4] sm:$0xff]
      %v241 = vld [vmem:[#allocation2 + $0xc] sm:$0xff]
      %v242 = vpack.c.bf16 %v241, %v240
      %243 = vst.msk [vmem:[#allocation3 + $0x8] sm:$0xff] %vm206, %v242
      %v244 = vld [vmem:[#allocation3] sm:$0xff]
      %v245 = vld [vmem:[#allocation3 + $0x8] sm:$0xff]
      %v246 = vld [vmem:[%s1] sm:$0xf]
      %v247 = vld [vmem:[%s1 + $0x4] sm:$0xf]
      %v248 = vld [vmem:[%s1 + $0x8] sm:$0xf]
      %v249 = vld [vmem:[%s1 + $0xc] sm:$0xf]
      %v250 = vld [vmem:[%s1 + $0x10] sm:$0xf]
      %v251 = vld [vmem:[%s1 + $0x14] sm:$0xf]
      %v252 = vld [vmem:[%s1 + $0x18] sm:$0xf]
      %v253 = vld [vmem:[%s1 + $0x1c] sm:$0xf]
      %v254 = vld [vmem:[%s1 + $0x20] sm:$0xf]
      %v255 = vld [vmem:[%s1 + $0x24] sm:$0xf]
      %v256 = vld [vmem:[%s1 + $0x28] sm:$0xf]
      %v257 = vld [vmem:[%s1 + $0x2c] sm:$0xf]
      %v258 = vld [vmem:[%s1 + $0x30] sm:$0xf]
      %v259 = vld [vmem:[%s1 + $0x34] sm:$0xf]
      %v260 = vld [vmem:[%s1 + $0x38] sm:$0xf]
      %v261 = vld [vmem:[%s1 + $0x3c] sm:$0xf]
      %v262 = vld [vmem:[%s1 + $0x40] sm:$0xf]
      %v263 = vld [vmem:[%s1 + $0x44] sm:$0xf]
      %v264 = vld [vmem:[%s1 + $0x48] sm:$0xf]
      %v265 = vld [vmem:[%s1 + $0x4c] sm:$0xf]
      %v286 = vunpack.c.l.b16 %v246
      %v287 = vunpack.c.l.b16 %v247
      %v288 = vunpack.c.l.b16 %v248
      %v289 = vunpack.c.l.b16 %v249
      %v290 = vunpack.c.l.b16 %v250
      %v291 = vunpack.c.l.b16 %v251
      %v292 = vunpack.c.l.b16 %v252
      %v293 = vunpack.c.l.b16 %v253
      %v294 = vunpack.c.l.b16 %v254
      %v295 = vunpack.c.l.b16 %v255
      %v296 = vunpack.c.l.b16 %v256
      %v297 = vunpack.c.l.b16 %v257
      %v298 = vunpack.c.l.b16 %v258
      %v299 = vunpack.c.l.b16 %v259
      %v300 = vunpack.c.l.b16 %v260
      %v301 = vunpack.c.l.b16 %v261
      %v302 = vunpack.c.l.b16 %v262
      %v303 = vunpack.c.l.b16 %v263
      %v304 = vunpack.c.l.b16 %v264
      %v305 = vunpack.c.l.b16 %v265
      %v306 = vpack.c.b16 %v287, %v286
      %v307 = vpack.c.b16 %v289, %v288
      %v308 = vpack.c.b16 %v291, %v290
      %v309 = vpack.c.b16 %v293, %v292
      %v310 = vpack.c.b16 %v295, %v294
      %v311 = vpack.c.b16 %v297, %v296
      %v312 = vpack.c.b16 %v299, %v298
      %v313 = vpack.c.b16 %v301, %v300
      %v314 = vpack.c.b16 %v303, %v302
      %v315 = vpack.c.b16 %v305, %v304
      %v327 = vsel %vm206, %v245, 0
      %329 = vmatprep.subr.bf16.mxu0 0
      %330 = vmatpush1.bf16.msra.mxu0 %v306
      %331 = vmatprep.subr.bf16.mxu0 0
      %332 = vmatpush1.bf16.msra.mxu0 %v307
      %333 = vmatprep.subr.bf16.mxu0 0
      %334 = vmatpush1.bf16.msra.mxu0 %v308
      %335 = vmatprep.subr.bf16.mxu0 0
      %336 = vmatpush1.bf16.msra.mxu0 %v309
      %337 = vmatprep.subr.bf16.mxu0 0
      %338 = vmatpush1.bf16.msra.mxu0 %v310
      %339 = vmatprep.subr.bf16.mxu0 0
      %340 = vmatpush1.bf16.msra.mxu0 %v311
      %341 = vmatprep.subr.bf16.mxu0 0
      %342 = vmatpush1.bf16.msra.mxu0 %v312
      %343 = vmatprep.subr.bf16.mxu0 0
      %344 = vmatpush1.bf16.msra.mxu0 %v313
      %345 = vmatprep.subr.bf16.mxu0 0
      %346 = vmatpush1.bf16.msra.mxu0 %v314
      %347 = vmatprep.subr.bf16.mxu0 0
      %348 = vmatpush1.bf16.msra.mxu0 %v315
      %349 = vmatprep.subr.bf16.mxu0 0
      %350 = vmatpush1.bf16.msra.mxu0 0
      %351 = vmatprep.subr.bf16.mxu0 0
      %352 = vmatpush1.bf16.msra.mxu0 0
      %353 = vmatprep.subr.bf16.mxu0 0
      %354 = vmatpush1.bf16.msra.mxu0 0
      %355 = vmatprep.subr.bf16.mxu0 0
      %356 = vmatpush1.bf16.msra.mxu0 0
      %357 = vmatprep.subr.bf16.mxu0 0
      %358 = vmatpush1.bf16.msra.mxu0 0
      %359 = vmatprep.subr.bf16.mxu0 0
      %360 = vmatpush1.bf16.msra.mxu0 0
      %361 = vmatprep.mubr.bf16.mxu0 %v327
      %362 = vmatmul.mubr.bf16.gmra.mrb[0].mxu0 %v244
      %v363 = vpop.f32.mrb[0].mxu0
      %v364 = vadd.f32 0.0, %v363
      %v365 = vpop.f32.mrb[0].mxu0
      %v366 = vpop.f32.mrb[0].mxu0
      %v367 = vadd.f32 0.0, %v366
      %v368 = vpop.f32.mrb[0].mxu0
      %369 = vdwg.mxu0
      %v370 = vld [vmem:[%s2] sm:$0x1]
      %v372 = vlaneseq
      %v373 = vshrl.u32 %v372, 7
      %v374 = vsub.s32 0, %v373
      %v375 = vrot.slane %v370, %v374
      %v377 = vmul.f32 %v364, %v375
      %v378 = vmul.f32 %v367, %v375
      %v379 = vld [vmem:[%s3] sm:$0x1]
      %v381 = vlaneseq
      %v382 = vshrl.u32 %v381, 7
      %v383 = vsub.s32 0, %v382
      %v384 = vrot.slane %v379, %v383
      %v386 = vadd.f32 %v377, %v384
      %v387 = vadd.f32 %v378, %v384
      %v388 = vmax.f32 %v386, 0.0
      %v389 = vmax.f32 %v387, 0.0
      %v390 = vpack.c.bf16 %v389, %v388
      %v392 = vunpack.c.l.b16 %v390
      %v393 = vunpack.c.h.b16 %v390
      %v394 = vpack.c.b16 %v392, %v392
      %v395 = vpack.c.b16 %v393, %v393
      %vm398 = vcmask 519168
      %399 = vst.msk [vmem:[%s197] sm:$0xf] %vm398, %v394
      %400 = vst.msk [vmem:[%s197 + $0x4] sm:$0xf] %vm398, %v395
      %p401 = scmp.lt.s32.totalorder %s15, 1
      %s402 = scalar_select %p401, %s15, 1
      %s403 = smul.addr %s402, 2
      %s404 = smul.addr %s403, 4
      %s405 = scalar_lea.vmem %s4, %s404
      // Predicated region
      $region37: #{ecapa_forward.5} parent=35 // pred_check
        %p406 = pneg %p122
      $region38: #{ecapa_forward.5} parent=35 // pred_check_branch
        %408 = sbr.rel (%p406) target = $region40
      $region39: #{ecapa_forward.5} parent=35 // pred_region
        _
      $region40: #{ecapa_forward.5} parent=35 // pred_fallthru
        _
    $region36: #{ecapa_forward.5} parent=5 // pred_fallthru
      _
    %p409 = scmp.le.s32.totalorder 2, %s10
    // Predicated region
    $region41: #{ecapa_forward.5} parent=5 // pred_check
      %p410 = pneg %p409
    $region42: #{ecapa_forward.5} parent=5 // pred_check_branch
      %412 = sbr.rel (%p410) target = $region44
    $region43: #{ecapa_forward.5} parent=5 // pred_region
      %s413 = ssub.s32 %s10, 2
      // Predicated region
      $region45: #{ecapa_forward.5} parent=43 // pred_check
        %p414 = pneg %p128
      $region46: #{ecapa_forward.5} parent=43 // pred_check_branch
        %416 = sbr.rel (%p414) target = $region48
      $region47: #{ecapa_forward.5} parent=43 // pred_region
        %p417 = scmp.lt.s32.totalorder %s16, 1
        %s418 = scalar_select %p417, %s16, 1
        %s419 = smul.addr %s418, 2
        %s420 = smul.addr %s419, 4
        %s421 = scalar_lea.vmem %s4, %s420
      $region48: #{ecapa_forward.5} parent=43 // pred_fallthru
        _
    $region44: #{ecapa_forward.5} parent=5 // pred_fallthru
      _
  $region6: #{ecapa_forward.5} parent=0 // loop_footer
    %s14 = sadd.s32 1, %s10
  $region7: #{ecapa_forward.5} parent=0 // loop_footer_branch
    %9 = sbr.rel target = $region3
  $region8: #{ecapa_forward.5} parent=0 // loop_exit
    _

// kernel: ecapa_forward.8
$region0: #{ecapa_forward.8}
  #allocation0 [shape = 'u32[]', space=smem, size = 0x4, offset = 0x4, fixed_abs, tag = 'smem constant byte address 0x4 - core index']
  #allocation1 [shape = 'u32[144,128]{1,0:T(1,128)}', space=vmem, size = 0x12000, scoped, tag = 'internal scratch']
  #allocation2 [shape = 'f32[24,8]{1,0:T(8,128)}', space=vmem, size = 0x3000, scoped, tag = 'scratch operand']
  #allocation3 [shape = 'bf16[16,24]{1,0:T(16,128)(2,1)}', space=vmem, size = 0x1000, scoped, tag = 'scratch operand']
  #allocation4 [shape = 'bf16[16,64]{1,0:T(16,128)(2,1)}', space=vmem, size = 0x1000, scoped, tag = 'scratch operand']
  %s0 = inlined_call_operand.vmem [shape: bf16[2,16,64], index: 0, kind: input, shape index: {}]
  %s1 = inlined_call_operand.vmem [shape: bf16[7,24,8], index: 1, kind: input, shape index: {}]
  %s2 = inlined_call_operand.vmem [shape: f32[7,1,8], index: 2, kind: input, shape index: {}]
  %s3 = inlined_call_operand.vmem [shape: f32[7,1,8], index: 3, kind: input, shape index: {}]
  %s4 = inlined_call_operand.vmem [shape: bf16[64,32], index: 4, kind: input, shape index: {}]
  %s5 = inlined_call_operand.vmem [shape: f32[1,32], index: 5, kind: input, shape index: {}]
  %s6 = inlined_call_operand.vmem [shape: bf16[32,64], index: 6, kind: input, shape index: {}]
  %s7 = inlined_call_operand.vmem [shape: f32[1,64], index: 7, kind: input, shape index: {}]
  %s8 = inlined_call_operand.vmem [shape: bf16[64,64], index: 8, kind: input, shape index: {}]
  %s9 = inlined_call_operand.vmem [shape: f32[1,64], index: 9, kind: input, shape index: {}]
  %s10 = inlined_call_operand.vmem [shape: f32[1,64], index: 10, kind: input, shape index: {}]
  %s11 = inlined_call_operand.vmem [shape: bf16[2,16,64], index: 11, kind: output, shape index: {}]
  %s12 = sld [smem:[#allocation0]]
  $region77: #{ecapa_forward.8} parent=0
    _
  %s14 = ssub.s32 1, %s12
  %s15 = scalar_select 0, %s14, %s12
  loop: start=0, step=1, limit=4
  $region2: #{ecapa_forward.8} parent=0 // loop_pre_header
    _
  $region3: #{ecapa_forward.8} parent=0 // loop_header
    %s17 = sphi 0, %s21
    %p18 = scmp.ge.s32.totalorder %s17, 4
    %s27 = sphi 0, %s29
    %s30 = sphi 0, %s27
    %s31 = sphi 0, %s30
    %s47 = sphi 0, %s31
    %s51 = sphi 0, %s51
    %s53 = sphi 0, %s51
    %s54 = sphi 0, %s53
    %s68 = sphi 0, %s54
    %s72 = sphi 0, %s72
    %s74 = sphi 0, %s72
    %s75 = sphi 0, %s74
    %s89 = sphi 0, %s75
    %s93 = sphi 0, %s93
    %s95 = sphi 0, %s93
    %s96 = sphi 0, %s95
    %s110 = sphi 0, %s96
    %s114 = sphi 0, %s114
    %s116 = sphi 0, %s114
    %s117 = sphi 0, %s116
    %s131 = sphi 0, %s117
    %s135 = sphi 0, %s135
    %s137 = sphi 0, %s135
    %s138 = sphi 0, %s137
    %s152 = sphi 0, %s138
    %s156 = sphi 0, %s156
    %s158 = sphi 0, %s156
    %s159 = sphi 0, %s158
    %s173 = sphi 0, %s159
    %s177 = sphi 0, %s177
    %s179 = sphi 0, %s177
    %s180 = sphi 0, %s179
    %s194 = sphi 0, %s180
    %s198 = sphi 0, %s198
    %s200 = sphi 0, %s198
    %s201 = sphi 0, %s200
    %s215 = sphi 0, %s201
    %s219 = sphi 0, %s219
    %s221 = sphi 0, %s219
    %s222 = sphi 0, %s221
    %s236 = sphi 0, %s222
    %s240 = sphi 0, %s240
    %s242 = sphi 0, %s240
    %s243 = sphi 0, %s242
    %s257 = sphi 0, %s243
    %s263 = sphi 0, %s265
    %s266 = sphi 0, %s263
    %s267 = sphi 0, %s266
    %s283 = sphi 0, %s267
  $region4: #{ecapa_forward.8} parent=0 // loop_header_branch
    %20 = sbr.rel (%p18) target = $region8
  $region5: #{ecapa_forward.8} parent=0 // loop_body
    %s22 = ssub.s32 %s17, 1
    %s23 = ssub.s32 %s17, 2
    %s24 = sadd.s32 %s17, 1
    %s25 = ssub.s32 %s17, %s24
    %p26 = scmp.eq.s32.totalorder %s25, 0
    %s28 = sadd.s32 %s27, 1
    %s29 = scalar_select %p26, %s27, %s28
    %p32 = pneg %p26
    %p33 = scmp.eq.s32.totalorder %s17, 1
    %p34 = por %p32, %p33
    %p35 = scmp.ne.s32.totalorder %s27, %s30
    %p36 = scmp.eq.s32.totalorder %s17, 0
    %p37 = por %p35, %p36
    %p38 = scmp.ne.s32.totalorder %s27, %s30
    %p39 = scmp.eq.s32.totalorder %s22, 1
    %p40 = por %p38, %p39
    %p41 = scmp.ne.s32.totalorder %s30, %s31
    %p42 = scmp.eq.s32.totalorder %s22, 0
    %p43 = por %p41, %p42
    %p44 = scmp.ne.s32.totalorder %s30, %s31
    %p45 = scmp.eq.s32.totalorder %s23, 1
    %p46 = por %p44, %p45
    %p48 = scmp.ne.s32.totalorder %s31, %s47
    %p49 = scmp.eq.s32.totalorder %s23, 0
    %p50 = por %p48, %p49
    %s52 = sadd.s32 %s51, 1
    %p55 = scmp.eq.s32.totalorder %s17, 1
    %p56 = scmp.ne.s32.totalorder %s51, %s53
    %p57 = scmp.eq.s32.totalorder %s17, 0
    %p58 = por %p56, %p57
    %p59 = scmp.ne.s32.totalorder %s51, %s53
    %p60 = scmp.eq.s32.totalorder %s22, 1
    %p61 = por %p59, %p60
    %p62 = scmp.ne.s32.totalorder %s53, %s54
    %p63 = scmp.eq.s32.totalorder %s22, 0
    %p64 = por %p62, %p63
    %p65 = scmp.ne.s32.totalorder %s53, %s54
    %p66 = scmp.eq.s32.totalorder %s23, 1
    %p67 = por %p65, %p66
    %p69 = scmp.ne.s32.totalorder %s54, %s68
    %p70 = scmp.eq.s32.totalorder %s23, 0
    %p71 = por %p69, %p70
    %s73 = sadd.s32 %s72, 1
    %p76 = scmp.eq.s32.totalorder %s17, 1
    %p77 = scmp.ne.s32.totalorder %s72, %s74
    %p78 = scmp.eq.s32.totalorder %s17, 0
    %p79 = por %p77, %p78
    %p80 = scmp.ne.s32.totalorder %s72, %s74
    %p81 = scmp.eq.s32.totalorder %s22, 1
    %p82 = por %p80, %p81
    %p83 = scmp.ne.s32.totalorder %s74, %s75
    %p84 = scmp.eq.s32.totalorder %s22, 0
    %p85 = por %p83, %p84
    %p86 = scmp.ne.s32.totalorder %s74, %s75
    %p87 = scmp.eq.s32.totalorder %s23, 1
    %p88 = por %p86, %p87
    %p90 = scmp.ne.s32.totalorder %s75, %s89
    %p91 = scmp.eq.s32.totalorder %s23, 0
    %p92 = por %p90, %p91
    %s94 = sadd.s32 %s93, 1
    %p97 = scmp.eq.s32.totalorder %s17, 1
    %p98 = scmp.ne.s32.totalorder %s93, %s95
    %p99 = scmp.eq.s32.totalorder %s17, 0
    %p100 = por %p98, %p99
    %p101 = scmp.ne.s32.totalorder %s93, %s95
    %p102 = scmp.eq.s32.totalorder %s22, 1
    %p103 = por %p101, %p102
    %p104 = scmp.ne.s32.totalorder %s95, %s96
    %p105 = scmp.eq.s32.totalorder %s22, 0
    %p106 = por %p104, %p105
    %p107 = scmp.ne.s32.totalorder %s95, %s96
    %p108 = scmp.eq.s32.totalorder %s23, 1
    %p109 = por %p107, %p108
    %p111 = scmp.ne.s32.totalorder %s96, %s110
    %p112 = scmp.eq.s32.totalorder %s23, 0
    %p113 = por %p111, %p112
    %s115 = sadd.s32 %s114, 1
    %p118 = scmp.eq.s32.totalorder %s17, 1
    %p119 = scmp.ne.s32.totalorder %s114, %s116
    %p120 = scmp.eq.s32.totalorder %s17, 0
    %p121 = por %p119, %p120
    %p122 = scmp.ne.s32.totalorder %s114, %s116
    %p123 = scmp.eq.s32.totalorder %s22, 1
    %p124 = por %p122, %p123
    %p125 = scmp.ne.s32.totalorder %s116, %s117
    %p126 = scmp.eq.s32.totalorder %s22, 0
    %p127 = por %p125, %p126
    %p128 = scmp.ne.s32.totalorder %s116, %s117
    %p129 = scmp.eq.s32.totalorder %s23, 1
    %p130 = por %p128, %p129
    %p132 = scmp.ne.s32.totalorder %s117, %s131
    %p133 = scmp.eq.s32.totalorder %s23, 0
    %p134 = por %p132, %p133
    %s136 = sadd.s32 %s135, 1
    %p139 = scmp.eq.s32.totalorder %s17, 1
    %p140 = scmp.ne.s32.totalorder %s135, %s137
    %p141 = scmp.eq.s32.totalorder %s17, 0
    %p142 = por %p140, %p141
    %p143 = scmp.ne.s32.totalorder %s135, %s137
    %p144 = scmp.eq.s32.totalorder %s22, 1
    %p145 = por %p143, %p144
    %p146 = scmp.ne.s32.totalorder %s137, %s138
    %p147 = scmp.eq.s32.totalorder %s22, 0
    %p148 = por %p146, %p147
    %p149 = scmp.ne.s32.totalorder %s137, %s138
    %p150 = scmp.eq.s32.totalorder %s23, 1
    %p151 = por %p149, %p150
    %p153 = scmp.ne.s32.totalorder %s138, %s152
    %p154 = scmp.eq.s32.totalorder %s23, 0
    %p155 = por %p153, %p154
    %s157 = sadd.s32 %s156, 1
    %p160 = scmp.eq.s32.totalorder %s17, 1
    %p161 = scmp.ne.s32.totalorder %s156, %s158
    %p162 = scmp.eq.s32.totalorder %s17, 0
    %p163 = por %p161, %p162
    %p164 = scmp.ne.s32.totalorder %s156, %s158
    %p165 = scmp.eq.s32.totalorder %s22, 1
    %p166 = por %p164, %p165
    %p167 = scmp.ne.s32.totalorder %s158, %s159
    %p168 = scmp.eq.s32.totalorder %s22, 0
    %p169 = por %p167, %p168
    %p170 = scmp.ne.s32.totalorder %s158, %s159
    %p171 = scmp.eq.s32.totalorder %s23, 1
    %p172 = por %p170, %p171
    %p174 = scmp.ne.s32.totalorder %s159, %s173
    %p175 = scmp.eq.s32.totalorder %s23, 0
    %p176 = por %p174, %p175
    %s178 = sadd.s32 %s177, 1
    %p181 = scmp.eq.s32.totalorder %s17, 1
    %p182 = scmp.ne.s32.totalorder %s177, %s179
    %p183 = scmp.eq.s32.totalorder %s17, 0
    %p184 = por %p182, %p183
    %p185 = scmp.ne.s32.totalorder %s177, %s179
    %p186 = scmp.eq.s32.totalorder %s22, 1
    %p187 = por %p185, %p186
    %p188 = scmp.ne.s32.totalorder %s179, %s180
    %p189 = scmp.eq.s32.totalorder %s22, 0
    %p190 = por %p188, %p189
    %p191 = scmp.ne.s32.totalorder %s179, %s180
    %p192 = scmp.eq.s32.totalorder %s23, 1
    %p193 = por %p191, %p192
    %p195 = scmp.ne.s32.totalorder %s180, %s194
    %p196 = scmp.eq.s32.totalorder %s23, 0
    %p197 = por %p195, %p196
    %s199 = sadd.s32 %s198, 1
    %p202 = scmp.eq.s32.totalorder %s17, 1
    %p203 = scmp.ne.s32.totalorder %s198, %s200
    %p204 = scmp.eq.s32.totalorder %s17, 0
    %p205 = por %p203, %p204
    %p206 = scmp.ne.s32.totalorder %s198, %s200
    %p207 = scmp.eq.s32.totalorder %s22, 1
    %p208 = por %p206, %p207
    %p209 = scmp.ne.s32.totalorder %s200, %s201
    %p210 = scmp.eq.s32.totalorder %s22, 0
    %p211 = por %p209, %p210
    %p212 = scmp.ne.s32.totalorder %s200, %s201
    %p213 = scmp.eq.s32.totalorder %s23, 1
    %p214 = por %p212, %p213
    %p216 = scmp.ne.s32.totalorder %s201, %s215
    %p217 = scmp.eq.s32.totalorder %s23, 0
    %p218 = por %p216, %p217
    %s220 = sadd.s32 %s219, 1
    %p223 = scmp.eq.s32.totalorder %s17, 1
    %p224 = scmp.ne.s32.totalorder %s219, %s221
    %p225 = scmp.eq.s32.totalorder %s17, 0
    %p226 = por %p224, %p225
    %p227 = scmp.ne.s32.totalorder %s219, %s221
    %p228 = scmp.eq.s32.totalorder %s22, 1
    %p229 = por %p227, %p228
    %p230 = scmp.ne.s32.totalorder %s221, %s222
    %p231 = scmp.eq.s32.totalorder %s22, 0
    %p232 = por %p230, %p231
    %p233 = scmp.ne.s32.totalorder %s221, %s222
    %p234 = scmp.eq.s32.totalorder %s23, 1
    %p235 = por %p233, %p234
    %p237 = scmp.ne.s32.totalorder %s222, %s236
    %p238 = scmp.eq.s32.totalorder %s23, 0
    %p239 = por %p237, %p238
    %s241 = sadd.s32 %s240, 1
    %p244 = scmp.eq.s32.totalorder %s17, 1
    %p245 = scmp.ne.s32.totalorder %s240, %s242
    %p246 = scmp.eq.s32.totalorder %s17, 0
    %p247 = por %p245, %p246
    %p248 = scmp.ne.s32.totalorder %s240, %s242
    %p249 = scmp.eq.s32.totalorder %s22, 1
    %p250 = por %p248, %p249
    %p251 = scmp.ne.s32.totalorder %s242, %s243
    %p252 = scmp.eq.s32.totalorder %s22, 0
    %p253 = por %p251, %p252
    %p254 = scmp.ne.s32.totalorder %s242, %s243
    %p255 = scmp.eq.s32.totalorder %s23, 1
    %p256 = por %p254, %p255
    %p258 = scmp.ne.s32.totalorder %s243, %s257
    %p259 = scmp.eq.s32.totalorder %s23, 0
    %p260 = por %p258, %p259
    %s261 = ssub.s32 %s17, %s24
    %p262 = scmp.eq.s32.totalorder %s261, 0
    %s264 = sadd.s32 %s263, 1
    %s265 = scalar_select %p262, %s263, %s264
    %p268 = pneg %p262
    %p269 = scmp.eq.s32.totalorder %s17, 1
    %p270 = por %p268, %p269
    %p271 = scmp.ne.s32.totalorder %s263, %s266
    %p272 = scmp.eq.s32.totalorder %s17, 0
    %p273 = por %p271, %p272
    %p274 = scmp.ne.s32.totalorder %s263, %s266
    %p275 = scmp.eq.s32.totalorder %s22, 1
    %p276 = por %p274, %p275
    %p277 = scmp.ne.s32.totalorder %s266, %s267
    %p278 = scmp.eq.s32.totalorder %s22, 0
    %p279 = por %p277, %p278
    %p280 = scmp.ne.s32.totalorder %s266, %s267
    %p281 = scmp.eq.s32.totalorder %s23, 1
    %p282 = por %p280, %p281
    %p284 = scmp.ne.s32.totalorder %s267, %s283
    %p285 = scmp.eq.s32.totalorder %s23, 0
    %p286 = por %p284, %p285
    %p287 = scmp.le.s32.totalorder 1, %s17
    %p288 = scmp.lt.s32.totalorder %s17, 3
    %p289 = pnand %p287, %p288
    %p290 = pneg %p289
    // Predicated region
    $region9: #{ecapa_forward.8} parent=5 // pred_check
      _
    $region10: #{ecapa_forward.8} parent=5 // pred_check_branch
      %292 = sbr.rel (%p289) target = $region12
    $region11: #{ecapa_forward.8} parent=5 // pred_region
      %s293 = ssub.s32 %s17, 1
      // Predicated region
      $region13: #{ecapa_forward.8} parent=11 // pred_check
        %p294 = pneg %p64
      $region14: #{ecapa_forward.8} parent=11 // pred_check_branch
        %296 = sbr.rel (%p294) target = $region16
      $region15: #{ecapa_forward.8} parent=11 // pred_region
        _
      $region16: #{ecapa_forward.8} parent=11 // pred_fallthru
        _
      // Predicated region
      $region17: #{ecapa_forward.8} parent=11 // pred_check
        %p297 = pneg %p85
      $region18: #{ecapa_forward.8} parent=11 // pred_check_branch
        %299 = sbr.rel (%p297) target = $region20
      $region19: #{ecapa_forward.8} parent=11 // pred_region
        _
      $region20: #{ecapa_forward.8} parent=11 // pred_fallthru
        _
      // Predicated region
      $region21: #{ecapa_forward.8} parent=11 // pred_check
        %p300 = pneg %p106
      $region22: #{ecapa_forward.8} parent=11 // pred_check_branch
        %302 = sbr.rel (%p300) target = $region24
      $region23: #{ecapa_forward.8} parent=11 // pred_region
        _
      $region24: #{ecapa_forward.8} parent=11 // pred_fallthru
        _
      // Predicated region
      $region25: #{ecapa_forward.8} parent=11 // pred_check
        %p303 = pneg %p127
      $region26: #{ecapa_forward.8} parent=11 // pred_check_branch
        %305 = sbr.rel (%p303) target = $region28
      $region27: #{ecapa_forward.8} parent=11 // pred_region
        _
      $region28: #{ecapa_forward.8} parent=11 // pred_fallthru
        _
      // Predicated region
      $region29: #{ecapa_forward.8} parent=11 // pred_check
        %p306 = pneg %p148
      $region30: #{ecapa_forward.8} parent=11 // pred_check_branch
        %308 = sbr.rel (%p306) target = $region32
      $region31: #{ecapa_forward.8} parent=11 // pred_region
        _
      $region32: #{ecapa_forward.8} parent=11 // pred_fallthru
        _
      // Predicated region
      $region33: #{ecapa_forward.8} parent=11 // pred_check
        %p309 = pneg %p169
      $region34: #{ecapa_forward.8} parent=11 // pred_check_branch
        %311 = sbr.rel (%p309) target = $region36
      $region35: #{ecapa_forward.8} parent=11 // pred_region
        _
      $region36: #{ecapa_forward.8} parent=11 // pred_fallthru
        _
      // Predicated region
      $region37: #{ecapa_forward.8} parent=11 // pred_check
        %p312 = pneg %p190
      $region38: #{ecapa_forward.8} parent=11 // pred_check_branch
        %314 = sbr.rel (%p312) target = $region40
      $region39: #{ecapa_forward.8} parent=11 // pred_region
        _
      $region40: #{ecapa_forward.8} parent=11 // pred_fallthru
        _
      // Predicated region
      $region41: #{ecapa_forward.8} parent=11 // pred_check
        %p315 = pneg %p211
      $region42: #{ecapa_forward.8} parent=11 // pred_check_branch
        %317 = sbr.rel (%p315) target = $region44
      $region43: #{ecapa_forward.8} parent=11 // pred_region
        _
      $region44: #{ecapa_forward.8} parent=11 // pred_fallthru
        _
      // Predicated region
      $region45: #{ecapa_forward.8} parent=11 // pred_check
        %p318 = pneg %p232
      $region46: #{ecapa_forward.8} parent=11 // pred_check_branch
        %320 = sbr.rel (%p318) target = $region48
      $region47: #{ecapa_forward.8} parent=11 // pred_region
        _
      $region48: #{ecapa_forward.8} parent=11 // pred_fallthru
        _
      // Predicated region
      $region49: #{ecapa_forward.8} parent=11 // pred_check
        %p321 = pneg %p253
      $region50: #{ecapa_forward.8} parent=11 // pred_check_branch
        %323 = sbr.rel (%p321) target = $region52
      $region51: #{ecapa_forward.8} parent=11 // pred_region
        _
      $region52: #{ecapa_forward.8} parent=11 // pred_fallthru
        _
    $region12: #{ecapa_forward.8} parent=5 // pred_fallthru
      _
    %p324 = scmp.lt.s32.totalorder %s17, 2
    // Predicated region
    $region53: #{ecapa_forward.8} parent=5 // pred_check
      %p325 = pneg %p324
    $region54: #{ecapa_forward.8} parent=5 // pred_check_branch
      %327 = sbr.rel (%p325) target = $region56
    $region55: #{ecapa_forward.8} parent=5 // pred_region
      // Predicated region
      $region57: #{ecapa_forward.8} parent=55 // pred_check
        %p328 = pneg %p37
      $region58: #{ecapa_forward.8} parent=55 // pred_check_branch
        %330 = sbr.rel (%p328) target = $region60
      $region59: #{ecapa_forward.8} parent=55 // pred_region
        %p331 = scmp.lt.s32.totalorder %s17, 1
        %s332 = scalar_select %p331, %s17, 1
        %s333 = smul.addr %s332, 2
        %s334 = smul.addr %s333, 4
        %s335 = scalar_lea.vmem %s0, %s334
      $region60: #{ecapa_forward.8} parent=55 // pred_fallthru
        _
    $region56: #{ecapa_forward.8} parent=5 // pred_fallthru
      _
    %p336 = scmp.le.s32.totalorder 1, %s17
    %p337 = scmp.lt.s32.totalorder %s17, 3
    %p338 = pnand %p336, %p337
    %p339 = pneg %p338
    // Predicated region
    $region61: #{ecapa_forward.8} parent=5 // pred_check
      _
    $region62: #{ecapa_forward.8} parent=5 // pred_check_branch
      %341 = sbr.rel (%p338) target = $region64
    $region63: #{ecapa_forward.8} parent=5 // pred_region
      %s342 = ssub.s32 %s17, 1
      %p343 = scmp.lt.s32.totalorder %s22, 1
      %s344 = scalar_select %p343, %s22, 1
      %s345 = smul.addr %s344, 2
      %s346 = smul.addr %s345, 4
      %s347 = scalar_lea.vmem %s0, %s346
      %p348 = pneg %p43
      %p349 = pneg %p40
      %p350 = pneg %p64
      %p351 = pneg %p61
      %p352 = pneg %p85
      %p353 = pneg %p82
      %p354 = pneg %p106
      %p355 = pneg %p103
      %p356 = pneg %p127
      %p357 = pneg %p124
      %p358 = pneg %p148
      %p359 = pneg %p145
      %p360 = pneg %p169
      %p361 = pneg %p166
      %p362 = pneg %p190
      %p363 = pneg %p187
      %p364 = pneg %p211
      %p365 = pneg %p208
      %p366 = pneg %p232
      %p367 = pneg %p229
      %p368 = pneg %p253
      %p369 = pneg %p250
      %p370 = pneg %p279
      %p371 = pneg %p276
      %p372 = scmp.lt.s32.totalorder %s22, 1
      %s373 = scalar_select %p372, %s22, 1
      %s374 = smul.addr %s373, 2
      %s375 = smul.addr %s374, 4
      %s376 = scalar_lea.vmem %s11, %s375
      %p377 = scmp.lt.s32.totalorder %s22, 1
      %s378 = scalar_select %p377, %s22, 1
      %s379 = smul.addr %s378, 2
      %s380 = smul.addr %s379, 4
      %s381 = scalar_lea.vmem %s0, %s380
      %p382 = scmp.lt.s32.totalorder %s22, 1
      %s383 = scalar_select %p382, %s22, 1
      %s384 = smul.addr %s383, 2
      %s385 = smul.addr %s384, 4
      %s386 = scalar_lea.vmem %s11, %s385
      %vm388 = vcmask 60416
      %389 = vst.msk [vmem:[#allocation2] sm:$0xf] %vm388, 0.0
      %390 = vst.msk [vmem:[#allocation2 + $0x14] sm:$0xf] %vm388, 0.0
      %v391 = vld [vmem:[%s381] sm:$0xf]
      %v392 = vld [vmem:[%s381 + $0x4] sm:$0xf]
      %v393 = vunpack.c.l.bf16 %v391
      %v394 = vunpack.c.l.bf16 %v392
      %v395 = vpack.c.bf16 %v394, %v393
      %vm396 = vcmask 64512
      %397 = vst.msk [vmem:[#allocation4] sm:$0xff] %vm396, %v395
      %400 = vrot.lane.b32.xlu0 %v393, 120
      %v401 = vpop.permute.xlu0 %400
      %402 = vrot.lane.b32.xlu0 %v394, 120
      %v403 = vpop.permute.xlu0 %402
      %406 = vst.msk [vmem:[#allocation2 + $0x4] sm:$0xff] %vm396, %v401
      %407 = vst.msk [vmem:[#allocation2 + $0xc] sm:$0xff] %vm396, %v403
      %v408 = vld [vmem:[#allocation2] sm:$0xff]
      %v409 = vld [vmem:[#allocation2 + $0x8] sm:$0xff]
      %v410 = vpack.c.bf16 %v409, %v408
      %411 = vst.msk [vmem:[#allocation3] sm:$0xff] %vm396, %v410
      %v412 = vld [vmem:[#allocation2 + $0x4] sm:$0xff]
      %v413 = vld [vmem:[#allocation2 + $0xc] sm:$0xff]
      %v414 = vpack.c.bf16 %v413, %v412
      %416 = vrot.lane.b32.xlu0 %v414, 8
      %v417 = vpop.permute.xlu0 %416
      %vm419 = vcmask 130112
      %420 = vst.msk [vmem:[#allocation3] sm:$0xff] %vm419, %v417
      %v421 = vld [vmem:[#allocation2 + $0x8] sm:$0xff]
      %v422 = vld [vmem:[#allocation2 + $0x10] sm:$0xff]
      %v423 = vpack.c.bf16 %v422, %v421
      %425 = vrot.lane.b32.xlu0 %v423, 16
      %v426 = vpop.permute.xlu0 %425
      %vm428 = vcmask 195712
      %429 = vst.msk [vmem:[#allocation3] sm:$0xff] %vm428, %v426
      %v430 = vld [vmem:[#allocation3] sm:$0xff]
      %v431 = vld [vmem:[%s1] sm:$0xf]
      %v432 = vld [vmem:[%s1 + $0x4] sm:$0xf]
      %v433 = vld [vmem:[%s1 + $0x8] sm:$0xf]
      %v437 = vunpack.c.l.b16 %v431
      %v438 = vunpack.c.l.b16 %v432
      %v439 = vunpack.c.l.b16 %v433
      %v440 = vpack.c.b16 %v438, %v437
      %v441 = vpack.c.b16 %v439, %v439
      %vm443 = vcmask 195584
      %v445 = vsel %vm443, %v430, 0
      %vm447 = vcmask 1043456
      %v449 = vsel %vm447, %v441, 0
      %451 = vmatprep.subr.bf16.mxu0 0
      %452 = vmatpush1.bf16.msra.mxu0 %v440
      %453 = vmatprep.subr.bf16.mxu0 0
      %454 = vmatpush1.bf16.msra.mxu0 %v449
      %455 = vmatprep.subr.bf16.mxu0 0
      %456 = vmatpush1.bf16.msra.mxu0 0
      %457 = vmatprep.subr.bf16.mxu0 0
      %458 = vmatpush1.bf16.msra.mxu0 0
      %459 = vmatprep.subr.bf16.mxu0 0
      %460 = vmatpush1.bf16.msra.mxu0 0
      %461 = vmatprep.subr.bf16.mxu0 0
      %462 = vmatpush1.bf16.msra.mxu0 0
      %463 = vmatprep.subr.bf16.mxu0 0
      %464 = vmatpush1.bf16.msra.mxu0 0
      %465 = vmatprep.subr.bf16.mxu0 0
      %466 = vmatpush1.bf16.msra.mxu0 0
      %467 = vmatprep.subr.bf16.mxu0 0
      %468 = vmatpush1.bf16.msra.mxu0 0
      %469 = vmatprep.subr.bf16.mxu0 0
      %470 = vmatpush1.bf16.msra.mxu0 0
      %471 = vmatprep.subr.bf16.mxu0 0
      %472 = vmatpush1.bf16.msra.mxu0 0
      %473 = vmatprep.subr.bf16.mxu0 0
      %474 = vmatpush1.bf16.msra.mxu0 0
      %475 = vmatprep.subr.bf16.mxu0 0
      %476 = vmatpush1.bf16.msra.mxu0 0
      %477 = vmatprep.subr.bf16.mxu0 0
      %478 = vmatpush1.bf16.msra.mxu0 0
      %479 = vmatprep.subr.bf16.mxu0 0
      %480 = vmatpush1.bf16.msra.mxu0 0
      %481 = vmatprep.subr.bf16.mxu0 0
      %482 = vmatpush1.bf16.msra.mxu0 0
      %483 = vmatprep.mubr.bf16.mxu0 0
      %484 = vmatmul.mubr.bf16.gmra.mrb[0].mxu0 %v445
      %v485 = vpop.f32.mrb[0].mxu0
      %v486 = vadd.f32 0.0, %v485
      %v487 = vpop.f32.mrb[0].mxu0
      %v488 = vpop.f32.mrb[0].mxu0
      %v489 = vadd.f32 0.0, %v488
      %v490 = vpop.f32.mrb[0].mxu0
      %491 = vdwg.mxu0
      %v492 = vld [vmem:[%s2] sm:$0x1]
      %v494 = vlaneseq
      %v495 = vshrl.u32 %v494, 7
      %v496 = vsub.s32 0, %v495
      %v497 = vrot.slane %v492, %v496
      %v499 = vmul.f32 %v486, %v497
      %v500 = vmul.f32 %v489, %v497
      %v501 = vld [vmem:[%s3] sm:$0x1]
      %v503 = vlaneseq
      %v504 = vshrl.u32 %v503, 7
      %v505 = vsub.s32 0, %v504
      %v506 = vrot.slane %v501, %v505
      %v508 = vadd.f32 %v499, %v506
      %v509 = vadd.f32 %v500, %v506
      %v510 = vmax.f32 %v508, 0.0
      %v511 = vmax.f32 %v509, 0.0
      %v512 = vpack.c.bf16 %v511, %v510
      %514 = vrot.lane.b32.xlu0 %v512, 8
      %v515 = vpop.permute.xlu0 %514
      %517 = vst.msk [vmem:[#allocation4] sm:$0xff] %vm419, %v515
      %520 = vrot.lane.b32.xlu0 %v510, 16
      %v521 = vpop.permute.xlu0 %520
      %522 = vrot.lane.b32.xlu0 %v511, 16
      %v523 = vpop.permute.xlu0 %522
      %v526 = vadd.f32 %v393, %v521
      %v527 = vadd.f32 %v394, %v523
      %530 = vrot.lane.b32.xlu0 %v526, 112
      %v531 = vpop.permute.xlu0 %530
      %532 = vrot.lane.b32.xlu0 %v527, 112
      %v533 = vpop.permute.xlu0 %532
      %536 = vst.msk [vmem:[#allocation2 + $0x4] sm:$0xff] %vm396, %v531
      %537 = vst.msk [vmem:[#allocation2 + $0xc] sm:$0xff] %vm396, %v533
      %v538 = vld [vmem:[#allocation2] sm:$0xff]
      %v539 = vld [vmem:[#allocation2 + $0x8] sm:$0xff]
      %v540 = vpack.c.bf16 %v539, %v538
      %541 = vst.msk [vmem:[#allocation3] sm:$0xff] %vm396, %v540
      %v542 = vld [vmem:[#allocation2 + $0x4] sm:$0xff]
      %v543 = vld [vmem:[#allocation2 + $0xc] sm:$0xff]
      %v544 = vpack.c.bf16 %v543, %v542
      %546 = vrot.lane.b32.xlu0 %v544, 8
      %v547 = vpop.permute.xlu0 %546
      %549 = vst.msk [vmem:[#allocation3] sm:$0xff] %vm419, %v547
      %v550 = vld [vmem:[#allocation2 + $0x8] sm:$0xff]
      %v551 = vld [vmem:[#allocation2 + $0x10] sm:$0xff]
      %v552 = vpack.c.bf16 %v551, %v550
      %554 = vrot.lane.b32.xlu0 %v552, 16
      %v555 = vpop.permute.xlu0 %554
      %557 = vst.msk [vmem:[#allocation3] sm:$0xff] %vm428, %v555
      %v558 = vld [vmem:[#allocation3] sm:$0xff]
      %s559 = scalar_lea.vmem %s1, 12
      %v560 = vld [vmem:[%s559] sm:$0xf]
      %v561 = vld [vmem:[%s559 + $0x4] sm:$0xf]
      %v562 = vld [vmem:[%s559 + $0x8] sm:$0xf]
      %v566 = vunpack.c.l.b16 %v560
      %v567 = vunpack.c.l.b16 %v561
      %v568 = vunpack.c.l.b16 %v562
      %v569 = vpack.c.b16 %v567, %v566
      %v570 = vpack.c.b16 %v568, %v568
      %v573 = vsel %vm443, %v558, 0
      %v576 = vsel %vm447, %v570, 0
      %578 = vmatprep.subr.bf16.mxu0 0
      %579 = vmatpush1.bf16.msra.mxu0 %v569
      %580 = vmatprep.subr.bf16.mxu0 0
      %581 = vmatpush1.bf16.msra.mxu0 %v576
      %582 = vmatprep.subr.bf16.mxu0 0
      %583 = vmatpush1.bf16.msra.mxu0 0
      %584 = vmatprep.subr.bf16.mxu0 0
      %585 = vmatpush1.bf16.msra.mxu0 0
      %586 = vmatprep.subr.bf16.mxu0 0
      %587 = vmatpush1.bf16.msra.mxu0 0
      %588 = vmatprep.subr.bf16.mxu0 0
      %589 = vmatpush1.bf16.msra.mxu0 0
      %590 = vmatprep.subr.bf16.mxu0 0
      %591 = vmatpush1.bf16.msra.mxu0 0
      %592 = vmatprep.subr.bf16.mxu0 0
      %593 = vmatpush1.bf16.msra.mxu0 0
      %594 = vmatprep.subr.bf16.mxu0 0
      %595 = vmatpush1.bf16.msra.mxu0 0
      %596 = vmatprep.subr.bf16.mxu0 0
      %597 = vmatpush1.bf16.msra.mxu0 0
      %598 = vmatprep.subr.bf16.mxu0 0
      %599 = vmatpush1.bf16.msra.mxu0 0
      %600 = vmatprep.subr.bf16.mxu0 0
      %601 = vmatpush1.bf16.msra.mxu0 0
      %602 = vmatprep.subr.bf16.mxu0 0
      %603 = vmatpush1.bf16.msra.mxu0 0
      %604 = vmatprep.subr.bf16.mxu0 0
      %605 = vmatpush1.bf16.msra.mxu0 0
      %606 = vmatprep.subr.bf16.mxu0 0
      %607 = vmatpush1.bf16.msra.mxu0 0
      %608 = vmatprep.subr.bf16.mxu0 0
      %609 = vmatpush1.bf16.msra.mxu0 0
      %610 = vmatprep.mubr.bf16.mxu0 0
      %611 = vmatmul.mubr.bf16.gmra.mrb[0].mxu0 %v573
      %v612 = vpop.f32.mrb[0].mxu0
      %v613 = vadd.f32 0.0, %v612
      %v614 = vpop.f32.mrb[0].mxu0
      %v615 = vpop.f32.mrb[0].mxu0
      %v616 = vadd.f32 0.0, %v615
      %v617 = vpop.f32.mrb[0].mxu0
      %618 = vdwg.mxu0
      %s619 = scalar_lea.vmem %s2, 1
      %v620 = vld [vmem:[%s619] sm:$0x1]
      %v622 = vlaneseq
      %v623 = vshrl.u32 %v622, 7
      %v624 = vsub.s32 0, %v623
      %v625 = vrot.slane %v620, %v624
      %v627 = vmul.f32 %v613, %v625
      %v628 = vmul.f32 %v616, %v625
      %s629 = scalar_lea.vmem %s3, 1
      %v630 = vld [vmem:[%s629] sm:$0x1]
      %v632 = vlaneseq
      %v633 = vshrl.u32 %v632, 7
      %v634 = vsub.s32 0, %v633
      %v635 = vrot.slane %v630, %v634
      %v637 = vadd.f32 %v627, %v635
      %v638 = vadd.f32 %v628, %v635
      %v639 = vmax.f32 %v637, 0.0
      %v640 = vmax.f32 %v638, 0.0
      %v641 = vpack.c.bf16 %v640, %v639
      %643 = vrot.lane.b32.xlu0 %v641, 16
      %v644 = vpop.permute.xlu0 %643
      %646 = vst.msk [vmem:[#allocation4] sm:$0xff] %vm428, %v644
      %649 = vrot.lane.b32.xlu0 %v639, 24
      %v650 = vpop.permute.xlu0 %649
      %651 = vrot.lane.b32.xlu0 %v640, 24
      %v652 = vpop.permute.xlu0 %651
      %v655 = vadd.f32 %v393, %v650
      %v656 = vadd.f32 %v394, %v652
      %659 = vrot.lane.b32.xlu0 %v655, 104
      %v660 = vpop.permute.xlu0 %659
      %661 = vrot.lane.b32.xlu0 %v656, 104
      %v662 = vpop.permute.xlu0 %661
      %665 = vst.msk [vmem:[#allocation2 + $0x4] sm:$0xff] %vm396, %v660
      %666 = vst.msk [vmem:[#allocation2 + $0xc] sm:$0xff] %vm396, %v662
      %v667 = vld [vmem:[#allocation2] sm:$0xff]
      %v668 = vld [vmem:[#allocation2 + $0x8] sm:$0xff]
      %v669 = vpack.c.bf16 %v668, %v667
      %670 = vst.msk [vmem:[#allocation3] sm:$0xff] %vm396, %v669
      %v671 = vld [vmem:[#allocation2 + $0x4] sm:$0xff]
      %v672 = vld [vmem:[#allocation2 + $0xc] sm:$0xff]
      %v673 = vpack.c.bf16 %v672, %v671
      %675 = vrot.lane.b32.xlu0 %v673, 8
      %v676 = vpop.permute.xlu0 %675
      %678 = vst.msk [vmem:[#allocation3] sm:$0xff] %vm419, %v676
      %v679 = vld [vmem:[#allocation2 + $0x8] sm:$0xff]
      %v680 = vld [vmem:[#allocation2 + $0x10] sm:$0xff]
      %v681 = vpack.c.bf16 %v680, %v679
      %683 = vrot.lane.b32.xlu0 %v681, 16
      %v684 = vpop.permute.xlu0 %683
      %686 = vst.msk [vmem:[#allocation3] sm:$0xff] %vm428, %v684
      %v687 = vld [vmem:[#allocation3] sm:$0xff]
      %s688 = scalar_lea.vmem %s1, 24
      %v689 = vld [vmem:[%s688] sm:$0xf]
      %v690 = vld [vmem:[%s688 + $0x4] sm:$0xf]
      %v691 = vld [vmem:[%s688 + $0x8] sm:$0xf]
      %v695 = vunpack.c.l.b16 %v689
      %v696 = vunpack.c.l.b16 %v690
      %v697 = vunpack.c.l.b16 %v691
      %v698 = vpack.c.b16 %v696, %v695
      %v699 = vpack.c.b16 %v697, %v697
      %v702 = vsel %vm443, %v687, 0
      %v705 = vsel %vm447, %v699, 0
      %707 = vmatprep.subr.bf16.mxu0 0
      %708 = vmatpush1.bf16.msra.mxu0 %v698
      %709 = vmatprep.subr.bf16.mxu0 0
      %710 = vmatpush1.bf16.msra.mxu0 %v705
      %711 = vmatprep.subr.bf16.mxu0 0
      %712 = vmatpush1.bf16.msra.mxu0 0
      %713 = vmatprep.subr.bf16.mxu0 0
      %714 = vmatpush1.bf16.msra.mxu0 0
      %715 = vmatprep.subr.bf16.mxu0 0
      %716 = vmatpush1.bf16.msra.mxu0 0
      %717 = vmatprep.subr.bf16.mxu0 0
      %718 = vmatpush1.bf16.msra.mxu0 0
      %719 = vmatprep.subr.bf16.mxu0 0
      %720 = vmatpush1.bf16.msra.mxu0 0
      %721 = vmatprep.subr.bf16.mxu0 0
      %722 = vmatpush1.bf16.msra.mxu0 0
      %723 = vmatprep.subr.bf16.mxu0 0
      %724 = vmatpush1.bf16.msra.mxu0 0
      %725 = vmatprep.subr.bf16.mxu0 0
      %726 = vmatpush1.bf16.msra.mxu0 0
      %727 = vmatprep.subr.bf16.mxu0 0
      %728 = vmatpush1.bf16.msra.mxu0 0
      %729 = vmatprep.subr.bf16.mxu0 0
      %730 = vmatpush1.bf16.msra.mxu0 0
      %731 = vmatprep.subr.bf16.mxu0 0
      %732 = vmatpush1.bf16.msra.mxu0 0
      %733 = vmatprep.subr.bf16.mxu0 0
      %734 = vmatpush1.bf16.msra.mxu0 0
      %735 = vmatprep.subr.bf16.mxu0 0
      %736 = vmatpush1.bf16.msra.mxu0 0
      %737 = vmatprep.subr.bf16.mxu0 0
      %738 = vmatpush1.bf16.msra.mxu0 0
      %739 = vmatprep.mubr.bf16.mxu0 0
      %740 = vmatmul.mubr.bf16.gmra.mrb[0].mxu0 %v702
      %v741 = vpop.f32.mrb[0].mxu0
      %v742 = vadd.f32 0.0, %v741
      %v743 = vpop.f32.mrb[0].mxu0
      %v744 = vpop.f32.mrb[0].mxu0
      %v745 = vadd.f32 0.0, %v744
      %v746 = vpop.f32.mrb[0].mxu0
      %747 = vdwg.mxu0
      %s748 = scalar_lea.vmem %s2, 2
      %v749 = vld [vmem:[%s748] sm:$0x1]
      %v751 = vlaneseq
      %v752 = vshrl.u32 %v751, 7
      %v753 = vsub.s32 0, %v752
      %v754 = vrot.slane %v749, %v753
      %v756 = vmul.f32 %v742, %v754
      %v757 = vmul.f32 %v745, %v754
      %s758 = scalar_lea.vmem %s3, 2
      %v759 = vld [vmem:[%s758] sm:$0x1]
      %v761 = vlaneseq
      %v762 = vshrl.u32 %v761, 7
      %v763 = vsub.s32 0, %v762
      %v764 = vrot.slane %v759, %v763
      %v766 = vadd.f32 %v756, %v764
      %v767 = vadd.f32 %v757, %v764
      %v768 = vmax.f32 %v766, 0.0
      %v769 = vmax.f32 %v767, 0.0
      %v770 = vpack.c.bf16 %v769, %v768
      %772 = vrot.lane.b32.xlu0 %v770, 24
      %v773 = vpop.permute.xlu0 %772
      %vm775 = vcmask 261312
      %776 = vst.msk [vmem:[#allocation4] sm:$0xff] %vm775, %v773
      %779 = vrot.lane.b32.xlu0 %v768, 32
      %v780 = vpop.permute.xlu0 %779
      %781 = vrot.lane.b32.xlu0 %v769, 32
      %v782 = vpop.permute.xlu0 %781
      %v785 = vadd.f32 %v393, %v780
      %v786 = vadd.f32 %v394, %v782
      %789 = vrot.lane.b32.xlu0 %v785, 96
      %v790 = vpop.permute.xlu0 %789
      %791 = vrot.lane.b32.xlu0 %v786, 96
      %v792 = vpop.permute.xlu0 %791
      %795 = vst.msk [vmem:[#allocation2 + $0x4] sm:$0xff] %vm396, %v790
      %796 = vst.msk [vmem:[#allocation2 + $0xc] sm:$0xff] %vm396, %v792
      %v797 = vld [vmem:[#allocation2] sm:$0xff]
      %v798 = vld [vmem:[#allocation2 + $0x8] sm:$0xff]
      %v799 = vpack.c.bf16 %v798, %v797
      %800 = vst.msk [vmem:[#allocation3] sm:$0xff] %vm396, %v799
      %v801 = vld [vmem:[#allocation2 + $0x4] sm:$0xff]
      %v802 = vld [vmem:[#allocation2 + $0xc] sm:$0xff]
      %v803 = vpack.c.bf16 %v802, %v801
      %805 = vrot.lane.b32.xlu0 %v803, 8
      %v806 = vpop.permute.xlu0 %805
      %808 = vst.msk [vmem:[#allocation3] sm:$0xff] %vm419, %v806
      %v809 = vld [vmem:[#allocation2 + $0x8] sm:$0xff]
      %v810 = vld [vmem:[#allocation2 + $0x10] sm:$0xff]
      %v811 = vpack.c.bf16 %v810, %v809
      %813 = vrot.lane.b32.xlu0 %v811, 16
      %v814 = vpop.permute.xlu0 %813
      %816 = vst.msk [vmem:[#allocation3] sm:$0xff] %vm428, %v814
      %v817 = vld [vmem:[#allocation3] sm:$0xff]
      %s818 = scalar_lea.vmem %s1, 36
      %v819 = vld [vmem:[%s818] sm:$0xf]
      %v820 = vld [vmem:[%s818 + $0x4] sm:$0xf]
      %v821 = vld [vmem:[%s818 + $0x8] sm:$0xf]
      %v825 = vunpack.c.l.b16 %v819
      %v826 = vunpack.c.l.b16 %v820
      %v827 = vunpack.c.l.b16 %v821
      %v828 = vpack.c.b16 %v826, %v825
      %v829 = vpack.c.b16 %v827, %v827
      %v832 = vsel %vm443, %v817, 0
      %v835 = vsel %vm447, %v829, 0
      %837 = vmatprep.subr.bf16.mxu0 0
      %838 = vmatpush1.bf16.msra.mxu0 %v828
      %839 = vmatprep.subr.bf16.mxu0 0
      %840 = vmatpush1.bf16.msra.mxu0 %v835
      %841 = vmatprep.subr.bf16.mxu0 0
      %842 = vmatpush1.bf16.msra.mxu0 0
      %843 = vmatprep.subr.bf16.mxu0 0
      %844 = vmatpush1.bf16.msra.mxu0 0
      %845 = vmatprep.subr.bf16.mxu0 0
      %846 = vmatpush1.bf16.msra.mxu0 0
      %847 = vmatprep.subr.bf16.mxu0 0
      %848 = vmatpush1.bf16.msra.mxu0 0
      %849 = vmatprep.subr.bf16.mxu0 0
      %850 = vmatpush1.bf16.msra.mxu0 0
      %851 = vmatprep.subr.bf16.mxu0 0
      %852 = vmatpush1.bf16.msra.mxu0 0
      %853 = vmatprep.subr.bf16.mxu0 0
      %854 = vmatpush1.bf16.msra.mxu0 0
      %855 = vmatprep.subr.bf16.mxu0 0
      %856 = vmatpush1.bf16.msra.mxu0 0
      %857 = vmatprep.subr.bf16.mxu0 0
      %858 = vmatpush1.bf16.msra.mxu0 0
      %859 = vmatprep.subr.bf16.mxu0 0
      %860 = vmatpush1.bf16.msra.mxu0 0
      %861 = vmatprep.subr.bf16.mxu0 0
      %862 = vmatpush1.bf16.msra.mxu0 0
      %863 = vmatprep.subr.bf16.mxu0 0
      %864 = vmatpush1.bf16.msra.mxu0 0
      %865 = vmatprep.subr.bf16.mxu0 0
      %866 = vmatpush1.bf16.msra.mxu0 0
      %867 = vmatprep.subr.bf16.mxu0 0
      %868 = vmatpush1.bf16.msra.mxu0 0
      %869 = vmatprep.mubr.bf16.mxu0 0
      %870 = vmatmul.mubr.bf16.gmra.mrb[0].mxu0 %v832
      %v871 = vpop.f32.mrb[0].mxu0
      %v872 = vadd.f32 0.0, %v871
      %v873 = vpop.f32.mrb[0].mxu0
      %v874 = vpop.f32.mrb[0].mxu0
      %v875 = vadd.f32 0.0, %v874
      %v876 = vpop.f32.mrb[0].mxu0
      %877 = vdwg.mxu0
      %s878 = scalar_lea.vmem %s2, 3
      %v879 = vld [vmem:[%s878] sm:$0x1]
      %v881 = vlaneseq
      %v882 = vshrl.u32 %v881, 7
      %v883 = vsub.s32 0, %v882
      %v884 = vrot.slane %v879, %v883
      %v886 = vmul.f32 %v872, %v884
      %v887 = vmul.f32 %v875, %v884
      %s888 = scalar_lea.vmem %s3, 3
      %v889 = vld [vmem:[%s888] sm:$0x1]
      %v891 = vlaneseq
      %v892 = vshrl.u32 %v891, 7
      %v893 = vsub.s32 0, %v892
      %v894 = vrot.slane %v889, %v893
      %v896 = vadd.f32 %v886, %v894
      %v897 = vadd.f32 %v887, %v894
      %v898 = vmax.f32 %v896, 0.0
      %v899 = vmax.f32 %v897, 0.0
      %v900 = vpack.c.bf16 %v899, %v898
      %902 = vrot.lane.b32.xlu0 %v900, 32
      %v903 = vpop.permute.xlu0 %902
      %vm905 = vcmask 326912
      %906 = vst.msk [vmem:[#allocation4] sm:$0xff] %vm905, %v903
      %909 = vrot.lane.b32.xlu0 %v898, 40
      %v910 = vpop.permute.xlu0 %909
      %911 = vrot.lane.b32.xlu0 %v899, 40
      %v912 = vpop.permute.xlu0 %911
      %v915 = vadd.f32 %v393, %v910
      %v916 = vadd.f32 %v394, %v912
      %919 = vrot.lane.b32.xlu0 %v915, 88
      %v920 = vpop.permute.xlu0 %919
      %921 = vrot.lane.b32.xlu0 %v916, 88
      %v922 = vpop.permute.xlu0 %921
      %925 = vst.msk [vmem:[#allocation2 + $0x4] sm:$0xff] %vm396, %v920
      %926 = vst.msk [vmem:[#allocation2 + $0xc] sm:$0xff] %vm396, %v922
      %v927 = vld [vmem:[#allocation2] sm:$0xff]
      %v928 = vld [vmem:[#allocation2 + $0x8] sm:$0xff]
      %v929 = vpack.c.bf16 %v928, %v927
      %930 = vst.msk [vmem:[#allocation3] sm:$0xff] %vm396, %v929
      %v931 = vld [vmem:[#allocation2 + $0x4] sm:$0xff]
      %v932 = vld [vmem:[#allocation2 + $0xc] sm:$0xff]
      %v933 = vpack.c.bf16 %v932, %v931
      %935 = vrot.lane.b32.xlu0 %v933, 8
      %v936 = vpop.permute.xlu0 %935
      %938 = vst.msk [vmem:[#allocation3] sm:$0xff] %vm419, %v936
      %v939 = vld [vmem:[#allocation2 + $0x8] sm:$0xff]
      %v940 = vld [vmem:[#allocation2 + $0x10] sm:$0xff]
      %v941 = vpack.c.bf16 %v940, %v939
      %943 = vrot.lane.b32.xlu0 %v941, 16
      %v944 = vpop.permute.xlu0 %943
      %946 = vst.msk [vmem:[#allocation3] sm:$0xff] %vm428, %v944
      %v947 = vld [vmem:[#allocation3] sm:$0xff]
      %s948 = scalar_lea.vmem %s1, 48
      %v949 = vld [vmem:[%s948] sm:$0xf]
      %v950 = vld [vmem:[%s948 + $0x4] sm:$0xf]
      %v951 = vld [vmem:[%s948 + $0x8] sm:$0xf]
      %v955 = vunpack.c.l.b16 %v949
      %v956 = vunpack.c.l.b16 %v950
      %v957 = vunpack.c.l.b16 %v951
      %v958 = vpack.c.b16 %v956, %v955
      %v959 = vpack.c.b16 %v957, %v957
      %v962 = vsel %vm443, %v947, 0
      %v965 = vsel %vm447, %v959, 0
      %967 = vmatprep.subr.bf16.mxu0 0
      %968 = vmatpush1.bf16.msra.mxu0 %v958
      %969 = vmatprep.subr.bf16.mxu0 0
      %970 = vmatpush1.bf16.msra.mxu0 %v965
      %971 = vmatprep.subr.bf16.mxu0 0
      %972 = vmatpush1.bf16.msra.mxu0 0
      %973 = vmatprep.subr.bf16.mxu0 0
      %974 = vmatpush1.bf16.msra.mxu0 0
      %975 = vmatprep.subr.bf16.mxu0 0
      %976 = vmatpush1.bf16.msra.mxu0 0
      %977 = vmatprep.subr.bf16.mxu0 0
      %978 = vmatpush1.bf16.msra.mxu0 0
      %979 = vmatprep.subr.bf16.mxu0 0
      %980 = vmatpush1.bf16.msra.mxu0 0
      %981 = vmatprep.subr.bf16.mxu0 0
      %982 = vmatpush1.bf16.msra.mxu0 0
      %983 = vmatprep.subr.bf16.mxu0 0
      %984 = vmatpush1.bf16.msra.mxu0 0
      %985 = vmatprep.subr.bf16.mxu0 0
      %986 = vmatpush1.bf16.msra.mxu0 0
      %987 = vmatprep.subr.bf16.mxu0 0
      %988 = vmatpush1.bf16.msra.mxu0 0
      %989 = vmatprep.subr.bf16.mxu0 0
      %990 = vmatpush1.bf16.msra.mxu0 0
      %991 = vmatprep.subr.bf16.mxu0 0
      %992 = vmatpush1.bf16.msra.mxu0 0
      %993 = vmatprep.subr.bf16.mxu0 0
      %994 = vmatpush1.bf16.msra.mxu0 0
      %995 = vmatprep.subr.bf16.mxu0 0
      %996 = vmatpush1.bf16.msra.mxu0 0
      %997 = vmatprep.subr.bf16.mxu0 0
      %998 = vmatpush1.bf16.msra.mxu0 0
      %999 = vmatprep.mubr.bf16.mxu0 0
      %1000 = vmatmul.mubr.bf16.gmra.mrb[0].mxu0 %v962
      %v1001 = vpop.f32.mrb[0].mxu0
      %v1002 = vadd.f32 0.0, %v1001
      %v1003 = vpop.f32.mrb[0].mxu0
      %v1004 = vpop.f32.mrb[0].mxu0
      %v1005 = vadd.f32 0.0, %v1004
      %v1006 = vpop.f32.mrb[0].mxu0
      %1007 = vdwg.mxu0
      %s1008 = scalar_lea.vmem %s2, 4
      %v1009 = vld [vmem:[%s1008] sm:$0x1]
      %v1011 = vlaneseq
      %v1012 = vshrl.u32 %v1011, 7
      %v1013 = vsub.s32 0, %v1012
      %v1014 = vrot.slane %v1009, %v1013
      %v1016 = vmul.f32 %v1002, %v1014
      %v1017 = vmul.f32 %v1005, %v1014
      %s1018 = scalar_lea.vmem %s3, 4
      %v1019 = vld [vmem:[%s1018] sm:$0x1]
      %v1021 = vlaneseq
      %v1022 = vshrl.u32 %v1021, 7
      %v1023 = vsub.s32 0, %v1022
      %v1024 = vrot.slane %v1019, %v1023
      %v1026 = vadd.f32 %v1016, %v1024
      %v1027 = vadd.f32 %v1017, %v1024
      %v1028 = vmax.f32 %v1026, 0.0
      %v1029 = vmax.f32 %v1027, 0.0
      %v1030 = vpack.c.bf16 %v1029, %v1028
      %1032 = vrot.lane.b32.xlu0 %v1030, 40
      %v1033 = vpop.permute.xlu0 %1032
      %vm1035 = vcmask 392512
      %1036 = vst.msk [vmem:[#allocation4] sm:$0xff] %vm1035, %v1033
      %1039 = vrot.lane.b32.xlu0 %v1028, 48
      %v1040 = vpop.permute.xlu0 %1039
      %1041 = vrot.lane.b32.xlu0 %v1029, 48
      %v1042 = vpop.permute.xlu0 %1041
      %v1045 = vadd.f32 %v393, %v1040
      %v1046 = vadd.f32 %v394, %v1042
      %1049 = vrot.lane.b32.xlu0 %v1045, 80
      %v1050 = vpop.permute.xlu0 %1049
      %1051 = vrot.lane.b32.xlu0 %v1046, 80
      %v1052 = vpop.permute.xlu0 %1051
      %1055 = vst.msk [vmem:[#allocation2 + $0x4] sm:$0xff] %vm396, %v1050
      %1056 = vst.msk [vmem:[#allocation2 + $0xc] sm:$0xff] %vm396, %v1052
      %v1057 = vld [vmem:[#allocation2] sm:$0xff]
      %v1058 = vld [vmem:[#allocation2 + $0x8] sm:$0xff]
      %v1059 = vpack.c.bf16 %v1058, %v1057
      %1060 = vst.msk [vmem:[#allocation3] sm:$0xff] %vm396, %v1059
      %v1061 = vld [vmem:[#allocation2 + $0x4] sm:$0xff]
      %v1062 = vld [vmem:[#allocation2 + $0xc] sm:$0xff]
      %v1063 = vpack.c.bf16 %v1062, %v1061
      %1065 = vrot.lane.b32.xlu0 %v1063, 8
      %v1066 = vpop.permute.xlu0 %1065
      %1068 = vst.msk [vmem:[#allocation3] sm:$0xff] %vm419, %v1066
      %v1069 = vld [vmem:[#allocation2 + $0x8] sm:$0xff]
      %v1070 = vld [vmem:[#allocation2 + $0x10] sm:$0xff]
      %v1071 = vpack.c.bf16 %v1070, %v1069
      %1073 = vrot.lane.b32.xlu0 %v1071, 16
      %v1074 = vpop.permute.xlu0 %1073
      %1076 = vst.msk [vmem:[#allocation3] sm:$0xff] %vm428, %v1074
      %v1077 = vld [vmem:[#allocation3] sm:$0xff]
      %s1078 = scalar_lea.vmem %s1, 60
      %v1079 = vld [vmem:[%s1078] sm:$0xf]
      %v1080 = vld [vmem:[%s1078 + $0x4] sm:$0xf]
      %v1081 = vld [vmem:[%s1078 + $0x8] sm:$0xf]
      %v1085 = vunpack.c.l.b16 %v1079
      %v1086 = vunpack.c.l.b16 %v1080
      %v1087 = vunpack.c.l.b16 %v1081
      %v1088 = vpack.c.b16 %v1086, %v1085
      %v1089 = vpack.c.b16 %v1087, %v1087
      %v1092 = vsel %vm443, %v1077, 0
      %v1095 = vsel %vm447, %v1089, 0
      %1097 = vmatprep.subr.bf16.mxu0 0
      %1098 = vmatpush1.bf16.msra.mxu0 %v1088
      %1099 = vmatprep.subr.bf16.mxu0 0
      %1100 = vmatpush1.bf16.msra.mxu0 %v1095
      %1101 = vmatprep.subr.bf16.mxu0 0
      %1102 = vmatpush1.bf16.msra.mxu0 0
      %1103 = vmatprep.subr.bf16.mxu0 0
      %1104 = vmatpush1.bf16.msra.mxu0 0
      %1105 = vmatprep.subr.bf16.mxu0 0
      %1106 = vmatpush1.bf16.msra.mxu0 0
      %1107 = vmatprep.subr.bf16.mxu0 0
      %1108 = vmatpush1.bf16.msra.mxu0 0
      %1109 = vmatprep.subr.bf16.mxu0 0
      %1110 = vmatpush1.bf16.msra.mxu0 0
      %1111 = vmatprep.subr.bf16.mxu0 0
      %1112 = vmatpush1.bf16.msra.mxu0 0
      %1113 = vmatprep.subr.bf16.mxu0 0
      %1114 = vmatpush1.bf16.msra.mxu0 0
      %1115 = vmatprep.subr.bf16.mxu0 0
      %1116 = vmatpush1.bf16.msra.mxu0 0
      %1117 = vmatprep.subr.bf16.mxu0 0
      %1118 = vmatpush1.bf16.msra.mxu0 0
      %1119 = vmatprep.subr.bf16.mxu0 0
      %1120 = vmatpush1.bf16.msra.mxu0 0
      %1121 = vmatprep.subr.bf16.mxu0 0
      %1122 = vmatpush1.bf16.msra.mxu0 0
      %1123 = vmatprep.subr.bf16.mxu0 0
      %1124 = vmatpush1.bf16.msra.mxu0 0
      %1125 = vmatprep.subr.bf16.mxu0 0
      %1126 = vmatpush1.bf16.msra.mxu0 0
      %1127 = vmatprep.subr.bf16.mxu0 0
      %1128 = vmatpush1.bf16.msra.mxu0 0
      %1129 = vmatprep.mubr.bf16.mxu0 0
      %1130 = vmatmul.mubr.bf16.gmra.mrb[0].mxu0 %v1092
      %v1131 = vpop.f32.mrb[0].mxu0
      %v1132 = vadd.f32 0.0, %v1131
      %v1133 = vpop.f32.mrb[0].mxu0
      %v1134 = vpop.f32.mrb[0].mxu0
      %v1135 = vadd.f32 0.0, %v1134
      %v1136 = vpop.f32.mrb[0].mxu0
      %1137 = vdwg.mxu0
      %s1138 = scalar_lea.vmem %s2, 5
      %v1139 = vld [vmem:[%s1138] sm:$0x1]
      %v1141 = vlaneseq
      %v1142 = vshrl.u32 %v1141, 7
      %v1143 = vsub.s32 0, %v1142
      %v1144 = vrot.slane %v1139, %v1143
      %v1146 = vmul.f32 %v1132, %v1144
      %v1147 = vmul.f32 %v1135, %v1144
      %s1148 = scalar_lea.vmem %s3, 5
      %v1149 = vld [vmem:[%s1148] sm:$0x1]
      %v1151 = vlaneseq
      %v1152 = vshrl.u32 %v1151, 7
      %v1153 = vsub.s32 0, %v1152
      %v1154 = vrot.slane %v1149, %v1153
      %v1156 = vadd.f32 %v1146, %v1154
      %v1157 = vadd.f32 %v1147, %v1154
      %v1158 = vmax.f32 %v1156, 0.0
      %v1159 = vmax.f32 %v1157, 0.0
      %v1160 = vpack.c.bf16 %v1159, %v1158
      %1162 = vrot.lane.b32.xlu0 %v1160, 48
      %v1163 = vpop.permute.xlu0 %1162
      %vm1165 = vcmask 458112
      %1166 = vst.msk [vmem:[#allocation4] sm:$0xff] %vm1165, %v1163
      %1169 = vrot.lane.b32.xlu0 %v1158, 56
      %v1170 = vpop.permute.xlu0 %1169
      %1171 = vrot.lane.b32.xlu0 %v1159, 56
      %v1172 = vpop.permute.xlu0 %1171
      %v1175 = vadd.f32 %v393, %v1170
      %v1176 = vadd.f32 %v394, %v1172
      %1179 = vrot.lane.b32.xlu0 %v1175, 72
      %v1180 = vpop.permute.xlu0 %1179
      %1181 = vrot.lane.b32.xlu0 %v1176, 72
      %v1182 = vpop.permute.xlu0 %1181
      %1185 = vst.msk [vmem:[#allocation2 + $0x4] sm:$0xff] %vm396, %v1180
      %1186 = vst.msk [vmem:[#allocation2 + $0xc] sm:$0xff] %vm396, %v1182
      %v1187 = vld [vmem:[#allocation2] sm:$0xff]
      %v1188 = vld [vmem:[#allocation2 + $0x8] sm:$0xff]
      %v1189 = vpack.c.bf16 %v1188, %v1187
      %1190 = vst.msk [vmem:[#allocation3] sm:$0xff] %vm396, %v1189
      %v1191 = vld [vmem:[#allocation2 + $0x4] sm:$0xff]
      %v1192 = vld [vmem:[#allocation2 + $0xc] sm:$0xff]
      %v1193 = vpack.c.bf16 %v1192, %v1191
      %1195 = vrot.lane.b32.xlu0 %v1193, 8
      %v1196 = vpop.permute.xlu0 %1195
      %1198 = vst.msk [vmem:[#allocation3] sm:$0xff] %vm419, %v1196
      %v1199 = vld [vmem:[#allocation2 + $0x8] sm:$0xff]
      %v1200 = vld [vmem:[#allocation2 + $0x10] sm:$0xff]
      %v1201 = vpack.c.bf16 %v1200, %v1199
      %1203 = vrot.lane.b32.xlu0 %v1201, 16
      %v1204 = vpop.permute.xlu0 %1203
      %1206 = vst.msk [vmem:[#allocation3] sm:$0xff] %vm428, %v1204
      %v1207 = vld [vmem:[#allocation3] sm:$0xff]
      %s1208 = scalar_lea.vmem %s1, 72
      %v1209 = vld [vmem:[%s1208] sm:$0xf]
      %v1210 = vld [vmem:[%s1208 + $0x4] sm:$0xf]
      %v1211 = vld [vmem:[%s1208 + $0x8] sm:$0xf]
      %v1215 = vunpack.c.l.b16 %v1209
      %v1216 = vunpack.c.l.b16 %v1210
      %v1217 = vunpack.c.l.b16 %v1211
      %v1218 = vpack.c.b16 %v1216, %v1215
      %v1219 = vpack.c.b16 %v1217, %v1217
      %v1222 = vsel %vm443, %v1207, 0
      %v1225 = vsel %vm447, %v1219, 0
      %1227 = vmatprep.subr.bf16.mxu0 0
      %1228 = vmatpush1.bf16.msra.mxu0 %v1218
      %1229 = vmatprep.subr.bf16.mxu0 0
      %1230 = vmatpush1.bf16.msra.mxu0 %v1225
      %1231 = vmatprep.subr.bf16.mxu0 0
      %1232 = vmatpush1.bf16.msra.mxu0 0
      %1233 = vmatprep.subr.bf16.mxu0 0
      %1234 = vmatpush1.bf16.msra.mxu0 0
      %1235 = vmatprep.subr.bf16.mxu0 0
      %1236 = vmatpush1.bf16.msra.mxu0 0
      %1237 = vmatprep.subr.bf16.mxu0 0
      %1238 = vmatpush1.bf16.msra.mxu0 0
      %1239 = vmatprep.subr.bf16.mxu0 0
      %1240 = vmatpush1.bf16.msra.mxu0 0
      %1241 = vmatprep.subr.bf16.mxu0 0
      %1242 = vmatpush1.bf16.msra.mxu0 0
      %1243 = vmatprep.subr.bf16.mxu0 0
      %1244 = vmatpush1.bf16.msra.mxu0 0
      %1245 = vmatprep.subr.bf16.mxu0 0
      %1246 = vmatpush1.bf16.msra.mxu0 0
      %1247 = vmatprep.subr.bf16.mxu0 0
      %1248 = vmatpush1.bf16.msra.mxu0 0
      %1249 = vmatprep.subr.bf16.mxu0 0
      %1250 = vmatpush1.bf16.msra.mxu0 0
      %1251 = vmatprep.subr.bf16.mxu0 0
      %1252 = vmatpush1.bf16.msra.mxu0 0
      %1253 = vmatprep.subr.bf16.mxu0 0
      %1254 = vmatpush1.bf16.msra.mxu0 0
      %1255 = vmatprep.subr.bf16.mxu0 0
      %1256 = vmatpush1.bf16.msra.mxu0 0
      %1257 = vmatprep.subr.bf16.mxu0 0
      %1258 = vmatpush1.bf16.msra.mxu0 0
      %1259 = vmatprep.mubr.bf16.mxu0 0
      %1260 = vmatmul.mubr.bf16.gmra.mrb[0].mxu0 %v1222
      %v1261 = vpop.f32.mrb[0].mxu0
      %v1262 = vadd.f32 0.0, %v1261
      %v1263 = vpop.f32.mrb[0].mxu0
      %v1264 = vpop.f32.mrb[0].mxu0
      %v1265 = vadd.f32 0.0, %v1264
      %v1266 = vpop.f32.mrb[0].mxu0
      %1267 = vdwg.mxu0
      %s1268 = scalar_lea.vmem %s2, 6
      %v1269 = vld [vmem:[%s1268] sm:$0x1]
      %v1271 = vlaneseq
      %v1272 = vshrl.u32 %v1271, 7
      %v1273 = vsub.s32 0, %v1272
      %v1274 = vrot.slane %v1269, %v1273
      %v1276 = vmul.f32 %v1262, %v1274
      %v1277 = vmul.f32 %v1265, %v1274
      %s1278 = scalar_lea.vmem %s3, 6
      %v1279 = vld [vmem:[%s1278] sm:$0x1]
      %v1281 = vlaneseq
      %v1282 = vshrl.u32 %v1281, 7
      %v1283 = vsub.s32 0, %v1282
      %v1284 = vrot.slane %v1279, %v1283
      %v1286 = vadd.f32 %v1276, %v1284
      %v1287 = vadd.f32 %v1277, %v1284
      %v1288 = vmax.f32 %v1286, 0.0
      %v1289 = vmax.f32 %v1287, 0.0
      %v1290 = vpack.c.bf16 %v1289, %v1288
      %1292 = vrot.lane.b32.xlu0 %v1290, 56
      %v1293 = vpop.permute.xlu0 %1292
      %vm1295 = vcmask 523712
      %1296 = vst.msk [vmem:[#allocation4] sm:$0xff] %vm1295, %v1293
      %v1297 = vld [vmem:[#allocation4] sm:$0xff]
      %v1298 = vunpack.c.l.bf16 %v1297
      %v1299 = vunpack.c.h.bf16 %v1297
      %vm1300 = vcmask 523264
      %v1301 = vsel %vm1300, %v1298, 0.0
      %v1302 = vsel %vm1300, %v1299, 0.0
      %v1303 = vadd.f32 %v1301, %v1302
      %v1304 = vrot.slane %v1303, 4
      %v1305 = vadd.f32 %v1303, %v1304
      %v1306 = vrot.slane %v1305, 2
      %v1307 = vadd.f32 %v1305, %v1306
      %v1308 = vrot.slane %v1307, 1
      %v1309 = vadd.f32 %v1307, %v1308
      %v1310 = vrcp.pop 16.0
      %v1311 = vmul.f32 %v1309, %v1310
      %v1312 = vpack.c.bf16 %v1311, %v1311
      %v1313 = vld [vmem:[%s4] sm:$0xf]
      %v1314 = vld [vmem:[%s4 + $0x4] sm:$0xf]
      %v1315 = vld [vmem:[%s4 + $0x8] sm:$0xf]
      %v1316 = vld [vmem:[%s4 + $0xc] sm:$0xf]
      %v1317 = vld [vmem:[%s4 + $0x10] sm:$0xf]
      %v1318 = vld [vmem:[%s4 + $0x14] sm:$0xf]
      %v1319 = vld [vmem:[%s4 + $0x18] sm:$0xf]
      %v1320 = vld [vmem:[%s4 + $0x1c] sm:$0xf]
      %v1321 = vld [vmem:[%s5] sm:$0x1]
      %v1330 = vunpack.c.l.b16 %v1313
      %v1331 = vunpack.c.l.b16 %v1314
      %v1332 = vunpack.c.l.b16 %v1315
      %v1333 = vunpack.c.l.b16 %v1316
      %v1334 = vunpack.c.l.b16 %v1317
      %v1335 = vunpack.c.l.b16 %v1318
      %v1336 = vunpack.c.l.b16 %v1319
      %v1337 = vunpack.c.l.b16 %v1320
      %v1338 = vpack.c.b16 %v1331, %v1330
      %v1339 = vpack.c.b16 %v1333, %v1332
      %v1340 = vpack.c.b16 %v1335, %v1334
      %v1341 = vpack.c.b16 %v1337, %v1336
      %v1347 = vsel %vm1300, %v1312, 0
      %1349 = vmatprep.subr.bf16.mxu0 0
      %1350 = vmatpush1.bf16.msra.mxu0 %v1338
      %1351 = vmatprep.subr.bf16.mxu0 0
      %1352 = vmatpush1.bf16.msra.mxu0 %v1339
      %1353 = vmatprep.subr.bf16.mxu0 0
      %1354 = vmatpush1.bf16.msra.mxu0 %v1340
      %1355 = vmatprep.subr.bf16.mxu0 0
      %1356 = vmatpush1.bf16.msra.mxu0 %v1341
      %1357 = vmatprep.subr.bf16.mxu0 0
      %1358 = vmatpush1.bf16.msra.mxu0 0
      %1359 = vmatprep.subr.bf16.mxu0 0
      %1360 = vmatpush1.bf16.msra.mxu0 0
      %1361 = vmatprep.subr.bf16.mxu0 0
      %1362 = vmatpush1.bf16.msra.mxu0 0
      %1363 = vmatprep.subr.bf16.mxu0 0
      %1364 = vmatpush1.bf16.msra.mxu0 0
      %1365 = vmatprep.subr.bf16.mxu0 0
      %1366 = vmatpush1.bf16.msra.mxu0 0
      %1367 = vmatprep.subr.bf16.mxu0 0
      %1368 = vmatpush1.bf16.msra.mxu0 0
      %1369 = vmatprep.subr.bf16.mxu0 0
      %1370 = vmatpush1.bf16.msra.mxu0 0
      %1371 = vmatprep.subr.bf16.mxu0 0
      %1372 = vmatpush1.bf16.msra.mxu0 0
      %1373 = vmatprep.subr.bf16.mxu0 0
      %1374 = vmatpush1.bf16.msra.mxu0 0
      %1375 = vmatprep.subr.bf16.mxu0 0
      %1376 = vmatpush1.bf16.msra.mxu0 0
      %1377 = vmatprep.subr.bf16.mxu0 0
      %1378 = vmatpush1.bf16.msra.mxu0 0
      %1379 = vmatprep.subr.bf16.mxu0 0
      %1380 = vmatpush1.bf16.msra.mxu0 0
      %1381 = vmatprep.mubr.bf16.mxu0 0
      %1382 = vmatmul.mubr.bf16.gmra.mrb[0].mxu0 %v1347
      %v1383 = vpop.f32.mrb[0].mxu0
      %v1384 = vadd.f32 %v1321, %v1383
      %v1385 = vpop.f32.mrb[0].mxu0
      %v1386 = vpop.f32.mrb[0].mxu0
      %v1387 = vpop.f32.mrb[0].mxu0
      %1388 = vdwg.mxu0
      %v1389 = vmax.f32 %v1384, 0.0
      %v1390 = vpack.c.bf16 %v1389, %v1389
      %v1391 = vld [vmem:[%s6] sm:$0xf]
      %v1392 = vld [vmem:[%s6 + $0x4] sm:$0xf]
      %v1393 = vld [vmem:[%s6 + $0x8] sm:$0xf]
      %v1394 = vld [vmem:[%s6 + $0xc] sm:$0xf]
      %v1395 = vld [vmem:[%s7] sm:$0x1]
      %v1400 = vunpack.c.l.b16 %v1391
      %v1401 = vunpack.c.l.b16 %v1392
      %v1402 = vunpack.c.l.b16 %v1393
      %v1403 = vunpack.c.l.b16 %v1394
      %v1404 = vpack.c.b16 %v1401, %v1400
      %v1405 = vpack.c.b16 %v1403, %v1402
      %vm1408 = vcmask 261120
      %v1410 = vsel %vm1408, %v1390, 0
      %1412 = vmatprep.subr.bf16.mxu0 0
      %1413 = vmatpush1.bf16.msra.mxu0 %v1404
      %1414 = vmatprep.subr.bf16.mxu0 0
      %1415 = vmatpush1.bf16.msra.mxu0 %v1405
      %1416 = vmatprep.subr.bf16.mxu0 0
      %1417 = vmatpush1.bf16.msra.mxu0 0
      %1418 = vmatprep.subr.bf16.mxu0 0
      %1419 = vmatpush1.bf16.msra.mxu0 0
      %1420 = vmatprep.subr.bf16.mxu0 0
      %1421 = vmatpush1.bf16.msra.mxu0 0
      %1422 = vmatprep.subr.bf16.mxu0 0
      %1423 = vmatpush1.bf16.msra.mxu0 0
      %1424 = vmatprep.subr.bf16.mxu0 0
      %1425 = vmatpush1.bf16.msra.mxu0 0
      %1426 = vmatprep.subr.bf16.mxu0 0
      %1427 = vmatpush1.bf16.msra.mxu0 0
      %1428 = vmatprep.subr.bf16.mxu0 0
      %1429 = vmatpush1.bf16.msra.mxu0 0
      %1430 = vmatprep.subr.bf16.mxu0 0
      %1431 = vmatpush1.bf16.msra.mxu0 0
      %1432 = vmatprep.subr.bf16.mxu0 0
      %1433 = vmatpush1.bf16.msra.mxu0 0
      %1434 = vmatprep.subr.bf16.mxu0 0
      %1435 = vmatpush1.bf16.msra.mxu0 0
      %1436 = vmatprep.subr.bf16.mxu0 0
      %1437 = vmatpush1.bf16.msra.mxu0 0
      %1438 = vmatprep.subr.bf16.mxu0 0
      %1439 = vmatpush1.bf16.msra.mxu0 0
      %1440 = vmatprep.subr.bf16.mxu0 0
      %1441 = vmatpush1.bf16.msra.mxu0 0
      %1442 = vmatprep.subr.bf16.mxu0 0
      %1443 = vmatpush1.bf16.msra.mxu0 0
      %1444 = vmatprep.mubr.bf16.mxu0 0
      %1445 = vmatmul.mubr.bf16.gmra.mrb[0].mxu0 %v1410
      %v1446 = vpop.f32.mrb[0].mxu0
      %v1447 = vadd.f32 %v1395, %v1446
      %v1448 = vpop.f32.mrb[0].mxu0
      %v1449 = vpop.f32.mrb[0].mxu0
      %v1450 = vpop.f32.mrb[0].mxu0
      %1451 = vdwg.mxu0
      %v1452 = vxor.u32 %v1447, 2147483648
      %v1453 = vmul.f32 %v1452, 1.442695
      %v1454 = vpow.pop %v1453
      %v1455 = vadd.f32 %v1454, 1.0
      %v1456 = vrcp.pop %v1455
      %v1457 = vmul.f32 1.0, %v1456
      %v1458 = vlaneseq
      %v1459 = vshrl.u32 %v1458, 7
      %v1460 = vsub.s32 0, %v1459
      %v1461 = vrot.slane %v1457, %v1460
      %v1462 = vmul.f32 %v1298, %v1461
      %v1463 = vmul.f32 %v1299, %v1461
      %v1464 = vpack.c.bf16 %v1463, %v1462
      %v1465 = vld [vmem:[%s8] sm:$0xf]
      %v1466 = vld [vmem:[%s8 + $0x4] sm:$0xf]
      %v1467 = vld [vmem:[%s8 + $0x8] sm:$0xf]
      %v1468 = vld [vmem:[%s8 + $0xc] sm:$0xf]
      %v1469 = vld [vmem:[%s8 + $0x10] sm:$0xf]
      %v1470 = vld [vmem:[%s8 + $0x14] sm:$0xf]
      %v1471 = vld [vmem:[%s8 + $0x18] sm:$0xf]
      %v1472 = vld [vmem:[%s8 + $0x1c] sm:$0xf]
      %v1481 = vunpack.c.l.b16 %v1465
      %v1482 = vunpack.c.l.b16 %v1466
      %v1483 = vunpack.c.l.b16 %v1467
      %v1484 = vunpack.c.l.b16 %v1468
      %v1485 = vunpack.c.l.b16 %v1469
      %v1486 = vunpack.c.l.b16 %v1470
      %v1487 = vunpack.c.l.b16 %v1471
      %v1488 = vunpack.c.l.b16 %v1472
      %v1489 = vpack.c.b16 %v1482, %v1481
      %v1490 = vpack.c.b16 %v1484, %v1483
      %v1491 = vpack.c.b16 %v1486, %v1485
      %v1492 = vpack.c.b16 %v1488, %v1487
      %v1498 = vsel %vm1300, %v1464, 0
      %1500 = vmatprep.subr.bf16.mxu0 0
      %1501 = vmatpush1.bf16.msra.mxu0 %v1489
      %1502 = vmatprep.subr.bf16.mxu0 0
      %1503 = vmatpush1.bf16.msra.mxu0 %v1490
      %1504 = vmatprep.subr.bf16.mxu0 0
      %1505 = vmatpush1.bf16.msra.mxu0 %v1491
      %1506 = vmatprep.subr.bf16.mxu0 0
      %1507 = vmatpush1.bf16.msra.mxu0 %v1492
      %1508 = vmatprep.subr.bf16.mxu0 0
      %1509 = vmatpush1.bf16.msra.mxu0 0
      %1510 = vmatprep.subr.bf16.mxu0 0
      %1511 = vmatpush1.bf16.msra.mxu0 0
      %1512 = vmatprep.subr.bf16.mxu0 0
      %1513 = vmatpush1.bf16.msra.mxu0 0
      %1514 = vmatprep.subr.bf16.mxu0 0
      %1515 = vmatpush1.bf16.msra.mxu0 0
      %1516 = vmatprep.subr.bf16.mxu0 0
      %1517 = vmatpush1.bf16.msra.mxu0 0
      %1518 = vmatprep.subr.bf16.mxu0 0
      %1519 = vmatpush1.bf16.msra.mxu0 0
      %1520 = vmatprep.subr.bf16.mxu0 0
      %1521 = vmatpush1.bf16.msra.mxu0 0
      %1522 = vmatprep.subr.bf16.mxu0 0
      %1523 = vmatpush1.bf16.msra.mxu0 0
      %1524 = vmatprep.subr.bf16.mxu0 0
      %1525 = vmatpush1.bf16.msra.mxu0 0
      %1526 = vmatprep.subr.bf16.mxu0 0
      %1527 = vmatpush1.bf16.msra.mxu0 0
      %1528 = vmatprep.subr.bf16.mxu0 0
      %1529 = vmatpush1.bf16.msra.mxu0 0
      %1530 = vmatprep.subr.bf16.mxu0 0
      %1531 = vmatpush1.bf16.msra.mxu0 0
      %1532 = vmatprep.mubr.bf16.mxu0 0
      %1533 = vmatmul.mubr.bf16.gmra.mrb[0].mxu0 %v1498
      %v1534 = vpop.f32.mrb[0].mxu0
      %v1535 = vadd.f32 0.0, %v1534
      %v1536 = vpop.f32.mrb[0].mxu0
      %v1537 = vpop.f32.mrb[0].mxu0
      %v1538 = vadd.f32 0.0, %v1537
      %v1539 = vpop.f32.mrb[0].mxu0
      %1540 = vdwg.mxu0
      %v1541 = vld [vmem:[%s9] sm:$0x1]
      %v1543 = vlaneseq
      %v1544 = vshrl.u32 %v1543, 7
      %v1545 = vsub.s32 0, %v1544
      %v1546 = vrot.slane %v1541, %v1545
      %v1548 = vmul.f32 %v1535, %v1546
      %v1549 = vmul.f32 %v1538, %v1546
      %v1550 = vld [vmem:[%s10] sm:$0x1]
      %v1552 = vlaneseq
      %v1553 = vshrl.u32 %v1552, 7
      %v1554 = vsub.s32 0, %v1553
      %v1555 = vrot.slane %v1550, %v1554
      %v1557 = vadd.f32 %v1548, %v1555
      %v1558 = vadd.f32 %v1549, %v1555
      %v1559 = vmax.f32 %v1557, 0.0
      %v1560 = vmax.f32 %v1558, 0.0
      %v1561 = vpack.c.bf16 %v1560, %v1559
      %v1563 = vunpack.c.l.b16 %v1561
      %v1564 = vunpack.c.h.b16 %v1561
      %v1565 = vpack.c.b16 %v1563, %v1563
      %v1566 = vpack.c.b16 %v1564, %v1564
      %vm1569 = vcmask 519168
      %1570 = vst.msk [vmem:[%s386] sm:$0xf] %vm1569, %v1565
      %1571 = vst.msk [vmem:[%s386 + $0x4] sm:$0xf] %vm1569, %v1566
      %p1572 = scmp.lt.s32.totalorder %s22, 1
      %s1573 = scalar_select %p1572, %s22, 1
      %s1574 = smul.addr %s1573, 2
      %s1575 = smul.addr %s1574, 4
      %s1576 = scalar_lea.vmem %s11, %s1575
      // Predicated region
      $region65: #{ecapa_forward.8} parent=63 // pred_check
        %p1577 = pneg %p276
      $region66: #{ecapa_forward.8} parent=63 // pred_check_branch
        %1579 = sbr.rel (%p1577) target = $region68
      $region67: #{ecapa_forward.8} parent=63 // pred_region
        _
      $region68: #{ecapa_forward.8} parent=63 // pred_fallthru
        _
    $region64: #{ecapa_forward.8} parent=5 // pred_fallthru
      _
    %p1580 = scmp.le.s32.totalorder 2, %s17
    // Predicated region
    $region69: #{ecapa_forward.8} parent=5 // pred_check
      %p1581 = pneg %p1580
    $region70: #{ecapa_forward.8} parent=5 // pred_check_branch
      %1583 = sbr.rel (%p1581) target = $region72
    $region71: #{ecapa_forward.8} parent=5 // pred_region
      %s1584 = ssub.s32 %s17, 2
      // Predicated region
      $region73: #{ecapa_forward.8} parent=71 // pred_check
        %p1585 = pneg %p282
      $region74: #{ecapa_forward.8} parent=71 // pred_check_branch
        %1587 = sbr.rel (%p1585) target = $region76
      $region75: #{ecapa_forward.8} parent=71 // pred_region
        %p1588 = scmp.lt.s32.totalorder %s23, 1
        %s1589 = scalar_select %p1588, %s23, 1
        %s1590 = smul.addr %s1589, 2
        %s1591 = smul.addr %s1590, 4
        %s1592 = scalar_lea.vmem %s11, %s1591
      $region76: #{ecapa_forward.8} parent=71 // pred_fallthru
        _
    $region72: #{ecapa_forward.8} parent=5 // pred_fallthru
      _
  $region6: #{ecapa_forward.8} parent=0 // loop_footer
    %s21 = sadd.s32 1, %s17
  $region7: #{ecapa_forward.8} parent=0 // loop_footer_branch
    %16 = sbr.rel target = $region3
  $region8: #{ecapa_forward.8} parent=0 // loop_exit
    _

// kernel: ecapa_forward.7
$region0: #{ecapa_forward.7}
  #allocation0 [shape = 'u32[]', space=smem, size = 0x4, offset = 0x4, fixed_abs, tag = 'smem constant byte address 0x4 - core index']
  #allocation1 [shape = 'u32[144,128]{1,0:T(1,128)}', space=vmem, size = 0x12000, scoped, tag = 'internal scratch']
  #allocation2 [shape = 'f32[22,8]{1,0:T(8,128)}', space=vmem, size = 0x3000, scoped, tag = 'scratch operand']
  #allocation3 [shape = 'bf16[16,24]{1,0:T(16,128)(2,1)}', space=vmem, size = 0x1000, scoped, tag = 'scratch operand']
  #allocation4 [shape = 'bf16[16,64]{1,0:T(16,128)(2,1)}', space=vmem, size = 0x1000, scoped, tag = 'scratch operand']
  %s0 = inlined_call_operand.vmem [shape: bf16[2,16,64], index: 0, kind: input, shape index: {}]
  %s1 = inlined_call_operand.vmem [shape: bf16[7,24,8], index: 1, kind: input, shape index: {}]
  %s2 = inlined_call_operand.vmem [shape: f32[7,1,8], index: 2, kind: input, shape index: {}]
  %s3 = inlined_call_operand.vmem [shape: f32[7,1,8], index: 3, kind: input, shape index: {}]
  %s4 = inlined_call_operand.vmem [shape: bf16[64,32], index: 4, kind: input, shape index: {}]
  %s5 = inlined_call_operand.vmem [shape: f32[1,32], index: 5, kind: input, shape index: {}]
  %s6 = inlined_call_operand.vmem [shape: bf16[32,64], index: 6, kind: input, shape index: {}]
  %s7 = inlined_call_operand.vmem [shape: f32[1,64], index: 7, kind: input, shape index: {}]
  %s8 = inlined_call_operand.vmem [shape: bf16[64,64], index: 8, kind: input, shape index: {}]
  %s9 = inlined_call_operand.vmem [shape: f32[1,64], index: 9, kind: input, shape index: {}]
  %s10 = inlined_call_operand.vmem [shape: f32[1,64], index: 10, kind: input, shape index: {}]
  %s11 = inlined_call_operand.vmem [shape: bf16[2,16,64], index: 11, kind: output, shape index: {0}]
  %s12 = inlined_call_operand.vmem [shape: bf16[2,16,64], index: 12, kind: output, shape index: {1}]
  %13 = xla_tuple %s11, %s12
  %s14 = sld [smem:[#allocation0]]
  $region85: #{ecapa_forward.7} parent=0
    _
  %s16 = ssub.s32 1, %s14
  %s17 = scalar_select 0, %s16, %s14
  loop: start=0, step=1, limit=4
  $region2: #{ecapa_forward.7} parent=0 // loop_pre_header
    _
  $region3: #{ecapa_forward.7} parent=0 // loop_header
    %s19 = sphi 0, %s23
    %p20 = scmp.ge.s32.totalorder %s19, 4
    %s29 = sphi 0, %s31
    %s32 = sphi 0, %s29
    %s33 = sphi 0, %s32
    %s49 = sphi 0, %s33
    %s53 = sphi 0, %s53
    %s55 = sphi 0, %s53
    %s56 = sphi 0, %s55
    %s70 = sphi 0, %s56
    %s74 = sphi 0, %s74
    %s76 = sphi 0, %s74
    %s77 = sphi 0, %s76
    %s91 = sphi 0, %s77
    %s95 = sphi 0, %s95
    %s97 = sphi 0, %s95
    %s98 = sphi 0, %s97
    %s112 = sphi 0, %s98
    %s116 = sphi 0, %s116
    %s118 = sphi 0, %s116
    %s119 = sphi 0, %s118
    %s133 = sphi 0, %s119
    %s137 = sphi 0, %s137
    %s139 = sphi 0, %s137
    %s140 = sphi 0, %s139
    %s154 = sphi 0, %s140
    %s158 = sphi 0, %s158
    %s160 = sphi 0, %s158
    %s161 = sphi 0, %s160
    %s175 = sphi 0, %s161
    %s179 = sphi 0, %s179
    %s181 = sphi 0, %s179
    %s182 = sphi 0, %s181
    %s196 = sphi 0, %s182
    %s200 = sphi 0, %s200
    %s202 = sphi 0, %s200
    %s203 = sphi 0, %s202
    %s217 = sphi 0, %s203
    %s221 = sphi 0, %s221
    %s223 = sphi 0, %s221
    %s224 = sphi 0, %s223
    %s238 = sphi 0, %s224
    %s242 = sphi 0, %s242
    %s244 = sphi 0, %s242
    %s245 = sphi 0, %s244
    %s259 = sphi 0, %s245
    %s265 = sphi 0, %s267
    %s268 = sphi 0, %s265
    %s269 = sphi 0, %s268
    %s285 = sphi 0, %s269
    %s291 = sphi 0, %s293
    %s294 = sphi 0, %s291
    %s295 = sphi 0, %s294
    %s311 = sphi 0, %s295
  $region4: #{ecapa_forward.7} parent=0 // loop_header_branch
    %22 = sbr.rel (%p20) target = $region8
  $region5: #{ecapa_forward.7} parent=0 // loop_body
    %s24 = ssub.s32 %s19, 1
    %s25 = ssub.s32 %s19, 2
    %s26 = sadd.s32 %s19, 1
    %s27 = ssub.s32 %s19, %s26
    %p28 = scmp.eq.s32.totalorder %s27, 0
    %s30 = sadd.s32 %s29, 1
    %s31 = scalar_select %p28, %s29, %s30
    %p34 = pneg %p28
    %p35 = scmp.eq.s32.totalorder %s19, 1
    %p36 = por %p34, %p35
    %p37 = scmp.ne.s32.totalorder %s29, %s32
    %p38 = scmp.eq.s32.totalorder %s19, 0
    %p39 = por %p37, %p38
    %p40 = scmp.ne.s32.totalorder %s29, %s32
    %p41 = scmp.eq.s32.totalorder %s24, 1
    %p42 = por %p40, %p41
    %p43 = scmp.ne.s32.totalorder %s32, %s33
    %p44 = scmp.eq.s32.totalorder %s24, 0
    %p45 = por %p43, %p44
    %p46 = scmp.ne.s32.totalorder %s32, %s33
    %p47 = scmp.eq.s32.totalorder %s25, 1
    %p48 = por %p46, %p47
    %p50 = scmp.ne.s32.totalorder %s33, %s49
    %p51 = scmp.eq.s32.totalorder %s25, 0
    %p52 = por %p50, %p51
    %s54 = sadd.s32 %s53, 1
    %p57 = scmp.eq.s32.totalorder %s19, 1
    %p58 = scmp.ne.s32.totalorder %s53, %s55
    %p59 = scmp.eq.s32.totalorder %s19, 0
    %p60 = por %p58, %p59
    %p61 = scmp.ne.s32.totalorder %s53, %s55
    %p62 = scmp.eq.s32.totalorder %s24, 1
    %p63 = por %p61, %p62
    %p64 = scmp.ne.s32.totalorder %s55, %s56
    %p65 = scmp.eq.s32.totalorder %s24, 0
    %p66 = por %p64, %p65
    %p67 = scmp.ne.s32.totalorder %s55, %s56
    %p68 = scmp.eq.s32.totalorder %s25, 1
    %p69 = por %p67, %p68
    %p71 = scmp.ne.s32.totalorder %s56, %s70
    %p72 = scmp.eq.s32.totalorder %s25, 0
    %p73 = por %p71, %p72
    %s75 = sadd.s32 %s74, 1
    %p78 = scmp.eq.s32.totalorder %s19, 1
    %p79 = scmp.ne.s32.totalorder %s74, %s76
    %p80 = scmp.eq.s32.totalorder %s19, 0
    %p81 = por %p79, %p80
    %p82 = scmp.ne.s32.totalorder %s74, %s76
    %p83 = scmp.eq.s32.totalorder %s24, 1
    %p84 = por %p82, %p83
    %p85 = scmp.ne.s32.totalorder %s76, %s77
    %p86 = scmp.eq.s32.totalorder %s24, 0
    %p87 = por %p85, %p86
    %p88 = scmp.ne.s32.totalorder %s76, %s77
    %p89 = scmp.eq.s32.totalorder %s25, 1
    %p90 = por %p88, %p89
    %p92 = scmp.ne.s32.totalorder %s77, %s91
    %p93 = scmp.eq.s32.totalorder %s25, 0
    %p94 = por %p92, %p93
    %s96 = sadd.s32 %s95, 1
    %p99 = scmp.eq.s32.totalorder %s19, 1
    %p100 = scmp.ne.s32.totalorder %s95, %s97
    %p101 = scmp.eq.s32.totalorder %s19, 0
    %p102 = por %p100, %p101
    %p103 = scmp.ne.s32.totalorder %s95, %s97
    %p104 = scmp.eq.s32.totalorder %s24, 1
    %p105 = por %p103, %p104
    %p106 = scmp.ne.s32.totalorder %s97, %s98
    %p107 = scmp.eq.s32.totalorder %s24, 0
    %p108 = por %p106, %p107
    %p109 = scmp.ne.s32.totalorder %s97, %s98
    %p110 = scmp.eq.s32.totalorder %s25, 1
    %p111 = por %p109, %p110
    %p113 = scmp.ne.s32.totalorder %s98, %s112
    %p114 = scmp.eq.s32.totalorder %s25, 0
    %p115 = por %p113, %p114
    %s117 = sadd.s32 %s116, 1
    %p120 = scmp.eq.s32.totalorder %s19, 1
    %p121 = scmp.ne.s32.totalorder %s116, %s118
    %p122 = scmp.eq.s32.totalorder %s19, 0
    %p123 = por %p121, %p122
    %p124 = scmp.ne.s32.totalorder %s116, %s118
    %p125 = scmp.eq.s32.totalorder %s24, 1
    %p126 = por %p124, %p125
    %p127 = scmp.ne.s32.totalorder %s118, %s119
    %p128 = scmp.eq.s32.totalorder %s24, 0
    %p129 = por %p127, %p128
    %p130 = scmp.ne.s32.totalorder %s118, %s119
    %p131 = scmp.eq.s32.totalorder %s25, 1
    %p132 = por %p130, %p131
    %p134 = scmp.ne.s32.totalorder %s119, %s133
    %p135 = scmp.eq.s32.totalorder %s25, 0
    %p136 = por %p134, %p135
    %s138 = sadd.s32 %s137, 1
    %p141 = scmp.eq.s32.totalorder %s19, 1
    %p142 = scmp.ne.s32.totalorder %s137, %s139
    %p143 = scmp.eq.s32.totalorder %s19, 0
    %p144 = por %p142, %p143
    %p145 = scmp.ne.s32.totalorder %s137, %s139
    %p146 = scmp.eq.s32.totalorder %s24, 1
    %p147 = por %p145, %p146
    %p148 = scmp.ne.s32.totalorder %s139, %s140
    %p149 = scmp.eq.s32.totalorder %s24, 0
    %p150 = por %p148, %p149
    %p151 = scmp.ne.s32.totalorder %s139, %s140
    %p152 = scmp.eq.s32.totalorder %s25, 1
    %p153 = por %p151, %p152
    %p155 = scmp.ne.s32.totalorder %s140, %s154
    %p156 = scmp.eq.s32.totalorder %s25, 0
    %p157 = por %p155, %p156
    %s159 = sadd.s32 %s158, 1
    %p162 = scmp.eq.s32.totalorder %s19, 1
    %p163 = scmp.ne.s32.totalorder %s158, %s160
    %p164 = scmp.eq.s32.totalorder %s19, 0
    %p165 = por %p163, %p164
    %p166 = scmp.ne.s32.totalorder %s158, %s160
    %p167 = scmp.eq.s32.totalorder %s24, 1
    %p168 = por %p166, %p167
    %p169 = scmp.ne.s32.totalorder %s160, %s161
    %p170 = scmp.eq.s32.totalorder %s24, 0
    %p171 = por %p169, %p170
    %p172 = scmp.ne.s32.totalorder %s160, %s161
    %p173 = scmp.eq.s32.totalorder %s25, 1
    %p174 = por %p172, %p173
    %p176 = scmp.ne.s32.totalorder %s161, %s175
    %p177 = scmp.eq.s32.totalorder %s25, 0
    %p178 = por %p176, %p177
    %s180 = sadd.s32 %s179, 1
    %p183 = scmp.eq.s32.totalorder %s19, 1
    %p184 = scmp.ne.s32.totalorder %s179, %s181
    %p185 = scmp.eq.s32.totalorder %s19, 0
    %p186 = por %p184, %p185
    %p187 = scmp.ne.s32.totalorder %s179, %s181
    %p188 = scmp.eq.s32.totalorder %s24, 1
    %p189 = por %p187, %p188
    %p190 = scmp.ne.s32.totalorder %s181, %s182
    %p191 = scmp.eq.s32.totalorder %s24, 0
    %p192 = por %p190, %p191
    %p193 = scmp.ne.s32.totalorder %s181, %s182
    %p194 = scmp.eq.s32.totalorder %s25, 1
    %p195 = por %p193, %p194
    %p197 = scmp.ne.s32.totalorder %s182, %s196
    %p198 = scmp.eq.s32.totalorder %s25, 0
    %p199 = por %p197, %p198
    %s201 = sadd.s32 %s200, 1
    %p204 = scmp.eq.s32.totalorder %s19, 1
    %p205 = scmp.ne.s32.totalorder %s200, %s202
    %p206 = scmp.eq.s32.totalorder %s19, 0
    %p207 = por %p205, %p206
    %p208 = scmp.ne.s32.totalorder %s200, %s202
    %p209 = scmp.eq.s32.totalorder %s24, 1
    %p210 = por %p208, %p209
    %p211 = scmp.ne.s32.totalorder %s202, %s203
    %p212 = scmp.eq.s32.totalorder %s24, 0
    %p213 = por %p211, %p212
    %p214 = scmp.ne.s32.totalorder %s202, %s203
    %p215 = scmp.eq.s32.totalorder %s25, 1
    %p216 = por %p214, %p215
    %p218 = scmp.ne.s32.totalorder %s203, %s217
    %p219 = scmp.eq.s32.totalorder %s25, 0
    %p220 = por %p218, %p219
    %s222 = sadd.s32 %s221, 1
    %p225 = scmp.eq.s32.totalorder %s19, 1
    %p226 = scmp.ne.s32.totalorder %s221, %s223
    %p227 = scmp.eq.s32.totalorder %s19, 0
    %p228 = por %p226, %p227
    %p229 = scmp.ne.s32.totalorder %s221, %s223
    %p230 = scmp.eq.s32.totalorder %s24, 1
    %p231 = por %p229, %p230
    %p232 = scmp.ne.s32.totalorder %s223, %s224
    %p233 = scmp.eq.s32.totalorder %s24, 0
    %p234 = por %p232, %p233
    %p235 = scmp.ne.s32.totalorder %s223, %s224
    %p236 = scmp.eq.s32.totalorder %s25, 1
    %p237 = por %p235, %p236
    %p239 = scmp.ne.s32.totalorder %s224, %s238
    %p240 = scmp.eq.s32.totalorder %s25, 0
    %p241 = por %p239, %p240
    %s243 = sadd.s32 %s242, 1
    %p246 = scmp.eq.s32.totalorder %s19, 1
    %p247 = scmp.ne.s32.totalorder %s242, %s244
    %p248 = scmp.eq.s32.totalorder %s19, 0
    %p249 = por %p247, %p248
    %p250 = scmp.ne.s32.totalorder %s242, %s244
    %p251 = scmp.eq.s32.totalorder %s24, 1
    %p252 = por %p250, %p251
    %p253 = scmp.ne.s32.totalorder %s244, %s245
    %p254 = scmp.eq.s32.totalorder %s24, 0
    %p255 = por %p253, %p254
    %p256 = scmp.ne.s32.totalorder %s244, %s245
    %p257 = scmp.eq.s32.totalorder %s25, 1
    %p258 = por %p256, %p257
    %p260 = scmp.ne.s32.totalorder %s245, %s259
    %p261 = scmp.eq.s32.totalorder %s25, 0
    %p262 = por %p260, %p261
    %s263 = ssub.s32 %s19, %s26
    %p264 = scmp.eq.s32.totalorder %s263, 0
    %s266 = sadd.s32 %s265, 1
    %s267 = scalar_select %p264, %s265, %s266
    %p270 = pneg %p264
    %p271 = scmp.eq.s32.totalorder %s19, 1
    %p272 = por %p270, %p271
    %p273 = scmp.ne.s32.totalorder %s265, %s268
    %p274 = scmp.eq.s32.totalorder %s19, 0
    %p275 = por %p273, %p274
    %p276 = scmp.ne.s32.totalorder %s265, %s268
    %p277 = scmp.eq.s32.totalorder %s24, 1
    %p278 = por %p276, %p277
    %p279 = scmp.ne.s32.totalorder %s268, %s269
    %p280 = scmp.eq.s32.totalorder %s24, 0
    %p281 = por %p279, %p280
    %p282 = scmp.ne.s32.totalorder %s268, %s269
    %p283 = scmp.eq.s32.totalorder %s25, 1
    %p284 = por %p282, %p283
    %p286 = scmp.ne.s32.totalorder %s269, %s285
    %p287 = scmp.eq.s32.totalorder %s25, 0
    %p288 = por %p286, %p287
    %s289 = ssub.s32 %s19, %s26
    %p290 = scmp.eq.s32.totalorder %s289, 0
    %s292 = sadd.s32 %s291, 1
    %s293 = scalar_select %p290, %s291, %s292
    %p296 = pneg %p290
    %p297 = scmp.eq.s32.totalorder %s19, 1
    %p298 = por %p296, %p297
    %p299 = scmp.ne.s32.totalorder %s291, %s294
    %p300 = scmp.eq.s32.totalorder %s19, 0
    %p301 = por %p299, %p300
    %p302 = scmp.ne.s32.totalorder %s291, %s294
    %p303 = scmp.eq.s32.totalorder %s24, 1
    %p304 = por %p302, %p303
    %p305 = scmp.ne.s32.totalorder %s294, %s295
    %p306 = scmp.eq.s32.totalorder %s24, 0
    %p307 = por %p305, %p306
    %p308 = scmp.ne.s32.totalorder %s294, %s295
    %p309 = scmp.eq.s32.totalorder %s25, 1
    %p310 = por %p308, %p309
    %p312 = scmp.ne.s32.totalorder %s295, %s311
    %p313 = scmp.eq.s32.totalorder %s25, 0
    %p314 = por %p312, %p313
    %p315 = scmp.le.s32.totalorder 1, %s19
    %p316 = scmp.lt.s32.totalorder %s19, 3
    %p317 = pnand %p315, %p316
    %p318 = pneg %p317
    // Predicated region
    $region9: #{ecapa_forward.7} parent=5 // pred_check
      _
    $region10: #{ecapa_forward.7} parent=5 // pred_check_branch
      %320 = sbr.rel (%p317) target = $region12
    $region11: #{ecapa_forward.7} parent=5 // pred_region
      %s321 = ssub.s32 %s19, 1
      // Predicated region
      $region13: #{ecapa_forward.7} parent=11 // pred_check
        %p322 = pneg %p66
      $region14: #{ecapa_forward.7} parent=11 // pred_check_branch
        %324 = sbr.rel (%p322) target = $region16
      $region15: #{ecapa_forward.7} parent=11 // pred_region
        _
      $region16: #{ecapa_forward.7} parent=11 // pred_fallthru
        _
      // Predicated region
      $region17: #{ecapa_forward.7} parent=11 // pred_check
        %p325 = pneg %p87
      $region18: #{ecapa_forward.7} parent=11 // pred_check_branch
        %327 = sbr.rel (%p325) target = $region20
      $region19: #{ecapa_forward.7} parent=11 // pred_region
        _
      $region20: #{ecapa_forward.7} parent=11 // pred_fallthru
        _
      // Predicated region
      $region21: #{ecapa_forward.7} parent=11 // pred_check
        %p328 = pneg %p108
      $region22: #{ecapa_forward.7} parent=11 // pred_check_branch
        %330 = sbr.rel (%p328) target = $region24
      $region23: #{ecapa_forward.7} parent=11 // pred_region
        _
      $region24: #{ecapa_forward.7} parent=11 // pred_fallthru
        _
      // Predicated region
      $region25: #{ecapa_forward.7} parent=11 // pred_check
        %p331 = pneg %p129
      $region26: #{ecapa_forward.7} parent=11 // pred_check_branch
        %333 = sbr.rel (%p331) target = $region28
      $region27: #{ecapa_forward.7} parent=11 // pred_region
        _
      $region28: #{ecapa_forward.7} parent=11 // pred_fallthru
        _
      // Predicated region
      $region29: #{ecapa_forward.7} parent=11 // pred_check
        %p334 = pneg %p150
      $region30: #{ecapa_forward.7} parent=11 // pred_check_branch
        %336 = sbr.rel (%p334) target = $region32
      $region31: #{ecapa_forward.7} parent=11 // pred_region
        _
      $region32: #{ecapa_forward.7} parent=11 // pred_fallthru
        _
      // Predicated region
      $region33: #{ecapa_forward.7} parent=11 // pred_check
        %p337 = pneg %p171
      $region34: #{ecapa_forward.7} parent=11 // pred_check_branch
        %339 = sbr.rel (%p337) target = $region36
      $region35: #{ecapa_forward.7} parent=11 // pred_region
        _
      $region36: #{ecapa_forward.7} parent=11 // pred_fallthru
        _
      // Predicated region
      $region37: #{ecapa_forward.7} parent=11 // pred_check
        %p340 = pneg %p192
      $region38: #{ecapa_forward.7} parent=11 // pred_check_branch
        %342 = sbr.rel (%p340) target = $region40
      $region39: #{ecapa_forward.7} parent=11 // pred_region
        _
      $region40: #{ecapa_forward.7} parent=11 // pred_fallthru
        _
      // Predicated region
      $region41: #{ecapa_forward.7} parent=11 // pred_check
        %p343 = pneg %p213
      $region42: #{ecapa_forward.7} parent=11 // pred_check_branch
        %345 = sbr.rel (%p343) target = $region44
      $region43: #{ecapa_forward.7} parent=11 // pred_region
        _
      $region44: #{ecapa_forward.7} parent=11 // pred_fallthru
        _
      // Predicated region
      $region45: #{ecapa_forward.7} parent=11 // pred_check
        %p346 = pneg %p234
      $region46: #{ecapa_forward.7} parent=11 // pred_check_branch
        %348 = sbr.rel (%p346) target = $region48
      $region47: #{ecapa_forward.7} parent=11 // pred_region
        _
      $region48: #{ecapa_forward.7} parent=11 // pred_fallthru
        _
      // Predicated region
      $region49: #{ecapa_forward.7} parent=11 // pred_check
        %p349 = pneg %p255
      $region50: #{ecapa_forward.7} parent=11 // pred_check_branch
        %351 = sbr.rel (%p349) target = $region52
      $region51: #{ecapa_forward.7} parent=11 // pred_region
        _
      $region52: #{ecapa_forward.7} parent=11 // pred_fallthru
        _
    $region12: #{ecapa_forward.7} parent=5 // pred_fallthru
      _
    %p352 = scmp.lt.s32.totalorder %s19, 2
    // Predicated region
    $region53: #{ecapa_forward.7} parent=5 // pred_check
      %p353 = pneg %p352
    $region54: #{ecapa_forward.7} parent=5 // pred_check_branch
      %355 = sbr.rel (%p353) target = $region56
    $region55: #{ecapa_forward.7} parent=5 // pred_region
      // Predicated region
      $region57: #{ecapa_forward.7} parent=55 // pred_check
        %p356 = pneg %p39
      $region58: #{ecapa_forward.7} parent=55 // pred_check_branch
        %358 = sbr.rel (%p356) target = $region60
      $region59: #{ecapa_forward.7} parent=55 // pred_region
        %p359 = scmp.lt.s32.totalorder %s19, 1
        %s360 = scalar_select %p359, %s19, 1
        %s361 = smul.addr %s360, 2
        %s362 = smul.addr %s361, 4
        %s363 = scalar_lea.vmem %s0, %s362
      $region60: #{ecapa_forward.7} parent=55 // pred_fallthru
        _
    $region56: #{ecapa_forward.7} parent=5 // pred_fallthru
      _
    %p364 = scmp.le.s32.totalorder 1, %s19
    %p365 = scmp.lt.s32.totalorder %s19, 3
    %p366 = pnand %p364, %p365
    %p367 = pneg %p366
    // Predicated region
    $region61: #{ecapa_forward.7} parent=5 // pred_check
      _
    $region62: #{ecapa_forward.7} parent=5 // pred_check_branch
      %369 = sbr.rel (%p366) target = $region64
    $region63: #{ecapa_forward.7} parent=5 // pred_region
      %s370 = ssub.s32 %s19, 1
      %p371 = scmp.lt.s32.totalorder %s24, 1
      %s372 = scalar_select %p371, %s24, 1
      %s373 = smul.addr %s372, 2
      %s374 = smul.addr %s373, 4
      %s375 = scalar_lea.vmem %s0, %s374
      %p376 = pneg %p45
      %p377 = pneg %p42
      %p378 = pneg %p66
      %p379 = pneg %p63
      %p380 = pneg %p87
      %p381 = pneg %p84
      %p382 = pneg %p108
      %p383 = pneg %p105
      %p384 = pneg %p129
      %p385 = pneg %p126
      %p386 = pneg %p150
      %p387 = pneg %p147
      %p388 = pneg %p171
      %p389 = pneg %p168
      %p390 = pneg %p192
      %p391 = pneg %p189
      %p392 = pneg %p213
      %p393 = pneg %p210
      %p394 = pneg %p234
      %p395 = pneg %p231
      %p396 = pneg %p255
      %p397 = pneg %p252
      %p398 = pneg %p281
      %p399 = pneg %p278
      %p400 = scmp.lt.s32.totalorder %s24, 1
      %s401 = scalar_select %p400, %s24, 1
      %s402 = smul.addr %s401, 2
      %s403 = smul.addr %s402, 4
      %s404 = scalar_lea.vmem %s11, %s403
      %p405 = pneg %p307
      %p406 = pneg %p304
      %p407 = scmp.lt.s32.totalorder %s24, 1
      %s408 = scalar_select %p407, %s24, 1
      %s409 = smul.addr %s408, 2
      %s410 = smul.addr %s409, 4
      %s411 = scalar_lea.vmem %s12, %s410
      %p412 = scmp.lt.s32.totalorder %s24, 1
      %s413 = scalar_select %p412, %s24, 1
      %s414 = smul.addr %s413, 2
      %s415 = smul.addr %s414, 4
      %s416 = scalar_lea.vmem %s0, %s415
      %p417 = scmp.lt.s32.totalorder %s24, 1
      %s418 = scalar_select %p417, %s24, 1
      %s419 = smul.addr %s418, 2
      %s420 = smul.addr %s419, 4
      %s421 = scalar_lea.vmem %s11, %s420
      %p422 = scmp.lt.s32.totalorder %s24, 1
      %s423 = scalar_select %p422, %s24, 1
      %s424 = smul.addr %s423, 2
      %s425 = smul.addr %s424, 4
      %s426 = scalar_lea.vmem %s12, %s425
      %vm428 = vcmask 59392
      %429 = vst.msk [vmem:[#allocation2] sm:$0x7] %vm428, 0.0
      %430 = vst.msk [vmem:[#allocation2 + $0x13] sm:$0x7] %vm428, 0.0
      %v431 = vld [vmem:[%s416] sm:$0xf]
      %v432 = vld [vmem:[%s416 + $0x4] sm:$0xf]
      %v433 = vunpack.c.l.bf16 %v431
      %v434 = vunpack.c.l.bf16 %v432
      %v435 = vpack.c.bf16 %v434, %v433
      %vm436 = vcmask 64512
      %437 = vst.msk [vmem:[#allocation4] sm:$0xff] %vm436, %v435
      %440 = vrot.lane.b32.xlu0 %v433, 120
      %v441 = vpop.permute.xlu0 %440
      %442 = vrot.lane.b32.xlu0 %v434, 120
      %v443 = vpop.permute.xlu0 %442
      %446 = vst.msk [vmem:[#allocation2 + $0x3] sm:$0xff] %vm436, %v441
      %447 = vst.msk [vmem:[#allocation2 + $0xb] sm:$0xff] %vm436, %v443
      %v448 = vld [vmem:[#allocation2] sm:$0xff]
      %v449 = vld [vmem:[#allocation2 + $0x8] sm:$0xff]
      %v450 = vpack.c.bf16 %v449, %v448
      %451 = vst.msk [vmem:[#allocation3] sm:$0xff] %vm436, %v450
      %v452 = vld [vmem:[#allocation2 + $0x3] sm:$0xff]
      %v453 = vld [vmem:[#allocation2 + $0xb] sm:$0xff]
      %v454 = vpack.c.bf16 %v453, %v452
      %456 = vrot.lane.b32.xlu0 %v454, 8
      %v457 = vpop.permute.xlu0 %456
      %vm459 = vcmask 130112
      %460 = vst.msk [vmem:[#allocation3] sm:$0xff] %vm459, %v457
      %v461 = vld [vmem:[#allocation2 + $0x6] sm:$0xff]
      %v462 = vld [vmem:[#allocation2 + $0xe] sm:$0xff]
      %v463 = vpack.c.bf16 %v462, %v461
      %465 = vrot.lane.b32.xlu0 %v463, 16
      %v466 = vpop.permute.xlu0 %465
      %vm468 = vcmask 195712
      %469 = vst.msk [vmem:[#allocation3] sm:$0xff] %vm468, %v466
      %v470 = vld [vmem:[#allocation3] sm:$0xff]
      %v471 = vld [vmem:[%s1] sm:$0xf]
      %v472 = vld [vmem:[%s1 + $0x4] sm:$0xf]
      %v473 = vld [vmem:[%s1 + $0x8] sm:$0xf]
      %v477 = vunpack.c.l.b16 %v471
      %v478 = vunpack.c.l.b16 %v472
      %v479 = vunpack.c.l.b16 %v473
      %v480 = vpack.c.b16 %v478, %v477
      %v481 = vpack.c.b16 %v479, %v479
      %vm483 = vcmask 195584
      %v485 = vsel %vm483, %v470, 0
      %vm487 = vcmask 1043456
      %v489 = vsel %vm487, %v481, 0
      %491 = vmatprep.subr.bf16.mxu0 0
      %492 = vmatpush1.bf16.msra.mxu0 %v480
      %493 = vmatprep.subr.bf16.mxu0 0
      %494 = vmatpush1.bf16.msra.mxu0 %v489
      %495 = vmatprep.subr.bf16.mxu0 0
      %496 = vmatpush1.bf16.msra.mxu0 0
      %497 = vmatprep.subr.bf16.mxu0 0
      %498 = vmatpush1.bf16.msra.mxu0 0
      %499 = vmatprep.subr.bf16.mxu0 0
      %500 = vmatpush1.bf16.msra.mxu0 0
      %501 = vmatprep.subr.bf16.mxu0 0
      %502 = vmatpush1.bf16.msra.mxu0 0
      %503 = vmatprep.subr.bf16.mxu0 0
      %504 = vmatpush1.bf16.msra.mxu0 0
      %505 = vmatprep.subr.bf16.mxu0 0
      %506 = vmatpush1.bf16.msra.mxu0 0
      %507 = vmatprep.subr.bf16.mxu0 0
      %508 = vmatpush1.bf16.msra.mxu0 0
      %509 = vmatprep.subr.bf16.mxu0 0
      %510 = vmatpush1.bf16.msra.mxu0 0
      %511 = vmatprep.subr.bf16.mxu0 0
      %512 = vmatpush1.bf16.msra.mxu0 0
      %513 = vmatprep.subr.bf16.mxu0 0
      %514 = vmatpush1.bf16.msra.mxu0 0
      %515 = vmatprep.subr.bf16.mxu0 0
      %516 = vmatpush1.bf16.msra.mxu0 0
      %517 = vmatprep.subr.bf16.mxu0 0
      %518 = vmatpush1.bf16.msra.mxu0 0
      %519 = vmatprep.subr.bf16.mxu0 0
      %520 = vmatpush1.bf16.msra.mxu0 0
      %521 = vmatprep.subr.bf16.mxu0 0
      %522 = vmatpush1.bf16.msra.mxu0 0
      %523 = vmatprep.mubr.bf16.mxu0 0
      %524 = vmatmul.mubr.bf16.gmra.mrb[0].mxu0 %v485
      %v525 = vpop.f32.mrb[0].mxu0
      %v526 = vadd.f32 0.0, %v525
      %v527 = vpop.f32.mrb[0].mxu0
      %v528 = vpop.f32.mrb[0].mxu0
      %v529 = vadd.f32 0.0, %v528
      %v530 = vpop.f32.mrb[0].mxu0
      %531 = vdwg.mxu0
      %v532 = vld [vmem:[%s2] sm:$0x1]
      %v534 = vlaneseq
      %v535 = vshrl.u32 %v534, 7
      %v536 = vsub.s32 0, %v535
      %v537 = vrot.slane %v532, %v536
      %v539 = vmul.f32 %v526, %v537
      %v540 = vmul.f32 %v529, %v537
      %v541 = vld [vmem:[%s3] sm:$0x1]
      %v543 = vlaneseq
      %v544 = vshrl.u32 %v543, 7
      %v545 = vsub.s32 0, %v544
      %v546 = vrot.slane %v541, %v545
      %v548 = vadd.f32 %v539, %v546
      %v549 = vadd.f32 %v540, %v546
      %v550 = vmax.f32 %v548, 0.0
      %v551 = vmax.f32 %v549, 0.0
      %v552 = vpack.c.bf16 %v551, %v550
      %554 = vrot.lane.b32.xlu0 %v552, 8
      %v555 = vpop.permute.xlu0 %554
      %557 = vst.msk [vmem:[#allocation4] sm:$0xff] %vm459, %v555
      %560 = vrot.lane.b32.xlu0 %v550, 16
      %v561 = vpop.permute.xlu0 %560
      %562 = vrot.lane.b32.xlu0 %v551, 16
      %v563 = vpop.permute.xlu0 %562
      %v566 = vadd.f32 %v433, %v561
      %v567 = vadd.f32 %v434, %v563
      %570 = vrot.lane.b32.xlu0 %v566, 112
      %v571 = vpop.permute.xlu0 %570
      %572 = vrot.lane.b32.xlu0 %v567, 112
      %v573 = vpop.permute.xlu0 %572
      %576 = vst.msk [vmem:[#allocation2 + $0x3] sm:$0xff] %vm436, %v571
      %577 = vst.msk [vmem:[#allocation2 + $0xb] sm:$0xff] %vm436, %v573
      %v578 = vld [vmem:[#allocation2] sm:$0xff]
      %v579 = vld [vmem:[#allocation2 + $0x8] sm:$0xff]
      %v580 = vpack.c.bf16 %v579, %v578
      %581 = vst.msk [vmem:[#allocation3] sm:$0xff] %vm436, %v580
      %v582 = vld [vmem:[#allocation2 + $0x3] sm:$0xff]
      %v583 = vld [vmem:[#allocation2 + $0xb] sm:$0xff]
      %v584 = vpack.c.bf16 %v583, %v582
      %586 = vrot.lane.b32.xlu0 %v584, 8
      %v587 = vpop.permute.xlu0 %586
      %589 = vst.msk [vmem:[#allocation3] sm:$0xff] %vm459, %v587
      %v590 = vld [vmem:[#allocation2 + $0x6] sm:$0xff]
      %v591 = vld [vmem:[#allocation2 + $0xe] sm:$0xff]
      %v592 = vpack.c.bf16 %v591, %v590
      %594 = vrot.lane.b32.xlu0 %v592, 16
      %v595 = vpop.permute.xlu0 %594
      %597 = vst.msk [vmem:[#allocation3] sm:$0xff] %vm468, %v595
      %v598 = vld [vmem:[#allocation3] sm:$0xff]
      %s599 = scalar_lea.vmem %s1, 12
      %v600 = vld [vmem:[%s599] sm:$0xf]
      %v601 = vld [vmem:[%s599 + $0x4] sm:$0xf]
      %v602 = vld [vmem:[%s599 + $0x8] sm:$0xf]
      %v606 = vunpack.c.l.b16 %v600
      %v607 = vunpack.c.l.b16 %v601
      %v608 = vunpack.c.l.b16 %v602
      %v609 = vpack.c.b16 %v607, %v606
      %v610 = vpack.c.b16 %v608, %v608
      %v613 = vsel %vm483, %v598, 0
      %v616 = vsel %vm487, %v610, 0
      %618 = vmatprep.subr.bf16.mxu0 0
      %619 = vmatpush1.bf16.msra.mxu0 %v609
      %620 = vmatprep.subr.bf16.mxu0 0
      %621 = vmatpush1.bf16.msra.mxu0 %v616
      %622 = vmatprep.subr.bf16.mxu0 0
      %623 = vmatpush1.bf16.msra.mxu0 0
      %624 = vmatprep.subr.bf16.mxu0 0
      %625 = vmatpush1.bf16.msra.mxu0 0
      %626 = vmatprep.subr.bf16.mxu0 0
      %627 = vmatpush1.bf16.msra.mxu0 0
      %628 = vmatprep.subr.bf16.mxu0 0
      %629 = vmatpush1.bf16.msra.mxu0 0
      %630 = vmatprep.subr.bf16.mxu0 0
      %631 = vmatpush1.bf16.msra.mxu0 0
      %632 = vmatprep.subr.bf16.mxu0 0
      %633 = vmatpush1.bf16.msra.mxu0 0
      %634 = vmatprep.subr.bf16.mxu0 0
      %635 = vmatpush1.bf16.msra.mxu0 0
      %636 = vmatprep.subr.bf16.mxu0 0
      %637 = vmatpush1.bf16.msra.mxu0 0
      %638 = vmatprep.subr.bf16.mxu0 0
      %639 = vmatpush1.bf16.msra.mxu0 0
      %640 = vmatprep.subr.bf16.mxu0 0
      %641 = vmatpush1.bf16.msra.mxu0 0
      %642 = vmatprep.subr.bf16.mxu0 0
      %643 = vmatpush1.bf16.msra.mxu0 0
      %644 = vmatprep.subr.bf16.mxu0 0
      %645 = vmatpush1.bf16.msra.mxu0 0
      %646 = vmatprep.subr.bf16.mxu0 0
      %647 = vmatpush1.bf16.msra.mxu0 0
      %648 = vmatprep.subr.bf16.mxu0 0
      %649 = vmatpush1.bf16.msra.mxu0 0
      %650 = vmatprep.mubr.bf16.mxu0 0
      %651 = vmatmul.mubr.bf16.gmra.mrb[0].mxu0 %v613
      %v652 = vpop.f32.mrb[0].mxu0
      %v653 = vadd.f32 0.0, %v652
      %v654 = vpop.f32.mrb[0].mxu0
      %v655 = vpop.f32.mrb[0].mxu0
      %v656 = vadd.f32 0.0, %v655
      %v657 = vpop.f32.mrb[0].mxu0
      %658 = vdwg.mxu0
      %s659 = scalar_lea.vmem %s2, 1
      %v660 = vld [vmem:[%s659] sm:$0x1]
      %v662 = vlaneseq
      %v663 = vshrl.u32 %v662, 7
      %v664 = vsub.s32 0, %v663
      %v665 = vrot.slane %v660, %v664
      %v667 = vmul.f32 %v653, %v665
      %v668 = vmul.f32 %v656, %v665
      %s669 = scalar_lea.vmem %s3, 1
      %v670 = vld [vmem:[%s669] sm:$0x1]
      %v672 = vlaneseq
      %v673 = vshrl.u32 %v672, 7
      %v674 = vsub.s32 0, %v673
      %v675 = vrot.slane %v670, %v674
      %v677 = vadd.f32 %v667, %v675
      %v678 = vadd.f32 %v668, %v675
      %v679 = vmax.f32 %v677, 0.0
      %v680 = vmax.f32 %v678, 0.0
      %v681 = vpack.c.bf16 %v680, %v679
      %683 = vrot.lane.b32.xlu0 %v681, 16
      %v684 = vpop.permute.xlu0 %683
      %686 = vst.msk [vmem:[#allocation4] sm:$0xff] %vm468, %v684
      %689 = vrot.lane.b32.xlu0 %v679, 24
      %v690 = vpop.permute.xlu0 %689
      %691 = vrot.lane.b32.xlu0 %v680, 24
      %v692 = vpop.permute.xlu0 %691
      %v695 = vadd.f32 %v433, %v690
      %v696 = vadd.f32 %v434, %v692
      %699 = vrot.lane.b32.xlu0 %v695, 104
      %v700 = vpop.permute.xlu0 %699
      %701 = vrot.lane.b32.xlu0 %v696, 104
      %v702 = vpop.permute.xlu0 %701
      %705 = vst.msk [vmem:[#allocation2 + $0x3] sm:$0xff] %vm436, %v700
      %706 = vst.msk [vmem:[#allocation2 + $0xb] sm:$0xff] %vm436, %v702
      %v707 = vld [vmem:[#allocation2] sm:$0xff]
      %v708 = vld [vmem:[#allocation2 + $0x8] sm:$0xff]
      %v709 = vpack.c.bf16 %v708, %v707
      %710 = vst.msk [vmem:[#allocation3] sm:$0xff] %vm436, %v709
      %v711 = vld [vmem:[#allocation2 + $0x3] sm:$0xff]
      %v712 = vld [vmem:[#allocation2 + $0xb] sm:$0xff]
      %v713 = vpack.c.bf16 %v712, %v711
      %715 = vrot.lane.b32.xlu0 %v713, 8
      %v716 = vpop.permute.xlu0 %715
      %718 = vst.msk [vmem:[#allocation3] sm:$0xff] %vm459, %v716
      %v719 = vld [vmem:[#allocation2 + $0x6] sm:$0xff]
      %v720 = vld [vmem:[#allocation2 + $0xe] sm:$0xff]
      %v721 = vpack.c.bf16 %v720, %v719
      %723 = vrot.lane.b32.xlu0 %v721, 16
      %v724 = vpop.permute.xlu0 %723
      %726 = vst.msk [vmem:[#allocation3] sm:$0xff] %vm468, %v724
      %v727 = vld [vmem:[#allocation3] sm:$0xff]
      %s728 = scalar_lea.vmem %s1, 24
      %v729 = vld [vmem:[%s728] sm:$0xf]
      %v730 = vld [vmem:[%s728 + $0x4] sm:$0xf]
      %v731 = vld [vmem:[%s728 + $0x8] sm:$0xf]
      %v735 = vunpack.c.l.b16 %v729
      %v736 = vunpack.c.l.b16 %v730
      %v737 = vunpack.c.l.b16 %v731
      %v738 = vpack.c.b16 %v736, %v735
      %v739 = vpack.c.b16 %v737, %v737
      %v742 = vsel %vm483, %v727, 0
      %v745 = vsel %vm487, %v739, 0
      %747 = vmatprep.subr.bf16.mxu0 0
      %748 = vmatpush1.bf16.msra.mxu0 %v738
      %749 = vmatprep.subr.bf16.mxu0 0
      %750 = vmatpush1.bf16.msra.mxu0 %v745
      %751 = vmatprep.subr.bf16.mxu0 0
      %752 = vmatpush1.bf16.msra.mxu0 0
      %753 = vmatprep.subr.bf16.mxu0 0
      %754 = vmatpush1.bf16.msra.mxu0 0
      %755 = vmatprep.subr.bf16.mxu0 0
      %756 = vmatpush1.bf16.msra.mxu0 0
      %757 = vmatprep.subr.bf16.mxu0 0
      %758 = vmatpush1.bf16.msra.mxu0 0
      %759 = vmatprep.subr.bf16.mxu0 0
      %760 = vmatpush1.bf16.msra.mxu0 0
      %761 = vmatprep.subr.bf16.mxu0 0
      %762 = vmatpush1.bf16.msra.mxu0 0
      %763 = vmatprep.subr.bf16.mxu0 0
      %764 = vmatpush1.bf16.msra.mxu0 0
      %765 = vmatprep.subr.bf16.mxu0 0
      %766 = vmatpush1.bf16.msra.mxu0 0
      %767 = vmatprep.subr.bf16.mxu0 0
      %768 = vmatpush1.bf16.msra.mxu0 0
      %769 = vmatprep.subr.bf16.mxu0 0
      %770 = vmatpush1.bf16.msra.mxu0 0
      %771 = vmatprep.subr.bf16.mxu0 0
      %772 = vmatpush1.bf16.msra.mxu0 0
      %773 = vmatprep.subr.bf16.mxu0 0
      %774 = vmatpush1.bf16.msra.mxu0 0
      %775 = vmatprep.subr.bf16.mxu0 0
      %776 = vmatpush1.bf16.msra.mxu0 0
      %777 = vmatprep.subr.bf16.mxu0 0
      %778 = vmatpush1.bf16.msra.mxu0 0
      %779 = vmatprep.mubr.bf16.mxu0 0
      %780 = vmatmul.mubr.bf16.gmra.mrb[0].mxu0 %v742
      %v781 = vpop.f32.mrb[0].mxu0
      %v782 = vadd.f32 0.0, %v781
      %v783 = vpop.f32.mrb[0].mxu0
      %v784 = vpop.f32.mrb[0].mxu0
      %v785 = vadd.f32 0.0, %v784
      %v786 = vpop.f32.mrb[0].mxu0
      %787 = vdwg.mxu0
      %s788 = scalar_lea.vmem %s2, 2
      %v789 = vld [vmem:[%s788] sm:$0x1]
      %v791 = vlaneseq
      %v792 = vshrl.u32 %v791, 7
      %v793 = vsub.s32 0, %v792
      %v794 = vrot.slane %v789, %v793
      %v796 = vmul.f32 %v782, %v794
      %v797 = vmul.f32 %v785, %v794
      %s798 = scalar_lea.vmem %s3, 2
      %v799 = vld [vmem:[%s798] sm:$0x1]
      %v801 = vlaneseq
      %v802 = vshrl.u32 %v801, 7
      %v803 = vsub.s32 0, %v802
      %v804 = vrot.slane %v799, %v803
      %v806 = vadd.f32 %v796, %v804
      %v807 = vadd.f32 %v797, %v804
      %v808 = vmax.f32 %v806, 0.0
      %v809 = vmax.f32 %v807, 0.0
      %v810 = vpack.c.bf16 %v809, %v808
      %812 = vrot.lane.b32.xlu0 %v810, 24
      %v813 = vpop.permute.xlu0 %812
      %vm815 = vcmask 261312
      %816 = vst.msk [vmem:[#allocation4] sm:$0xff] %vm815, %v813
      %819 = vrot.lane.b32.xlu0 %v808, 32
      %v820 = vpop.permute.xlu0 %819
      %821 = vrot.lane.b32.xlu0 %v809, 32
      %v822 = vpop.permute.xlu0 %821
      %v825 = vadd.f32 %v433, %v820
      %v826 = vadd.f32 %v434, %v822
      %829 = vrot.lane.b32.xlu0 %v825, 96
      %v830 = vpop.permute.xlu0 %829
      %831 = vrot.lane.b32.xlu0 %v826, 96
      %v832 = vpop.permute.xlu0 %831
      %835 = vst.msk [vmem:[#allocation2 + $0x3] sm:$0xff] %vm436, %v830
      %836 = vst.msk [vmem:[#allocation2 + $0xb] sm:$0xff] %vm436, %v832
      %v837 = vld [vmem:[#allocation2] sm:$0xff]
      %v838 = vld [vmem:[#allocation2 + $0x8] sm:$0xff]
      %v839 = vpack.c.bf16 %v838, %v837
      %840 = vst.msk [vmem:[#allocation3] sm:$0xff] %vm436, %v839
      %v841 = vld [vmem:[#allocation2 + $0x3] sm:$0xff]
      %v842 = vld [vmem:[#allocation2 + $0xb] sm:$0xff]
      %v843 = vpack.c.bf16 %v842, %v841
      %845 = vrot.lane.b32.xlu0 %v843, 8
      %v846 = vpop.permute.xlu0 %845
      %848 = vst.msk [vmem:[#allocation3] sm:$0xff] %vm459, %v846
      %v849 = vld [vmem:[#allocation2 + $0x6] sm:$0xff]
      %v850 = vld [vmem:[#allocation2 + $0xe] sm:$0xff]
      %v851 = vpack.c.bf16 %v850, %v849
      %853 = vrot.lane.b32.xlu0 %v851, 16
      %v854 = vpop.permute.xlu0 %853
      %856 = vst.msk [vmem:[#allocation3] sm:$0xff] %vm468, %v854
      %v857 = vld [vmem:[#allocation3] sm:$0xff]
      %s858 = scalar_lea.vmem %s1, 36
      %v859 = vld [vmem:[%s858] sm:$0xf]
      %v860 = vld [vmem:[%s858 + $0x4] sm:$0xf]
      %v861 = vld [vmem:[%s858 + $0x8] sm:$0xf]
      %v865 = vunpack.c.l.b16 %v859
      %v866 = vunpack.c.l.b16 %v860
      %v867 = vunpack.c.l.b16 %v861
      %v868 = vpack.c.b16 %v866, %v865
      %v869 = vpack.c.b16 %v867, %v867
      %v872 = vsel %vm483, %v857, 0
      %v875 = vsel %vm487, %v869, 0
      %877 = vmatprep.subr.bf16.mxu0 0
      %878 = vmatpush1.bf16.msra.mxu0 %v868
      %879 = vmatprep.subr.bf16.mxu0 0
      %880 = vmatpush1.bf16.msra.mxu0 %v875
      %881 = vmatprep.subr.bf16.mxu0 0
      %882 = vmatpush1.bf16.msra.mxu0 0
      %883 = vmatprep.subr.bf16.mxu0 0
      %884 = vmatpush1.bf16.msra.mxu0 0
      %885 = vmatprep.subr.bf16.mxu0 0
      %886 = vmatpush1.bf16.msra.mxu0 0
      %887 = vmatprep.subr.bf16.mxu0 0
      %888 = vmatpush1.bf16.msra.mxu0 0
      %889 = vmatprep.subr.bf16.mxu0 0
      %890 = vmatpush1.bf16.msra.mxu0 0
      %891 = vmatprep.subr.bf16.mxu0 0
      %892 = vmatpush1.bf16.msra.mxu0 0
      %893 = vmatprep.subr.bf16.mxu0 0
      %894 = vmatpush1.bf16.msra.mxu0 0
      %895 = vmatprep.subr.bf16.mxu0 0
      %896 = vmatpush1.bf16.msra.mxu0 0
      %897 = vmatprep.subr.bf16.mxu0 0
      %898 = vmatpush1.bf16.msra.mxu0 0
      %899 = vmatprep.subr.bf16.mxu0 0
      %900 = vmatpush1.bf16.msra.mxu0 0
      %901 = vmatprep.subr.bf16.mxu0 0
      %902 = vmatpush1.bf16.msra.mxu0 0
      %903 = vmatprep.subr.bf16.mxu0 0
      %904 = vmatpush1.bf16.msra.mxu0 0
      %905 = vmatprep.subr.bf16.mxu0 0
      %906 = vmatpush1.bf16.msra.mxu0 0
      %907 = vmatprep.subr.bf16.mxu0 0
      %908 = vmatpush1.bf16.msra.mxu0 0
      %909 = vmatprep.mubr.bf16.mxu0 0
      %910 = vmatmul.mubr.bf16.gmra.mrb[0].mxu0 %v872
      %v911 = vpop.f32.mrb[0].mxu0
      %v912 = vadd.f32 0.0, %v911
      %v913 = vpop.f32.mrb[0].mxu0
      %v914 = vpop.f32.mrb[0].mxu0
      %v915 = vadd.f32 0.0, %v914
      %v916 = vpop.f32.mrb[0].mxu0
      %917 = vdwg.mxu0
      %s918 = scalar_lea.vmem %s2, 3
      %v919 = vld [vmem:[%s918] sm:$0x1]
      %v921 = vlaneseq
      %v922 = vshrl.u32 %v921, 7
      %v923 = vsub.s32 0, %v922
      %v924 = vrot.slane %v919, %v923
      %v926 = vmul.f32 %v912, %v924
      %v927 = vmul.f32 %v915, %v924
      %s928 = scalar_lea.vmem %s3, 3
      %v929 = vld [vmem:[%s928] sm:$0x1]
      %v931 = vlaneseq
      %v932 = vshrl.u32 %v931, 7
      %v933 = vsub.s32 0, %v932
      %v934 = vrot.slane %v929, %v933
      %v936 = vadd.f32 %v926, %v934
      %v937 = vadd.f32 %v927, %v934
      %v938 = vmax.f32 %v936, 0.0
      %v939 = vmax.f32 %v937, 0.0
      %v940 = vpack.c.bf16 %v939, %v938
      %942 = vrot.lane.b32.xlu0 %v940, 32
      %v943 = vpop.permute.xlu0 %942
      %vm945 = vcmask 326912
      %946 = vst.msk [vmem:[#allocation4] sm:$0xff] %vm945, %v943
      %949 = vrot.lane.b32.xlu0 %v938, 40
      %v950 = vpop.permute.xlu0 %949
      %951 = vrot.lane.b32.xlu0 %v939, 40
      %v952 = vpop.permute.xlu0 %951
      %v955 = vadd.f32 %v433, %v950
      %v956 = vadd.f32 %v434, %v952
      %959 = vrot.lane.b32.xlu0 %v955, 88
      %v960 = vpop.permute.xlu0 %959
      %961 = vrot.lane.b32.xlu0 %v956, 88
      %v962 = vpop.permute.xlu0 %961
      %965 = vst.msk [vmem:[#allocation2 + $0x3] sm:$0xff] %vm436, %v960
      %966 = vst.msk [vmem:[#allocation2 + $0xb] sm:$0xff] %vm436, %v962
      %v967 = vld [vmem:[#allocation2] sm:$0xff]
      %v968 = vld [vmem:[#allocation2 + $0x8] sm:$0xff]
      %v969 = vpack.c.bf16 %v968, %v967
      %970 = vst.msk [vmem:[#allocation3] sm:$0xff] %vm436, %v969
      %v971 = vld [vmem:[#allocation2 + $0x3] sm:$0xff]
      %v972 = vld [vmem:[#allocation2 + $0xb] sm:$0xff]
      %v973 = vpack.c.bf16 %v972, %v971
      %975 = vrot.lane.b32.xlu0 %v973, 8
      %v976 = vpop.permute.xlu0 %975
      %978 = vst.msk [vmem:[#allocation3] sm:$0xff] %vm459, %v976
      %v979 = vld [vmem:[#allocation2 + $0x6] sm:$0xff]
      %v980 = vld [vmem:[#allocation2 + $0xe] sm:$0xff]
      %v981 = vpack.c.bf16 %v980, %v979
      %983 = vrot.lane.b32.xlu0 %v981, 16
      %v984 = vpop.permute.xlu0 %983
      %986 = vst.msk [vmem:[#allocation3] sm:$0xff] %vm468, %v984
      %v987 = vld [vmem:[#allocation3] sm:$0xff]
      %s988 = scalar_lea.vmem %s1, 48
      %v989 = vld [vmem:[%s988] sm:$0xf]
      %v990 = vld [vmem:[%s988 + $0x4] sm:$0xf]
      %v991 = vld [vmem:[%s988 + $0x8] sm:$0xf]
      %v995 = vunpack.c.l.b16 %v989
      %v996 = vunpack.c.l.b16 %v990
      %v997 = vunpack.c.l.b16 %v991
      %v998 = vpack.c.b16 %v996, %v995
      %v999 = vpack.c.b16 %v997, %v997
      %v1002 = vsel %vm483, %v987, 0
      %v1005 = vsel %vm487, %v999, 0
      %1007 = vmatprep.subr.bf16.mxu0 0
      %1008 = vmatpush1.bf16.msra.mxu0 %v998
      %1009 = vmatprep.subr.bf16.mxu0 0
      %1010 = vmatpush1.bf16.msra.mxu0 %v1005
      %1011 = vmatprep.subr.bf16.mxu0 0
      %1012 = vmatpush1.bf16.msra.mxu0 0
      %1013 = vmatprep.subr.bf16.mxu0 0
      %1014 = vmatpush1.bf16.msra.mxu0 0
      %1015 = vmatprep.subr.bf16.mxu0 0
      %1016 = vmatpush1.bf16.msra.mxu0 0
      %1017 = vmatprep.subr.bf16.mxu0 0
      %1018 = vmatpush1.bf16.msra.mxu0 0
      %1019 = vmatprep.subr.bf16.mxu0 0
      %1020 = vmatpush1.bf16.msra.mxu0 0
      %1021 = vmatprep.subr.bf16.mxu0 0
      %1022 = vmatpush1.bf16.msra.mxu0 0
      %1023 = vmatprep.subr.bf16.mxu0 0
      %1024 = vmatpush1.bf16.msra.mxu0 0
      %1025 = vmatprep.subr.bf16.mxu0 0
      %1026 = vmatpush1.bf16.msra.mxu0 0
      %1027 = vmatprep.subr.bf16.mxu0 0
      %1028 = vmatpush1.bf16.msra.mxu0 0
      %1029 = vmatprep.subr.bf16.mxu0 0
      %1030 = vmatpush1.bf16.msra.mxu0 0
      %1031 = vmatprep.subr.bf16.mxu0 0
      %1032 = vmatpush1.bf16.msra.mxu0 0
      %1033 = vmatprep.subr.bf16.mxu0 0
      %1034 = vmatpush1.bf16.msra.mxu0 0
      %1035 = vmatprep.subr.bf16.mxu0 0
      %1036 = vmatpush1.bf16.msra.mxu0 0
      %1037 = vmatprep.subr.bf16.mxu0 0
      %1038 = vmatpush1.bf16.msra.mxu0 0
      %1039 = vmatprep.mubr.bf16.mxu0 0
      %1040 = vmatmul.mubr.bf16.gmra.mrb[0].mxu0 %v1002
      %v1041 = vpop.f32.mrb[0].mxu0
      %v1042 = vadd.f32 0.0, %v1041
      %v1043 = vpop.f32.mrb[0].mxu0
      %v1044 = vpop.f32.mrb[0].mxu0
      %v1045 = vadd.f32 0.0, %v1044
      %v1046 = vpop.f32.mrb[0].mxu0
      %1047 = vdwg.mxu0
      %s1048 = scalar_lea.vmem %s2, 4
      %v1049 = vld [vmem:[%s1048] sm:$0x1]
      %v1051 = vlaneseq
      %v1052 = vshrl.u32 %v1051, 7
      %v1053 = vsub.s32 0, %v1052
      %v1054 = vrot.slane %v1049, %v1053
      %v1056 = vmul.f32 %v1042, %v1054
      %v1057 = vmul.f32 %v1045, %v1054
      %s1058 = scalar_lea.vmem %s3, 4
      %v1059 = vld [vmem:[%s1058] sm:$0x1]
      %v1061 = vlaneseq
      %v1062 = vshrl.u32 %v1061, 7
      %v1063 = vsub.s32 0, %v1062
      %v1064 = vrot.slane %v1059, %v1063
      %v1066 = vadd.f32 %v1056, %v1064
      %v1067 = vadd.f32 %v1057, %v1064
      %v1068 = vmax.f32 %v1066, 0.0
      %v1069 = vmax.f32 %v1067, 0.0
      %v1070 = vpack.c.bf16 %v1069, %v1068
      %1072 = vrot.lane.b32.xlu0 %v1070, 40
      %v1073 = vpop.permute.xlu0 %1072
      %vm1075 = vcmask 392512
      %1076 = vst.msk [vmem:[#allocation4] sm:$0xff] %vm1075, %v1073
      %1079 = vrot.lane.b32.xlu0 %v1068, 48
      %v1080 = vpop.permute.xlu0 %1079
      %1081 = vrot.lane.b32.xlu0 %v1069, 48
      %v1082 = vpop.permute.xlu0 %1081
      %v1085 = vadd.f32 %v433, %v1080
      %v1086 = vadd.f32 %v434, %v1082
      %1089 = vrot.lane.b32.xlu0 %v1085, 80
      %v1090 = vpop.permute.xlu0 %1089
      %1091 = vrot.lane.b32.xlu0 %v1086, 80
      %v1092 = vpop.permute.xlu0 %1091
      %1095 = vst.msk [vmem:[#allocation2 + $0x3] sm:$0xff] %vm436, %v1090
      %1096 = vst.msk [vmem:[#allocation2 + $0xb] sm:$0xff] %vm436, %v1092
      %v1097 = vld [vmem:[#allocation2] sm:$0xff]
      %v1098 = vld [vmem:[#allocation2 + $0x8] sm:$0xff]
      %v1099 = vpack.c.bf16 %v1098, %v1097
      %1100 = vst.msk [vmem:[#allocation3] sm:$0xff] %vm436, %v1099
      %v1101 = vld [vmem:[#allocation2 + $0x3] sm:$0xff]
      %v1102 = vld [vmem:[#allocation2 + $0xb] sm:$0xff]
      %v1103 = vpack.c.bf16 %v1102, %v1101
      %1105 = vrot.lane.b32.xlu0 %v1103, 8
      %v1106 = vpop.permute.xlu0 %1105
      %1108 = vst.msk [vmem:[#allocation3] sm:$0xff] %vm459, %v1106
      %v1109 = vld [vmem:[#allocation2 + $0x6] sm:$0xff]
      %v1110 = vld [vmem:[#allocation2 + $0xe] sm:$0xff]
      %v1111 = vpack.c.bf16 %v1110, %v1109
      %1113 = vrot.lane.b32.xlu0 %v1111, 16
      %v1114 = vpop.permute.xlu0 %1113
      %1116 = vst.msk [vmem:[#allocation3] sm:$0xff] %vm468, %v1114
      %v1117 = vld [vmem:[#allocation3] sm:$0xff]
      %s1118 = scalar_lea.vmem %s1, 60
      %v1119 = vld [vmem:[%s1118] sm:$0xf]
      %v1120 = vld [vmem:[%s1118 + $0x4] sm:$0xf]
      %v1121 = vld [vmem:[%s1118 + $0x8] sm:$0xf]
      %v1125 = vunpack.c.l.b16 %v1119
      %v1126 = vunpack.c.l.b16 %v1120
      %v1127 = vunpack.c.l.b16 %v1121
      %v1128 = vpack.c.b16 %v1126, %v1125
      %v1129 = vpack.c.b16 %v1127, %v1127
      %v1132 = vsel %vm483, %v1117, 0
      %v1135 = vsel %vm487, %v1129, 0
      %1137 = vmatprep.subr.bf16.mxu0 0
      %1138 = vmatpush1.bf16.msra.mxu0 %v1128
      %1139 = vmatprep.subr.bf16.mxu0 0
      %1140 = vmatpush1.bf16.msra.mxu0 %v1135
      %1141 = vmatprep.subr.bf16.mxu0 0
      %1142 = vmatpush1.bf16.msra.mxu0 0
      %1143 = vmatprep.subr.bf16.mxu0 0
      %1144 = vmatpush1.bf16.msra.mxu0 0
      %1145 = vmatprep.subr.bf16.mxu0 0
      %1146 = vmatpush1.bf16.msra.mxu0 0
      %1147 = vmatprep.subr.bf16.mxu0 0
      %1148 = vmatpush1.bf16.msra.mxu0 0
      %1149 = vmatprep.subr.bf16.mxu0 0
      %1150 = vmatpush1.bf16.msra.mxu0 0
      %1151 = vmatprep.subr.bf16.mxu0 0
      %1152 = vmatpush1.bf16.msra.mxu0 0
      %1153 = vmatprep.subr.bf16.mxu0 0
      %1154 = vmatpush1.bf16.msra.mxu0 0
      %1155 = vmatprep.subr.bf16.mxu0 0
      %1156 = vmatpush1.bf16.msra.mxu0 0
      %1157 = vmatprep.subr.bf16.mxu0 0
      %1158 = vmatpush1.bf16.msra.mxu0 0
      %1159 = vmatprep.subr.bf16.mxu0 0
      %1160 = vmatpush1.bf16.msra.mxu0 0
      %1161 = vmatprep.subr.bf16.mxu0 0
      %1162 = vmatpush1.bf16.msra.mxu0 0
      %1163 = vmatprep.subr.bf16.mxu0 0
      %1164 = vmatpush1.bf16.msra.mxu0 0
      %1165 = vmatprep.subr.bf16.mxu0 0
      %1166 = vmatpush1.bf16.msra.mxu0 0
      %1167 = vmatprep.subr.bf16.mxu0 0
      %1168 = vmatpush1.bf16.msra.mxu0 0
      %1169 = vmatprep.mubr.bf16.mxu0 0
      %1170 = vmatmul.mubr.bf16.gmra.mrb[0].mxu0 %v1132
      %v1171 = vpop.f32.mrb[0].mxu0
      %v1172 = vadd.f32 0.0, %v1171
      %v1173 = vpop.f32.mrb[0].mxu0
      %v1174 = vpop.f32.mrb[0].mxu0
      %v1175 = vadd.f32 0.0, %v1174
      %v1176 = vpop.f32.mrb[0].mxu0
      %1177 = vdwg.mxu0
      %s1178 = scalar_lea.vmem %s2, 5
      %v1179 = vld [vmem:[%s1178] sm:$0x1]
      %v1181 = vlaneseq
      %v1182 = vshrl.u32 %v1181, 7
      %v1183 = vsub.s32 0, %v1182
      %v1184 = vrot.slane %v1179, %v1183
      %v1186 = vmul.f32 %v1172, %v1184
      %v1187 = vmul.f32 %v1175, %v1184
      %s1188 = scalar_lea.vmem %s3, 5
      %v1189 = vld [vmem:[%s1188] sm:$0x1]
      %v1191 = vlaneseq
      %v1192 = vshrl.u32 %v1191, 7
      %v1193 = vsub.s32 0, %v1192
      %v1194 = vrot.slane %v1189, %v1193
      %v1196 = vadd.f32 %v1186, %v1194
      %v1197 = vadd.f32 %v1187, %v1194
      %v1198 = vmax.f32 %v1196, 0.0
      %v1199 = vmax.f32 %v1197, 0.0
      %v1200 = vpack.c.bf16 %v1199, %v1198
      %1202 = vrot.lane.b32.xlu0 %v1200, 48
      %v1203 = vpop.permute.xlu0 %1202
      %vm1205 = vcmask 458112
      %1206 = vst.msk [vmem:[#allocation4] sm:$0xff] %vm1205, %v1203
      %1209 = vrot.lane.b32.xlu0 %v1198, 56
      %v1210 = vpop.permute.xlu0 %1209
      %1211 = vrot.lane.b32.xlu0 %v1199, 56
      %v1212 = vpop.permute.xlu0 %1211
      %v1215 = vadd.f32 %v433, %v1210
      %v1216 = vadd.f32 %v434, %v1212
      %1219 = vrot.lane.b32.xlu0 %v1215, 72
      %v1220 = vpop.permute.xlu0 %1219
      %1221 = vrot.lane.b32.xlu0 %v1216, 72
      %v1222 = vpop.permute.xlu0 %1221
      %1225 = vst.msk [vmem:[#allocation2 + $0x3] sm:$0xff] %vm436, %v1220
      %1226 = vst.msk [vmem:[#allocation2 + $0xb] sm:$0xff] %vm436, %v1222
      %v1227 = vld [vmem:[#allocation2] sm:$0xff]
      %v1228 = vld [vmem:[#allocation2 + $0x8] sm:$0xff]
      %v1229 = vpack.c.bf16 %v1228, %v1227
      %1230 = vst.msk [vmem:[#allocation3] sm:$0xff] %vm436, %v1229
      %v1231 = vld [vmem:[#allocation2 + $0x3] sm:$0xff]
      %v1232 = vld [vmem:[#allocation2 + $0xb] sm:$0xff]
      %v1233 = vpack.c.bf16 %v1232, %v1231
      %1235 = vrot.lane.b32.xlu0 %v1233, 8
      %v1236 = vpop.permute.xlu0 %1235
      %1238 = vst.msk [vmem:[#allocation3] sm:$0xff] %vm459, %v1236
      %v1239 = vld [vmem:[#allocation2 + $0x6] sm:$0xff]
      %v1240 = vld [vmem:[#allocation2 + $0xe] sm:$0xff]
      %v1241 = vpack.c.bf16 %v1240, %v1239
      %1243 = vrot.lane.b32.xlu0 %v1241, 16
      %v1244 = vpop.permute.xlu0 %1243
      %1246 = vst.msk [vmem:[#allocation3] sm:$0xff] %vm468, %v1244
      %v1247 = vld [vmem:[#allocation3] sm:$0xff]
      %s1248 = scalar_lea.vmem %s1, 72
      %v1249 = vld [vmem:[%s1248] sm:$0xf]
      %v1250 = vld [vmem:[%s1248 + $0x4] sm:$0xf]
      %v1251 = vld [vmem:[%s1248 + $0x8] sm:$0xf]
      %v1255 = vunpack.c.l.b16 %v1249
      %v1256 = vunpack.c.l.b16 %v1250
      %v1257 = vunpack.c.l.b16 %v1251
      %v1258 = vpack.c.b16 %v1256, %v1255
      %v1259 = vpack.c.b16 %v1257, %v1257
      %v1262 = vsel %vm483, %v1247, 0
      %v1265 = vsel %vm487, %v1259, 0
      %1267 = vmatprep.subr.bf16.mxu0 0
      %1268 = vmatpush1.bf16.msra.mxu0 %v1258
      %1269 = vmatprep.subr.bf16.mxu0 0
      %1270 = vmatpush1.bf16.msra.mxu0 %v1265
      %1271 = vmatprep.subr.bf16.mxu0 0
      %1272 = vmatpush1.bf16.msra.mxu0 0
      %1273 = vmatprep.subr.bf16.mxu0 0
      %1274 = vmatpush1.bf16.msra.mxu0 0
      %1275 = vmatprep.subr.bf16.mxu0 0
      %1276 = vmatpush1.bf16.msra.mxu0 0
      %1277 = vmatprep.subr.bf16.mxu0 0
      %1278 = vmatpush1.bf16.msra.mxu0 0
      %1279 = vmatprep.subr.bf16.mxu0 0
      %1280 = vmatpush1.bf16.msra.mxu0 0
      %1281 = vmatprep.subr.bf16.mxu0 0
      %1282 = vmatpush1.bf16.msra.mxu0 0
      %1283 = vmatprep.subr.bf16.mxu0 0
      %1284 = vmatpush1.bf16.msra.mxu0 0
      %1285 = vmatprep.subr.bf16.mxu0 0
      %1286 = vmatpush1.bf16.msra.mxu0 0
      %1287 = vmatprep.subr.bf16.mxu0 0
      %1288 = vmatpush1.bf16.msra.mxu0 0
      %1289 = vmatprep.subr.bf16.mxu0 0
      %1290 = vmatpush1.bf16.msra.mxu0 0
      %1291 = vmatprep.subr.bf16.mxu0 0
      %1292 = vmatpush1.bf16.msra.mxu0 0
      %1293 = vmatprep.subr.bf16.mxu0 0
      %1294 = vmatpush1.bf16.msra.mxu0 0
      %1295 = vmatprep.subr.bf16.mxu0 0
      %1296 = vmatpush1.bf16.msra.mxu0 0
      %1297 = vmatprep.subr.bf16.mxu0 0
      %1298 = vmatpush1.bf16.msra.mxu0 0
      %1299 = vmatprep.mubr.bf16.mxu0 0
      %1300 = vmatmul.mubr.bf16.gmra.mrb[0].mxu0 %v1262
      %v1301 = vpop.f32.mrb[0].mxu0
      %v1302 = vadd.f32 0.0, %v1301
      %v1303 = vpop.f32.mrb[0].mxu0
      %v1304 = vpop.f32.mrb[0].mxu0
      %v1305 = vadd.f32 0.0, %v1304
      %v1306 = vpop.f32.mrb[0].mxu0
      %1307 = vdwg.mxu0
      %s1308 = scalar_lea.vmem %s2, 6
      %v1309 = vld [vmem:[%s1308] sm:$0x1]
      %v1311 = vlaneseq
      %v1312 = vshrl.u32 %v1311, 7
      %v1313 = vsub.s32 0, %v1312
      %v1314 = vrot.slane %v1309, %v1313
      %v1316 = vmul.f32 %v1302, %v1314
      %v1317 = vmul.f32 %v1305, %v1314
      %s1318 = scalar_lea.vmem %s3, 6
      %v1319 = vld [vmem:[%s1318] sm:$0x1]
      %v1321 = vlaneseq
      %v1322 = vshrl.u32 %v1321, 7
      %v1323 = vsub.s32 0, %v1322
      %v1324 = vrot.slane %v1319, %v1323
      %v1326 = vadd.f32 %v1316, %v1324
      %v1327 = vadd.f32 %v1317, %v1324
      %v1328 = vmax.f32 %v1326, 0.0
      %v1329 = vmax.f32 %v1327, 0.0
      %v1330 = vpack.c.bf16 %v1329, %v1328
      %1332 = vrot.lane.b32.xlu0 %v1330, 56
      %v1333 = vpop.permute.xlu0 %1332
      %vm1335 = vcmask 523712
      %1336 = vst.msk [vmem:[#allocation4] sm:$0xff] %vm1335, %v1333
      %v1337 = vld [vmem:[#allocation4] sm:$0xff]
      %v1338 = vunpack.c.l.bf16 %v1337
      %v1339 = vunpack.c.h.bf16 %v1337
      %vm1340 = vcmask 523264
      %v1341 = vsel %vm1340, %v1338, 0.0
      %v1342 = vsel %vm1340, %v1339, 0.0
      %v1343 = vadd.f32 %v1341, %v1342
      %v1344 = vrot.slane %v1343, 4
      %v1345 = vadd.f32 %v1343, %v1344
      %v1346 = vrot.slane %v1345, 2
      %v1347 = vadd.f32 %v1345, %v1346
      %v1348 = vrot.slane %v1347, 1
      %v1349 = vadd.f32 %v1347, %v1348
      %v1350 = vrcp.pop 16.0
      %v1351 = vmul.f32 %v1349, %v1350
      %v1352 = vpack.c.bf16 %v1351, %v1351
      %v1353 = vld [vmem:[%s4] sm:$0xf]
      %v1354 = vld [vmem:[%s4 + $0x4] sm:$0xf]
      %v1355 = vld [vmem:[%s4 + $0x8] sm:$0xf]
      %v1356 = vld [vmem:[%s4 + $0xc] sm:$0xf]
      %v1357 = vld [vmem:[%s4 + $0x10] sm:$0xf]
      %v1358 = vld [vmem:[%s4 + $0x14] sm:$0xf]
      %v1359 = vld [vmem:[%s4 + $0x18] sm:$0xf]
      %v1360 = vld [vmem:[%s4 + $0x1c] sm:$0xf]
      %v1361 = vld [vmem:[%s5] sm:$0x1]
      %v1370 = vunpack.c.l.b16 %v1353
      %v1371 = vunpack.c.l.b16 %v1354
      %v1372 = vunpack.c.l.b16 %v1355
      %v1373 = vunpack.c.l.b16 %v1356
      %v1374 = vunpack.c.l.b16 %v1357
      %v1375 = vunpack.c.l.b16 %v1358
      %v1376 = vunpack.c.l.b16 %v1359
      %v1377 = vunpack.c.l.b16 %v1360
      %v1378 = vpack.c.b16 %v1371, %v1370
      %v1379 = vpack.c.b16 %v1373, %v1372
      %v1380 = vpack.c.b16 %v1375, %v1374
      %v1381 = vpack.c.b16 %v1377, %v1376
      %v1387 = vsel %vm1340, %v1352, 0
      %1389 = vmatprep.subr.bf16.mxu0 0
      %1390 = vmatpush1.bf16.msra.mxu0 %v1378
      %1391 = vmatprep.subr.bf16.mxu0 0
      %1392 = vmatpush1.bf16.msra.mxu0 %v1379
      %1393 = vmatprep.subr.bf16.mxu0 0
      %1394 = vmatpush1.bf16.msra.mxu0 %v1380
      %1395 = vmatprep.subr.bf16.mxu0 0
      %1396 = vmatpush1.bf16.msra.mxu0 %v1381
      %1397 = vmatprep.subr.bf16.mxu0 0
      %1398 = vmatpush1.bf16.msra.mxu0 0
      %1399 = vmatprep.subr.bf16.mxu0 0
      %1400 = vmatpush1.bf16.msra.mxu0 0
      %1401 = vmatprep.subr.bf16.mxu0 0
      %1402 = vmatpush1.bf16.msra.mxu0 0
      %1403 = vmatprep.subr.bf16.mxu0 0
      %1404 = vmatpush1.bf16.msra.mxu0 0
      %1405 = vmatprep.subr.bf16.mxu0 0
      %1406 = vmatpush1.bf16.msra.mxu0 0
      %1407 = vmatprep.subr.bf16.mxu0 0
      %1408 = vmatpush1.bf16.msra.mxu0 0
      %1409 = vmatprep.subr.bf16.mxu0 0
      %1410 = vmatpush1.bf16.msra.mxu0 0
      %1411 = vmatprep.subr.bf16.mxu0 0
      %1412 = vmatpush1.bf16.msra.mxu0 0
      %1413 = vmatprep.subr.bf16.mxu0 0
      %1414 = vmatpush1.bf16.msra.mxu0 0
      %1415 = vmatprep.subr.bf16.mxu0 0
      %1416 = vmatpush1.bf16.msra.mxu0 0
      %1417 = vmatprep.subr.bf16.mxu0 0
      %1418 = vmatpush1.bf16.msra.mxu0 0
      %1419 = vmatprep.subr.bf16.mxu0 0
      %1420 = vmatpush1.bf16.msra.mxu0 0
      %1421 = vmatprep.mubr.bf16.mxu0 0
      %1422 = vmatmul.mubr.bf16.gmra.mrb[0].mxu0 %v1387
      %v1423 = vpop.f32.mrb[0].mxu0
      %v1424 = vadd.f32 %v1361, %v1423
      %v1425 = vpop.f32.mrb[0].mxu0
      %v1426 = vpop.f32.mrb[0].mxu0
      %v1427 = vpop.f32.mrb[0].mxu0
      %1428 = vdwg.mxu0
      %v1429 = vmax.f32 %v1424, 0.0
      %v1430 = vpack.c.bf16 %v1429, %v1429
      %v1431 = vld [vmem:[%s6] sm:$0xf]
      %v1432 = vld [vmem:[%s6 + $0x4] sm:$0xf]
      %v1433 = vld [vmem:[%s6 + $0x8] sm:$0xf]
      %v1434 = vld [vmem:[%s6 + $0xc] sm:$0xf]
      %v1435 = vld [vmem:[%s7] sm:$0x1]
      %v1440 = vunpack.c.l.b16 %v1431
      %v1441 = vunpack.c.l.b16 %v1432
      %v1442 = vunpack.c.l.b16 %v1433
      %v1443 = vunpack.c.l.b16 %v1434
      %v1444 = vpack.c.b16 %v1441, %v1440
      %v1445 = vpack.c.b16 %v1443, %v1442
      %vm1448 = vcmask 261120
      %v1450 = vsel %vm1448, %v1430, 0
      %1452 = vmatprep.subr.bf16.mxu0 0
      %1453 = vmatpush1.bf16.msra.mxu0 %v1444
      %1454 = vmatprep.subr.bf16.mxu0 0
      %1455 = vmatpush1.bf16.msra.mxu0 %v1445
      %1456 = vmatprep.subr.bf16.mxu0 0
      %1457 = vmatpush1.bf16.msra.mxu0 0
      %1458 = vmatprep.subr.bf16.mxu0 0
      %1459 = vmatpush1.bf16.msra.mxu0 0
      %1460 = vmatprep.subr.bf16.mxu0 0
      %1461 = vmatpush1.bf16.msra.mxu0 0
      %1462 = vmatprep.subr.bf16.mxu0 0
      %1463 = vmatpush1.bf16.msra.mxu0 0
      %1464 = vmatprep.subr.bf16.mxu0 0
      %1465 = vmatpush1.bf16.msra.mxu0 0
      %1466 = vmatprep.subr.bf16.mxu0 0
      %1467 = vmatpush1.bf16.msra.mxu0 0
      %1468 = vmatprep.subr.bf16.mxu0 0
      %1469 = vmatpush1.bf16.msra.mxu0 0
      %1470 = vmatprep.subr.bf16.mxu0 0
      %1471 = vmatpush1.bf16.msra.mxu0 0
      %1472 = vmatprep.subr.bf16.mxu0 0
      %1473 = vmatpush1.bf16.msra.mxu0 0
      %1474 = vmatprep.subr.bf16.mxu0 0
      %1475 = vmatpush1.bf16.msra.mxu0 0
      %1476 = vmatprep.subr.bf16.mxu0 0
      %1477 = vmatpush1.bf16.msra.mxu0 0
      %1478 = vmatprep.subr.bf16.mxu0 0
      %1479 = vmatpush1.bf16.msra.mxu0 0
      %1480 = vmatprep.subr.bf16.mxu0 0
      %1481 = vmatpush1.bf16.msra.mxu0 0
      %1482 = vmatprep.subr.bf16.mxu0 0
      %1483 = vmatpush1.bf16.msra.mxu0 0
      %1484 = vmatprep.mubr.bf16.mxu0 0
      %1485 = vmatmul.mubr.bf16.gmra.mrb[0].mxu0 %v1450
      %v1486 = vpop.f32.mrb[0].mxu0
      %v1487 = vadd.f32 %v1435, %v1486
      %v1488 = vpop.f32.mrb[0].mxu0
      %v1489 = vpop.f32.mrb[0].mxu0
      %v1490 = vpop.f32.mrb[0].mxu0
      %1491 = vdwg.mxu0
      %v1492 = vxor.u32 %v1487, 2147483648
      %v1493 = vmul.f32 %v1492, 1.442695
      %v1494 = vpow.pop %v1493
      %v1495 = vadd.f32 %v1494, 1.0
      %v1496 = vrcp.pop %v1495
      %v1497 = vmul.f32 1.0, %v1496
      %v1498 = vlaneseq
      %v1499 = vshrl.u32 %v1498, 7
      %v1500 = vsub.s32 0, %v1499
      %v1501 = vrot.slane %v1497, %v1500
      %v1502 = vmul.f32 %v1338, %v1501
      %v1503 = vmul.f32 %v1339, %v1501
      %v1504 = vpack.c.bf16 %v1503, %v1502
      %v1505 = vld [vmem:[%s8] sm:$0xf]
      %v1506 = vld [vmem:[%s8 + $0x4] sm:$0xf]
      %v1507 = vld [vmem:[%s8 + $0x8] sm:$0xf]
      %v1508 = vld [vmem:[%s8 + $0xc] sm:$0xf]
      %v1509 = vld [vmem:[%s8 + $0x10] sm:$0xf]
      %v1510 = vld [vmem:[%s8 + $0x14] sm:$0xf]
      %v1511 = vld [vmem:[%s8 + $0x18] sm:$0xf]
      %v1512 = vld [vmem:[%s8 + $0x1c] sm:$0xf]
      %v1521 = vunpack.c.l.b16 %v1505
      %v1522 = vunpack.c.l.b16 %v1506
      %v1523 = vunpack.c.l.b16 %v1507
      %v1524 = vunpack.c.l.b16 %v1508
      %v1525 = vunpack.c.l.b16 %v1509
      %v1526 = vunpack.c.l.b16 %v1510
      %v1527 = vunpack.c.l.b16 %v1511
      %v1528 = vunpack.c.l.b16 %v1512
      %v1529 = vpack.c.b16 %v1522, %v1521
      %v1530 = vpack.c.b16 %v1524, %v1523
      %v1531 = vpack.c.b16 %v1526, %v1525
      %v1532 = vpack.c.b16 %v1528, %v1527
      %v1538 = vsel %vm1340, %v1504, 0
      %1540 = vmatprep.subr.bf16.mxu0 0
      %1541 = vmatpush1.bf16.msra.mxu0 %v1529
      %1542 = vmatprep.subr.bf16.mxu0 0
      %1543 = vmatpush1.bf16.msra.mxu0 %v1530
      %1544 = vmatprep.subr.bf16.mxu0 0
      %1545 = vmatpush1.bf16.msra.mxu0 %v1531
      %1546 = vmatprep.subr.bf16.mxu0 0
      %1547 = vmatpush1.bf16.msra.mxu0 %v1532
      %1548 = vmatprep.subr.bf16.mxu0 0
      %1549 = vmatpush1.bf16.msra.mxu0 0
      %1550 = vmatprep.subr.bf16.mxu0 0
      %1551 = vmatpush1.bf16.msra.mxu0 0
      %1552 = vmatprep.subr.bf16.mxu0 0
      %1553 = vmatpush1.bf16.msra.mxu0 0
      %1554 = vmatprep.subr.bf16.mxu0 0
      %1555 = vmatpush1.bf16.msra.mxu0 0
      %1556 = vmatprep.subr.bf16.mxu0 0
      %1557 = vmatpush1.bf16.msra.mxu0 0
      %1558 = vmatprep.subr.bf16.mxu0 0
      %1559 = vmatpush1.bf16.msra.mxu0 0
      %1560 = vmatprep.subr.bf16.mxu0 0
      %1561 = vmatpush1.bf16.msra.mxu0 0
      %1562 = vmatprep.subr.bf16.mxu0 0
      %1563 = vmatpush1.bf16.msra.mxu0 0
      %1564 = vmatprep.subr.bf16.mxu0 0
      %1565 = vmatpush1.bf16.msra.mxu0 0
      %1566 = vmatprep.subr.bf16.mxu0 0
      %1567 = vmatpush1.bf16.msra.mxu0 0
      %1568 = vmatprep.subr.bf16.mxu0 0
      %1569 = vmatpush1.bf16.msra.mxu0 0
      %1570 = vmatprep.subr.bf16.mxu0 0
      %1571 = vmatpush1.bf16.msra.mxu0 0
      %1572 = vmatprep.mubr.bf16.mxu0 0
      %1573 = vmatmul.mubr.bf16.gmra.mrb[0].mxu0 %v1538
      %v1574 = vpop.f32.mrb[0].mxu0
      %v1575 = vadd.f32 0.0, %v1574
      %v1576 = vpop.f32.mrb[0].mxu0
      %v1577 = vpop.f32.mrb[0].mxu0
      %v1578 = vadd.f32 0.0, %v1577
      %v1579 = vpop.f32.mrb[0].mxu0
      %1580 = vdwg.mxu0
      %v1581 = vld [vmem:[%s9] sm:$0x1]
      %v1583 = vlaneseq
      %v1584 = vshrl.u32 %v1583, 7
      %v1585 = vsub.s32 0, %v1584
      %v1586 = vrot.slane %v1581, %v1585
      %v1588 = vmul.f32 %v1575, %v1586
      %v1589 = vmul.f32 %v1578, %v1586
      %v1590 = vld [vmem:[%s10] sm:$0x1]
      %v1592 = vlaneseq
      %v1593 = vshrl.u32 %v1592, 7
      %v1594 = vsub.s32 0, %v1593
      %v1595 = vrot.slane %v1590, %v1594
      %v1597 = vadd.f32 %v1588, %v1595
      %v1598 = vadd.f32 %v1589, %v1595
      %v1599 = vmax.f32 %v1597, 0.0
      %v1600 = vmax.f32 %v1598, 0.0
      %v1601 = vpack.c.bf16 %v1600, %v1599
      %v1603 = vunpack.c.l.b16 %v1601
      %v1604 = vunpack.c.h.b16 %v1601
      %v1605 = vpack.c.b16 %v1603, %v1603
      %v1606 = vpack.c.b16 %v1604, %v1604
      %vm1609 = vcmask 519168
      %1610 = vst.msk [vmem:[%s421] sm:$0xf] %vm1609, %v1605
      %1611 = vst.msk [vmem:[%s421 + $0x4] sm:$0xf] %vm1609, %v1606
      %v1612 = vadd.f32 %v433, %v1599
      %v1613 = vadd.f32 %v434, %v1600
      %v1614 = vpack.c.bf16 %v1613, %v1612
      %v1616 = vunpack.c.l.b16 %v1614
      %v1617 = vunpack.c.h.b16 %v1614
      %v1618 = vpack.c.b16 %v1616, %v1616
      %v1619 = vpack.c.b16 %v1617, %v1617
      %1622 = vst.msk [vmem:[%s426] sm:$0xf] %vm1609, %v1618
      %1623 = vst.msk [vmem:[%s426 + $0x4] sm:$0xf] %vm1609, %v1619
      %p1624 = scmp.lt.s32.totalorder %s24, 1
      %s1625 = scalar_select %p1624, %s24, 1
      %s1626 = smul.addr %s1625, 2
      %s1627 = smul.addr %s1626, 4
      %s1628 = scalar_lea.vmem %s11, %s1627
      %p1629 = scmp.lt.s32.totalorder %s24, 1
      %s1630 = scalar_select %p1629, %s24, 1
      %s1631 = smul.addr %s1630, 2
      %s1632 = smul.addr %s1631, 4
      %s1633 = scalar_lea.vmem %s12, %s1632
      // Predicated region
      $region65: #{ecapa_forward.7} parent=63 // pred_check
        %p1634 = pneg %p278
      $region66: #{ecapa_forward.7} parent=63 // pred_check_branch
        %1636 = sbr.rel (%p1634) target = $region68
      $region67: #{ecapa_forward.7} parent=63 // pred_region
        _
      $region68: #{ecapa_forward.7} parent=63 // pred_fallthru
        _
      // Predicated region
      $region69: #{ecapa_forward.7} parent=63 // pred_check
        %p1637 = pneg %p304
      $region70: #{ecapa_forward.7} parent=63 // pred_check_branch
        %1639 = sbr.rel (%p1637) target = $region72
      $region71: #{ecapa_forward.7} parent=63 // pred_region
        _
      $region72: #{ecapa_forward.7} parent=63 // pred_fallthru
        _
    $region64: #{ecapa_forward.7} parent=5 // pred_fallthru
      _
    %p1640 = scmp.le.s32.totalorder 2, %s19
    // Predicated region
    $region73: #{ecapa_forward.7} parent=5 // pred_check
      %p1641 = pneg %p1640
    $region74: #{ecapa_forward.7} parent=5 // pred_check_branch
      %1643 = sbr.rel (%p1641) target = $region76
    $region75: #{ecapa_forward.7} parent=5 // pred_region
      %s1644 = ssub.s32 %s19, 2
      // Predicated region
      $region77: #{ecapa_forward.7} parent=75 // pred_check
        %p1645 = pneg %p284
      $region78: #{ecapa_forward.7} parent=75 // pred_check_branch
        %1647 = sbr.rel (%p1645) target = $region80
      $region79: #{ecapa_forward.7} parent=75 // pred_region
        %p1648 = scmp.lt.s32.totalorder %s25, 1
        %s1649 = scalar_select %p1648, %s25, 1
        %s1650 = smul.addr %s1649, 2
        %s1651 = smul.addr %s1650, 4
        %s1652 = scalar_lea.vmem %s11, %s1651
      $region80: #{ecapa_forward.7} parent=75 // pred_fallthru
        _
      // Predicated region
      $region81: #{ecapa_forward.7} parent=75 // pred_check
        %p1653 = pneg %p310
      $region82: #{ecapa_forward.7} parent=75 // pred_check_branch
        %1655 = sbr.rel (%p1653) target = $region84
      $region83: #{ecapa_forward.7} parent=75 // pred_region
        %p1656 = scmp.lt.s32.totalorder %s25, 1
        %s1657 = scalar_select %p1656, %s25, 1
        %s1658 = smul.addr %s1657, 2
        %s1659 = smul.addr %s1658, 4
        %s1660 = scalar_lea.vmem %s12, %s1659
      $region84: #{ecapa_forward.7} parent=75 // pred_fallthru
        _
    $region76: #{ecapa_forward.7} parent=5 // pred_fallthru
      _
  $region6: #{ecapa_forward.7} parent=0 // loop_footer
    %s23 = sadd.s32 1, %s19
  $region7: #{ecapa_forward.7} parent=0 // loop_footer_branch
    %18 = sbr.rel target = $region3
  $region8: #{ecapa_forward.7} parent=0 // loop_exit
    _

// kernel: ecapa_forward.6
$region0: #{ecapa_forward.6}
  #allocation0 [shape = 'u32[]', space=smem, size = 0x4, offset = 0x4, fixed_abs, tag = 'smem constant byte address 0x4 - core index']
  #allocation1 [shape = 'u32[144,128]{1,0:T(1,128)}', space=vmem, size = 0x12000, scoped, tag = 'internal scratch']
  #allocation2 [shape = 'f32[20,8]{1,0:T(8,128)}', space=vmem, size = 0x3000, scoped, tag = 'scratch operand']
  #allocation3 [shape = 'bf16[16,24]{1,0:T(16,128)(2,1)}', space=vmem, size = 0x1000, scoped, tag = 'scratch operand']
  #allocation4 [shape = 'bf16[16,64]{1,0:T(16,128)(2,1)}', space=vmem, size = 0x1000, scoped, tag = 'scratch operand']
  %s0 = inlined_call_operand.vmem [shape: bf16[2,16,64], index: 0, kind: input, shape index: {}]
  %s1 = inlined_call_operand.vmem [shape: bf16[7,24,8], index: 1, kind: input, shape index: {}]
  %s2 = inlined_call_operand.vmem [shape: f32[7,1,8], index: 2, kind: input, shape index: {}]
  %s3 = inlined_call_operand.vmem [shape: f32[7,1,8], index: 3, kind: input, shape index: {}]
  %s4 = inlined_call_operand.vmem [shape: bf16[64,32], index: 4, kind: input, shape index: {}]
  %s5 = inlined_call_operand.vmem [shape: f32[1,32], index: 5, kind: input, shape index: {}]
  %s6 = inlined_call_operand.vmem [shape: bf16[32,64], index: 6, kind: input, shape index: {}]
  %s7 = inlined_call_operand.vmem [shape: f32[1,64], index: 7, kind: input, shape index: {}]
  %s8 = inlined_call_operand.vmem [shape: bf16[64,64], index: 8, kind: input, shape index: {}]
  %s9 = inlined_call_operand.vmem [shape: f32[1,64], index: 9, kind: input, shape index: {}]
  %s10 = inlined_call_operand.vmem [shape: f32[1,64], index: 10, kind: input, shape index: {}]
  %s11 = inlined_call_operand.vmem [shape: bf16[2,16,64], index: 11, kind: output, shape index: {0}]
  %s12 = inlined_call_operand.vmem [shape: bf16[2,16,64], index: 12, kind: output, shape index: {1}]
  %13 = xla_tuple %s11, %s12
  %s14 = sld [smem:[#allocation0]]
  $region85: #{ecapa_forward.6} parent=0
    _
  %s16 = ssub.s32 1, %s14
  %s17 = scalar_select 0, %s16, %s14
  loop: start=0, step=1, limit=4
  $region2: #{ecapa_forward.6} parent=0 // loop_pre_header
    _
  $region3: #{ecapa_forward.6} parent=0 // loop_header
    %s19 = sphi 0, %s23
    %p20 = scmp.ge.s32.totalorder %s19, 4
    %s29 = sphi 0, %s31
    %s32 = sphi 0, %s29
    %s33 = sphi 0, %s32
    %s49 = sphi 0, %s33
    %s53 = sphi 0, %s53
    %s55 = sphi 0, %s53
    %s56 = sphi 0, %s55
    %s70 = sphi 0, %s56
    %s74 = sphi 0, %s74
    %s76 = sphi 0, %s74
    %s77 = sphi 0, %s76
    %s91 = sphi 0, %s77
    %s95 = sphi 0, %s95
    %s97 = sphi 0, %s95
    %s98 = sphi 0, %s97
    %s112 = sphi 0, %s98
    %s116 = sphi 0, %s116
    %s118 = sphi 0, %s116
    %s119 = sphi 0, %s118
    %s133 = sphi 0, %s119
    %s137 = sphi 0, %s137
    %s139 = sphi 0, %s137
    %s140 = sphi 0, %s139
    %s154 = sphi 0, %s140
    %s158 = sphi 0, %s158
    %s160 = sphi 0, %s158
    %s161 = sphi 0, %s160
    %s175 = sphi 0, %s161
    %s179 = sphi 0, %s179
    %s181 = sphi 0, %s179
    %s182 = sphi 0, %s181
    %s196 = sphi 0, %s182
    %s200 = sphi 0, %s200
    %s202 = sphi 0, %s200
    %s203 = sphi 0, %s202
    %s217 = sphi 0, %s203
    %s221 = sphi 0, %s221
    %s223 = sphi 0, %s221
    %s224 = sphi 0, %s223
    %s238 = sphi 0, %s224
    %s242 = sphi 0, %s242
    %s244 = sphi 0, %s242
    %s245 = sphi 0, %s244
    %s259 = sphi 0, %s245
    %s265 = sphi 0, %s267
    %s268 = sphi 0, %s265
    %s269 = sphi 0, %s268
    %s285 = sphi 0, %s269
    %s291 = sphi 0, %s293
    %s294 = sphi 0, %s291
    %s295 = sphi 0, %s294
    %s311 = sphi 0, %s295
  $region4: #{ecapa_forward.6} parent=0 // loop_header_branch
    %22 = sbr.rel (%p20) target = $region8
  $region5: #{ecapa_forward.6} parent=0 // loop_body
    %s24 = ssub.s32 %s19, 1
    %s25 = ssub.s32 %s19, 2
    %s26 = sadd.s32 %s19, 1
    %s27 = ssub.s32 %s19, %s26
    %p28 = scmp.eq.s32.totalorder %s27, 0
    %s30 = sadd.s32 %s29, 1
    %s31 = scalar_select %p28, %s29, %s30
    %p34 = pneg %p28
    %p35 = scmp.eq.s32.totalorder %s19, 1
    %p36 = por %p34, %p35
    %p37 = scmp.ne.s32.totalorder %s29, %s32
    %p38 = scmp.eq.s32.totalorder %s19, 0
    %p39 = por %p37, %p38
    %p40 = scmp.ne.s32.totalorder %s29, %s32
    %p41 = scmp.eq.s32.totalorder %s24, 1
    %p42 = por %p40, %p41
    %p43 = scmp.ne.s32.totalorder %s32, %s33
    %p44 = scmp.eq.s32.totalorder %s24, 0
    %p45 = por %p43, %p44
    %p46 = scmp.ne.s32.totalorder %s32, %s33
    %p47 = scmp.eq.s32.totalorder %s25, 1
    %p48 = por %p46, %p47
    %p50 = scmp.ne.s32.totalorder %s33, %s49
    %p51 = scmp.eq.s32.totalorder %s25, 0
    %p52 = por %p50, %p51
    %s54 = sadd.s32 %s53, 1
    %p57 = scmp.eq.s32.totalorder %s19, 1
    %p58 = scmp.ne.s32.totalorder %s53, %s55
    %p59 = scmp.eq.s32.totalorder %s19, 0
    %p60 = por %p58, %p59
    %p61 = scmp.ne.s32.totalorder %s53, %s55
    %p62 = scmp.eq.s32.totalorder %s24, 1
    %p63 = por %p61, %p62
    %p64 = scmp.ne.s32.totalorder %s55, %s56
    %p65 = scmp.eq.s32.totalorder %s24, 0
    %p66 = por %p64, %p65
    %p67 = scmp.ne.s32.totalorder %s55, %s56
    %p68 = scmp.eq.s32.totalorder %s25, 1
    %p69 = por %p67, %p68
    %p71 = scmp.ne.s32.totalorder %s56, %s70
    %p72 = scmp.eq.s32.totalorder %s25, 0
    %p73 = por %p71, %p72
    %s75 = sadd.s32 %s74, 1
    %p78 = scmp.eq.s32.totalorder %s19, 1
    %p79 = scmp.ne.s32.totalorder %s74, %s76
    %p80 = scmp.eq.s32.totalorder %s19, 0
    %p81 = por %p79, %p80
    %p82 = scmp.ne.s32.totalorder %s74, %s76
    %p83 = scmp.eq.s32.totalorder %s24, 1
    %p84 = por %p82, %p83
    %p85 = scmp.ne.s32.totalorder %s76, %s77
    %p86 = scmp.eq.s32.totalorder %s24, 0
    %p87 = por %p85, %p86
    %p88 = scmp.ne.s32.totalorder %s76, %s77
    %p89 = scmp.eq.s32.totalorder %s25, 1
    %p90 = por %p88, %p89
    %p92 = scmp.ne.s32.totalorder %s77, %s91
    %p93 = scmp.eq.s32.totalorder %s25, 0
    %p94 = por %p92, %p93
    %s96 = sadd.s32 %s95, 1
    %p99 = scmp.eq.s32.totalorder %s19, 1
    %p100 = scmp.ne.s32.totalorder %s95, %s97
    %p101 = scmp.eq.s32.totalorder %s19, 0
    %p102 = por %p100, %p101
    %p103 = scmp.ne.s32.totalorder %s95, %s97
    %p104 = scmp.eq.s32.totalorder %s24, 1
    %p105 = por %p103, %p104
    %p106 = scmp.ne.s32.totalorder %s97, %s98
    %p107 = scmp.eq.s32.totalorder %s24, 0
    %p108 = por %p106, %p107
    %p109 = scmp.ne.s32.totalorder %s97, %s98
    %p110 = scmp.eq.s32.totalorder %s25, 1
    %p111 = por %p109, %p110
    %p113 = scmp.ne.s32.totalorder %s98, %s112
    %p114 = scmp.eq.s32.totalorder %s25, 0
    %p115 = por %p113, %p114
    %s117 = sadd.s32 %s116, 1
    %p120 = scmp.eq.s32.totalorder %s19, 1
    %p121 = scmp.ne.s32.totalorder %s116, %s118
    %p122 = scmp.eq.s32.totalorder %s19, 0
    %p123 = por %p121, %p122
    %p124 = scmp.ne.s32.totalorder %s116, %s118
    %p125 = scmp.eq.s32.totalorder %s24, 1
    %p126 = por %p124, %p125
    %p127 = scmp.ne.s32.totalorder %s118, %s119
    %p128 = scmp.eq.s32.totalorder %s24, 0
    %p129 = por %p127, %p128
    %p130 = scmp.ne.s32.totalorder %s118, %s119
    %p131 = scmp.eq.s32.totalorder %s25, 1
    %p132 = por %p130, %p131
    %p134 = scmp.ne.s32.totalorder %s119, %s133
    %p135 = scmp.eq.s32.totalorder %s25, 0
    %p136 = por %p134, %p135
    %s138 = sadd.s32 %s137, 1
    %p141 = scmp.eq.s32.totalorder %s19, 1
    %p142 = scmp.ne.s32.totalorder %s137, %s139
    %p143 = scmp.eq.s32.totalorder %s19, 0
    %p144 = por %p142, %p143
    %p145 = scmp.ne.s32.totalorder %s137, %s139
    %p146 = scmp.eq.s32.totalorder %s24, 1
    %p147 = por %p145, %p146
    %p148 = scmp.ne.s32.totalorder %s139, %s140
    %p149 = scmp.eq.s32.totalorder %s24, 0
    %p150 = por %p148, %p149
    %p151 = scmp.ne.s32.totalorder %s139, %s140
    %p152 = scmp.eq.s32.totalorder %s25, 1
    %p153 = por %p151, %p152
    %p155 = scmp.ne.s32.totalorder %s140, %s154
    %p156 = scmp.eq.s32.totalorder %s25, 0
    %p157 = por %p155, %p156
    %s159 = sadd.s32 %s158, 1
    %p162 = scmp.eq.s32.totalorder %s19, 1
    %p163 = scmp.ne.s32.totalorder %s158, %s160
    %p164 = scmp.eq.s32.totalorder %s19, 0
    %p165 = por %p163, %p164
    %p166 = scmp.ne.s32.totalorder %s158, %s160
    %p167 = scmp.eq.s32.totalorder %s24, 1
    %p168 = por %p166, %p167
    %p169 = scmp.ne.s32.totalorder %s160, %s161
    %p170 = scmp.eq.s32.totalorder %s24, 0
    %p171 = por %p169, %p170
    %p172 = scmp.ne.s32.totalorder %s160, %s161
    %p173 = scmp.eq.s32.totalorder %s25, 1
    %p174 = por %p172, %p173
    %p176 = scmp.ne.s32.totalorder %s161, %s175
    %p177 = scmp.eq.s32.totalorder %s25, 0
    %p178 = por %p176, %p177
    %s180 = sadd.s32 %s179, 1
    %p183 = scmp.eq.s32.totalorder %s19, 1
    %p184 = scmp.ne.s32.totalorder %s179, %s181
    %p185 = scmp.eq.s32.totalorder %s19, 0
    %p186 = por %p184, %p185
    %p187 = scmp.ne.s32.totalorder %s179, %s181
    %p188 = scmp.eq.s32.totalorder %s24, 1
    %p189 = por %p187, %p188
    %p190 = scmp.ne.s32.totalorder %s181, %s182
    %p191 = scmp.eq.s32.totalorder %s24, 0
    %p192 = por %p190, %p191
    %p193 = scmp.ne.s32.totalorder %s181, %s182
    %p194 = scmp.eq.s32.totalorder %s25, 1
    %p195 = por %p193, %p194
    %p197 = scmp.ne.s32.totalorder %s182, %s196
    %p198 = scmp.eq.s32.totalorder %s25, 0
    %p199 = por %p197, %p198
    %s201 = sadd.s32 %s200, 1
    %p204 = scmp.eq.s32.totalorder %s19, 1
    %p205 = scmp.ne.s32.totalorder %s200, %s202
    %p206 = scmp.eq.s32.totalorder %s19, 0
    %p207 = por %p205, %p206
    %p208 = scmp.ne.s32.totalorder %s200, %s202
    %p209 = scmp.eq.s32.totalorder %s24, 1
    %p210 = por %p208, %p209
    %p211 = scmp.ne.s32.totalorder %s202, %s203
    %p212 = scmp.eq.s32.totalorder %s24, 0
    %p213 = por %p211, %p212
    %p214 = scmp.ne.s32.totalorder %s202, %s203
    %p215 = scmp.eq.s32.totalorder %s25, 1
    %p216 = por %p214, %p215
    %p218 = scmp.ne.s32.totalorder %s203, %s217
    %p219 = scmp.eq.s32.totalorder %s25, 0
    %p220 = por %p218, %p219
    %s222 = sadd.s32 %s221, 1
    %p225 = scmp.eq.s32.totalorder %s19, 1
    %p226 = scmp.ne.s32.totalorder %s221, %s223
    %p227 = scmp.eq.s32.totalorder %s19, 0
    %p228 = por %p226, %p227
    %p229 = scmp.ne.s32.totalorder %s221, %s223
    %p230 = scmp.eq.s32.totalorder %s24, 1
    %p231 = por %p229, %p230
    %p232 = scmp.ne.s32.totalorder %s223, %s224
    %p233 = scmp.eq.s32.totalorder %s24, 0
    %p234 = por %p232, %p233
    %p235 = scmp.ne.s32.totalorder %s223, %s224
    %p236 = scmp.eq.s32.totalorder %s25, 1
    %p237 = por %p235, %p236
    %p239 = scmp.ne.s32.totalorder %s224, %s238
    %p240 = scmp.eq.s32.totalorder %s25, 0
    %p241 = por %p239, %p240
    %s243 = sadd.s32 %s242, 1
    %p246 = scmp.eq.s32.totalorder %s19, 1
    %p247 = scmp.ne.s32.totalorder %s242, %s244
    %p248 = scmp.eq.s32.totalorder %s19, 0
    %p249 = por %p247, %p248
    %p250 = scmp.ne.s32.totalorder %s242, %s244
    %p251 = scmp.eq.s32.totalorder %s24, 1
    %p252 = por %p250, %p251
    %p253 = scmp.ne.s32.totalorder %s244, %s245
    %p254 = scmp.eq.s32.totalorder %s24, 0
    %p255 = por %p253, %p254
    %p256 = scmp.ne.s32.totalorder %s244, %s245
    %p257 = scmp.eq.s32.totalorder %s25, 1
    %p258 = por %p256, %p257
    %p260 = scmp.ne.s32.totalorder %s245, %s259
    %p261 = scmp.eq.s32.totalorder %s25, 0
    %p262 = por %p260, %p261
    %s263 = ssub.s32 %s19, %s26
    %p264 = scmp.eq.s32.totalorder %s263, 0
    %s266 = sadd.s32 %s265, 1
    %s267 = scalar_select %p264, %s265, %s266
    %p270 = pneg %p264
    %p271 = scmp.eq.s32.totalorder %s19, 1
    %p272 = por %p270, %p271
    %p273 = scmp.ne.s32.totalorder %s265, %s268
    %p274 = scmp.eq.s32.totalorder %s19, 0
    %p275 = por %p273, %p274
    %p276 = scmp.ne.s32.totalorder %s265, %s268
    %p277 = scmp.eq.s32.totalorder %s24, 1
    %p278 = por %p276, %p277
    %p279 = scmp.ne.s32.totalorder %s268, %s269
    %p280 = scmp.eq.s32.totalorder %s24, 0
    %p281 = por %p279, %p280
    %p282 = scmp.ne.s32.totalorder %s268, %s269
    %p283 = scmp.eq.s32.totalorder %s25, 1
    %p284 = por %p282, %p283
    %p286 = scmp.ne.s32.totalorder %s269, %s285
    %p287 = scmp.eq.s32.totalorder %s25, 0
    %p288 = por %p286, %p287
    %s289 = ssub.s32 %s19, %s26
    %p290 = scmp.eq.s32.totalorder %s289, 0
    %s292 = sadd.s32 %s291, 1
    %s293 = scalar_select %p290, %s291, %s292
    %p296 = pneg %p290
    %p297 = scmp.eq.s32.totalorder %s19, 1
    %p298 = por %p296, %p297
    %p299 = scmp.ne.s32.totalorder %s291, %s294
    %p300 = scmp.eq.s32.totalorder %s19, 0
    %p301 = por %p299, %p300
    %p302 = scmp.ne.s32.totalorder %s291, %s294
    %p303 = scmp.eq.s32.totalorder %s24, 1
    %p304 = por %p302, %p303
    %p305 = scmp.ne.s32.totalorder %s294, %s295
    %p306 = scmp.eq.s32.totalorder %s24, 0
    %p307 = por %p305, %p306
    %p308 = scmp.ne.s32.totalorder %s294, %s295
    %p309 = scmp.eq.s32.totalorder %s25, 1
    %p310 = por %p308, %p309
    %p312 = scmp.ne.s32.totalorder %s295, %s311
    %p313 = scmp.eq.s32.totalorder %s25, 0
    %p314 = por %p312, %p313
    %p315 = scmp.le.s32.totalorder 1, %s19
    %p316 = scmp.lt.s32.totalorder %s19, 3
    %p317 = pnand %p315, %p316
    %p318 = pneg %p317
    // Predicated region
    $region9: #{ecapa_forward.6} parent=5 // pred_check
      _
    $region10: #{ecapa_forward.6} parent=5 // pred_check_branch
      %320 = sbr.rel (%p317) target = $region12
    $region11: #{ecapa_forward.6} parent=5 // pred_region
      %s321 = ssub.s32 %s19, 1
      // Predicated region
      $region13: #{ecapa_forward.6} parent=11 // pred_check
        %p322 = pneg %p66
      $region14: #{ecapa_forward.6} parent=11 // pred_check_branch
        %324 = sbr.rel (%p322) target = $region16
      $region15: #{ecapa_forward.6} parent=11 // pred_region
        _
      $region16: #{ecapa_forward.6} parent=11 // pred_fallthru
        _
      // Predicated region
      $region17: #{ecapa_forward.6} parent=11 // pred_check
        %p325 = pneg %p87
      $region18: #{ecapa_forward.6} parent=11 // pred_check_branch
        %327 = sbr.rel (%p325) target = $region20
      $region19: #{ecapa_forward.6} parent=11 // pred_region
        _
      $region20: #{ecapa_forward.6} parent=11 // pred_fallthru
        _
      // Predicated region
      $region21: #{ecapa_forward.6} parent=11 // pred_check
        %p328 = pneg %p108
      $region22: #{ecapa_forward.6} parent=11 // pred_check_branch
        %330 = sbr.rel (%p328) target = $region24
      $region23: #{ecapa_forward.6} parent=11 // pred_region
        _
      $region24: #{ecapa_forward.6} parent=11 // pred_fallthru
        _
      // Predicated region
      $region25: #{ecapa_forward.6} parent=11 // pred_check
        %p331 = pneg %p129
      $region26: #{ecapa_forward.6} parent=11 // pred_check_branch
        %333 = sbr.rel (%p331) target = $region28
      $region27: #{ecapa_forward.6} parent=11 // pred_region
        _
      $region28: #{ecapa_forward.6} parent=11 // pred_fallthru
        _
      // Predicated region
      $region29: #{ecapa_forward.6} parent=11 // pred_check
        %p334 = pneg %p150
      $region30: #{ecapa_forward.6} parent=11 // pred_check_branch
        %336 = sbr.rel (%p334) target = $region32
      $region31: #{ecapa_forward.6} parent=11 // pred_region
        _
      $region32: #{ecapa_forward.6} parent=11 // pred_fallthru
        _
      // Predicated region
      $region33: #{ecapa_forward.6} parent=11 // pred_check
        %p337 = pneg %p171
      $region34: #{ecapa_forward.6} parent=11 // pred_check_branch
        %339 = sbr.rel (%p337) target = $region36
      $region35: #{ecapa_forward.6} parent=11 // pred_region
        _
      $region36: #{ecapa_forward.6} parent=11 // pred_fallthru
        _
      // Predicated region
      $region37: #{ecapa_forward.6} parent=11 // pred_check
        %p340 = pneg %p192
      $region38: #{ecapa_forward.6} parent=11 // pred_check_branch
        %342 = sbr.rel (%p340) target = $region40
      $region39: #{ecapa_forward.6} parent=11 // pred_region
        _
      $region40: #{ecapa_forward.6} parent=11 // pred_fallthru
        _
      // Predicated region
      $region41: #{ecapa_forward.6} parent=11 // pred_check
        %p343 = pneg %p213
      $region42: #{ecapa_forward.6} parent=11 // pred_check_branch
        %345 = sbr.rel (%p343) target = $region44
      $region43: #{ecapa_forward.6} parent=11 // pred_region
        _
      $region44: #{ecapa_forward.6} parent=11 // pred_fallthru
        _
      // Predicated region
      $region45: #{ecapa_forward.6} parent=11 // pred_check
        %p346 = pneg %p234
      $region46: #{ecapa_forward.6} parent=11 // pred_check_branch
        %348 = sbr.rel (%p346) target = $region48
      $region47: #{ecapa_forward.6} parent=11 // pred_region
        _
      $region48: #{ecapa_forward.6} parent=11 // pred_fallthru
        _
      // Predicated region
      $region49: #{ecapa_forward.6} parent=11 // pred_check
        %p349 = pneg %p255
      $region50: #{ecapa_forward.6} parent=11 // pred_check_branch
        %351 = sbr.rel (%p349) target = $region52
      $region51: #{ecapa_forward.6} parent=11 // pred_region
        _
      $region52: #{ecapa_forward.6} parent=11 // pred_fallthru
        _
    $region12: #{ecapa_forward.6} parent=5 // pred_fallthru
      _
    %p352 = scmp.lt.s32.totalorder %s19, 2
    // Predicated region
    $region53: #{ecapa_forward.6} parent=5 // pred_check
      %p353 = pneg %p352
    $region54: #{ecapa_forward.6} parent=5 // pred_check_branch
      %355 = sbr.rel (%p353) target = $region56
    $region55: #{ecapa_forward.6} parent=5 // pred_region
      // Predicated region
      $region57: #{ecapa_forward.6} parent=55 // pred_check
        %p356 = pneg %p39
      $region58: #{ecapa_forward.6} parent=55 // pred_check_branch
        %358 = sbr.rel (%p356) target = $region60
      $region59: #{ecapa_forward.6} parent=55 // pred_region
        %p359 = scmp.lt.s32.totalorder %s19, 1
        %s360 = scalar_select %p359, %s19, 1
        %s361 = smul.addr %s360, 2
        %s362 = smul.addr %s361, 4
        %s363 = scalar_lea.vmem %s0, %s362
      $region60: #{ecapa_forward.6} parent=55 // pred_fallthru
        _
    $region56: #{ecapa_forward.6} parent=5 // pred_fallthru
      _
    %p364 = scmp.le.s32.totalorder 1, %s19
    %p365 = scmp.lt.s32.totalorder %s19, 3
    %p366 = pnand %p364, %p365
    %p367 = pneg %p366
    // Predicated region
    $region61: #{ecapa_forward.6} parent=5 // pred_check
      _
    $region62: #{ecapa_forward.6} parent=5 // pred_check_branch
      %369 = sbr.rel (%p366) target = $region64
    $region63: #{ecapa_forward.6} parent=5 // pred_region
      %s370 = ssub.s32 %s19, 1
      %p371 = scmp.lt.s32.totalorder %s24, 1
      %s372 = scalar_select %p371, %s24, 1
      %s373 = smul.addr %s372, 2
      %s374 = smul.addr %s373, 4
      %s375 = scalar_lea.vmem %s0, %s374
      %p376 = pneg %p45
      %p377 = pneg %p42
      %p378 = pneg %p66
      %p379 = pneg %p63
      %p380 = pneg %p87
      %p381 = pneg %p84
      %p382 = pneg %p108
      %p383 = pneg %p105
      %p384 = pneg %p129
      %p385 = pneg %p126
      %p386 = pneg %p150
      %p387 = pneg %p147
      %p388 = pneg %p171
      %p389 = pneg %p168
      %p390 = pneg %p192
      %p391 = pneg %p189
      %p392 = pneg %p213
      %p393 = pneg %p210
      %p394 = pneg %p234
      %p395 = pneg %p231
      %p396 = pneg %p255
      %p397 = pneg %p252
      %p398 = pneg %p281
      %p399 = pneg %p278
      %p400 = scmp.lt.s32.totalorder %s24, 1
      %s401 = scalar_select %p400, %s24, 1
      %s402 = smul.addr %s401, 2
      %s403 = smul.addr %s402, 4
      %s404 = scalar_lea.vmem %s11, %s403
      %p405 = pneg %p307
      %p406 = pneg %p304
      %p407 = scmp.lt.s32.totalorder %s24, 1
      %s408 = scalar_select %p407, %s24, 1
      %s409 = smul.addr %s408, 2
      %s410 = smul.addr %s409, 4
      %s411 = scalar_lea.vmem %s12, %s410
      %p412 = scmp.lt.s32.totalorder %s24, 1
      %s413 = scalar_select %p412, %s24, 1
      %s414 = smul.addr %s413, 2
      %s415 = smul.addr %s414, 4
      %s416 = scalar_lea.vmem %s0, %s415
      %p417 = scmp.lt.s32.totalorder %s24, 1
      %s418 = scalar_select %p417, %s24, 1
      %s419 = smul.addr %s418, 2
      %s420 = smul.addr %s419, 4
      %s421 = scalar_lea.vmem %s11, %s420
      %p422 = scmp.lt.s32.totalorder %s24, 1
      %s423 = scalar_select %p422, %s24, 1
      %s424 = smul.addr %s423, 2
      %s425 = smul.addr %s424, 4
      %s426 = scalar_lea.vmem %s12, %s425
      %vm428 = vcmask 58368
      %429 = vst.msk [vmem:[#allocation2] sm:$0x3] %vm428, 0.0
      %430 = vst.msk [vmem:[#allocation2 + $0x12] sm:$0x3] %vm428, 0.0
      %v431 = vld [vmem:[%s416] sm:$0xf]
      %v432 = vld [vmem:[%s416 + $0x4] sm:$0xf]
      %v433 = vunpack.c.l.bf16 %v431
      %v434 = vunpack.c.l.bf16 %v432
      %v435 = vpack.c.bf16 %v434, %v433
      %vm436 = vcmask 64512
      %437 = vst.msk [vmem:[#allocation4] sm:$0xff] %vm436, %v435
      %440 = vrot.lane.b32.xlu0 %v433, 120
      %v441 = vpop.permute.xlu0 %440
      %442 = vrot.lane.b32.xlu0 %v434, 120
      %v443 = vpop.permute.xlu0 %442
      %446 = vst.msk [vmem:[#allocation2 + $0x2] sm:$0xff] %vm436, %v441
      %447 = vst.msk [vmem:[#allocation2 + $0xa] sm:$0xff] %vm436, %v443
      %v448 = vld [vmem:[#allocation2] sm:$0xff]
      %v449 = vld [vmem:[#allocation2 + $0x8] sm:$0xff]
      %v450 = vpack.c.bf16 %v449, %v448
      %451 = vst.msk [vmem:[#allocation3] sm:$0xff] %vm436, %v450
      %v452 = vld [vmem:[#allocation2 + $0x2] sm:$0xff]
      %v453 = vld [vmem:[#allocation2 + $0xa] sm:$0xff]
      %v454 = vpack.c.bf16 %v453, %v452
      %456 = vrot.lane.b32.xlu0 %v454, 8
      %v457 = vpop.permute.xlu0 %456
      %vm459 = vcmask 130112
      %460 = vst.msk [vmem:[#allocation3] sm:$0xff] %vm459, %v457
      %v461 = vld [vmem:[#allocation2 + $0x4] sm:$0xff]
      %v462 = vld [vmem:[#allocation2 + $0xc] sm:$0xff]
      %v463 = vpack.c.bf16 %v462, %v461
      %465 = vrot.lane.b32.xlu0 %v463, 16
      %v466 = vpop.permute.xlu0 %465
      %vm468 = vcmask 195712
      %469 = vst.msk [vmem:[#allocation3] sm:$0xff] %vm468, %v466
      %v470 = vld [vmem:[#allocation3] sm:$0xff]
      %v471 = vld [vmem:[%s1] sm:$0xf]
      %v472 = vld [vmem:[%s1 + $0x4] sm:$0xf]
      %v473 = vld [vmem:[%s1 + $0x8] sm:$0xf]
      %v477 = vunpack.c.l.b16 %v471
      %v478 = vunpack.c.l.b16 %v472
      %v479 = vunpack.c.l.b16 %v473
      %v480 = vpack.c.b16 %v478, %v477
      %v481 = vpack.c.b16 %v479, %v479
      %vm483 = vcmask 195584
      %v485 = vsel %vm483, %v470, 0
      %vm487 = vcmask 1043456
      %v489 = vsel %vm487, %v481, 0
      %491 = vmatprep.subr.bf16.mxu0 0
      %492 = vmatpush1.bf16.msra.mxu0 %v480
      %493 = vmatprep.subr.bf16.mxu0 0
      %494 = vmatpush1.bf16.msra.mxu0 %v489
      %495 = vmatprep.subr.bf16.mxu0 0
      %496 = vmatpush1.bf16.msra.mxu0 0
      %497 = vmatprep.subr.bf16.mxu0 0
      %498 = vmatpush1.bf16.msra.mxu0 0
      %499 = vmatprep.subr.bf16.mxu0 0
      %500 = vmatpush1.bf16.msra.mxu0 0
      %501 = vmatprep.subr.bf16.mxu0 0
      %502 = vmatpush1.bf16.msra.mxu0 0
      %503 = vmatprep.subr.bf16.mxu0 0
      %504 = vmatpush1.bf16.msra.mxu0 0
      %505 = vmatprep.subr.bf16.mxu0 0
      %506 = vmatpush1.bf16.msra.mxu0 0
      %507 = vmatprep.subr.bf16.mxu0 0
      %508 = vmatpush1.bf16.msra.mxu0 0
      %509 = vmatprep.subr.bf16.mxu0 0
      %510 = vmatpush1.bf16.msra.mxu0 0
      %511 = vmatprep.subr.bf16.mxu0 0
      %512 = vmatpush1.bf16.msra.mxu0 0
      %513 = vmatprep.subr.bf16.mxu0 0
      %514 = vmatpush1.bf16.msra.mxu0 0
      %515 = vmatprep.subr.bf16.mxu0 0
      %516 = vmatpush1.bf16.msra.mxu0 0
      %517 = vmatprep.subr.bf16.mxu0 0
      %518 = vmatpush1.bf16.msra.mxu0 0
      %519 = vmatprep.subr.bf16.mxu0 0
      %520 = vmatpush1.bf16.msra.mxu0 0
      %521 = vmatprep.subr.bf16.mxu0 0
      %522 = vmatpush1.bf16.msra.mxu0 0
      %523 = vmatprep.mubr.bf16.mxu0 0
      %524 = vmatmul.mubr.bf16.gmra.mrb[0].mxu0 %v485
      %v525 = vpop.f32.mrb[0].mxu0
      %v526 = vadd.f32 0.0, %v525
      %v527 = vpop.f32.mrb[0].mxu0
      %v528 = vpop.f32.mrb[0].mxu0
      %v529 = vadd.f32 0.0, %v528
      %v530 = vpop.f32.mrb[0].mxu0
      %531 = vdwg.mxu0
      %v532 = vld [vmem:[%s2] sm:$0x1]
      %v534 = vlaneseq
      %v535 = vshrl.u32 %v534, 7
      %v536 = vsub.s32 0, %v535
      %v537 = vrot.slane %v532, %v536
      %v539 = vmul.f32 %v526, %v537
      %v540 = vmul.f32 %v529, %v537
      %v541 = vld [vmem:[%s3] sm:$0x1]
      %v543 = vlaneseq
      %v544 = vshrl.u32 %v543, 7
      %v545 = vsub.s32 0, %v544
      %v546 = vrot.slane %v541, %v545
      %v548 = vadd.f32 %v539, %v546
      %v549 = vadd.f32 %v540, %v546
      %v550 = vmax.f32 %v548, 0.0
      %v551 = vmax.f32 %v549, 0.0
      %v552 = vpack.c.bf16 %v551, %v550
      %554 = vrot.lane.b32.xlu0 %v552, 8
      %v555 = vpop.permute.xlu0 %554
      %557 = vst.msk [vmem:[#allocation4] sm:$0xff] %vm459, %v555
      %560 = vrot.lane.b32.xlu0 %v550, 16
      %v561 = vpop.permute.xlu0 %560
      %562 = vrot.lane.b32.xlu0 %v551, 16
      %v563 = vpop.permute.xlu0 %562
      %v566 = vadd.f32 %v433, %v561
      %v567 = vadd.f32 %v434, %v563
      %570 = vrot.lane.b32.xlu0 %v566, 112
      %v571 = vpop.permute.xlu0 %570
      %572 = vrot.lane.b32.xlu0 %v567, 112
      %v573 = vpop.permute.xlu0 %572
      %576 = vst.msk [vmem:[#allocation2 + $0x2] sm:$0xff] %vm436, %v571
      %577 = vst.msk [vmem:[#allocation2 + $0xa] sm:$0xff] %vm436, %v573
      %v578 = vld [vmem:[#allocation2] sm:$0xff]
      %v579 = vld [vmem:[#allocation2 + $0x8] sm:$0xff]
      %v580 = vpack.c.bf16 %v579, %v578
      %581 = vst.msk [vmem:[#allocation3] sm:$0xff] %vm436, %v580
      %v582 = vld [vmem:[#allocation2 + $0x2] sm:$0xff]
      %v583 = vld [vmem:[#allocation2 + $0xa] sm:$0xff]
      %v584 = vpack.c.bf16 %v583, %v582
      %586 = vrot.lane.b32.xlu0 %v584, 8
      %v587 = vpop.permute.xlu0 %586
      %589 = vst.msk [vmem:[#allocation3] sm:$0xff] %vm459, %v587
      %v590 = vld [vmem:[#allocation2 + $0x4] sm:$0xff]
      %v591 = vld [vmem:[#allocation2 + $0xc] sm:$0xff]
      %v592 = vpack.c.bf16 %v591, %v590
      %594 = vrot.lane.b32.xlu0 %v592, 16
      %v595 = vpop.permute.xlu0 %594
      %597 = vst.msk [vmem:[#allocation3] sm:$0xff] %vm468, %v595
      %v598 = vld [vmem:[#allocation3] sm:$0xff]
      %s599 = scalar_lea.vmem %s1, 12
      %v600 = vld [vmem:[%s599] sm:$0xf]
      %v601 = vld [vmem:[%s599 + $0x4] sm:$0xf]
      %v602 = vld [vmem:[%s599 + $0x8] sm:$0xf]
      %v606 = vunpack.c.l.b16 %v600
      %v607 = vunpack.c.l.b16 %v601
      %v608 = vunpack.c.l.b16 %v602
      %v609 = vpack.c.b16 %v607, %v606
      %v610 = vpack.c.b16 %v608, %v608
      %v613 = vsel %vm483, %v598, 0
      %v616 = vsel %vm487, %v610, 0
      %618 = vmatprep.subr.bf16.mxu0 0
      %619 = vmatpush1.bf16.msra.mxu0 %v609
      %620 = vmatprep.subr.bf16.mxu0 0
      %621 = vmatpush1.bf16.msra.mxu0 %v616
      %622 = vmatprep.subr.bf16.mxu0 0
      %623 = vmatpush1.bf16.msra.mxu0 0
      %624 = vmatprep.subr.bf16.mxu0 0
      %625 = vmatpush1.bf16.msra.mxu0 0
      %626 = vmatprep.subr.bf16.mxu0 0
      %627 = vmatpush1.bf16.msra.mxu0 0
      %628 = vmatprep.subr.bf16.mxu0 0
      %629 = vmatpush1.bf16.msra.mxu0 0
      %630 = vmatprep.subr.bf16.mxu0 0
      %631 = vmatpush1.bf16.msra.mxu0 0
      %632 = vmatprep.subr.bf16.mxu0 0
      %633 = vmatpush1.bf16.msra.mxu0 0
      %634 = vmatprep.subr.bf16.mxu0 0
      %635 = vmatpush1.bf16.msra.mxu0 0
      %636 = vmatprep.subr.bf16.mxu0 0
      %637 = vmatpush1.bf16.msra.mxu0 0
      %638 = vmatprep.subr.bf16.mxu0 0
      %639 = vmatpush1.bf16.msra.mxu0 0
      %640 = vmatprep.subr.bf16.mxu0 0
      %641 = vmatpush1.bf16.msra.mxu0 0
      %642 = vmatprep.subr.bf16.mxu0 0
      %643 = vmatpush1.bf16.msra.mxu0 0
      %644 = vmatprep.subr.bf16.mxu0 0
      %645 = vmatpush1.bf16.msra.mxu0 0
      %646 = vmatprep.subr.bf16.mxu0 0
      %647 = vmatpush1.bf16.msra.mxu0 0
      %648 = vmatprep.subr.bf16.mxu0 0
      %649 = vmatpush1.bf16.msra.mxu0 0
      %650 = vmatprep.mubr.bf16.mxu0 0
      %651 = vmatmul.mubr.bf16.gmra.mrb[0].mxu0 %v613
      %v652 = vpop.f32.mrb[0].mxu0
      %v653 = vadd.f32 0.0, %v652
      %v654 = vpop.f32.mrb[0].mxu0
      %v655 = vpop.f32.mrb[0].mxu0
      %v656 = vadd.f32 0.0, %v655
      %v657 = vpop.f32.mrb[0].mxu0
      %658 = vdwg.mxu0
      %s659 = scalar_lea.vmem %s2, 1
      %v660 = vld [vmem:[%s659] sm:$0x1]
      %v662 = vlaneseq
      %v663 = vshrl.u32 %v662, 7
      %v664 = vsub.s32 0, %v663
      %v665 = vrot.slane %v660, %v664
      %v667 = vmul.f32 %v653, %v665
      %v668 = vmul.f32 %v656, %v665
      %s669 = scalar_lea.vmem %s3, 1
      %v670 = vld [vmem:[%s669] sm:$0x1]
      %v672 = vlaneseq
      %v673 = vshrl.u32 %v672, 7
      %v674 = vsub.s32 0, %v673
      %v675 = vrot.slane %v670, %v674
      %v677 = vadd.f32 %v667, %v675
      %v678 = vadd.f32 %v668, %v675
      %v679 = vmax.f32 %v677, 0.0
      %v680 = vmax.f32 %v678, 0.0
      %v681 = vpack.c.bf16 %v680, %v679
      %683 = vrot.lane.b32.xlu0 %v681, 16
      %v684 = vpop.permute.xlu0 %683
      %686 = vst.msk [vmem:[#allocation4] sm:$0xff] %vm468, %v684
      %689 = vrot.lane.b32.xlu0 %v679, 24
      %v690 = vpop.permute.xlu0 %689
      %691 = vrot.lane.b32.xlu0 %v680, 24
      %v692 = vpop.permute.xlu0 %691
      %v695 = vadd.f32 %v433, %v690
      %v696 = vadd.f32 %v434, %v692
      %699 = vrot.lane.b32.xlu0 %v695, 104
      %v700 = vpop.permute.xlu0 %699
      %701 = vrot.lane.b32.xlu0 %v696, 104
      %v702 = vpop.permute.xlu0 %701
      %705 = vst.msk [vmem:[#allocation2 + $0x2] sm:$0xff] %vm436, %v700
      %706 = vst.msk [vmem:[#allocation2 + $0xa] sm:$0xff] %vm436, %v702
      %v707 = vld [vmem:[#allocation2] sm:$0xff]
      %v708 = vld [vmem:[#allocation2 + $0x8] sm:$0xff]
      %v709 = vpack.c.bf16 %v708, %v707
      %710 = vst.msk [vmem:[#allocation3] sm:$0xff] %vm436, %v709
      %v711 = vld [vmem:[#allocation2 + $0x2] sm:$0xff]
      %v712 = vld [vmem:[#allocation2 + $0xa] sm:$0xff]
      %v713 = vpack.c.bf16 %v712, %v711
      %715 = vrot.lane.b32.xlu0 %v713, 8
      %v716 = vpop.permute.xlu0 %715
      %718 = vst.msk [vmem:[#allocation3] sm:$0xff] %vm459, %v716
      %v719 = vld [vmem:[#allocation2 + $0x4] sm:$0xff]
      %v720 = vld [vmem:[#allocation2 + $0xc] sm:$0xff]
      %v721 = vpack.c.bf16 %v720, %v719
      %723 = vrot.lane.b32.xlu0 %v721, 16
      %v724 = vpop.permute.xlu0 %723
      %726 = vst.msk [vmem:[#allocation3] sm:$0xff] %vm468, %v724
      %v727 = vld [vmem:[#allocation3] sm:$0xff]
      %s728 = scalar_lea.vmem %s1, 24
      %v729 = vld [vmem:[%s728] sm:$0xf]
      %v730 = vld [vmem:[%s728 + $0x4] sm:$0xf]
      %v731 = vld [vmem:[%s728 + $0x8] sm:$0xf]
      %v735 = vunpack.c.l.b16 %v729
      %v736 = vunpack.c.l.b16 %v730
      %v737 = vunpack.c.l.b16 %v731
      %v738 = vpack.c.b16 %v736, %v735
      %v739 = vpack.c.b16 %v737, %v737
      %v742 = vsel %vm483, %v727, 0
      %v745 = vsel %vm487, %v739, 0
      %747 = vmatprep.subr.bf16.mxu0 0
      %748 = vmatpush1.bf16.msra.mxu0 %v738
      %749 = vmatprep.subr.bf16.mxu0 0
      %750 = vmatpush1.bf16.msra.mxu0 %v745
      %751 = vmatprep.subr.bf16.mxu0 0
      %752 = vmatpush1.bf16.msra.mxu0 0
      %753 = vmatprep.subr.bf16.mxu0 0
      %754 = vmatpush1.bf16.msra.mxu0 0
      %755 = vmatprep.subr.bf16.mxu0 0
      %756 = vmatpush1.bf16.msra.mxu0 0
      %757 = vmatprep.subr.bf16.mxu0 0
      %758 = vmatpush1.bf16.msra.mxu0 0
      %759 = vmatprep.subr.bf16.mxu0 0
      %760 = vmatpush1.bf16.msra.mxu0 0
      %761 = vmatprep.subr.bf16.mxu0 0
      %762 = vmatpush1.bf16.msra.mxu0 0
      %763 = vmatprep.subr.bf16.mxu0 0
      %764 = vmatpush1.bf16.msra.mxu0 0
      %765 = vmatprep.subr.bf16.mxu0 0
      %766 = vmatpush1.bf16.msra.mxu0 0
      %767 = vmatprep.subr.bf16.mxu0 0
      %768 = vmatpush1.bf16.msra.mxu0 0
      %769 = vmatprep.subr.bf16.mxu0 0
      %770 = vmatpush1.bf16.msra.mxu0 0
      %771 = vmatprep.subr.bf16.mxu0 0
      %772 = vmatpush1.bf16.msra.mxu0 0
      %773 = vmatprep.subr.bf16.mxu0 0
      %774 = vmatpush1.bf16.msra.mxu0 0
      %775 = vmatprep.subr.bf16.mxu0 0
      %776 = vmatpush1.bf16.msra.mxu0 0
      %777 = vmatprep.subr.bf16.mxu0 0
      %778 = vmatpush1.bf16.msra.mxu0 0
      %779 = vmatprep.mubr.bf16.mxu0 0
      %780 = vmatmul.mubr.bf16.gmra.mrb[0].mxu0 %v742
      %v781 = vpop.f32.mrb[0].mxu0
      %v782 = vadd.f32 0.0, %v781
      %v783 = vpop.f32.mrb[0].mxu0
      %v784 = vpop.f32.mrb[0].mxu0
      %v785 = vadd.f32 0.0, %v784
      %v786 = vpop.f32.mrb[0].mxu0
      %787 = vdwg.mxu0
      %s788 = scalar_lea.vmem %s2, 2
      %v789 = vld [vmem:[%s788] sm:$0x1]
      %v791 = vlaneseq
      %v792 = vshrl.u32 %v791, 7
      %v793 = vsub.s32 0, %v792
      %v794 = vrot.slane %v789, %v793
      %v796 = vmul.f32 %v782, %v794
      %v797 = vmul.f32 %v785, %v794
      %s798 = scalar_lea.vmem %s3, 2
      %v799 = vld [vmem:[%s798] sm:$0x1]
      %v801 = vlaneseq
      %v802 = vshrl.u32 %v801, 7
      %v803 = vsub.s32 0, %v802
      %v804 = vrot.slane %v799, %v803
      %v806 = vadd.f32 %v796, %v804
      %v807 = vadd.f32 %v797, %v804
      %v808 = vmax.f32 %v806, 0.0
      %v809 = vmax.f32 %v807, 0.0
      %v810 = vpack.c.bf16 %v809, %v808
      %812 = vrot.lane.b32.xlu0 %v810, 24
      %v813 = vpop.permute.xlu0 %812
      %vm815 = vcmask 261312
      %816 = vst.msk [vmem:[#allocation4] sm:$0xff] %vm815, %v813
      %819 = vrot.lane.b32.xlu0 %v808, 32
      %v820 = vpop.permute.xlu0 %819
      %821 = vrot.lane.b32.xlu0 %v809, 32
      %v822 = vpop.permute.xlu0 %821
      %v825 = vadd.f32 %v433, %v820
      %v826 = vadd.f32 %v434, %v822
      %829 = vrot.lane.b32.xlu0 %v825, 96
      %v830 = vpop.permute.xlu0 %829
      %831 = vrot.lane.b32.xlu0 %v826, 96
      %v832 = vpop.permute.xlu0 %831
      %835 = vst.msk [vmem:[#allocation2 + $0x2] sm:$0xff] %vm436, %v830
      %836 = vst.msk [vmem:[#allocation2 + $0xa] sm:$0xff] %vm436, %v832
      %v837 = vld [vmem:[#allocation2] sm:$0xff]
      %v838 = vld [vmem:[#allocation2 + $0x8] sm:$0xff]
      %v839 = vpack.c.bf16 %v838, %v837
      %840 = vst.msk [vmem:[#allocation3] sm:$0xff] %vm436, %v839
      %v841 = vld [vmem:[#allocation2 + $0x2] sm:$0xff]
      %v842 = vld [vmem:[#allocation2 + $0xa] sm:$0xff]
      %v843 = vpack.c.bf16 %v842, %v841
      %845 = vrot.lane.b32.xlu0 %v843, 8
      %v846 = vpop.permute.xlu0 %845
      %848 = vst.msk [vmem:[#allocation3] sm:$0xff] %vm459, %v846
      %v849 = vld [vmem:[#allocation2 + $0x4] sm:$0xff]
      %v850 = vld [vmem:[#allocation2 + $0xc] sm:$0xff]
      %v851 = vpack.c.bf16 %v850, %v849
      %853 = vrot.lane.b32.xlu0 %v851, 16
      %v854 = vpop.permute.xlu0 %853
      %856 = vst.msk [vmem:[#allocation3] sm:$0xff] %vm468, %v854
      %v857 = vld [vmem:[#allocation3] sm:$0xff]
      %s858 = scalar_lea.vmem %s1, 36
      %v859 = vld [vmem:[%s858] sm:$0xf]
      %v860 = vld [vmem:[%s858 + $0x4] sm:$0xf]
      %v861 = vld [vmem:[%s858 + $0x8] sm:$0xf]
      %v865 = vunpack.c.l.b16 %v859
      %v866 = vunpack.c.l.b16 %v860
      %v867 = vunpack.c.l.b16 %v861
      %v868 = vpack.c.b16 %v866, %v865
      %v869 = vpack.c.b16 %v867, %v867
      %v872 = vsel %vm483, %v857, 0
      %v875 = vsel %vm487, %v869, 0
      %877 = vmatprep.subr.bf16.mxu0 0
      %878 = vmatpush1.bf16.msra.mxu0 %v868
      %879 = vmatprep.subr.bf16.mxu0 0
      %880 = vmatpush1.bf16.msra.mxu0 %v875
      %881 = vmatprep.subr.bf16.mxu0 0
      %882 = vmatpush1.bf16.msra.mxu0 0
      %883 = vmatprep.subr.bf16.mxu0 0
      %884 = vmatpush1.bf16.msra.mxu0 0
      %885 = vmatprep.subr.bf16.mxu0 0
      %886 = vmatpush1.bf16.msra.mxu0 0
      %887 = vmatprep.subr.bf16.mxu0 0
      %888 = vmatpush1.bf16.msra.mxu0 0
      %889 = vmatprep.subr.bf16.mxu0 0
      %890 = vmatpush1.bf16.msra.mxu0 0
      %891 = vmatprep.subr.bf16.mxu0 0
      %892 = vmatpush1.bf16.msra.mxu0 0
      %893 = vmatprep.subr.bf16.mxu0 0
      %894 = vmatpush1.bf16.msra.mxu0 0
      %895 = vmatprep.subr.bf16.mxu0 0
      %896 = vmatpush1.bf16.msra.mxu0 0
      %897 = vmatprep.subr.bf16.mxu0 0
      %898 = vmatpush1.bf16.msra.mxu0 0
      %899 = vmatprep.subr.bf16.mxu0 0
      %900 = vmatpush1.bf16.msra.mxu0 0
      %901 = vmatprep.subr.bf16.mxu0 0
      %902 = vmatpush1.bf16.msra.mxu0 0
      %903 = vmatprep.subr.bf16.mxu0 0
      %904 = vmatpush1.bf16.msra.mxu0 0
      %905 = vmatprep.subr.bf16.mxu0 0
      %906 = vmatpush1.bf16.msra.mxu0 0
      %907 = vmatprep.subr.bf16.mxu0 0
      %908 = vmatpush1.bf16.msra.mxu0 0
      %909 = vmatprep.mubr.bf16.mxu0 0
      %910 = vmatmul.mubr.bf16.gmra.mrb[0].mxu0 %v872
      %v911 = vpop.f32.mrb[0].mxu0
      %v912 = vadd.f32 0.0, %v911
      %v913 = vpop.f32.mrb[0].mxu0
      %v914 = vpop.f32.mrb[0].mxu0
      %v915 = vadd.f32 0.0, %v914
      %v916 = vpop.f32.mrb[0].mxu0
      %917 = vdwg.mxu0
      %s918 = scalar_lea.vmem %s2, 3
      %v919 = vld [vmem:[%s918] sm:$0x1]
      %v921 = vlaneseq
      %v922 = vshrl.u32 %v921, 7
      %v923 = vsub.s32 0, %v922
      %v924 = vrot.slane %v919, %v923
      %v926 = vmul.f32 %v912, %v924
      %v927 = vmul.f32 %v915, %v924
      %s928 = scalar_lea.vmem %s3, 3
      %v929 = vld [vmem:[%s928] sm:$0x1]
      %v931 = vlaneseq
      %v932 = vshrl.u32 %v931, 7
      %v933 = vsub.s32 0, %v932
      %v934 = vrot.slane %v929, %v933
      %v936 = vadd.f32 %v926, %v934
      %v937 = vadd.f32 %v927, %v934
      %v938 = vmax.f32 %v936, 0.0
      %v939 = vmax.f32 %v937, 0.0
      %v940 = vpack.c.bf16 %v939, %v938
      %942 = vrot.lane.b32.xlu0 %v940, 32
      %v943 = vpop.permute.xlu0 %942
      %vm945 = vcmask 326912
      %946 = vst.msk [vmem:[#allocation4] sm:$0xff] %vm945, %v943
      %949 = vrot.lane.b32.xlu0 %v938, 40
      %v950 = vpop.permute.xlu0 %949
      %951 = vrot.lane.b32.xlu0 %v939, 40
      %v952 = vpop.permute.xlu0 %951
      %v955 = vadd.f32 %v433, %v950
      %v956 = vadd.f32 %v434, %v952
      %959 = vrot.lane.b32.xlu0 %v955, 88
      %v960 = vpop.permute.xlu0 %959
      %961 = vrot.lane.b32.xlu0 %v956, 88
      %v962 = vpop.permute.xlu0 %961
      %965 = vst.msk [vmem:[#allocation2 + $0x2] sm:$0xff] %vm436, %v960
      %966 = vst.msk [vmem:[#allocation2 + $0xa] sm:$0xff] %vm436, %v962
      %v967 = vld [vmem:[#allocation2] sm:$0xff]
      %v968 = vld [vmem:[#allocation2 + $0x8] sm:$0xff]
      %v969 = vpack.c.bf16 %v968, %v967
      %970 = vst.msk [vmem:[#allocation3] sm:$0xff] %vm436, %v969
      %v971 = vld [vmem:[#allocation2 + $0x2] sm:$0xff]
      %v972 = vld [vmem:[#allocation2 + $0xa] sm:$0xff]
      %v973 = vpack.c.bf16 %v972, %v971
      %975 = vrot.lane.b32.xlu0 %v973, 8
      %v976 = vpop.permute.xlu0 %975
      %978 = vst.msk [vmem:[#allocation3] sm:$0xff] %vm459, %v976
      %v979 = vld [vmem:[#allocation2 + $0x4] sm:$0xff]
      %v980 = vld [vmem:[#allocation2 + $0xc] sm:$0xff]
      %v981 = vpack.c.bf16 %v980, %v979
      %983 = vrot.lane.b32.xlu0 %v981, 16
      %v984 = vpop.permute.xlu0 %983
      %986 = vst.msk [vmem:[#allocation3] sm:$0xff] %vm468, %v984
      %v987 = vld [vmem:[#allocation3] sm:$0xff]
      %s988 = scalar_lea.vmem %s1, 48
      %v989 = vld [vmem:[%s988] sm:$0xf]
      %v990 = vld [vmem:[%s988 + $0x4] sm:$0xf]
      %v991 = vld [vmem:[%s988 + $0x8] sm:$0xf]
      %v995 = vunpack.c.l.b16 %v989
      %v996 = vunpack.c.l.b16 %v990
      %v997 = vunpack.c.l.b16 %v991
      %v998 = vpack.c.b16 %v996, %v995
      %v999 = vpack.c.b16 %v997, %v997
      %v1002 = vsel %vm483, %v987, 0
      %v1005 = vsel %vm487, %v999, 0
      %1007 = vmatprep.subr.bf16.mxu0 0
      %1008 = vmatpush1.bf16.msra.mxu0 %v998
      %1009 = vmatprep.subr.bf16.mxu0 0
      %1010 = vmatpush1.bf16.msra.mxu0 %v1005
      %1011 = vmatprep.subr.bf16.mxu0 0
      %1012 = vmatpush1.bf16.msra.mxu0 0
      %1013 = vmatprep.subr.bf16.mxu0 0
      %1014 = vmatpush1.bf16.msra.mxu0 0
      %1015 = vmatprep.subr.bf16.mxu0 0
      %1016 = vmatpush1.bf16.msra.mxu0 0
      %1017 = vmatprep.subr.bf16.mxu0 0
      %1018 = vmatpush1.bf16.msra.mxu0 0
      %1019 = vmatprep.subr.bf16.mxu0 0
      %1020 = vmatpush1.bf16.msra.mxu0 0
      %1021 = vmatprep.subr.bf16.mxu0 0
      %1022 = vmatpush1.bf16.msra.mxu0 0
      %1023 = vmatprep.subr.bf16.mxu0 0
      %1024 = vmatpush1.bf16.msra.mxu0 0
      %1025 = vmatprep.subr.bf16.mxu0 0
      %1026 = vmatpush1.bf16.msra.mxu0 0
      %1027 = vmatprep.subr.bf16.mxu0 0
      %1028 = vmatpush1.bf16.msra.mxu0 0
      %1029 = vmatprep.subr.bf16.mxu0 0
      %1030 = vmatpush1.bf16.msra.mxu0 0
      %1031 = vmatprep.subr.bf16.mxu0 0
      %1032 = vmatpush1.bf16.msra.mxu0 0
      %1033 = vmatprep.subr.bf16.mxu0 0
      %1034 = vmatpush1.bf16.msra.mxu0 0
      %1035 = vmatprep.subr.bf16.mxu0 0
      %1036 = vmatpush1.bf16.msra.mxu0 0
      %1037 = vmatprep.subr.bf16.mxu0 0
      %1038 = vmatpush1.bf16.msra.mxu0 0
      %1039 = vmatprep.mubr.bf16.mxu0 0
      %1040 = vmatmul.mubr.bf16.gmra.mrb[0].mxu0 %v1002
      %v1041 = vpop.f32.mrb[0].mxu0
      %v1042 = vadd.f32 0.0, %v1041
      %v1043 = vpop.f32.mrb[0].mxu0
      %v1044 = vpop.f32.mrb[0].mxu0
      %v1045 = vadd.f32 0.0, %v1044
      %v1046 = vpop.f32.mrb[0].mxu0
      %1047 = vdwg.mxu0
      %s1048 = scalar_lea.vmem %s2, 4
      %v1049 = vld [vmem:[%s1048] sm:$0x1]
      %v1051 = vlaneseq
      %v1052 = vshrl.u32 %v1051, 7
      %v1053 = vsub.s32 0, %v1052
      %v1054 = vrot.slane %v1049, %v1053
      %v1056 = vmul.f32 %v1042, %v1054
      %v1057 = vmul.f32 %v1045, %v1054
      %s1058 = scalar_lea.vmem %s3, 4
      %v1059 = vld [vmem:[%s1058] sm:$0x1]
      %v1061 = vlaneseq
      %v1062 = vshrl.u32 %v1061, 7
      %v1063 = vsub.s32 0, %v1062
      %v1064 = vrot.slane %v1059, %v1063
      %v1066 = vadd.f32 %v1056, %v1064
      %v1067 = vadd.f32 %v1057, %v1064
      %v1068 = vmax.f32 %v1066, 0.0
      %v1069 = vmax.f32 %v1067, 0.0
      %v1070 = vpack.c.bf16 %v1069, %v1068
      %1072 = vrot.lane.b32.xlu0 %v1070, 40
      %v1073 = vpop.permute.xlu0 %1072
      %vm1075 = vcmask 392512
      %1076 = vst.msk [vmem:[#allocation4] sm:$0xff] %vm1075, %v1073
      %1079 = vrot.lane.b32.xlu0 %v1068, 48
      %v1080 = vpop.permute.xlu0 %1079
      %1081 = vrot.lane.b32.xlu0 %v1069, 48
      %v1082 = vpop.permute.xlu0 %1081
      %v1085 = vadd.f32 %v433, %v1080
      %v1086 = vadd.f32 %v434, %v1082
      %1089 = vrot.lane.b32.xlu0 %v1085, 80
      %v1090 = vpop.permute.xlu0 %1089
      %1091 = vrot.lane.b32.xlu0 %v1086, 80
      %v1092 = vpop.permute.xlu0 %1091
      %1095 = vst.msk [vmem:[#allocation2 + $0x2] sm:$0xff] %vm436, %v1090
      %1096 = vst.msk [vmem:[#allocation2 + $0xa] sm:$0xff] %vm436, %v1092
      %v1097 = vld [vmem:[#allocation2] sm:$0xff]
      %v1098 = vld [vmem:[#allocation2 + $0x8] sm:$0xff]
      %v1099 = vpack.c.bf16 %v1098, %v1097
      %1100 = vst.msk [vmem:[#allocation3] sm:$0xff] %vm436, %v1099
      %v1101 = vld [vmem:[#allocation2 + $0x2] sm:$0xff]
      %v1102 = vld [vmem:[#allocation2 + $0xa] sm:$0xff]
      %v1103 = vpack.c.bf16 %v1102, %v1101
      %1105 = vrot.lane.b32.xlu0 %v1103, 8
      %v1106 = vpop.permute.xlu0 %1105
      %1108 = vst.msk [vmem:[#allocation3] sm:$0xff] %vm459, %v1106
      %v1109 = vld [vmem:[#allocation2 + $0x4] sm:$0xff]
      %v1110 = vld [vmem:[#allocation2 + $0xc] sm:$0xff]
      %v1111 = vpack.c.bf16 %v1110, %v1109
      %1113 = vrot.lane.b32.xlu0 %v1111, 16
      %v1114 = vpop.permute.xlu0 %1113
      %1116 = vst.msk [vmem:[#allocation3] sm:$0xff] %vm468, %v1114
      %v1117 = vld [vmem:[#allocation3] sm:$0xff]
      %s1118 = scalar_lea.vmem %s1, 60
      %v1119 = vld [vmem:[%s1118] sm:$0xf]
      %v1120 = vld [vmem:[%s1118 + $0x4] sm:$0xf]
      %v1121 = vld [vmem:[%s1118 + $0x8] sm:$0xf]
      %v1125 = vunpack.c.l.b16 %v1119
      %v1126 = vunpack.c.l.b16 %v1120
      %v1127 = vunpack.c.l.b16 %v1121
      %v1128 = vpack.c.b16 %v1126, %v1125
      %v1129 = vpack.c.b16 %v1127, %v1127
      %v1132 = vsel %vm483, %v1117, 0
      %v1135 = vsel %vm487, %v1129, 0
      %1137 = vmatprep.subr.bf16.mxu0 0
      %1138 = vmatpush1.bf16.msra.mxu0 %v1128
      %1139 = vmatprep.subr.bf16.mxu0 0
      %1140 = vmatpush1.bf16.msra.mxu0 %v1135
      %1141 = vmatprep.subr.bf16.mxu0 0
      %1142 = vmatpush1.bf16.msra.mxu0 0
      %1143 = vmatprep.subr.bf16.mxu0 0
      %1144 = vmatpush1.bf16.msra.mxu0 0
      %1145 = vmatprep.subr.bf16.mxu0 0
      %1146 = vmatpush1.bf16.msra.mxu0 0
      %1147 = vmatprep.subr.bf16.mxu0 0
      %1148 = vmatpush1.bf16.msra.mxu0 0
      %1149 = vmatprep.subr.bf16.mxu0 0
      %1150 = vmatpush1.bf16.msra.mxu0 0
      %1151 = vmatprep.subr.bf16.mxu0 0
      %1152 = vmatpush1.bf16.msra.mxu0 0
      %1153 = vmatprep.subr.bf16.mxu0 0
      %1154 = vmatpush1.bf16.msra.mxu0 0
      %1155 = vmatprep.subr.bf16.mxu0 0
      %1156 = vmatpush1.bf16.msra.mxu0 0
      %1157 = vmatprep.subr.bf16.mxu0 0
      %1158 = vmatpush1.bf16.msra.mxu0 0
      %1159 = vmatprep.subr.bf16.mxu0 0
      %1160 = vmatpush1.bf16.msra.mxu0 0
      %1161 = vmatprep.subr.bf16.mxu0 0
      %1162 = vmatpush1.bf16.msra.mxu0 0
      %1163 = vmatprep.subr.bf16.mxu0 0
      %1164 = vmatpush1.bf16.msra.mxu0 0
      %1165 = vmatprep.subr.bf16.mxu0 0
      %1166 = vmatpush1.bf16.msra.mxu0 0
      %1167 = vmatprep.subr.bf16.mxu0 0
      %1168 = vmatpush1.bf16.msra.mxu0 0
      %1169 = vmatprep.mubr.bf16.mxu0 0
      %1170 = vmatmul.mubr.bf16.gmra.mrb[0].mxu0 %v1132
      %v1171 = vpop.f32.mrb[0].mxu0
      %v1172 = vadd.f32 0.0, %v1171
      %v1173 = vpop.f32.mrb[0].mxu0
      %v1174 = vpop.f32.mrb[0].mxu0
      %v1175 = vadd.f32 0.0, %v1174
      %v1176 = vpop.f32.mrb[0].mxu0
      %1177 = vdwg.mxu0
      %s1178 = scalar_lea.vmem %s2, 5
      %v1179 = vld [vmem:[%s1178] sm:$0x1]
      %v1181 = vlaneseq
      %v1182 = vshrl.u32 %v1181, 7
      %v1183 = vsub.s32 0, %v1182
      %v1184 = vrot.slane %v1179, %v1183
      %v1186 = vmul.f32 %v1172, %v1184
      %v1187 = vmul.f32 %v1175, %v1184
      %s1188 = scalar_lea.vmem %s3, 5
      %v1189 = vld [vmem:[%s1188] sm:$0x1]
      %v1191 = vlaneseq
      %v1192 = vshrl.u32 %v1191, 7
      %v1193 = vsub.s32 0, %v1192
      %v1194 = vrot.slane %v1189, %v1193
      %v1196 = vadd.f32 %v1186, %v1194
      %v1197 = vadd.f32 %v1187, %v1194
      %v1198 = vmax.f32 %v1196, 0.0
      %v1199 = vmax.f32 %v1197, 0.0
      %v1200 = vpack.c.bf16 %v1199, %v1198
      %1202 = vrot.lane.b32.xlu0 %v1200, 48
      %v1203 = vpop.permute.xlu0 %1202
      %vm1205 = vcmask 458112
      %1206 = vst.msk [vmem:[#allocation4] sm:$0xff] %vm1205, %v1203
      %1209 = vrot.lane.b32.xlu0 %v1198, 56
      %v1210 = vpop.permute.xlu0 %1209
      %1211 = vrot.lane.b32.xlu0 %v1199, 56
      %v1212 = vpop.permute.xlu0 %1211
      %v1215 = vadd.f32 %v433, %v1210
      %v1216 = vadd.f32 %v434, %v1212
      %1219 = vrot.lane.b32.xlu0 %v1215, 72
      %v1220 = vpop.permute.xlu0 %1219
      %1221 = vrot.lane.b32.xlu0 %v1216, 72
      %v1222 = vpop.permute.xlu0 %1221
      %1225 = vst.msk [vmem:[#allocation2 + $0x2] sm:$0xff] %vm436, %v1220
      %1226 = vst.msk [vmem:[#allocation2 + $0xa] sm:$0xff] %vm436, %v1222
      %v1227 = vld [vmem:[#allocation2] sm:$0xff]
      %v1228 = vld [vmem:[#allocation2 + $0x8] sm:$0xff]
      %v1229 = vpack.c.bf16 %v1228, %v1227
      %1230 = vst.msk [vmem:[#allocation3] sm:$0xff] %vm436, %v1229
      %v1231 = vld [vmem:[#allocation2 + $0x2] sm:$0xff]
      %v1232 = vld [vmem:[#allocation2 + $0xa] sm:$0xff]
      %v1233 = vpack.c.bf16 %v1232, %v1231
      %1235 = vrot.lane.b32.xlu0 %v1233, 8
      %v1236 = vpop.permute.xlu0 %1235
      %1238 = vst.msk [vmem:[#allocation3] sm:$0xff] %vm459, %v1236
      %v1239 = vld [vmem:[#allocation2 + $0x4] sm:$0xff]
      %v1240 = vld [vmem:[#allocation2 + $0xc] sm:$0xff]
      %v1241 = vpack.c.bf16 %v1240, %v1239
      %1243 = vrot.lane.b32.xlu0 %v1241, 16
      %v1244 = vpop.permute.xlu0 %1243
      %1246 = vst.msk [vmem:[#allocation3] sm:$0xff] %vm468, %v1244
      %v1247 = vld [vmem:[#allocation3] sm:$0xff]
      %s1248 = scalar_lea.vmem %s1, 72
      %v1249 = vld [vmem:[%s1248] sm:$0xf]
      %v1250 = vld [vmem:[%s1248 + $0x4] sm:$0xf]
      %v1251 = vld [vmem:[%s1248 + $0x8] sm:$0xf]
      %v1255 = vunpack.c.l.b16 %v1249
      %v1256 = vunpack.c.l.b16 %v1250
      %v1257 = vunpack.c.l.b16 %v1251
      %v1258 = vpack.c.b16 %v1256, %v1255
      %v1259 = vpack.c.b16 %v1257, %v1257
      %v1262 = vsel %vm483, %v1247, 0
      %v1265 = vsel %vm487, %v1259, 0
      %1267 = vmatprep.subr.bf16.mxu0 0
      %1268 = vmatpush1.bf16.msra.mxu0 %v1258
      %1269 = vmatprep.subr.bf16.mxu0 0
      %1270 = vmatpush1.bf16.msra.mxu0 %v1265
      %1271 = vmatprep.subr.bf16.mxu0 0
      %1272 = vmatpush1.bf16.msra.mxu0 0
      %1273 = vmatprep.subr.bf16.mxu0 0
      %1274 = vmatpush1.bf16.msra.mxu0 0
      %1275 = vmatprep.subr.bf16.mxu0 0
      %1276 = vmatpush1.bf16.msra.mxu0 0
      %1277 = vmatprep.subr.bf16.mxu0 0
      %1278 = vmatpush1.bf16.msra.mxu0 0
      %1279 = vmatprep.subr.bf16.mxu0 0
      %1280 = vmatpush1.bf16.msra.mxu0 0
      %1281 = vmatprep.subr.bf16.mxu0 0
      %1282 = vmatpush1.bf16.msra.mxu0 0
      %1283 = vmatprep.subr.bf16.mxu0 0
      %1284 = vmatpush1.bf16.msra.mxu0 0
      %1285 = vmatprep.subr.bf16.mxu0 0
      %1286 = vmatpush1.bf16.msra.mxu0 0
      %1287 = vmatprep.subr.bf16.mxu0 0
      %1288 = vmatpush1.bf16.msra.mxu0 0
      %1289 = vmatprep.subr.bf16.mxu0 0
      %1290 = vmatpush1.bf16.msra.mxu0 0
      %1291 = vmatprep.subr.bf16.mxu0 0
      %1292 = vmatpush1.bf16.msra.mxu0 0
      %1293 = vmatprep.subr.bf16.mxu0 0
      %1294 = vmatpush1.bf16.msra.mxu0 0
      %1295 = vmatprep.subr.bf16.mxu0 0
      %1296 = vmatpush1.bf16.msra.mxu0 0
      %1297 = vmatprep.subr.bf16.mxu0 0
      %1298 = vmatpush1.bf16.msra.mxu0 0
      %1299 = vmatprep.mubr.bf16.mxu0 0
      %1300 = vmatmul.mubr.bf16.gmra.mrb[0].mxu0 %v1262
      %v1301 = vpop.f32.mrb[0].mxu0
      %v1302 = vadd.f32 0.0, %v1301
      %v1303 = vpop.f32.mrb[0].mxu0
      %v1304 = vpop.f32.mrb[0].mxu0
      %v1305 = vadd.f32 0.0, %v1304
      %v1306 = vpop.f32.mrb[0].mxu0
      %1307 = vdwg.mxu0
      %s1308 = scalar_lea.vmem %s2, 6
      %v1309 = vld [vmem:[%s1308] sm:$0x1]
      %v1311 = vlaneseq
      %v1312 = vshrl.u32 %v1311, 7
      %v1313 = vsub.s32 0, %v1312
      %v1314 = vrot.slane %v1309, %v1313
      %v1316 = vmul.f32 %v1302, %v1314
      %v1317 = vmul.f32 %v1305, %v1314
      %s1318 = scalar_lea.vmem %s3, 6
      %v1319 = vld [vmem:[%s1318] sm:$0x1]
      %v1321 = vlaneseq
      %v1322 = vshrl.u32 %v1321, 7
      %v1323 = vsub.s32 0, %v1322
      %v1324 = vrot.slane %v1319, %v1323
      %v1326 = vadd.f32 %v1316, %v1324
      %v1327 = vadd.f32 %v1317, %v1324
      %v1328 = vmax.f32 %v1326, 0.0
      %v1329 = vmax.f32 %v1327, 0.0
      %v1330 = vpack.c.bf16 %v1329, %v1328
      %1332 = vrot.lane.b32.xlu0 %v1330, 56
      %v1333 = vpop.permute.xlu0 %1332
      %vm1335 = vcmask 523712
      %1336 = vst.msk [vmem:[#allocation4] sm:$0xff] %vm1335, %v1333
      %v1337 = vld [vmem:[#allocation4] sm:$0xff]
      %v1338 = vunpack.c.l.bf16 %v1337
      %v1339 = vunpack.c.h.bf16 %v1337
      %vm1340 = vcmask 523264
      %v1341 = vsel %vm1340, %v1338, 0.0
      %v1342 = vsel %vm1340, %v1339, 0.0
      %v1343 = vadd.f32 %v1341, %v1342
      %v1344 = vrot.slane %v1343, 4
      %v1345 = vadd.f32 %v1343, %v1344
      %v1346 = vrot.slane %v1345, 2
      %v1347 = vadd.f32 %v1345, %v1346
      %v1348 = vrot.slane %v1347, 1
      %v1349 = vadd.f32 %v1347, %v1348
      %v1350 = vrcp.pop 16.0
      %v1351 = vmul.f32 %v1349, %v1350
      %v1352 = vpack.c.bf16 %v1351, %v1351
      %v1353 = vld [vmem:[%s4] sm:$0xf]
      %v1354 = vld [vmem:[%s4 + $0x4] sm:$0xf]
      %v1355 = vld [vmem:[%s4 + $0x8] sm:$0xf]
      %v1356 = vld [vmem:[%s4 + $0xc] sm:$0xf]
      %v1357 = vld [vmem:[%s4 + $0x10] sm:$0xf]
      %v1358 = vld [vmem:[%s4 + $0x14] sm:$0xf]
      %v1359 = vld [vmem:[%s4 + $0x18] sm:$0xf]
      %v1360 = vld [vmem:[%s4 + $0x1c] sm:$0xf]
      %v1361 = vld [vmem:[%s5] sm:$0x1]
      %v1370 = vunpack.c.l.b16 %v1353
      %v1371 = vunpack.c.l.b16 %v1354
      %v1372 = vunpack.c.l.b16 %v1355
      %v1373 = vunpack.c.l.b16 %v1356
      %v1374 = vunpack.c.l.b16 %v1357
      %v1375 = vunpack.c.l.b16 %v1358
      %v1376 = vunpack.c.l.b16 %v1359
      %v1377 = vunpack.c.l.b16 %v1360
      %v1378 = vpack.c.b16 %v1371, %v1370
      %v1379 = vpack.c.b16 %v1373, %v1372
      %v1380 = vpack.c.b16 %v1375, %v1374
      %v1381 = vpack.c.b16 %v1377, %v1376
      %v1387 = vsel %vm1340, %v1352, 0
      %1389 = vmatprep.subr.bf16.mxu0 0
      %1390 = vmatpush1.bf16.msra.mxu0 %v1378
      %1391 = vmatprep.subr.bf16.mxu0 0
      %1392 = vmatpush1.bf16.msra.mxu0 %v1379
      %1393 = vmatprep.subr.bf16.mxu0 0
      %1394 = vmatpush1.bf16.msra.mxu0 %v1380
      %1395 = vmatprep.subr.bf16.mxu0 0
      %1396 = vmatpush1.bf16.msra.mxu0 %v1381
      %1397 = vmatprep.subr.bf16.mxu0 0
      %1398 = vmatpush1.bf16.msra.mxu0 0
      %1399 = vmatprep.subr.bf16.mxu0 0
      %1400 = vmatpush1.bf16.msra.mxu0 0
      %1401 = vmatprep.subr.bf16.mxu0 0
      %1402 = vmatpush1.bf16.msra.mxu0 0
      %1403 = vmatprep.subr.bf16.mxu0 0
      %1404 = vmatpush1.bf16.msra.mxu0 0
      %1405 = vmatprep.subr.bf16.mxu0 0
      %1406 = vmatpush1.bf16.msra.mxu0 0
      %1407 = vmatprep.subr.bf16.mxu0 0
      %1408 = vmatpush1.bf16.msra.mxu0 0
      %1409 = vmatprep.subr.bf16.mxu0 0
      %1410 = vmatpush1.bf16.msra.mxu0 0
      %1411 = vmatprep.subr.bf16.mxu0 0
      %1412 = vmatpush1.bf16.msra.mxu0 0
      %1413 = vmatprep.subr.bf16.mxu0 0
      %1414 = vmatpush1.bf16.msra.mxu0 0
      %1415 = vmatprep.subr.bf16.mxu0 0
      %1416 = vmatpush1.bf16.msra.mxu0 0
      %1417 = vmatprep.subr.bf16.mxu0 0
      %1418 = vmatpush1.bf16.msra.mxu0 0
      %1419 = vmatprep.subr.bf16.mxu0 0
      %1420 = vmatpush1.bf16.msra.mxu0 0
      %1421 = vmatprep.mubr.bf16.mxu0 0
      %1422 = vmatmul.mubr.bf16.gmra.mrb[0].mxu0 %v1387
      %v1423 = vpop.f32.mrb[0].mxu0
      %v1424 = vadd.f32 %v1361, %v1423
      %v1425 = vpop.f32.mrb[0].mxu0
      %v1426 = vpop.f32.mrb[0].mxu0
      %v1427 = vpop.f32.mrb[0].mxu0
      %1428 = vdwg.mxu0
      %v1429 = vmax.f32 %v1424, 0.0
      %v1430 = vpack.c.bf16 %v1429, %v1429
      %v1431 = vld [vmem:[%s6] sm:$0xf]
      %v1432 = vld [vmem:[%s6 + $0x4] sm:$0xf]
      %v1433 = vld [vmem:[%s6 + $0x8] sm:$0xf]
      %v1434 = vld [vmem:[%s6 + $0xc] sm:$0xf]
      %v1435 = vld [vmem:[%s7] sm:$0x1]
      %v1440 = vunpack.c.l.b16 %v1431
      %v1441 = vunpack.c.l.b16 %v1432
      %v1442 = vunpack.c.l.b16 %v1433
      %v1443 = vunpack.c.l.b16 %v1434
      %v1444 = vpack.c.b16 %v1441, %v1440
      %v1445 = vpack.c.b16 %v1443, %v1442
      %vm1448 = vcmask 261120
      %v1450 = vsel %vm1448, %v1430, 0
      %1452 = vmatprep.subr.bf16.mxu0 0
      %1453 = vmatpush1.bf16.msra.mxu0 %v1444
      %1454 = vmatprep.subr.bf16.mxu0 0
      %1455 = vmatpush1.bf16.msra.mxu0 %v1445
      %1456 = vmatprep.subr.bf16.mxu0 0
      %1457 = vmatpush1.bf16.msra.mxu0 0
      %1458 = vmatprep.subr.bf16.mxu0 0
      %1459 = vmatpush1.bf16.msra.mxu0 0
      %1460 = vmatprep.subr.bf16.mxu0 0
      %1461 = vmatpush1.bf16.msra.mxu0 0
      %1462 = vmatprep.subr.bf16.mxu0 0
      %1463 = vmatpush1.bf16.msra.mxu0 0
      %1464 = vmatprep.subr.bf16.mxu0 0
      %1465 = vmatpush1.bf16.msra.mxu0 0
      %1466 = vmatprep.subr.bf16.mxu0 0
      %1467 = vmatpush1.bf16.msra.mxu0 0
      %1468 = vmatprep.subr.bf16.mxu0 0
      %1469 = vmatpush1.bf16.msra.mxu0 0
      %1470 = vmatprep.subr.bf16.mxu0 0
      %1471 = vmatpush1.bf16.msra.mxu0 0
      %1472 = vmatprep.subr.bf16.mxu0 0
      %1473 = vmatpush1.bf16.msra.mxu0 0
      %1474 = vmatprep.subr.bf16.mxu0 0
      %1475 = vmatpush1.bf16.msra.mxu0 0
      %1476 = vmatprep.subr.bf16.mxu0 0
      %1477 = vmatpush1.bf16.msra.mxu0 0
      %1478 = vmatprep.subr.bf16.mxu0 0
      %1479 = vmatpush1.bf16.msra.mxu0 0
      %1480 = vmatprep.subr.bf16.mxu0 0
      %1481 = vmatpush1.bf16.msra.mxu0 0
      %1482 = vmatprep.subr.bf16.mxu0 0
      %1483 = vmatpush1.bf16.msra.mxu0 0
      %1484 = vmatprep.mubr.bf16.mxu0 0
      %1485 = vmatmul.mubr.bf16.gmra.mrb[0].mxu0 %v1450
      %v1486 = vpop.f32.mrb[0].mxu0
      %v1487 = vadd.f32 %v1435, %v1486
      %v1488 = vpop.f32.mrb[0].mxu0
      %v1489 = vpop.f32.mrb[0].mxu0
      %v1490 = vpop.f32.mrb[0].mxu0
      %1491 = vdwg.mxu0
      %v1492 = vxor.u32 %v1487, 2147483648
      %v1493 = vmul.f32 %v1492, 1.442695
      %v1494 = vpow.pop %v1493
      %v1495 = vadd.f32 %v1494, 1.0
      %v1496 = vrcp.pop %v1495
      %v1497 = vmul.f32 1.0, %v1496
      %v1498 = vlaneseq
      %v1499 = vshrl.u32 %v1498, 7
      %v1500 = vsub.s32 0, %v1499
      %v1501 = vrot.slane %v1497, %v1500
      %v1502 = vmul.f32 %v1338, %v1501
      %v1503 = vmul.f32 %v1339, %v1501
      %v1504 = vpack.c.bf16 %v1503, %v1502
      %v1505 = vld [vmem:[%s8] sm:$0xf]
      %v1506 = vld [vmem:[%s8 + $0x4] sm:$0xf]
      %v1507 = vld [vmem:[%s8 + $0x8] sm:$0xf]
      %v1508 = vld [vmem:[%s8 + $0xc] sm:$0xf]
      %v1509 = vld [vmem:[%s8 + $0x10] sm:$0xf]
      %v1510 = vld [vmem:[%s8 + $0x14] sm:$0xf]
      %v1511 = vld [vmem:[%s8 + $0x18] sm:$0xf]
      %v1512 = vld [vmem:[%s8 + $0x1c] sm:$0xf]
      %v1521 = vunpack.c.l.b16 %v1505
      %v1522 = vunpack.c.l.b16 %v1506
      %v1523 = vunpack.c.l.b16 %v1507
      %v1524 = vunpack.c.l.b16 %v1508
      %v1525 = vunpack.c.l.b16 %v1509
      %v1526 = vunpack.c.l.b16 %v1510
      %v1527 = vunpack.c.l.b16 %v1511
      %v1528 = vunpack.c.l.b16 %v1512
      %v1529 = vpack.c.b16 %v1522, %v1521
      %v1530 = vpack.c.b16 %v1524, %v1523
      %v1531 = vpack.c.b16 %v1526, %v1525
      %v1532 = vpack.c.b16 %v1528, %v1527
      %v1538 = vsel %vm1340, %v1504, 0
      %1540 = vmatprep.subr.bf16.mxu0 0
      %1541 = vmatpush1.bf16.msra.mxu0 %v1529
      %1542 = vmatprep.subr.bf16.mxu0 0
      %1543 = vmatpush1.bf16.msra.mxu0 %v1530
      %1544 = vmatprep.subr.bf16.mxu0 0
      %1545 = vmatpush1.bf16.msra.mxu0 %v1531
      %1546 = vmatprep.subr.bf16.mxu0 0
      %1547 = vmatpush1.bf16.msra.mxu0 %v1532
      %1548 = vmatprep.subr.bf16.mxu0 0
      %1549 = vmatpush1.bf16.msra.mxu0 0
      %1550 = vmatprep.subr.bf16.mxu0 0
      %1551 = vmatpush1.bf16.msra.mxu0 0
      %1552 = vmatprep.subr.bf16.mxu0 0
      %1553 = vmatpush1.bf16.msra.mxu0 0
      %1554 = vmatprep.subr.bf16.mxu0 0
      %1555 = vmatpush1.bf16.msra.mxu0 0
      %1556 = vmatprep.subr.bf16.mxu0 0
      %1557 = vmatpush1.bf16.msra.mxu0 0
      %1558 = vmatprep.subr.bf16.mxu0 0
      %1559 = vmatpush1.bf16.msra.mxu0 0
      %1560 = vmatprep.subr.bf16.mxu0 0
      %1561 = vmatpush1.bf16.msra.mxu0 0
      %1562 = vmatprep.subr.bf16.mxu0 0
      %1563 = vmatpush1.bf16.msra.mxu0 0
      %1564 = vmatprep.subr.bf16.mxu0 0
      %1565 = vmatpush1.bf16.msra.mxu0 0
      %1566 = vmatprep.subr.bf16.mxu0 0
      %1567 = vmatpush1.bf16.msra.mxu0 0
      %1568 = vmatprep.subr.bf16.mxu0 0
      %1569 = vmatpush1.bf16.msra.mxu0 0
      %1570 = vmatprep.subr.bf16.mxu0 0
      %1571 = vmatpush1.bf16.msra.mxu0 0
      %1572 = vmatprep.mubr.bf16.mxu0 0
      %1573 = vmatmul.mubr.bf16.gmra.mrb[0].mxu0 %v1538
      %v1574 = vpop.f32.mrb[0].mxu0
      %v1575 = vadd.f32 0.0, %v1574
      %v1576 = vpop.f32.mrb[0].mxu0
      %v1577 = vpop.f32.mrb[0].mxu0
      %v1578 = vadd.f32 0.0, %v1577
      %v1579 = vpop.f32.mrb[0].mxu0
      %1580 = vdwg.mxu0
      %v1581 = vld [vmem:[%s9] sm:$0x1]
      %v1583 = vlaneseq
      %v1584 = vshrl.u32 %v1583, 7
      %v1585 = vsub.s32 0, %v1584
      %v1586 = vrot.slane %v1581, %v1585
      %v1588 = vmul.f32 %v1575, %v1586
      %v1589 = vmul.f32 %v1578, %v1586
      %v1590 = vld [vmem:[%s10] sm:$0x1]
      %v1592 = vlaneseq
      %v1593 = vshrl.u32 %v1592, 7
      %v1594 = vsub.s32 0, %v1593
      %v1595 = vrot.slane %v1590, %v1594
      %v1597 = vadd.f32 %v1588, %v1595
      %v1598 = vadd.f32 %v1589, %v1595
      %v1599 = vmax.f32 %v1597, 0.0
      %v1600 = vmax.f32 %v1598, 0.0
      %v1601 = vpack.c.bf16 %v1600, %v1599
      %v1603 = vunpack.c.l.b16 %v1601
      %v1604 = vunpack.c.h.b16 %v1601
      %v1605 = vpack.c.b16 %v1603, %v1603
      %v1606 = vpack.c.b16 %v1604, %v1604
      %vm1609 = vcmask 519168
      %1610 = vst.msk [vmem:[%s421] sm:$0xf] %vm1609, %v1605
      %1611 = vst.msk [vmem:[%s421 + $0x4] sm:$0xf] %vm1609, %v1606
      %v1612 = vadd.f32 %v433, %v1599
      %v1613 = vadd.f32 %v434, %v1600
      %v1614 = vpack.c.bf16 %v1613, %v1612
      %v1616 = vunpack.c.l.b16 %v1614
      %v1617 = vunpack.c.h.b16 %v1614
      %v1618 = vpack.c.b16 %v1616, %v1616
      %v1619 = vpack.c.b16 %v1617, %v1617
      %1622 = vst.msk [vmem:[%s426] sm:$0xf] %vm1609, %v1618
      %1623 = vst.msk [vmem:[%s426 + $0x4] sm:$0xf] %vm1609, %v1619
      %p1624 = scmp.lt.s32.totalorder %s24, 1
      %s1625 = scalar_select %p1624, %s24, 1
      %s1626 = smul.addr %s1625, 2
      %s1627 = smul.addr %s1626, 4
      %s1628 = scalar_lea.vmem %s11, %s1627
      %p1629 = scmp.lt.s32.totalorder %s24, 1
      %s1630 = scalar_select %p1629, %s24, 1
      %s1631 = smul.addr %s1630, 2
      %s1632 = smul.addr %s1631, 4
      %s1633 = scalar_lea.vmem %s12, %s1632
      // Predicated region
      $region65: #{ecapa_forward.6} parent=63 // pred_check
        %p1634 = pneg %p278
      $region66: #{ecapa_forward.6} parent=63 // pred_check_branch
        %1636 = sbr.rel (%p1634) target = $region68
      $region67: #{ecapa_forward.6} parent=63 // pred_region
        _
      $region68: #{ecapa_forward.6} parent=63 // pred_fallthru
        _
      // Predicated region
      $region69: #{ecapa_forward.6} parent=63 // pred_check
        %p1637 = pneg %p304
      $region70: #{ecapa_forward.6} parent=63 // pred_check_branch
        %1639 = sbr.rel (%p1637) target = $region72
      $region71: #{ecapa_forward.6} parent=63 // pred_region
        _
      $region72: #{ecapa_forward.6} parent=63 // pred_fallthru
        _
    $region64: #{ecapa_forward.6} parent=5 // pred_fallthru
      _
    %p1640 = scmp.le.s32.totalorder 2, %s19
    // Predicated region
    $region73: #{ecapa_forward.6} parent=5 // pred_check
      %p1641 = pneg %p1640
    $region74: #{ecapa_forward.6} parent=5 // pred_check_branch
      %1643 = sbr.rel (%p1641) target = $region76
    $region75: #{ecapa_forward.6} parent=5 // pred_region
      %s1644 = ssub.s32 %s19, 2
      // Predicated region
      $region77: #{ecapa_forward.6} parent=75 // pred_check
        %p1645 = pneg %p284
      $region78: #{ecapa_forward.6} parent=75 // pred_check_branch
        %1647 = sbr.rel (%p1645) target = $region80
      $region79: #{ecapa_forward.6} parent=75 // pred_region
        %p1648 = scmp.lt.s32.totalorder %s25, 1
        %s1649 = scalar_select %p1648, %s25, 1
        %s1650 = smul.addr %s1649, 2
        %s1651 = smul.addr %s1650, 4
        %s1652 = scalar_lea.vmem %s11, %s1651
      $region80: #{ecapa_forward.6} parent=75 // pred_fallthru
        _
      // Predicated region
      $region81: #{ecapa_forward.6} parent=75 // pred_check
        %p1653 = pneg %p310
      $region82: #{ecapa_forward.6} parent=75 // pred_check_branch
        %1655 = sbr.rel (%p1653) target = $region84
      $region83: #{ecapa_forward.6} parent=75 // pred_region
        %p1656 = scmp.lt.s32.totalorder %s25, 1
        %s1657 = scalar_select %p1656, %s25, 1
        %s1658 = smul.addr %s1657, 2
        %s1659 = smul.addr %s1658, 4
        %s1660 = scalar_lea.vmem %s12, %s1659
      $region84: #{ecapa_forward.6} parent=75 // pred_fallthru
        _
    $region76: #{ecapa_forward.6} parent=5 // pred_fallthru
      _
  $region6: #{ecapa_forward.6} parent=0 // loop_footer
    %s23 = sadd.s32 1, %s19
  $region7: #{ecapa_forward.6} parent=0 // loop_footer_branch
    %18 = sbr.rel target = $region3
  $region8: #{ecapa_forward.6} parent=0 // loop_exit
    _

// kernel: ecapa_forward.9
$region0: #{ecapa_forward.9}
  #allocation0 [shape = 'u32[]', space=smem, size = 0x4, offset = 0x4, fixed_abs, tag = 'smem constant byte address 0x4 - core index']
  #allocation1 [shape = 'u32[144,128]{1,0:T(1,128)}', space=vmem, size = 0x12000, scoped, tag = 'internal scratch']
  %s0 = inlined_call_operand.vmem [shape: bf16[2,16,64], index: 0, kind: input, shape index: {}]
  %s1 = inlined_call_operand.vmem [shape: bf16[2,16,64], index: 1, kind: input, shape index: {}]
  %s2 = inlined_call_operand.vmem [shape: bf16[2,16,64], index: 2, kind: input, shape index: {}]
  %s3 = inlined_call_operand.vmem [shape: bf16[64,192], index: 3, kind: input, shape index: {}]
  %s4 = inlined_call_operand.vmem [shape: bf16[64,192], index: 4, kind: input, shape index: {}]
  %s5 = inlined_call_operand.vmem [shape: bf16[64,192], index: 5, kind: input, shape index: {}]
  %s6 = inlined_call_operand.vmem [shape: f32[1,192], index: 6, kind: input, shape index: {}]
  %s7 = inlined_call_operand.vmem [shape: bf16[192,32], index: 7, kind: input, shape index: {}]
  %s8 = inlined_call_operand.vmem [shape: bf16[192,32], index: 8, kind: input, shape index: {}]
  %s9 = inlined_call_operand.vmem [shape: bf16[192,32], index: 9, kind: input, shape index: {}]
  %s10 = inlined_call_operand.vmem [shape: f32[1,32], index: 10, kind: input, shape index: {}]
  %s11 = inlined_call_operand.vmem [shape: bf16[32,32], index: 11, kind: input, shape index: {}]
  %s12 = inlined_call_operand.vmem [shape: f32[1,32], index: 12, kind: input, shape index: {}]
  %s13 = inlined_call_operand.vmem [shape: bf16[32,192], index: 13, kind: input, shape index: {}]
  %s14 = inlined_call_operand.vmem [shape: f32[1,192], index: 14, kind: input, shape index: {}]
  %s15 = inlined_call_operand.vmem [shape: f32[1,192], index: 15, kind: input, shape index: {}]
  %s16 = inlined_call_operand.vmem [shape: f32[1,192], index: 16, kind: input, shape index: {}]
  %s17 = inlined_call_operand.vmem [shape: f32[1,192], index: 17, kind: input, shape index: {}]
  %s18 = inlined_call_operand.vmem [shape: f32[1,192], index: 18, kind: input, shape index: {}]
  %s19 = inlined_call_operand.vmem [shape: bf16[192,32], index: 19, kind: input, shape index: {}]
  %s20 = inlined_call_operand.vmem [shape: bf16[192,32], index: 20, kind: input, shape index: {}]
  %s21 = inlined_call_operand.vmem [shape: f32[1,32], index: 21, kind: input, shape index: {}]
  %s22 = inlined_call_operand.vmem [shape: f32[1,32], index: 22, kind: input, shape index: {}]
  %s23 = inlined_call_operand.vmem [shape: f32[1,32], index: 23, kind: input, shape index: {}]
  %s24 = inlined_call_operand.hbm [shape: f32[2,1,32], index: 24, kind: output, shape index: {}]
  %s25 = sld [smem:[#allocation0]]
  $region129: #{ecapa_forward.9} parent=0
    _
  %s27 = ssub.s32 1, %s25
  %s28 = scalar_select 0, %s27, %s25
  $region1: #{ecapa_forward.9} parent=0
    #allocation2 [shape = 'u8[1024]{0}', space=vmem, size = 0x400, scoped, tag = 'output window, operand 0']
    #allocation3 [shape = 's32[2]{0}', space=sflag, size = 0x8, scoped, tag = 'scoped memory for ecapa_forward.9']
    %29 = vsyncpa [#allocation3], 0
    %s30 = scalar_lea.sflag [#allocation3], 1
    %31 = vsyncpa %s30, 0
    loop: start=0, step=1, limit=4
    $region2: #{ecapa_forward.9} parent=1 // loop_pre_header
      _
    $region3: #{ecapa_forward.9} parent=1 // loop_header
      %s33 = sphi 0, %s37
      %p34 = scmp.ge.s32.totalorder %s33, 4
      %s43 = sphi 0, %s45
      %s46 = sphi 0, %s43
      %s47 = sphi 0, %s46
      %s63 = sphi 0, %s47
      %s69 = sphi 0, %s71
      %s72 = sphi 0, %s69
      %s73 = sphi 0, %s72
      %s89 = sphi 0, %s73
      %s95 = sphi 0, %s97
      %s98 = sphi 0, %s95
      %s99 = sphi 0, %s98
      %s115 = sphi 0, %s99
      %s119 = sphi 0, %s119
      %s121 = sphi 0, %s119
      %s122 = sphi 0, %s121
      %s136 = sphi 0, %s122
      %s140 = sphi 0, %s140
      %s142 = sphi 0, %s140
      %s143 = sphi 0, %s142
      %s157 = sphi 0, %s143
      %s161 = sphi 0, %s161
      %s163 = sphi 0, %s161
      %s164 = sphi 0, %s163
      %s178 = sphi 0, %s164
      %s182 = sphi 0, %s182
      %s184 = sphi 0, %s182
      %s185 = sphi 0, %s184
      %s199 = sphi 0, %s185
      %s203 = sphi 0, %s203
      %s205 = sphi 0, %s203
      %s206 = sphi 0, %s205
      %s220 = sphi 0, %s206
      %s224 = sphi 0, %s224
      %s226 = sphi 0, %s224
      %s227 = sphi 0, %s226
      %s241 = sphi 0, %s227
      %s245 = sphi 0, %s245
      %s247 = sphi 0, %s245
      %s248 = sphi 0, %s247
      %s262 = sphi 0, %s248
      %s266 = sphi 0, %s266
      %s268 = sphi 0, %s266
      %s269 = sphi 0, %s268
      %s283 = sphi 0, %s269
      %s287 = sphi 0, %s287
      %s289 = sphi 0, %s287
      %s290 = sphi 0, %s289
      %s304 = sphi 0, %s290
      %s308 = sphi 0, %s308
      %s310 = sphi 0, %s308
      %s311 = sphi 0, %s310
      %s325 = sphi 0, %s311
      %s329 = sphi 0, %s329
      %s331 = sphi 0, %s329
      %s332 = sphi 0, %s331
      %s346 = sphi 0, %s332
      %s350 = sphi 0, %s350
      %s352 = sphi 0, %s350
      %s353 = sphi 0, %s352
      %s367 = sphi 0, %s353
      %s371 = sphi 0, %s371
      %s373 = sphi 0, %s371
      %s374 = sphi 0, %s373
      %s388 = sphi 0, %s374
      %s392 = sphi 0, %s392
      %s394 = sphi 0, %s392
      %s395 = sphi 0, %s394
      %s409 = sphi 0, %s395
      %s413 = sphi 0, %s413
      %s415 = sphi 0, %s413
      %s416 = sphi 0, %s415
      %s430 = sphi 0, %s416
      %s434 = sphi 0, %s434
      %s436 = sphi 0, %s434
      %s437 = sphi 0, %s436
      %s451 = sphi 0, %s437
      %s455 = sphi 0, %s455
      %s457 = sphi 0, %s455
      %s458 = sphi 0, %s457
      %s472 = sphi 0, %s458
      %s476 = sphi 0, %s476
      %s478 = sphi 0, %s476
      %s479 = sphi 0, %s478
      %s493 = sphi 0, %s479
      %s497 = sphi 0, %s497
      %s499 = sphi 0, %s497
      %s500 = sphi 0, %s499
      %s514 = sphi 0, %s500
      %s518 = sphi 0, %s518
      %s520 = sphi 0, %s518
      %s521 = sphi 0, %s520
      %s535 = sphi 0, %s521
      %s539 = sphi 0, %s539
      %s541 = sphi 0, %s539
      %s542 = sphi 0, %s541
      %s556 = sphi 0, %s542
      %s562 = sphi 0, %s564
      %s565 = sphi 0, %s562
      %s566 = sphi 0, %s565
      %s582 = sphi 0, %s566
    $region4: #{ecapa_forward.9} parent=1 // loop_header_branch
      %36 = sbr.rel (%p34) target = $region8
    $region5: #{ecapa_forward.9} parent=1 // loop_body
      %s38 = ssub.s32 %s33, 1
      %s39 = ssub.s32 %s33, 2
      %s40 = sadd.s32 %s33, 1
      %s41 = ssub.s32 %s33, %s40
      %p42 = scmp.eq.s32.totalorder %s41, 0
      %s44 = sadd.s32 %s43, 1
      %s45 = scalar_select %p42, %s43, %s44
      %p48 = pneg %p42
      %p49 = scmp.eq.s32.totalorder %s33, 1
      %p50 = por %p48, %p49
      %p51 = scmp.ne.s32.totalorder %s43, %s46
      %p52 = scmp.eq.s32.totalorder %s33, 0
      %p53 = por %p51, %p52
      %p54 = scmp.ne.s32.totalorder %s43, %s46
      %p55 = scmp.eq.s32.totalorder %s38, 1
      %p56 = por %p54, %p55
      %p57 = scmp.ne.s32.totalorder %s46, %s47
      %p58 = scmp.eq.s32.totalorder %s38, 0
      %p59 = por %p57, %p58
      %p60 = scmp.ne.s32.totalorder %s46, %s47
      %p61 = scmp.eq.s32.totalorder %s39, 1
      %p62 = por %p60, %p61
      %p64 = scmp.ne.s32.totalorder %s47, %s63
      %p65 = scmp.eq.s32.totalorder %s39, 0
      %p66 = por %p64, %p65
      %s67 = ssub.s32 %s33, %s40
      %p68 = scmp.eq.s32.totalorder %s67, 0
      %s70 = sadd.s32 %s69, 1
      %s71 = scalar_select %p68, %s69, %s70
      %p74 = pneg %p68
      %p75 = scmp.eq.s32.totalorder %s33, 1
      %p76 = por %p74, %p75
      %p77 = scmp.ne.s32.totalorder %s69, %s72
      %p78 = scmp.eq.s32.totalorder %s33, 0
      %p79 = por %p77, %p78
      %p80 = scmp.ne.s32.totalorder %s69, %s72
      %p81 = scmp.eq.s32.totalorder %s38, 1
      %p82 = por %p80, %p81
      %p83 = scmp.ne.s32.totalorder %s72, %s73
      %p84 = scmp.eq.s32.totalorder %s38, 0
      %p85 = por %p83, %p84
      %p86 = scmp.ne.s32.totalorder %s72, %s73
      %p87 = scmp.eq.s32.totalorder %s39, 1
      %p88 = por %p86, %p87
      %p90 = scmp.ne.s32.totalorder %s73, %s89
      %p91 = scmp.eq.s32.totalorder %s39, 0
      %p92 = por %p90, %p91
      %s93 = ssub.s32 %s33, %s40
      %p94 = scmp.eq.s32.totalorder %s93, 0
      %s96 = sadd.s32 %s95, 1
      %s97 = scalar_select %p94, %s95, %s96
      %p100 = pneg %p94
      %p101 = scmp.eq.s32.totalorder %s33, 1
      %p102 = por %p100, %p101
      %p103 = scmp.ne.s32.totalorder %s95, %s98
      %p104 = scmp.eq.s32.totalorder %s33, 0
      %p105 = por %p103, %p104
      %p106 = scmp.ne.s32.totalorder %s95, %s98
      %p107 = scmp.eq.s32.totalorder %s38, 1
      %p108 = por %p106, %p107
      %p109 = scmp.ne.s32.totalorder %s98, %s99
      %p110 = scmp.eq.s32.totalorder %s38, 0
      %p111 = por %p109, %p110
      %p112 = scmp.ne.s32.totalorder %s98, %s99
      %p113 = scmp.eq.s32.totalorder %s39, 1
      %p114 = por %p112, %p113
      %p116 = scmp.ne.s32.totalorder %s99, %s115
      %p117 = scmp.eq.s32.totalorder %s39, 0
      %p118 = por %p116, %p117
      %s120 = sadd.s32 %s119, 1
      %p123 = scmp.eq.s32.totalorder %s33, 1
      %p124 = scmp.ne.s32.totalorder %s119, %s121
      %p125 = scmp.eq.s32.totalorder %s33, 0
      %p126 = por %p124, %p125
      %p127 = scmp.ne.s32.totalorder %s119, %s121
      %p128 = scmp.eq.s32.totalorder %s38, 1
      %p129 = por %p127, %p128
      %p130 = scmp.ne.s32.totalorder %s121, %s122
      %p131 = scmp.eq.s32.totalorder %s38, 0
      %p132 = por %p130, %p131
      %p133 = scmp.ne.s32.totalorder %s121, %s122
      %p134 = scmp.eq.s32.totalorder %s39, 1
      %p135 = por %p133, %p134
      %p137 = scmp.ne.s32.totalorder %s122, %s136
      %p138 = scmp.eq.s32.totalorder %s39, 0
      %p139 = por %p137, %p138
      %s141 = sadd.s32 %s140, 1
      %p144 = scmp.eq.s32.totalorder %s33, 1
      %p145 = scmp.ne.s32.totalorder %s140, %s142
      %p146 = scmp.eq.s32.totalorder %s33, 0
      %p147 = por %p145, %p146
      %p148 = scmp.ne.s32.totalorder %s140, %s142
      %p149 = scmp.eq.s32.totalorder %s38, 1
      %p150 = por %p148, %p149
      %p151 = scmp.ne.s32.totalorder %s142, %s143
      %p152 = scmp.eq.s32.totalorder %s38, 0
      %p153 = por %p151, %p152
      %p154 = scmp.ne.s32.totalorder %s142, %s143
      %p155 = scmp.eq.s32.totalorder %s39, 1
      %p156 = por %p154, %p155
      %p158 = scmp.ne.s32.totalorder %s143, %s157
      %p159 = scmp.eq.s32.totalorder %s39, 0
      %p160 = por %p158, %p159
      %s162 = sadd.s32 %s161, 1
      %p165 = scmp.eq.s32.totalorder %s33, 1
      %p166 = scmp.ne.s32.totalorder %s161, %s163
      %p167 = scmp.eq.s32.totalorder %s33, 0
      %p168 = por %p166, %p167
      %p169 = scmp.ne.s32.totalorder %s161, %s163
      %p170 = scmp.eq.s32.totalorder %s38, 1
      %p171 = por %p169, %p170
      %p172 = scmp.ne.s32.totalorder %s163, %s164
      %p173 = scmp.eq.s32.totalorder %s38, 0
      %p174 = por %p172, %p173
      %p175 = scmp.ne.s32.totalorder %s163, %s164
      %p176 = scmp.eq.s32.totalorder %s39, 1
      %p177 = por %p175, %p176
      %p179 = scmp.ne.s32.totalorder %s164, %s178
      %p180 = scmp.eq.s32.totalorder %s39, 0
      %p181 = por %p179, %p180
      %s183 = sadd.s32 %s182, 1
      %p186 = scmp.eq.s32.totalorder %s33, 1
      %p187 = scmp.ne.s32.totalorder %s182, %s184
      %p188 = scmp.eq.s32.totalorder %s33, 0
      %p189 = por %p187, %p188
      %p190 = scmp.ne.s32.totalorder %s182, %s184
      %p191 = scmp.eq.s32.totalorder %s38, 1
      %p192 = por %p190, %p191
      %p193 = scmp.ne.s32.totalorder %s184, %s185
      %p194 = scmp.eq.s32.totalorder %s38, 0
      %p195 = por %p193, %p194
      %p196 = scmp.ne.s32.totalorder %s184, %s185
      %p197 = scmp.eq.s32.totalorder %s39, 1
      %p198 = por %p196, %p197
      %p200 = scmp.ne.s32.totalorder %s185, %s199
      %p201 = scmp.eq.s32.totalorder %s39, 0
      %p202 = por %p200, %p201
      %s204 = sadd.s32 %s203, 1
      %p207 = scmp.eq.s32.totalorder %s33, 1
      %p208 = scmp.ne.s32.totalorder %s203, %s205
      %p209 = scmp.eq.s32.totalorder %s33, 0
      %p210 = por %p208, %p209
      %p211 = scmp.ne.s32.totalorder %s203, %s205
      %p212 = scmp.eq.s32.totalorder %s38, 1
      %p213 = por %p211, %p212
      %p214 = scmp.ne.s32.totalorder %s205, %s206
      %p215 = scmp.eq.s32.totalorder %s38, 0
      %p216 = por %p214, %p215
      %p217 = scmp.ne.s32.totalorder %s205, %s206
      %p218 = scmp.eq.s32.totalorder %s39, 1
      %p219 = por %p217, %p218
      %p221 = scmp.ne.s32.totalorder %s206, %s220
      %p222 = scmp.eq.s32.totalorder %s39, 0
      %p223 = por %p221, %p222
      %s225 = sadd.s32 %s224, 1
      %p228 = scmp.eq.s32.totalorder %s33, 1
      %p229 = scmp.ne.s32.totalorder %s224, %s226
      %p230 = scmp.eq.s32.totalorder %s33, 0
      %p231 = por %p229, %p230
      %p232 = scmp.ne.s32.totalorder %s224, %s226
      %p233 = scmp.eq.s32.totalorder %s38, 1
      %p234 = por %p232, %p233
      %p235 = scmp.ne.s32.totalorder %s226, %s227
      %p236 = scmp.eq.s32.totalorder %s38, 0
      %p237 = por %p235, %p236
      %p238 = scmp.ne.s32.totalorder %s226, %s227
      %p239 = scmp.eq.s32.totalorder %s39, 1
      %p240 = por %p238, %p239
      %p242 = scmp.ne.s32.totalorder %s227, %s241
      %p243 = scmp.eq.s32.totalorder %s39, 0
      %p244 = por %p242, %p243
      %s246 = sadd.s32 %s245, 1
      %p249 = scmp.eq.s32.totalorder %s33, 1
      %p250 = scmp.ne.s32.totalorder %s245, %s247
      %p251 = scmp.eq.s32.totalorder %s33, 0
      %p252 = por %p250, %p251
      %p253 = scmp.ne.s32.totalorder %s245, %s247
      %p254 = scmp.eq.s32.totalorder %s38, 1
      %p255 = por %p253, %p254
      %p256 = scmp.ne.s32.totalorder %s247, %s248
      %p257 = scmp.eq.s32.totalorder %s38, 0
      %p258 = por %p256, %p257
      %p259 = scmp.ne.s32.totalorder %s247, %s248
      %p260 = scmp.eq.s32.totalorder %s39, 1
      %p261 = por %p259, %p260
      %p263 = scmp.ne.s32.totalorder %s248, %s262
      %p264 = scmp.eq.s32.totalorder %s39, 0
      %p265 = por %p263, %p264
      %s267 = sadd.s32 %s266, 1
      %p270 = scmp.eq.s32.totalorder %s33, 1
      %p271 = scmp.ne.s32.totalorder %s266, %s268
      %p272 = scmp.eq.s32.totalorder %s33, 0
      %p273 = por %p271, %p272
      %p274 = scmp.ne.s32.totalorder %s266, %s268
      %p275 = scmp.eq.s32.totalorder %s38, 1
      %p276 = por %p274, %p275
      %p277 = scmp.ne.s32.totalorder %s268, %s269
      %p278 = scmp.eq.s32.totalorder %s38, 0
      %p279 = por %p277, %p278
      %p280 = scmp.ne.s32.totalorder %s268, %s269
      %p281 = scmp.eq.s32.totalorder %s39, 1
      %p282 = por %p280, %p281
      %p284 = scmp.ne.s32.totalorder %s269, %s283
      %p285 = scmp.eq.s32.totalorder %s39, 0
      %p286 = por %p284, %p285
      %s288 = sadd.s32 %s287, 1
      %p291 = scmp.eq.s32.totalorder %s33, 1
      %p292 = scmp.ne.s32.totalorder %s287, %s289
      %p293 = scmp.eq.s32.totalorder %s33, 0
      %p294 = por %p292, %p293
      %p295 = scmp.ne.s32.totalorder %s287, %s289
      %p296 = scmp.eq.s32.totalorder %s38, 1
      %p297 = por %p295, %p296
      %p298 = scmp.ne.s32.totalorder %s289, %s290
      %p299 = scmp.eq.s32.totalorder %s38, 0
      %p300 = por %p298, %p299
      %p301 = scmp.ne.s32.totalorder %s289, %s290
      %p302 = scmp.eq.s32.totalorder %s39, 1
      %p303 = por %p301, %p302
      %p305 = scmp.ne.s32.totalorder %s290, %s304
      %p306 = scmp.eq.s32.totalorder %s39, 0
      %p307 = por %p305, %p306
      %s309 = sadd.s32 %s308, 1
      %p312 = scmp.eq.s32.totalorder %s33, 1
      %p313 = scmp.ne.s32.totalorder %s308, %s310
      %p314 = scmp.eq.s32.totalorder %s33, 0
      %p315 = por %p313, %p314
      %p316 = scmp.ne.s32.totalorder %s308, %s310
      %p317 = scmp.eq.s32.totalorder %s38, 1
      %p318 = por %p316, %p317
      %p319 = scmp.ne.s32.totalorder %s310, %s311
      %p320 = scmp.eq.s32.totalorder %s38, 0
      %p321 = por %p319, %p320
      %p322 = scmp.ne.s32.totalorder %s310, %s311
      %p323 = scmp.eq.s32.totalorder %s39, 1
      %p324 = por %p322, %p323
      %p326 = scmp.ne.s32.totalorder %s311, %s325
      %p327 = scmp.eq.s32.totalorder %s39, 0
      %p328 = por %p326, %p327
      %s330 = sadd.s32 %s329, 1
      %p333 = scmp.eq.s32.totalorder %s33, 1
      %p334 = scmp.ne.s32.totalorder %s329, %s331
      %p335 = scmp.eq.s32.totalorder %s33, 0
      %p336 = por %p334, %p335
      %p337 = scmp.ne.s32.totalorder %s329, %s331
      %p338 = scmp.eq.s32.totalorder %s38, 1
      %p339 = por %p337, %p338
      %p340 = scmp.ne.s32.totalorder %s331, %s332
      %p341 = scmp.eq.s32.totalorder %s38, 0
      %p342 = por %p340, %p341
      %p343 = scmp.ne.s32.totalorder %s331, %s332
      %p344 = scmp.eq.s32.totalorder %s39, 1
      %p345 = por %p343, %p344
      %p347 = scmp.ne.s32.totalorder %s332, %s346
      %p348 = scmp.eq.s32.totalorder %s39, 0
      %p349 = por %p347, %p348
      %s351 = sadd.s32 %s350, 1
      %p354 = scmp.eq.s32.totalorder %s33, 1
      %p355 = scmp.ne.s32.totalorder %s350, %s352
      %p356 = scmp.eq.s32.totalorder %s33, 0
      %p357 = por %p355, %p356
      %p358 = scmp.ne.s32.totalorder %s350, %s352
      %p359 = scmp.eq.s32.totalorder %s38, 1
      %p360 = por %p358, %p359
      %p361 = scmp.ne.s32.totalorder %s352, %s353
      %p362 = scmp.eq.s32.totalorder %s38, 0
      %p363 = por %p361, %p362
      %p364 = scmp.ne.s32.totalorder %s352, %s353
      %p365 = scmp.eq.s32.totalorder %s39, 1
      %p366 = por %p364, %p365
      %p368 = scmp.ne.s32.totalorder %s353, %s367
      %p369 = scmp.eq.s32.totalorder %s39, 0
      %p370 = por %p368, %p369
      %s372 = sadd.s32 %s371, 1
      %p375 = scmp.eq.s32.totalorder %s33, 1
      %p376 = scmp.ne.s32.totalorder %s371, %s373
      %p377 = scmp.eq.s32.totalorder %s33, 0
      %p378 = por %p376, %p377
      %p379 = scmp.ne.s32.totalorder %s371, %s373
      %p380 = scmp.eq.s32.totalorder %s38, 1
      %p381 = por %p379, %p380
      %p382 = scmp.ne.s32.totalorder %s373, %s374
      %p383 = scmp.eq.s32.totalorder %s38, 0
      %p384 = por %p382, %p383
      %p385 = scmp.ne.s32.totalorder %s373, %s374
      %p386 = scmp.eq.s32.totalorder %s39, 1
      %p387 = por %p385, %p386
      %p389 = scmp.ne.s32.totalorder %s374, %s388
      %p390 = scmp.eq.s32.totalorder %s39, 0
      %p391 = por %p389, %p390
      %s393 = sadd.s32 %s392, 1
      %p396 = scmp.eq.s32.totalorder %s33, 1
      %p397 = scmp.ne.s32.totalorder %s392, %s394
      %p398 = scmp.eq.s32.totalorder %s33, 0
      %p399 = por %p397, %p398
      %p400 = scmp.ne.s32.totalorder %s392, %s394
      %p401 = scmp.eq.s32.totalorder %s38, 1
      %p402 = por %p400, %p401
      %p403 = scmp.ne.s32.totalorder %s394, %s395
      %p404 = scmp.eq.s32.totalorder %s38, 0
      %p405 = por %p403, %p404
      %p406 = scmp.ne.s32.totalorder %s394, %s395
      %p407 = scmp.eq.s32.totalorder %s39, 1
      %p408 = por %p406, %p407
      %p410 = scmp.ne.s32.totalorder %s395, %s409
      %p411 = scmp.eq.s32.totalorder %s39, 0
      %p412 = por %p410, %p411
      %s414 = sadd.s32 %s413, 1
      %p417 = scmp.eq.s32.totalorder %s33, 1
      %p418 = scmp.ne.s32.totalorder %s413, %s415
      %p419 = scmp.eq.s32.totalorder %s33, 0
      %p420 = por %p418, %p419
      %p421 = scmp.ne.s32.totalorder %s413, %s415
      %p422 = scmp.eq.s32.totalorder %s38, 1
      %p423 = por %p421, %p422
      %p424 = scmp.ne.s32.totalorder %s415, %s416
      %p425 = scmp.eq.s32.totalorder %s38, 0
      %p426 = por %p424, %p425
      %p427 = scmp.ne.s32.totalorder %s415, %s416
      %p428 = scmp.eq.s32.totalorder %s39, 1
      %p429 = por %p427, %p428
      %p431 = scmp.ne.s32.totalorder %s416, %s430
      %p432 = scmp.eq.s32.totalorder %s39, 0
      %p433 = por %p431, %p432
      %s435 = sadd.s32 %s434, 1
      %p438 = scmp.eq.s32.totalorder %s33, 1
      %p439 = scmp.ne.s32.totalorder %s434, %s436
      %p440 = scmp.eq.s32.totalorder %s33, 0
      %p441 = por %p439, %p440
      %p442 = scmp.ne.s32.totalorder %s434, %s436
      %p443 = scmp.eq.s32.totalorder %s38, 1
      %p444 = por %p442, %p443
      %p445 = scmp.ne.s32.totalorder %s436, %s437
      %p446 = scmp.eq.s32.totalorder %s38, 0
      %p447 = por %p445, %p446
      %p448 = scmp.ne.s32.totalorder %s436, %s437
      %p449 = scmp.eq.s32.totalorder %s39, 1
      %p450 = por %p448, %p449
      %p452 = scmp.ne.s32.totalorder %s437, %s451
      %p453 = scmp.eq.s32.totalorder %s39, 0
      %p454 = por %p452, %p453
      %s456 = sadd.s32 %s455, 1
      %p459 = scmp.eq.s32.totalorder %s33, 1
      %p460 = scmp.ne.s32.totalorder %s455, %s457
      %p461 = scmp.eq.s32.totalorder %s33, 0
      %p462 = por %p460, %p461
      %p463 = scmp.ne.s32.totalorder %s455, %s457
      %p464 = scmp.eq.s32.totalorder %s38, 1
      %p465 = por %p463, %p464
      %p466 = scmp.ne.s32.totalorder %s457, %s458
      %p467 = scmp.eq.s32.totalorder %s38, 0
      %p468 = por %p466, %p467
      %p469 = scmp.ne.s32.totalorder %s457, %s458
      %p470 = scmp.eq.s32.totalorder %s39, 1
      %p471 = por %p469, %p470
      %p473 = scmp.ne.s32.totalorder %s458, %s472
      %p474 = scmp.eq.s32.totalorder %s39, 0
      %p475 = por %p473, %p474
      %s477 = sadd.s32 %s476, 1
      %p480 = scmp.eq.s32.totalorder %s33, 1
      %p481 = scmp.ne.s32.totalorder %s476, %s478
      %p482 = scmp.eq.s32.totalorder %s33, 0
      %p483 = por %p481, %p482
      %p484 = scmp.ne.s32.totalorder %s476, %s478
      %p485 = scmp.eq.s32.totalorder %s38, 1
      %p486 = por %p484, %p485
      %p487 = scmp.ne.s32.totalorder %s478, %s479
      %p488 = scmp.eq.s32.totalorder %s38, 0
      %p489 = por %p487, %p488
      %p490 = scmp.ne.s32.totalorder %s478, %s479
      %p491 = scmp.eq.s32.totalorder %s39, 1
      %p492 = por %p490, %p491
      %p494 = scmp.ne.s32.totalorder %s479, %s493
      %p495 = scmp.eq.s32.totalorder %s39, 0
      %p496 = por %p494, %p495
      %s498 = sadd.s32 %s497, 1
      %p501 = scmp.eq.s32.totalorder %s33, 1
      %p502 = scmp.ne.s32.totalorder %s497, %s499
      %p503 = scmp.eq.s32.totalorder %s33, 0
      %p504 = por %p502, %p503
      %p505 = scmp.ne.s32.totalorder %s497, %s499
      %p506 = scmp.eq.s32.totalorder %s38, 1
      %p507 = por %p505, %p506
      %p508 = scmp.ne.s32.totalorder %s499, %s500
      %p509 = scmp.eq.s32.totalorder %s38, 0
      %p510 = por %p508, %p509
      %p511 = scmp.ne.s32.totalorder %s499, %s500
      %p512 = scmp.eq.s32.totalorder %s39, 1
      %p513 = por %p511, %p512
      %p515 = scmp.ne.s32.totalorder %s500, %s514
      %p516 = scmp.eq.s32.totalorder %s39, 0
      %p517 = por %p515, %p516
      %s519 = sadd.s32 %s518, 1
      %p522 = scmp.eq.s32.totalorder %s33, 1
      %p523 = scmp.ne.s32.totalorder %s518, %s520
      %p524 = scmp.eq.s32.totalorder %s33, 0
      %p525 = por %p523, %p524
      %p526 = scmp.ne.s32.totalorder %s518, %s520
      %p527 = scmp.eq.s32.totalorder %s38, 1
      %p528 = por %p526, %p527
      %p529 = scmp.ne.s32.totalorder %s520, %s521
      %p530 = scmp.eq.s32.totalorder %s38, 0
      %p531 = por %p529, %p530
      %p532 = scmp.ne.s32.totalorder %s520, %s521
      %p533 = scmp.eq.s32.totalorder %s39, 1
      %p534 = por %p532, %p533
      %p536 = scmp.ne.s32.totalorder %s521, %s535
      %p537 = scmp.eq.s32.totalorder %s39, 0
      %p538 = por %p536, %p537
      %s540 = sadd.s32 %s539, 1
      %p543 = scmp.eq.s32.totalorder %s33, 1
      %p544 = scmp.ne.s32.totalorder %s539, %s541
      %p545 = scmp.eq.s32.totalorder %s33, 0
      %p546 = por %p544, %p545
      %p547 = scmp.ne.s32.totalorder %s539, %s541
      %p548 = scmp.eq.s32.totalorder %s38, 1
      %p549 = por %p547, %p548
      %p550 = scmp.ne.s32.totalorder %s541, %s542
      %p551 = scmp.eq.s32.totalorder %s38, 0
      %p552 = por %p550, %p551
      %p553 = scmp.ne.s32.totalorder %s541, %s542
      %p554 = scmp.eq.s32.totalorder %s39, 1
      %p555 = por %p553, %p554
      %p557 = scmp.ne.s32.totalorder %s542, %s556
      %p558 = scmp.eq.s32.totalorder %s39, 0
      %p559 = por %p557, %p558
      %s560 = ssub.s32 %s33, %s40
      %p561 = scmp.eq.s32.totalorder %s560, 0
      %s563 = sadd.s32 %s562, 1
      %s564 = scalar_select %p561, %s562, %s563
      %p567 = pneg %p561
      %p568 = scmp.eq.s32.totalorder %s33, 1
      %p569 = por %p567, %p568
      %p570 = scmp.ne.s32.totalorder %s562, %s565
      %p571 = scmp.eq.s32.totalorder %s33, 0
      %p572 = por %p570, %p571
      %p573 = scmp.ne.s32.totalorder %s562, %s565
      %p574 = scmp.eq.s32.totalorder %s38, 1
      %p575 = por %p573, %p574
      %p576 = scmp.ne.s32.totalorder %s565, %s566
      %p577 = scmp.eq.s32.totalorder %s38, 0
      %p578 = por %p576, %p577
      %p579 = scmp.ne.s32.totalorder %s565, %s566
      %p580 = scmp.eq.s32.totalorder %s39, 1
      %p581 = por %p579, %p580
      %p583 = scmp.ne.s32.totalorder %s566, %s582
      %p584 = scmp.eq.s32.totalorder %s39, 0
      %p585 = por %p583, %p584
      %p586 = scmp.le.s32.totalorder 1, %s33
      %p587 = scmp.lt.s32.totalorder %s33, 3
      %p588 = pnand %p586, %p587
      %p589 = pneg %p588
      // Predicated region
      $region9: #{ecapa_forward.9} parent=5 // pred_check
        _
      $region10: #{ecapa_forward.9} parent=5 // pred_check_branch
        %591 = sbr.rel (%p588) target = $region12
      $region11: #{ecapa_forward.9} parent=5 // pred_region
        %s592 = ssub.s32 %s33, 1
        // Predicated region
        $region13: #{ecapa_forward.9} parent=11 // pred_check
          %p593 = pneg %p132
        $region14: #{ecapa_forward.9} parent=11 // pred_check_branch
          %595 = sbr.rel (%p593) target = $region16
        $region15: #{ecapa_forward.9} parent=11 // pred_region
          _
        $region16: #{ecapa_forward.9} parent=11 // pred_fallthru
          _
        // Predicated region
        $region17: #{ecapa_forward.9} parent=11 // pred_check
          %p596 = pneg %p153
        $region18: #{ecapa_forward.9} parent=11 // pred_check_branch
          %598 = sbr.rel (%p596) target = $region20
        $region19: #{ecapa_forward.9} parent=11 // pred_region
          _
        $region20: #{ecapa_forward.9} parent=11 // pred_fallthru
          _
        // Predicated region
        $region21: #{ecapa_forward.9} parent=11 // pred_check
          %p599 = pneg %p174
        $region22: #{ecapa_forward.9} parent=11 // pred_check_branch
          %601 = sbr.rel (%p599) target = $region24
        $region23: #{ecapa_forward.9} parent=11 // pred_region
          _
        $region24: #{ecapa_forward.9} parent=11 // pred_fallthru
          _
        // Predicated region
        $region25: #{ecapa_forward.9} parent=11 // pred_check
          %p602 = pneg %p195
        $region26: #{ecapa_forward.9} parent=11 // pred_check_branch
          %604 = sbr.rel (%p602) target = $region28
        $region27: #{ecapa_forward.9} parent=11 // pred_region
          _
        $region28: #{ecapa_forward.9} parent=11 // pred_fallthru
          _
        // Predicated region
        $region29: #{ecapa_forward.9} parent=11 // pred_check
          %p605 = pneg %p216
        $region30: #{ecapa_forward.9} parent=11 // pred_check_branch
          %607 = sbr.rel (%p605) target = $region32
        $region31: #{ecapa_forward.9} parent=11 // pred_region
          _
        $region32: #{ecapa_forward.9} parent=11 // pred_fallthru
          _
        // Predicated region
        $region33: #{ecapa_forward.9} parent=11 // pred_check
          %p608 = pneg %p237
        $region34: #{ecapa_forward.9} parent=11 // pred_check_branch
          %610 = sbr.rel (%p608) target = $region36
        $region35: #{ecapa_forward.9} parent=11 // pred_region
          _
        $region36: #{ecapa_forward.9} parent=11 // pred_fallthru
          _
        // Predicated region
        $region37: #{ecapa_forward.9} parent=11 // pred_check
          %p611 = pneg %p258
        $region38: #{ecapa_forward.9} parent=11 // pred_check_branch
          %613 = sbr.rel (%p611) target = $region40
        $region39: #{ecapa_forward.9} parent=11 // pred_region
          _
        $region40: #{ecapa_forward.9} parent=11 // pred_fallthru
          _
        // Predicated region
        $region41: #{ecapa_forward.9} parent=11 // pred_check
          %p614 = pneg %p279
        $region42: #{ecapa_forward.9} parent=11 // pred_check_branch
          %616 = sbr.rel (%p614) target = $region44
        $region43: #{ecapa_forward.9} parent=11 // pred_region
          _
        $region44: #{ecapa_forward.9} parent=11 // pred_fallthru
          _
        // Predicated region
        $region45: #{ecapa_forward.9} parent=11 // pred_check
          %p617 = pneg %p300
        $region46: #{ecapa_forward.9} parent=11 // pred_check_branch
          %619 = sbr.rel (%p617) target = $region48
        $region47: #{ecapa_forward.9} parent=11 // pred_region
          _
        $region48: #{ecapa_forward.9} parent=11 // pred_fallthru
          _
        // Predicated region
        $region49: #{ecapa_forward.9} parent=11 // pred_check
          %p620 = pneg %p321
        $region50: #{ecapa_forward.9} parent=11 // pred_check_branch
          %622 = sbr.rel (%p620) target = $region52
        $region51: #{ecapa_forward.9} parent=11 // pred_region
          _
        $region52: #{ecapa_forward.9} parent=11 // pred_fallthru
          _
        // Predicated region
        $region53: #{ecapa_forward.9} parent=11 // pred_check
          %p623 = pneg %p342
        $region54: #{ecapa_forward.9} parent=11 // pred_check_branch
          %625 = sbr.rel (%p623) target = $region56
        $region55: #{ecapa_forward.9} parent=11 // pred_region
          _
        $region56: #{ecapa_forward.9} parent=11 // pred_fallthru
          _
        // Predicated region
        $region57: #{ecapa_forward.9} parent=11 // pred_check
          %p626 = pneg %p363
        $region58: #{ecapa_forward.9} parent=11 // pred_check_branch
          %628 = sbr.rel (%p626) target = $region60
        $region59: #{ecapa_forward.9} parent=11 // pred_region
          _
        $region60: #{ecapa_forward.9} parent=11 // pred_fallthru
          _
        // Predicated region
        $region61: #{ecapa_forward.9} parent=11 // pred_check
          %p629 = pneg %p384
        $region62: #{ecapa_forward.9} parent=11 // pred_check_branch
          %631 = sbr.rel (%p629) target = $region64
        $region63: #{ecapa_forward.9} parent=11 // pred_region
          _
        $region64: #{ecapa_forward.9} parent=11 // pred_fallthru
          _
        // Predicated region
        $region65: #{ecapa_forward.9} parent=11 // pred_check
          %p632 = pneg %p405
        $region66: #{ecapa_forward.9} parent=11 // pred_check_branch
          %634 = sbr.rel (%p632) target = $region68
        $region67: #{ecapa_forward.9} parent=11 // pred_region
          _
        $region68: #{ecapa_forward.9} parent=11 // pred_fallthru
          _
        // Predicated region
        $region69: #{ecapa_forward.9} parent=11 // pred_check
          %p635 = pneg %p426
        $region70: #{ecapa_forward.9} parent=11 // pred_check_branch
          %637 = sbr.rel (%p635) target = $region72
        $region71: #{ecapa_forward.9} parent=11 // pred_region
          _
        $region72: #{ecapa_forward.9} parent=11 // pred_fallthru
          _
        // Predicated region
        $region73: #{ecapa_forward.9} parent=11 // pred_check
          %p638 = pneg %p447
        $region74: #{ecapa_forward.9} parent=11 // pred_check_branch
          %640 = sbr.rel (%p638) target = $region76
        $region75: #{ecapa_forward.9} parent=11 // pred_region
          _
        $region76: #{ecapa_forward.9} parent=11 // pred_fallthru
          _
        // Predicated region
        $region77: #{ecapa_forward.9} parent=11 // pred_check
          %p641 = pneg %p468
        $region78: #{ecapa_forward.9} parent=11 // pred_check_branch
          %643 = sbr.rel (%p641) target = $region80
        $region79: #{ecapa_forward.9} parent=11 // pred_region
          _
        $region80: #{ecapa_forward.9} parent=11 // pred_fallthru
          _
        // Predicated region
        $region81: #{ecapa_forward.9} parent=11 // pred_check
          %p644 = pneg %p489
        $region82: #{ecapa_forward.9} parent=11 // pred_check_branch
          %646 = sbr.rel (%p644) target = $region84
        $region83: #{ecapa_forward.9} parent=11 // pred_region
          _
        $region84: #{ecapa_forward.9} parent=11 // pred_fallthru
          _
        // Predicated region
        $region85: #{ecapa_forward.9} parent=11 // pred_check
          %p647 = pneg %p510
        $region86: #{ecapa_forward.9} parent=11 // pred_check_branch
          %649 = sbr.rel (%p647) target = $region88
        $region87: #{ecapa_forward.9} parent=11 // pred_region
          _
        $region88: #{ecapa_forward.9} parent=11 // pred_fallthru
          _
        // Predicated region
        $region89: #{ecapa_forward.9} parent=11 // pred_check
          %p650 = pneg %p531
        $region90: #{ecapa_forward.9} parent=11 // pred_check_branch
          %652 = sbr.rel (%p650) target = $region92
        $region91: #{ecapa_forward.9} parent=11 // pred_region
          _
        $region92: #{ecapa_forward.9} parent=11 // pred_fallthru
          _
        // Predicated region
        $region93: #{ecapa_forward.9} parent=11 // pred_check
          %p653 = pneg %p552
        $region94: #{ecapa_forward.9} parent=11 // pred_check_branch
          %655 = sbr.rel (%p653) target = $region96
        $region95: #{ecapa_forward.9} parent=11 // pred_region
          _
        $region96: #{ecapa_forward.9} parent=11 // pred_fallthru
          _
      $region12: #{ecapa_forward.9} parent=5 // pred_fallthru
        _
      %p656 = scmp.lt.s32.totalorder %s33, 2
      // Predicated region
      $region97: #{ecapa_forward.9} parent=5 // pred_check
        %p657 = pneg %p656
      $region98: #{ecapa_forward.9} parent=5 // pred_check_branch
        %659 = sbr.rel (%p657) target = $region100
      $region99: #{ecapa_forward.9} parent=5 // pred_region
        // Predicated region
        $region101: #{ecapa_forward.9} parent=99 // pred_check
          %p660 = pneg %p53
        $region102: #{ecapa_forward.9} parent=99 // pred_check_branch
          %662 = sbr.rel (%p660) target = $region104
        $region103: #{ecapa_forward.9} parent=99 // pred_region
          %p663 = scmp.lt.s32.totalorder %s33, 1
          %s664 = scalar_select %p663, %s33, 1
          %s665 = smul.addr %s664, 2
          %s666 = smul.addr %s665, 4
          %s667 = scalar_lea.vmem %s0, %s666
        $region104: #{ecapa_forward.9} parent=99 // pred_fallthru
          _
        // Predicated region
        $region105: #{ecapa_forward.9} parent=99 // pred_check
          %p668 = pneg %p79
        $region106: #{ecapa_forward.9} parent=99 // pred_check_branch
          %670 = sbr.rel (%p668) target = $region108
        $region107: #{ecapa_forward.9} parent=99 // pred_region
          %p671 = scmp.lt.s32.totalorder %s33, 1
          %s672 = scalar_select %p671, %s33, 1
          %s673 = smul.addr %s672, 2
          %s674 = smul.addr %s673, 4
          %s675 = scalar_lea.vmem %s1, %s674
        $region108: #{ecapa_forward.9} parent=99 // pred_fallthru
          _
        // Predicated region
        $region109: #{ecapa_forward.9} parent=99 // pred_check
          %p676 = pneg %p105
        $region110: #{ecapa_forward.9} parent=99 // pred_check_branch
          %678 = sbr.rel (%p676) target = $region112
        $region111: #{ecapa_forward.9} parent=99 // pred_region
          %p679 = scmp.lt.s32.totalorder %s33, 1
          %s680 = scalar_select %p679, %s33, 1
          %s681 = smul.addr %s680, 2
          %s682 = smul.addr %s681, 4
          %s683 = scalar_lea.vmem %s2, %s682
        $region112: #{ecapa_forward.9} parent=99 // pred_fallthru
          _
      $region100: #{ecapa_forward.9} parent=5 // pred_fallthru
        _
      %p684 = scmp.le.s32.totalorder 1, %s33
      %p685 = scmp.lt.s32.totalorder %s33, 3
      %p686 = pnand %p684, %p685
      %p687 = pneg %p686
      // Predicated region
      $region113: #{ecapa_forward.9} parent=5 // pred_check
        _
      $region114: #{ecapa_forward.9} parent=5 // pred_check_branch
        %689 = sbr.rel (%p686) target = $region116
      $region115: #{ecapa_forward.9} parent=5 // pred_region
        %s690 = ssub.s32 %s33, 1
        %p691 = scmp.lt.s32.totalorder %s38, 1
        %s692 = scalar_select %p691, %s38, 1
        %s693 = smul.addr %s692, 2
        %s694 = smul.addr %s693, 4
        %s695 = scalar_lea.vmem %s0, %s694
        %p696 = pneg %p59
        %p697 = pneg %p56
        %p698 = scmp.lt.s32.totalorder %s38, 1
        %s699 = scalar_select %p698, %s38, 1
        %s700 = smul.addr %s699, 2
        %s701 = smul.addr %s700, 4
        %s702 = scalar_lea.vmem %s1, %s701
        %p703 = pneg %p85
        %p704 = pneg %p82
        %p705 = scmp.lt.s32.totalorder %s38, 1
        %s706 = scalar_select %p705, %s38, 1
        %s707 = smul.addr %s706, 2
        %s708 = smul.addr %s707, 4
        %s709 = scalar_lea.vmem %s2, %s708
        %p710 = pneg %p111
        %p711 = pneg %p108
        %p712 = pneg %p132
        %p713 = pneg %p129
        %p714 = pneg %p153
        %p715 = pneg %p150
        %p716 = pneg %p174
        %p717 = pneg %p171
        %p718 = pneg %p195
        %p719 = pneg %p192
        %p720 = pneg %p216
        %p721 = pneg %p213
        %p722 = pneg %p237
        %p723 = pneg %p234
        %p724 = pneg %p258
        %p725 = pneg %p255
        %p726 = pneg %p279
        %p727 = pneg %p276
        %p728 = pneg %p300
        %p729 = pneg %p297
        %p730 = pneg %p321
        %p731 = pneg %p318
        %p732 = pneg %p342
        %p733 = pneg %p339
        %p734 = pneg %p363
        %p735 = pneg %p360
        %p736 = pneg %p384
        %p737 = pneg %p381
        %p738 = pneg %p405
        %p739 = pneg %p402
        %p740 = pneg %p426
        %p741 = pneg %p423
        %p742 = pneg %p447
        %p743 = pneg %p444
        %p744 = pneg %p468
        %p745 = pneg %p465
        %p746 = pneg %p489
        %p747 = pneg %p486
        %p748 = pneg %p510
        %p749 = pneg %p507
        %p750 = pneg %p531
        %p751 = pneg %p528
        %p752 = pneg %p552
        %p753 = pneg %p549
        %p754 = pneg %p578
        %p755 = pneg %p575
        %s756 = sand.u32 %s565, 1
        %s757 = scalar_lea.sflag [#allocation3], %s756
        %s758 = sand.u32 %s565, 1
        %s759 = scalar_lea.vmem [#allocation2], %s758
        %p760 = scmp.lt.s32.totalorder %s38, 1
        %s761 = scalar_select %p760, %s38, 1
        %s762 = smul.addr %s761, 2
        %s763 = smul.addr %s762, 4
        %s764 = scalar_lea.vmem %s0, %s763
        %p765 = scmp.lt.s32.totalorder %s38, 1
        %s766 = scalar_select %p765, %s38, 1
        %s767 = smul.addr %s766, 2
        %s768 = smul.addr %s767, 4
        %s769 = scalar_lea.vmem %s1, %s768
        %p770 = scmp.lt.s32.totalorder %s38, 1
        %s771 = scalar_select %p770, %s38, 1
        %s772 = smul.addr %s771, 2
        %s773 = smul.addr %s772, 4
        %s774 = scalar_lea.vmem %s2, %s773
        %v776 = vld [vmem:[%s764] sm:$0xf]
        %v777 = vld [vmem:[%s764 + $0x4] sm:$0xf]
        %v778 = vld [vmem:[%s3] sm:$0xff]
        %v779 = vld [vmem:[%s3 + $0x8] sm:$0xff]
        %v780 = vld [vmem:[%s3 + $0x10] sm:$0xff]
        %v781 = vld [vmem:[%s3 + $0x18] sm:$0xff]
        %v782 = vld [vmem:[%s3 + $0x20] sm:$0xff]
        %v783 = vld [vmem:[%s3 + $0x28] sm:$0xff]
        %v784 = vld [vmem:[%s3 + $0x30] sm:$0xff]
        %v785 = vld [vmem:[%s3 + $0x38] sm:$0xff]
        %v786 = vld [vmem:[%s769] sm:$0xf]
        %v787 = vld [vmem:[%s769 + $0x4] sm:$0xf]
        %v788 = vld [vmem:[%s4] sm:$0xff]
        %v789 = vld [vmem:[%s4 + $0x8] sm:$0xff]
        %v790 = vld [vmem:[%s4 + $0x10] sm:$0xff]
        %v791 = vld [vmem:[%s4 + $0x18] sm:$0xff]
        %v792 = vld [vmem:[%s4 + $0x20] sm:$0xff]
        %v793 = vld [vmem:[%s4 + $0x28] sm:$0xff]
        %v794 = vld [vmem:[%s4 + $0x30] sm:$0xff]
        %v795 = vld [vmem:[%s4 + $0x38] sm:$0xff]
        %v798 = vunpack.c.l.b16 %v786
        %v799 = vunpack.c.l.b16 %v787
        %v800 = vpack.c.b16 %v799, %v798
        %v809 = vunpack.c.l.b16 %v788
        %v810 = vunpack.c.h.b16 %v788
        %v811 = vunpack.c.l.b16 %v789
        %v812 = vunpack.c.h.b16 %v789
        %v813 = vunpack.c.l.b16 %v790
        %v814 = vunpack.c.h.b16 %v790
        %v815 = vunpack.c.l.b16 %v791
        %v816 = vunpack.c.h.b16 %v791
        %v817 = vunpack.c.l.b16 %v792
        %v818 = vunpack.c.h.b16 %v792
        %v819 = vunpack.c.l.b16 %v793
        %v820 = vunpack.c.h.b16 %v793
        %v821 = vunpack.c.l.b16 %v794
        %v822 = vunpack.c.h.b16 %v794
        %v823 = vunpack.c.l.b16 %v795
        %v824 = vunpack.c.h.b16 %v795
        %v825 = vpack.c.b16 %v811, %v809
        %v826 = vpack.c.b16 %v812, %v810
        %v827 = vpack.c.b16 %v815, %v813
        %v828 = vpack.c.b16 %v816, %v814
        %v829 = vpack.c.b16 %v819, %v817
        %v830 = vpack.c.b16 %v820, %v818
        %v831 = vpack.c.b16 %v823, %v821
        %v832 = vpack.c.b16 %v824, %v822
        %vm841 = vcmask 523264
        %v843 = vsel %vm841, %v800, 0
        %845 = vmatprep.subr.bf16.mxu0 %v826
        %846 = vmatpush1.bf16.msra.mxu0 %v825
        %847 = vmatprep.subr.bf16.mxu0 %v828
        %848 = vmatpush1.bf16.msra.mxu0 %v827
        %849 = vmatprep.subr.bf16.mxu0 %v830
        %850 = vmatpush1.bf16.msra.mxu0 %v829
        %851 = vmatprep.subr.bf16.mxu0 %v832
        %852 = vmatpush1.bf16.msra.mxu0 %v831
        %853 = vmatprep.subr.bf16.mxu0 0
        %854 = vmatpush1.bf16.msra.mxu0 0
        %855 = vmatprep.subr.bf16.mxu0 0
        %856 = vmatpush1.bf16.msra.mxu0 0
        %857 = vmatprep.subr.bf16.mxu0 0
        %858 = vmatpush1.bf16.msra.mxu0 0
        %859 = vmatprep.subr.bf16.mxu0 0
        %860 = vmatpush1.bf16.msra.mxu0 0
        %861 = vmatprep.subr.bf16.mxu0 0
        %862 = vmatpush1.bf16.msra.mxu0 0
        %863 = vmatprep.subr.bf16.mxu0 0
        %864 = vmatpush1.bf16.msra.mxu0 0
        %865 = vmatprep.subr.bf16.mxu0 0
        %866 = vmatpush1.bf16.msra.mxu0 0
        %867 = vmatprep.subr.bf16.mxu0 0
        %868 = vmatpush1.bf16.msra.mxu0 0
        %869 = vmatprep.subr.bf16.mxu0 0
        %870 = vmatpush1.bf16.msra.mxu0 0
        %871 = vmatprep.subr.bf16.mxu0 0
        %872 = vmatpush1.bf16.msra.mxu0 0
        %873 = vmatprep.subr.bf16.mxu0 0
        %874 = vmatpush1.bf16.msra.mxu0 0
        %875 = vmatprep.subr.bf16.mxu0 0
        %876 = vmatpush1.bf16.msra.mxu0 0
        %877 = vmatprep.mubr.bf16.mxu0 0
        %878 = vmatmul.mubr.bf16.gmra.mrb[0].mxu0 %v843
        %v879 = vpop.f32.mrb[0].mxu0
        %v880 = vadd.f32 0.0, %v879
        %v881 = vpop.f32.mrb[0].mxu0
        %v882 = vadd.f32 0.0, %v881
        %v883 = vpop.f32.mrb[0].mxu0
        %v884 = vadd.f32 0.0, %v883
        %v885 = vpop.f32.mrb[0].mxu0
        %v886 = vadd.f32 0.0, %v885
        %887 = vdwg.mxu0
        %v890 = vunpack.c.l.b16 %v776
        %v891 = vunpack.c.l.b16 %v777
        %v892 = vpack.c.b16 %v891, %v890
        %v901 = vunpack.c.l.b16 %v778
        %v902 = vunpack.c.h.b16 %v778
        %v903 = vunpack.c.l.b16 %v779
        %v904 = vunpack.c.h.b16 %v779
        %v905 = vunpack.c.l.b16 %v780
        %v906 = vunpack.c.h.b16 %v780
        %v907 = vunpack.c.l.b16 %v781
        %v908 = vunpack.c.h.b16 %v781
        %v909 = vunpack.c.l.b16 %v782
        %v910 = vunpack.c.h.b16 %v782
        %v911 = vunpack.c.l.b16 %v783
        %v912 = vunpack.c.h.b16 %v783
        %v913 = vunpack.c.l.b16 %v784
        %v914 = vunpack.c.h.b16 %v784
        %v915 = vunpack.c.l.b16 %v785
        %v916 = vunpack.c.h.b16 %v785
        %v917 = vpack.c.b16 %v903, %v901
        %v918 = vpack.c.b16 %v904, %v902
        %v919 = vpack.c.b16 %v907, %v905
        %v920 = vpack.c.b16 %v908, %v906
        %v921 = vpack.c.b16 %v911, %v909
        %v922 = vpack.c.b16 %v912, %v910
        %v923 = vpack.c.b16 %v915, %v913
        %v924 = vpack.c.b16 %v916, %v914
        %v934 = vsel %vm841, %v892, 0
        %936 = vmatprep.subr.bf16.mxu0 %v918
        %937 = vmatpush1.bf16.msra.mxu0 %v917
        %938 = vmatprep.subr.bf16.mxu0 %v920
        %939 = vmatpush1.bf16.msra.mxu0 %v919
        %940 = vmatprep.subr.bf16.mxu0 %v922
        %941 = vmatpush1.bf16.msra.mxu0 %v921
        %942 = vmatprep.subr.bf16.mxu0 %v924
        %943 = vmatpush1.bf16.msra.mxu0 %v923
        %944 = vmatprep.subr.bf16.mxu0 0
        %945 = vmatpush1.bf16.msra.mxu0 0
        %946 = vmatprep.subr.bf16.mxu0 0
        %947 = vmatpush1.bf16.msra.mxu0 0
        %948 = vmatprep.subr.bf16.mxu0 0
        %949 = vmatpush1.bf16.msra.mxu0 0
        %950 = vmatprep.subr.bf16.mxu0 0
        %951 = vmatpush1.bf16.msra.mxu0 0
        %952 = vmatprep.subr.bf16.mxu0 0
        %953 = vmatpush1.bf16.msra.mxu0 0
        %954 = vmatprep.subr.bf16.mxu0 0
        %955 = vmatpush1.bf16.msra.mxu0 0
        %956 = vmatprep.subr.bf16.mxu0 0
        %957 = vmatpush1.bf16.msra.mxu0 0
        %958 = vmatprep.subr.bf16.mxu0 0
        %959 = vmatpush1.bf16.msra.mxu0 0
        %960 = vmatprep.subr.bf16.mxu0 0
        %961 = vmatpush1.bf16.msra.mxu0 0
        %962 = vmatprep.subr.bf16.mxu0 0
        %963 = vmatpush1.bf16.msra.mxu0 0
        %964 = vmatprep.subr.bf16.mxu0 0
        %965 = vmatpush1.bf16.msra.mxu0 0
        %966 = vmatprep.subr.bf16.mxu0 0
        %967 = vmatpush1.bf16.msra.mxu0 0
        %968 = vmatprep.mubr.bf16.mxu0 0
        %969 = vmatmul.mubr.bf16.gmra.mrb[0].mxu0 %v934
        %v970 = vpop.f32.mrb[0].mxu0
        %v971 = vadd.f32 %v880, %v970
        %v972 = vpop.f32.mrb[0].mxu0
        %v973 = vadd.f32 %v882, %v972
        %v974 = vpop.f32.mrb[0].mxu0
        %v975 = vadd.f32 %v884, %v974
        %v976 = vpop.f32.mrb[0].mxu0
        %v977 = vadd.f32 %v886, %v976
        %978 = vdwg.mxu0
        %v979 = vld [vmem:[%s774] sm:$0xf]
        %v980 = vld [vmem:[%s774 + $0x4] sm:$0xf]
        %v981 = vld [vmem:[%s5] sm:$0xff]
        %v982 = vld [vmem:[%s5 + $0x8] sm:$0xff]
        %v983 = vld [vmem:[%s5 + $0x10] sm:$0xff]
        %v984 = vld [vmem:[%s5 + $0x18] sm:$0xff]
        %v985 = vld [vmem:[%s5 + $0x20] sm:$0xff]
        %v986 = vld [vmem:[%s5 + $0x28] sm:$0xff]
        %v987 = vld [vmem:[%s5 + $0x30] sm:$0xff]
        %v988 = vld [vmem:[%s5 + $0x38] sm:$0xff]
        %v991 = vunpack.c.l.b16 %v979
        %v992 = vunpack.c.l.b16 %v980
        %v993 = vpack.c.b16 %v992, %v991
        %v1002 = vunpack.c.l.b16 %v981
        %v1003 = vunpack.c.h.b16 %v981
        %v1004 = vunpack.c.l.b16 %v982
        %v1005 = vunpack.c.h.b16 %v982
        %v1006 = vunpack.c.l.b16 %v983
        %v1007 = vunpack.c.h.b16 %v983
        %v1008 = vunpack.c.l.b16 %v984
        %v1009 = vunpack.c.h.b16 %v984
        %v1010 = vunpack.c.l.b16 %v985
        %v1011 = vunpack.c.h.b16 %v985
        %v1012 = vunpack.c.l.b16 %v986
        %v1013 = vunpack.c.h.b16 %v986
        %v1014 = vunpack.c.l.b16 %v987
        %v1015 = vunpack.c.h.b16 %v987
        %v1016 = vunpack.c.l.b16 %v988
        %v1017 = vunpack.c.h.b16 %v988
        %v1018 = vpack.c.b16 %v1004, %v1002
        %v1019 = vpack.c.b16 %v1005, %v1003
        %v1020 = vpack.c.b16 %v1008, %v1006
        %v1021 = vpack.c.b16 %v1009, %v1007
        %v1022 = vpack.c.b16 %v1012, %v1010
        %v1023 = vpack.c.b16 %v1013, %v1011
        %v1024 = vpack.c.b16 %v1016, %v1014
        %v1025 = vpack.c.b16 %v1017, %v1015
        %v1035 = vsel %vm841, %v993, 0
        %1037 = vmatprep.subr.bf16.mxu0 %v1019
        %1038 = vmatpush1.bf16.msra.mxu0 %v1018
        %1039 = vmatprep.subr.bf16.mxu0 %v1021
        %1040 = vmatpush1.bf16.msra.mxu0 %v1020
        %1041 = vmatprep.subr.bf16.mxu0 %v1023
        %1042 = vmatpush1.bf16.msra.mxu0 %v1022
        %1043 = vmatprep.subr.bf16.mxu0 %v1025
        %1044 = vmatpush1.bf16.msra.mxu0 %v1024
        %1045 = vmatprep.subr.bf16.mxu0 0
        %1046 = vmatpush1.bf16.msra.mxu0 0
        %1047 = vmatprep.subr.bf16.mxu0 0
        %1048 = vmatpush1.bf16.msra.mxu0 0
        %1049 = vmatprep.subr.bf16.mxu0 0
        %1050 = vmatpush1.bf16.msra.mxu0 0
        %1051 = vmatprep.subr.bf16.mxu0 0
        %1052 = vmatpush1.bf16.msra.mxu0 0
        %1053 = vmatprep.subr.bf16.mxu0 0
        %1054 = vmatpush1.bf16.msra.mxu0 0
        %1055 = vmatprep.subr.bf16.mxu0 0
        %1056 = vmatpush1.bf16.msra.mxu0 0
        %1057 = vmatprep.subr.bf16.mxu0 0
        %1058 = vmatpush1.bf16.msra.mxu0 0
        %1059 = vmatprep.subr.bf16.mxu0 0
        %1060 = vmatpush1.bf16.msra.mxu0 0
        %1061 = vmatprep.subr.bf16.mxu0 0
        %1062 = vmatpush1.bf16.msra.mxu0 0
        %1063 = vmatprep.subr.bf16.mxu0 0
        %1064 = vmatpush1.bf16.msra.mxu0 0
        %1065 = vmatprep.subr.bf16.mxu0 0
        %1066 = vmatpush1.bf16.msra.mxu0 0
        %1067 = vmatprep.subr.bf16.mxu0 0
        %1068 = vmatpush1.bf16.msra.mxu0 0
        %1069 = vmatprep.mubr.bf16.mxu0 0
        %1070 = vmatmul.mubr.bf16.gmra.mrb[0].mxu0 %v1035
        %v1071 = vpop.f32.mrb[0].mxu0
        %v1072 = vadd.f32 0.0, %v1071
        %v1073 = vpop.f32.mrb[0].mxu0
        %v1074 = vadd.f32 0.0, %v1073
        %v1075 = vpop.f32.mrb[0].mxu0
        %v1076 = vadd.f32 0.0, %v1075
        %v1077 = vpop.f32.mrb[0].mxu0
        %v1078 = vadd.f32 0.0, %v1077
        %1079 = vdwg.mxu0
        %v1080 = vadd.f32 %v971, %v1072
        %v1081 = vadd.f32 %v973, %v1074
        %v1082 = vadd.f32 %v975, %v1076
        %v1083 = vadd.f32 %v977, %v1078
        %v1084 = vld [vmem:[%s6] sm:$0x3]
        %v1086 = vlaneseq
        %v1087 = vshrl.u32 %v1086, 7
        %v1088 = vsub.s32 0, %v1087
        %v1089 = vrot.slane %v1084, %v1088
        %v1090 = vlaneseq
        %v1091 = vshrl.u32 %v1090, 7
        %v1092 = vsub.s32 1, %v1091
        %v1093 = vrot.slane %v1084, %v1092
        %v1096 = vadd.f32 %v1080, %v1089
        %v1097 = vadd.f32 %v1081, %v1093
        %v1098 = vadd.f32 %v1082, %v1089
        %v1099 = vadd.f32 %v1083, %v1093
        %v1100 = vmax.f32 %v1096, 0.0
        %v1101 = vmax.f32 %v1097, 0.0
        %v1102 = vmax.f32 %v1098, 0.0
        %v1103 = vmax.f32 %v1099, 0.0
        %v1104 = vadd.f32 %v1100, %v1102
        %v1105 = vrot.slane %v1104, 4
        %v1106 = vadd.f32 %v1104, %v1105
        %v1107 = vrot.slane %v1106, 2
        %v1108 = vadd.f32 %v1106, %v1107
        %v1109 = vrot.slane %v1108, 1
        %v1110 = vadd.f32 %v1108, %v1109
        %v1111 = vsel %vm841, %v1101, 0.0
        %v1112 = vsel %vm841, %v1103, 0.0
        %v1113 = vadd.f32 %v1111, %v1112
        %v1114 = vrot.slane %v1113, 4
        %v1115 = vadd.f32 %v1113, %v1114
        %v1116 = vrot.slane %v1115, 2
        %v1117 = vadd.f32 %v1115, %v1116
        %v1118 = vrot.slane %v1117, 1
        %v1119 = vadd.f32 %v1117, %v1118
        %v1120 = vrcp.pop 16.0
        %v1121 = vmul.f32 %v1110, %v1120
        %v1122 = vmul.f32 %v1119, %v1120
        %v1123 = vsub.f32 %v1100, %v1121
        %v1124 = vsub.f32 %v1101, %v1122
        %v1125 = vsub.f32 %v1102, %v1121
        %v1126 = vsub.f32 %v1103, %v1122
        %v1127 = vmul.f32 %v1123, %v1123
        %v1128 = vmul.f32 %v1124, %v1124
        %v1129 = vmul.f32 %v1125, %v1125
        %v1130 = vmul.f32 %v1126, %v1126
        %v1131 = vadd.f32 %v1127, %v1129
        %v1132 = vrot.slane %v1131, 4
        %v1133 = vadd.f32 %v1131, %v1132
        %v1134 = vrot.slane %v1133, 2
        %v1135 = vadd.f32 %v1133, %v1134
        %v1136 = vrot.slane %v1135, 1
        %v1137 = vadd.f32 %v1135, %v1136
        %v1138 = vsel %vm841, %v1128, 0.0
        %v1139 = vsel %vm841, %v1130, 0.0
        %v1140 = vadd.f32 %v1138, %v1139
        %v1141 = vrot.slane %v1140, 4
        %v1142 = vadd.f32 %v1140, %v1141
        %v1143 = vrot.slane %v1142, 2
        %v1144 = vadd.f32 %v1142, %v1143
        %v1145 = vrot.slane %v1144, 1
        %v1146 = vadd.f32 %v1144, %v1145
        %v1147 = vmul.f32 %v1137, 0.06666667
        %v1148 = vmul.f32 %v1146, 0.06666667
        %v1149 = vrsqrt.pop %v1147
        %v1150 = vmul.f32 %v1147, %v1149
        %vm1151 = vcmp.eq.f32.partialorder %v1147, inf
        %v1152 = vsel %vm1151, %v1147, %v1150
        %vm1153 = vcmp.eq.f32.partialorder %v1147, 0.0
        %v1154 = vand.u32 %v1147, 2147483648
        %v1155 = vsel %vm1153, %v1154, %v1152
        %v1156 = vrsqrt.pop %v1148
        %v1157 = vmul.f32 %v1148, %v1156
        %vm1158 = vcmp.eq.f32.partialorder %v1148, inf
        %v1159 = vsel %vm1158, %v1148, %v1157
        %vm1160 = vcmp.eq.f32.partialorder %v1148, 0.0
        %v1161 = vand.u32 %v1148, 2147483648
        %v1162 = vsel %vm1160, %v1161, %v1159
        %v1163 = vmax.f32 %v1155, 1e-05
        %v1164 = vmax.f32 %v1162, 1e-05
        %v1165 = vpack.c.bf16 %v1102, %v1100
        %v1166 = vpack.c.bf16 %v1103, %v1101
        %v1167 = vld [vmem:[%s7] sm:$0xf]
        %v1168 = vld [vmem:[%s7 + $0x4] sm:$0xf]
        %v1169 = vld [vmem:[%s7 + $0x8] sm:$0xf]
        %v1170 = vld [vmem:[%s7 + $0xc] sm:$0xf]
        %v1171 = vld [vmem:[%s7 + $0x10] sm:$0xf]
        %v1172 = vld [vmem:[%s7 + $0x14] sm:$0xf]
        %v1173 = vld [vmem:[%s7 + $0x18] sm:$0xf]
        %v1174 = vld [vmem:[%s7 + $0x1c] sm:$0xf]
        %v1175 = vld [vmem:[%s7 + $0x20] sm:$0xf]
        %v1176 = vld [vmem:[%s7 + $0x24] sm:$0xf]
        %v1177 = vld [vmem:[%s7 + $0x28] sm:$0xf]
        %v1178 = vld [vmem:[%s7 + $0x2c] sm:$0xf]
        %v1179 = vld [vmem:[%s7 + $0x30] sm:$0xf]
        %v1180 = vld [vmem:[%s7 + $0x34] sm:$0xf]
        %v1181 = vld [vmem:[%s7 + $0x38] sm:$0xf]
        %v1182 = vld [vmem:[%s7 + $0x3c] sm:$0xf]
        %v1183 = vld [vmem:[%s7 + $0x40] sm:$0xf]
        %v1184 = vld [vmem:[%s7 + $0x44] sm:$0xf]
        %v1185 = vld [vmem:[%s7 + $0x48] sm:$0xf]
        %v1186 = vld [vmem:[%s7 + $0x4c] sm:$0xf]
        %v1187 = vld [vmem:[%s7 + $0x50] sm:$0xf]
        %v1188 = vld [vmem:[%s7 + $0x54] sm:$0xf]
        %v1189 = vld [vmem:[%s7 + $0x58] sm:$0xf]
        %v1190 = vld [vmem:[%s7 + $0x5c] sm:$0xf]
        %v1191 = vpack.c.bf16 %v1121, %v1121
        %v1192 = vpack.c.bf16 %v1122, %v1122
        %v1193 = vld [vmem:[%s8] sm:$0xf]
        %v1194 = vld [vmem:[%s8 + $0x4] sm:$0xf]
        %v1195 = vld [vmem:[%s8 + $0x8] sm:$0xf]
        %v1196 = vld [vmem:[%s8 + $0xc] sm:$0xf]
        %v1197 = vld [vmem:[%s8 + $0x10] sm:$0xf]
        %v1198 = vld [vmem:[%s8 + $0x14] sm:$0xf]
        %v1199 = vld [vmem:[%s8 + $0x18] sm:$0xf]
        %v1200 = vld [vmem:[%s8 + $0x1c] sm:$0xf]
        %v1201 = vld [vmem:[%s8 + $0x20] sm:$0xf]
        %v1202 = vld [vmem:[%s8 + $0x24] sm:$0xf]
        %v1203 = vld [vmem:[%s8 + $0x28] sm:$0xf]
        %v1204 = vld [vmem:[%s8 + $0x2c] sm:$0xf]
        %v1205 = vld [vmem:[%s8 + $0x30] sm:$0xf]
        %v1206 = vld [vmem:[%s8 + $0x34] sm:$0xf]
        %v1207 = vld [vmem:[%s8 + $0x38] sm:$0xf]
        %v1208 = vld [vmem:[%s8 + $0x3c] sm:$0xf]
        %v1209 = vld [vmem:[%s8 + $0x40] sm:$0xf]
        %v1210 = vld [vmem:[%s8 + $0x44] sm:$0xf]
        %v1211 = vld [vmem:[%s8 + $0x48] sm:$0xf]
        %v1212 = vld [vmem:[%s8 + $0x4c] sm:$0xf]
        %v1213 = vld [vmem:[%s8 + $0x50] sm:$0xf]
        %v1214 = vld [vmem:[%s8 + $0x54] sm:$0xf]
        %v1215 = vld [vmem:[%s8 + $0x58] sm:$0xf]
        %v1216 = vld [vmem:[%s8 + $0x5c] sm:$0xf]
        %v1241 = vunpack.c.l.b16 %v1193
        %v1242 = vunpack.c.l.b16 %v1194
        %v1243 = vunpack.c.l.b16 %v1195
        %v1244 = vunpack.c.l.b16 %v1196
        %v1245 = vunpack.c.l.b16 %v1197
        %v1246 = vunpack.c.l.b16 %v1198
        %v1247 = vunpack.c.l.b16 %v1199
        %v1248 = vunpack.c.l.b16 %v1200
        %v1249 = vunpack.c.l.b16 %v1201
        %v1250 = vunpack.c.l.b16 %v1202
        %v1251 = vunpack.c.l.b16 %v1203
        %v1252 = vunpack.c.l.b16 %v1204
        %v1253 = vunpack.c.l.b16 %v1205
        %v1254 = vunpack.c.l.b16 %v1206
        %v1255 = vunpack.c.l.b16 %v1207
        %v1256 = vunpack.c.l.b16 %v1208
        %v1257 = vunpack.c.l.b16 %v1209
        %v1258 = vunpack.c.l.b16 %v1210
        %v1259 = vunpack.c.l.b16 %v1211
        %v1260 = vunpack.c.l.b16 %v1212
        %v1261 = vunpack.c.l.b16 %v1213
        %v1262 = vunpack.c.l.b16 %v1214
        %v1263 = vunpack.c.l.b16 %v1215
        %v1264 = vunpack.c.l.b16 %v1216
        %v1265 = vpack.c.b16 %v1242, %v1241
        %v1266 = vpack.c.b16 %v1244, %v1243
        %v1267 = vpack.c.b16 %v1246, %v1245
        %v1268 = vpack.c.b16 %v1248, %v1247
        %v1269 = vpack.c.b16 %v1250, %v1249
        %v1270 = vpack.c.b16 %v1252, %v1251
        %v1271 = vpack.c.b16 %v1254, %v1253
        %v1272 = vpack.c.b16 %v1256, %v1255
        %v1273 = vpack.c.b16 %v1258, %v1257
        %v1274 = vpack.c.b16 %v1260, %v1259
        %v1275 = vpack.c.b16 %v1262, %v1261
        %v1276 = vpack.c.b16 %v1264, %v1263
        %v1290 = vsel %vm841, %v1192, 0
        %1292 = vmatprep.subr.bf16.mxu0 0
        %1293 = vmatpush1.bf16.msra.mxu0 %v1265
        %1294 = vmatprep.subr.bf16.mxu0 0
        %1295 = vmatpush1.bf16.msra.mxu0 %v1266
        %1296 = vmatprep.subr.bf16.mxu0 0
        %1297 = vmatpush1.bf16.msra.mxu0 %v1267
        %1298 = vmatprep.subr.bf16.mxu0 0
        %1299 = vmatpush1.bf16.msra.mxu0 %v1268
        %1300 = vmatprep.subr.bf16.mxu0 0
        %1301 = vmatpush1.bf16.msra.mxu0 %v1269
        %1302 = vmatprep.subr.bf16.mxu0 0
        %1303 = vmatpush1.bf16.msra.mxu0 %v1270
        %1304 = vmatprep.subr.bf16.mxu0 0
        %1305 = vmatpush1.bf16.msra.mxu0 %v1271
        %1306 = vmatprep.subr.bf16.mxu0 0
        %1307 = vmatpush1.bf16.msra.mxu0 %v1272
        %1308 = vmatprep.subr.bf16.mxu0 0
        %1309 = vmatpush1.bf16.msra.mxu0 %v1273
        %1310 = vmatprep.subr.bf16.mxu0 0
        %1311 = vmatpush1.bf16.msra.mxu0 %v1274
        %1312 = vmatprep.subr.bf16.mxu0 0
        %1313 = vmatpush1.bf16.msra.mxu0 %v1275
        %1314 = vmatprep.subr.bf16.mxu0 0
        %1315 = vmatpush1.bf16.msra.mxu0 %v1276
        %1316 = vmatprep.subr.bf16.mxu0 0
        %1317 = vmatpush1.bf16.msra.mxu0 0
        %1318 = vmatprep.subr.bf16.mxu0 0
        %1319 = vmatpush1.bf16.msra.mxu0 0
        %1320 = vmatprep.subr.bf16.mxu0 0
        %1321 = vmatpush1.bf16.msra.mxu0 0
        %1322 = vmatprep.subr.bf16.mxu0 0
        %1323 = vmatpush1.bf16.msra.mxu0 0
        %1324 = vmatprep.mubr.bf16.mxu0 %v1290
        %1325 = vmatmul.mubr.bf16.gmra.mrb[0].mxu0 %v1191
        %v1326 = vpop.f32.mrb[0].mxu0
        %v1327 = vadd.f32 0.0, %v1326
        %v1328 = vpop.f32.mrb[0].mxu0
        %v1329 = vpop.f32.mrb[0].mxu0
        %v1330 = vpop.f32.mrb[0].mxu0
        %1331 = vdwg.mxu0
        %v1332 = vlaneseq
        %v1333 = vshrl.u32 %v1332, 7
        %v1334 = vsub.s32 0, %v1333
        %v1335 = vrot.slane %v1327, %v1334
        %v1360 = vunpack.c.l.b16 %v1167
        %v1361 = vunpack.c.l.b16 %v1168
        %v1362 = vunpack.c.l.b16 %v1169
        %v1363 = vunpack.c.l.b16 %v1170
        %v1364 = vunpack.c.l.b16 %v1171
        %v1365 = vunpack.c.l.b16 %v1172
        %v1366 = vunpack.c.l.b16 %v1173
        %v1367 = vunpack.c.l.b16 %v1174
        %v1368 = vunpack.c.l.b16 %v1175
        %v1369 = vunpack.c.l.b16 %v1176
        %v1370 = vunpack.c.l.b16 %v1177
        %v1371 = vunpack.c.l.b16 %v1178
        %v1372 = vunpack.c.l.b16 %v1179
        %v1373 = vunpack.c.l.b16 %v1180
        %v1374 = vunpack.c.l.b16 %v1181
        %v1375 = vunpack.c.l.b16 %v1182
        %v1376 = vunpack.c.l.b16 %v1183
        %v1377 = vunpack.c.l.b16 %v1184
        %v1378 = vunpack.c.l.b16 %v1185
        %v1379 = vunpack.c.l.b16 %v1186
        %v1380 = vunpack.c.l.b16 %v1187
        %v1381 = vunpack.c.l.b16 %v1188
        %v1382 = vunpack.c.l.b16 %v1189
        %v1383 = vunpack.c.l.b16 %v1190
        %v1384 = vpack.c.b16 %v1361, %v1360
        %v1385 = vpack.c.b16 %v1363, %v1362
        %v1386 = vpack.c.b16 %v1365, %v1364
        %v1387 = vpack.c.b16 %v1367, %v1366
        %v1388 = vpack.c.b16 %v1369, %v1368
        %v1389 = vpack.c.b16 %v1371, %v1370
        %v1390 = vpack.c.b16 %v1373, %v1372
        %v1391 = vpack.c.b16 %v1375, %v1374
        %v1392 = vpack.c.b16 %v1377, %v1376
        %v1393 = vpack.c.b16 %v1379, %v1378
        %v1394 = vpack.c.b16 %v1381, %v1380
        %v1395 = vpack.c.b16 %v1383, %v1382
        %v1409 = vsel %vm841, %v1166, 0
        %1411 = vmatprep.subr.bf16.mxu0 0
        %1412 = vmatpush1.bf16.msra.mxu0 %v1384
        %1413 = vmatprep.subr.bf16.mxu0 0
        %1414 = vmatpush1.bf16.msra.mxu0 %v1385
        %1415 = vmatprep.subr.bf16.mxu0 0
        %1416 = vmatpush1.bf16.msra.mxu0 %v1386
        %1417 = vmatprep.subr.bf16.mxu0 0
        %1418 = vmatpush1.bf16.msra.mxu0 %v1387
        %1419 = vmatprep.subr.bf16.mxu0 0
        %1420 = vmatpush1.bf16.msra.mxu0 %v1388
        %1421 = vmatprep.subr.bf16.mxu0 0
        %1422 = vmatpush1.bf16.msra.mxu0 %v1389
        %1423 = vmatprep.subr.bf16.mxu0 0
        %1424 = vmatpush1.bf16.msra.mxu0 %v1390
        %1425 = vmatprep.subr.bf16.mxu0 0
        %1426 = vmatpush1.bf16.msra.mxu0 %v1391
        %1427 = vmatprep.subr.bf16.mxu0 0
        %1428 = vmatpush1.bf16.msra.mxu0 %v1392
        %1429 = vmatprep.subr.bf16.mxu0 0
        %1430 = vmatpush1.bf16.msra.mxu0 %v1393
        %1431 = vmatprep.subr.bf16.mxu0 0
        %1432 = vmatpush1.bf16.msra.mxu0 %v1394
        %1433 = vmatprep.subr.bf16.mxu0 0
        %1434 = vmatpush1.bf16.msra.mxu0 %v1395
        %1435 = vmatprep.subr.bf16.mxu0 0
        %1436 = vmatpush1.bf16.msra.mxu0 0
        %1437 = vmatprep.subr.bf16.mxu0 0
        %1438 = vmatpush1.bf16.msra.mxu0 0
        %1439 = vmatprep.subr.bf16.mxu0 0
        %1440 = vmatpush1.bf16.msra.mxu0 0
        %1441 = vmatprep.subr.bf16.mxu0 0
        %1442 = vmatpush1.bf16.msra.mxu0 0
        %1443 = vmatprep.mubr.bf16.mxu0 %v1409
        %1444 = vmatmul.mubr.bf16.gmra.mrb[0].mxu0 %v1165
        %v1445 = vpop.f32.mrb[0].mxu0
        %v1446 = vadd.f32 %v1335, %v1445
        %v1447 = vpop.f32.mrb[0].mxu0
        %v1448 = vpop.f32.mrb[0].mxu0
        %v1449 = vadd.f32 %v1335, %v1448
        %v1450 = vpop.f32.mrb[0].mxu0
        %1451 = vdwg.mxu0
        %v1452 = vpack.c.bf16 %v1163, %v1163
        %v1453 = vpack.c.bf16 %v1164, %v1164
        %v1454 = vld [vmem:[%s9] sm:$0xf]
        %v1455 = vld [vmem:[%s9 + $0x4] sm:$0xf]
        %v1456 = vld [vmem:[%s9 + $0x8] sm:$0xf]
        %v1457 = vld [vmem:[%s9 + $0xc] sm:$0xf]
        %v1458 = vld [vmem:[%s9 + $0x10] sm:$0xf]
        %v1459 = vld [vmem:[%s9 + $0x14] sm:$0xf]
        %v1460 = vld [vmem:[%s9 + $0x18] sm:$0xf]
        %v1461 = vld [vmem:[%s9 + $0x1c] sm:$0xf]
        %v1462 = vld [vmem:[%s9 + $0x20] sm:$0xf]
        %v1463 = vld [vmem:[%s9 + $0x24] sm:$0xf]
        %v1464 = vld [vmem:[%s9 + $0x28] sm:$0xf]
        %v1465 = vld [vmem:[%s9 + $0x2c] sm:$0xf]
        %v1466 = vld [vmem:[%s9 + $0x30] sm:$0xf]
        %v1467 = vld [vmem:[%s9 + $0x34] sm:$0xf]
        %v1468 = vld [vmem:[%s9 + $0x38] sm:$0xf]
        %v1469 = vld [vmem:[%s9 + $0x3c] sm:$0xf]
        %v1470 = vld [vmem:[%s9 + $0x40] sm:$0xf]
        %v1471 = vld [vmem:[%s9 + $0x44] sm:$0xf]
        %v1472 = vld [vmem:[%s9 + $0x48] sm:$0xf]
        %v1473 = vld [vmem:[%s9 + $0x4c] sm:$0xf]
        %v1474 = vld [vmem:[%s9 + $0x50] sm:$0xf]
        %v1475 = vld [vmem:[%s9 + $0x54] sm:$0xf]
        %v1476 = vld [vmem:[%s9 + $0x58] sm:$0xf]
        %v1477 = vld [vmem:[%s9 + $0x5c] sm:$0xf]
        %v1502 = vunpack.c.l.b16 %v1454
        %v1503 = vunpack.c.l.b16 %v1455
        %v1504 = vunpack.c.l.b16 %v1456
        %v1505 = vunpack.c.l.b16 %v1457
        %v1506 = vunpack.c.l.b16 %v1458
        %v1507 = vunpack.c.l.b16 %v1459
        %v1508 = vunpack.c.l.b16 %v1460
        %v1509 = vunpack.c.l.b16 %v1461
        %v1510 = vunpack.c.l.b16 %v1462
        %v1511 = vunpack.c.l.b16 %v1463
        %v1512 = vunpack.c.l.b16 %v1464
        %v1513 = vunpack.c.l.b16 %v1465
        %v1514 = vunpack.c.l.b16 %v1466
        %v1515 = vunpack.c.l.b16 %v1467
        %v1516 = vunpack.c.l.b16 %v1468
        %v1517 = vunpack.c.l.b16 %v1469
        %v1518 = vunpack.c.l.b16 %v1470
        %v1519 = vunpack.c.l.b16 %v1471
        %v1520 = vunpack.c.l.b16 %v1472
        %v1521 = vunpack.c.l.b16 %v1473
        %v1522 = vunpack.c.l.b16 %v1474
        %v1523 = vunpack.c.l.b16 %v1475
        %v1524 = vunpack.c.l.b16 %v1476
        %v1525 = vunpack.c.l.b16 %v1477
        %v1526 = vpack.c.b16 %v1503, %v1502
        %v1527 = vpack.c.b16 %v1505, %v1504
        %v1528 = vpack.c.b16 %v1507, %v1506
        %v1529 = vpack.c.b16 %v1509, %v1508
        %v1530 = vpack.c.b16 %v1511, %v1510
        %v1531 = vpack.c.b16 %v1513, %v1512
        %v1532 = vpack.c.b16 %v1515, %v1514
        %v1533 = vpack.c.b16 %v1517, %v1516
        %v1534 = vpack.c.b16 %v1519, %v1518
        %v1535 = vpack.c.b16 %v1521, %v1520
        %v1536 = vpack.c.b16 %v1523, %v1522
        %v1537 = vpack.c.b16 %v1525, %v1524
        %v1551 = vsel %vm841, %v1453, 0
        %1553 = vmatprep.subr.bf16.mxu0 0
        %1554 = vmatpush1.bf16.msra.mxu0 %v1526
        %1555 = vmatprep.subr.bf16.mxu0 0
        %1556 = vmatpush1.bf16.msra.mxu0 %v1527
        %1557 = vmatprep.subr.bf16.mxu0 0
        %1558 = vmatpush1.bf16.msra.mxu0 %v1528
        %1559 = vmatprep.subr.bf16.mxu0 0
        %1560 = vmatpush1.bf16.msra.mxu0 %v1529
        %1561 = vmatprep.subr.bf16.mxu0 0
        %1562 = vmatpush1.bf16.msra.mxu0 %v1530
        %1563 = vmatprep.subr.bf16.mxu0 0
        %1564 = vmatpush1.bf16.msra.mxu0 %v1531
        %1565 = vmatprep.subr.bf16.mxu0 0
        %1566 = vmatpush1.bf16.msra.mxu0 %v1532
        %1567 = vmatprep.subr.bf16.mxu0 0
        %1568 = vmatpush1.bf16.msra.mxu0 %v1533
        %1569 = vmatprep.subr.bf16.mxu0 0
        %1570 = vmatpush1.bf16.msra.mxu0 %v1534
        %1571 = vmatprep.subr.bf16.mxu0 0
        %1572 = vmatpush1.bf16.msra.mxu0 %v1535
        %1573 = vmatprep.subr.bf16.mxu0 0
        %1574 = vmatpush1.bf16.msra.mxu0 %v1536
        %1575 = vmatprep.subr.bf16.mxu0 0
        %1576 = vmatpush1.bf16.msra.mxu0 %v1537
        %1577 = vmatprep.subr.bf16.mxu0 0
        %1578 = vmatpush1.bf16.msra.mxu0 0
        %1579 = vmatprep.subr.bf16.mxu0 0
        %1580 = vmatpush1.bf16.msra.mxu0 0
        %1581 = vmatprep.subr.bf16.mxu0 0
        %1582 = vmatpush1.bf16.msra.mxu0 0
        %1583 = vmatprep.subr.bf16.mxu0 0
        %1584 = vmatpush1.bf16.msra.mxu0 0
        %1585 = vmatprep.mubr.bf16.mxu0 %v1551
        %1586 = vmatmul.mubr.bf16.gmra.mrb[0].mxu0 %v1452
        %v1587 = vpop.f32.mrb[0].mxu0
        %v1588 = vadd.f32 0.0, %v1587
        %v1589 = vpop.f32.mrb[0].mxu0
        %v1590 = vpop.f32.mrb[0].mxu0
        %v1591 = vpop.f32.mrb[0].mxu0
        %1592 = vdwg.mxu0
        %v1593 = vlaneseq
        %v1594 = vshrl.u32 %v1593, 7
        %v1595 = vsub.s32 0, %v1594
        %v1596 = vrot.slane %v1588, %v1595
        %v1597 = vadd.f32 %v1446, %v1596
        %v1598 = vadd.f32 %v1449, %v1596
        %v1599 = vld [vmem:[%s10] sm:$0x1]
        %v1601 = vlaneseq
        %v1602 = vshrl.u32 %v1601, 7
        %v1603 = vsub.s32 0, %v1602
        %v1604 = vrot.slane %v1599, %v1603
        %v1606 = vadd.f32 %v1597, %v1604
        %v1607 = vadd.f32 %v1598, %v1604
        %v1608 = vmax.f32 %v1606, 0.0
        %v1609 = vmax.f32 %v1607, 0.0
        %v1610 = vpack.c.bf16 %v1609, %v1608
        %v1611 = vld [vmem:[%s11] sm:$0xf]
        %v1612 = vld [vmem:[%s11 + $0x4] sm:$0xf]
        %v1613 = vld [vmem:[%s11 + $0x8] sm:$0xf]
        %v1614 = vld [vmem:[%s11 + $0xc] sm:$0xf]
        %v1615 = vld [vmem:[%s12] sm:$0x1]
        %v1617 = vlaneseq
        %v1618 = vshrl.u32 %v1617, 7
        %v1619 = vsub.s32 0, %v1618
        %v1620 = vrot.slane %v1615, %v1619
        %v1626 = vunpack.c.l.b16 %v1611
        %v1627 = vunpack.c.l.b16 %v1612
        %v1628 = vunpack.c.l.b16 %v1613
        %v1629 = vunpack.c.l.b16 %v1614
        %v1630 = vpack.c.b16 %v1627, %v1626
        %v1631 = vpack.c.b16 %v1629, %v1628
        %vm1634 = vcmask 261120
        %v1636 = vsel %vm1634, %v1610, 0
        %1638 = vmatprep.subr.bf16.mxu0 0
        %1639 = vmatpush1.bf16.msra.mxu0 %v1630
        %1640 = vmatprep.subr.bf16.mxu0 0
        %1641 = vmatpush1.bf16.msra.mxu0 %v1631
        %1642 = vmatprep.subr.bf16.mxu0 0
        %1643 = vmatpush1.bf16.msra.mxu0 0
        %1644 = vmatprep.subr.bf16.mxu0 0
        %1645 = vmatpush1.bf16.msra.mxu0 0
        %1646 = vmatprep.subr.bf16.mxu0 0
        %1647 = vmatpush1.bf16.msra.mxu0 0
        %1648 = vmatprep.subr.bf16.mxu0 0
        %1649 = vmatpush1.bf16.msra.mxu0 0
        %1650 = vmatprep.subr.bf16.mxu0 0
        %1651 = vmatpush1.bf16.msra.mxu0 0
        %1652 = vmatprep.subr.bf16.mxu0 0
        %1653 = vmatpush1.bf16.msra.mxu0 0
        %1654 = vmatprep.subr.bf16.mxu0 0
        %1655 = vmatpush1.bf16.msra.mxu0 0
        %1656 = vmatprep.subr.bf16.mxu0 0
        %1657 = vmatpush1.bf16.msra.mxu0 0
        %1658 = vmatprep.subr.bf16.mxu0 0
        %1659 = vmatpush1.bf16.msra.mxu0 0
        %1660 = vmatprep.subr.bf16.mxu0 0
        %1661 = vmatpush1.bf16.msra.mxu0 0
        %1662 = vmatprep.subr.bf16.mxu0 0
        %1663 = vmatpush1.bf16.msra.mxu0 0
        %1664 = vmatprep.subr.bf16.mxu0 0
        %1665 = vmatpush1.bf16.msra.mxu0 0
        %1666 = vmatprep.subr.bf16.mxu0 0
        %1667 = vmatpush1.bf16.msra.mxu0 0
        %1668 = vmatprep.subr.bf16.mxu0 0
        %1669 = vmatpush1.bf16.msra.mxu0 0
        %1670 = vmatprep.mubr.bf16.mxu0 0
        %1671 = vmatmul.mubr.bf16.gmra.mrb[0].mxu0 %v1636
        %v1672 = vpop.f32.mrb[0].mxu0
        %v1673 = vadd.f32 %v1620, %v1672
        %v1674 = vpop.f32.mrb[0].mxu0
        %v1675 = vpop.f32.mrb[0].mxu0
        %v1676 = vadd.f32 %v1620, %v1675
        %v1677 = vpop.f32.mrb[0].mxu0
        %1678 = vdwg.mxu0
        %v1679 = vtanh.pop %v1673
        %v1680 = vtanh.pop %v1676
        %v1681 = vpack.c.bf16 %v1680, %v1679
        %v1682 = vld [vmem:[%s13] sm:$0xff]
        %v1683 = vld [vmem:[%s13 + $0x8] sm:$0xff]
        %v1684 = vld [vmem:[%s13 + $0x10] sm:$0xff]
        %v1685 = vld [vmem:[%s13 + $0x18] sm:$0xff]
        %v1686 = vld [vmem:[%s14] sm:$0x3]
        %v1688 = vlaneseq
        %v1689 = vshrl.u32 %v1688, 7
        %v1690 = vsub.s32 0, %v1689
        %v1691 = vrot.slane %v1686, %v1690
        %v1692 = vlaneseq
        %v1693 = vshrl.u32 %v1692, 7
        %v1694 = vsub.s32 1, %v1693
        %v1695 = vrot.slane %v1686, %v1694
        %v1702 = vunpack.c.l.b16 %v1682
        %v1703 = vunpack.c.h.b16 %v1682
        %v1704 = vunpack.c.l.b16 %v1683
        %v1705 = vunpack.c.h.b16 %v1683
        %v1706 = vunpack.c.l.b16 %v1684
        %v1707 = vunpack.c.h.b16 %v1684
        %v1708 = vunpack.c.l.b16 %v1685
        %v1709 = vunpack.c.h.b16 %v1685
        %v1710 = vpack.c.b16 %v1704, %v1702
        %v1711 = vpack.c.b16 %v1705, %v1703
        %v1712 = vpack.c.b16 %v1708, %v1706
        %v1713 = vpack.c.b16 %v1709, %v1707
        %v1719 = vsel %vm1634, %v1681, 0
        %1721 = vmatprep.subr.bf16.mxu0 %v1711
        %1722 = vmatpush1.bf16.msra.mxu0 %v1710
        %1723 = vmatprep.subr.bf16.mxu0 %v1713
        %1724 = vmatpush1.bf16.msra.mxu0 %v1712
        %1725 = vmatprep.subr.bf16.mxu0 0
        %1726 = vmatpush1.bf16.msra.mxu0 0
        %1727 = vmatprep.subr.bf16.mxu0 0
        %1728 = vmatpush1.bf16.msra.mxu0 0
        %1729 = vmatprep.subr.bf16.mxu0 0
        %1730 = vmatpush1.bf16.msra.mxu0 0
        %1731 = vmatprep.subr.bf16.mxu0 0
        %1732 = vmatpush1.bf16.msra.mxu0 0
        %1733 = vmatprep.subr.bf16.mxu0 0
        %1734 = vmatpush1.bf16.msra.mxu0 0
        %1735 = vmatprep.subr.bf16.mxu0 0
        %1736 = vmatpush1.bf16.msra.mxu0 0
        %1737 = vmatprep.subr.bf16.mxu0 0
        %1738 = vmatpush1.bf16.msra.mxu0 0
        %1739 = vmatprep.subr.bf16.mxu0 0
        %1740 = vmatpush1.bf16.msra.mxu0 0
        %1741 = vmatprep.subr.bf16.mxu0 0
        %1742 = vmatpush1.bf16.msra.mxu0 0
        %1743 = vmatprep.subr.bf16.mxu0 0
        %1744 = vmatpush1.bf16.msra.mxu0 0
        %1745 = vmatprep.subr.bf16.mxu0 0
        %1746 = vmatpush1.bf16.msra.mxu0 0
        %1747 = vmatprep.subr.bf16.mxu0 0
        %1748 = vmatpush1.bf16.msra.mxu0 0
        %1749 = vmatprep.subr.bf16.mxu0 0
        %1750 = vmatpush1.bf16.msra.mxu0 0
        %1751 = vmatprep.subr.bf16.mxu0 0
        %1752 = vmatpush1.bf16.msra.mxu0 0
        %1753 = vmatprep.mubr.bf16.mxu0 0
        %1754 = vmatmul.mubr.bf16.gmra.mrb[0].mxu0 %v1719
        %v1755 = vpop.f32.mrb[0].mxu0
        %v1756 = vadd.f32 %v1691, %v1755
        %v1757 = vpop.f32.mrb[0].mxu0
        %v1758 = vadd.f32 %v1695, %v1757
        %v1759 = vpop.f32.mrb[0].mxu0
        %v1760 = vadd.f32 %v1691, %v1759
        %v1761 = vpop.f32.mrb[0].mxu0
        %v1762 = vadd.f32 %v1695, %v1761
        %1763 = vdwg.mxu0
        %v1764 = vmax.f32 %v1756, %v1760
        %v1765 = vrot.slane %v1764, 4
        %v1766 = vmax.f32 %v1764, %v1765
        %v1767 = vrot.slane %v1766, 2
        %v1768 = vmax.f32 %v1766, %v1767
        %v1769 = vrot.slane %v1768, 1
        %v1770 = vmax.f32 %v1768, %v1769
        %v1771 = vsel %vm841, %v1758, -inf
        %v1772 = vsel %vm841, %v1762, -inf
        %v1773 = vmax.f32 %v1771, %v1772
        %v1774 = vrot.slane %v1773, 4
        %v1775 = vmax.f32 %v1773, %v1774
        %v1776 = vrot.slane %v1775, 2
        %v1777 = vmax.f32 %v1775, %v1776
        %v1778 = vrot.slane %v1777, 1
        %v1779 = vmax.f32 %v1777, %v1778
        %v1780 = vsub.f32 %v1756, %v1770
        %v1781 = vsub.f32 %v1758, %v1779
        %v1782 = vsub.f32 %v1760, %v1770
        %v1783 = vsub.f32 %v1762, %v1779
        %v1784 = vmul.f32 %v1780, 1.442695
        %v1785 = vpow.pop %v1784
        %v1786 = vmul.f32 %v1781, 1.442695
        %v1787 = vpow.pop %v1786
        %v1788 = vmul.f32 %v1782, 1.442695
        %v1789 = vpow.pop %v1788
        %v1790 = vmul.f32 %v1783, 1.442695
        %v1791 = vpow.pop %v1790
        %v1792 = vadd.f32 %v1785, %v1789
        %v1793 = vrot.slane %v1792, 4
        %v1794 = vadd.f32 %v1792, %v1793
        %v1795 = vrot.slane %v1794, 2
        %v1796 = vadd.f32 %v1794, %v1795
        %v1797 = vrot.slane %v1796, 1
        %v1798 = vadd.f32 %v1796, %v1797
        %v1799 = vsel %vm841, %v1787, 0.0
        %v1800 = vsel %vm841, %v1791, 0.0
        %v1801 = vadd.f32 %v1799, %v1800
        %v1802 = vrot.slane %v1801, 4
        %v1803 = vadd.f32 %v1801, %v1802
        %v1804 = vrot.slane %v1803, 2
        %v1805 = vadd.f32 %v1803, %v1804
        %v1806 = vrot.slane %v1805, 1
        %v1807 = vadd.f32 %v1805, %v1806
        %v1808 = vrcp.pop %v1798
        %v1809 = vmul.f32 1.0, %v1808
        %v1810 = vrcp.pop %v1807
        %v1811 = vmul.f32 1.0, %v1810
        %v1812 = vmul.f32 %v1785, %v1809
        %v1813 = vmul.f32 %v1787, %v1811
        %v1814 = vmul.f32 %v1789, %v1809
        %v1815 = vmul.f32 %v1791, %v1811
        %v1816 = vmul.f32 %v1100, %v1812
        %v1817 = vmul.f32 %v1101, %v1813
        %v1818 = vmul.f32 %v1102, %v1814
        %v1819 = vmul.f32 %v1103, %v1815
        %v1820 = vadd.f32 %v1816, %v1818
        %v1821 = vrot.slane %v1820, 4
        %v1822 = vadd.f32 %v1820, %v1821
        %v1823 = vrot.slane %v1822, 2
        %v1824 = vadd.f32 %v1822, %v1823
        %v1825 = vrot.slane %v1824, 1
        %v1826 = vadd.f32 %v1824, %v1825
        %v1827 = vsel %vm841, %v1817, 0.0
        %v1828 = vsel %vm841, %v1819, 0.0
        %v1829 = vadd.f32 %v1827, %v1828
        %v1830 = vrot.slane %v1829, 4
        %v1831 = vadd.f32 %v1829, %v1830
        %v1832 = vrot.slane %v1831, 2
        %v1833 = vadd.f32 %v1831, %v1832
        %v1834 = vrot.slane %v1833, 1
        %v1835 = vadd.f32 %v1833, %v1834
        %v1836 = vmul.f32 %v1100, %v1100
        %v1837 = vmul.f32 %v1101, %v1101
        %v1838 = vmul.f32 %v1102, %v1102
        %v1839 = vmul.f32 %v1103, %v1103
        %v1840 = vmul.f32 %v1836, %v1812
        %v1841 = vmul.f32 %v1837, %v1813
        %v1842 = vmul.f32 %v1838, %v1814
        %v1843 = vmul.f32 %v1839, %v1815
        %v1844 = vadd.f32 %v1840, %v1842
        %v1845 = vrot.slane %v1844, 4
        %v1846 = vadd.f32 %v1844, %v1845
        %v1847 = vrot.slane %v1846, 2
        %v1848 = vadd.f32 %v1846, %v1847
        %v1849 = vrot.slane %v1848, 1
        %v1850 = vadd.f32 %v1848, %v1849
        %v1851 = vsel %vm841, %v1841, 0.0
        %v1852 = vsel %vm841, %v1843, 0.0
        %v1853 = vadd.f32 %v1851, %v1852
        %v1854 = vrot.slane %v1853, 4
        %v1855 = vadd.f32 %v1853, %v1854
        %v1856 = vrot.slane %v1855, 2
        %v1857 = vadd.f32 %v1855, %v1856
        %v1858 = vrot.slane %v1857, 1
        %v1859 = vadd.f32 %v1857, %v1858
        %v1860 = vmul.f32 %v1826, %v1826
        %v1861 = vmul.f32 %v1835, %v1835
        %v1862 = vsub.f32 %v1850, %v1860
        %v1863 = vsub.f32 %v1859, %v1861
        %v1864 = vmax.f32 %v1862, 1e-05
        %v1865 = vmax.f32 %v1863, 1e-05
        %v1866 = vrsqrt.pop %v1864
        %v1867 = vmul.f32 %v1864, %v1866
        %vm1868 = vcmp.eq.f32.partialorder %v1864, inf
        %v1869 = vsel %vm1868, %v1864, %v1867
        %vm1870 = vcmp.eq.f32.partialorder %v1864, 0.0
        %v1871 = vand.u32 %v1864, 2147483648
        %v1872 = vsel %vm1870, %v1871, %v1869
        %v1873 = vrsqrt.pop %v1865
        %v1874 = vmul.f32 %v1865, %v1873
        %vm1875 = vcmp.eq.f32.partialorder %v1865, inf
        %v1876 = vsel %vm1875, %v1865, %v1874
        %vm1877 = vcmp.eq.f32.partialorder %v1865, 0.0
        %v1878 = vand.u32 %v1865, 2147483648
        %v1879 = vsel %vm1877, %v1878, %v1876
        %v1880 = vld [vmem:[%s15] sm:$0x3]
        %v1882 = vlaneseq
        %v1883 = vshrl.u32 %v1882, 7
        %v1884 = vsub.s32 0, %v1883
        %v1885 = vrot.slane %v1880, %v1884
        %v1886 = vlaneseq
        %v1887 = vshrl.u32 %v1886, 7
        %v1888 = vsub.s32 1, %v1887
        %v1889 = vrot.slane %v1880, %v1888
        %v1892 = vmul.f32 %v1826, %v1885
        %v1893 = vmul.f32 %v1835, %v1889
        %v1894 = vld [vmem:[%s16] sm:$0x3]
        %v1896 = vlaneseq
        %v1897 = vshrl.u32 %v1896, 7
        %v1898 = vsub.s32 0, %v1897
        %v1899 = vrot.slane %v1894, %v1898
        %v1900 = vlaneseq
        %v1901 = vshrl.u32 %v1900, 7
        %v1902 = vsub.s32 1, %v1901
        %v1903 = vrot.slane %v1894, %v1902
        %v1906 = vadd.f32 %v1892, %v1899
        %v1907 = vadd.f32 %v1893, %v1903
        %v1908 = vld [vmem:[%s17] sm:$0x3]
        %v1910 = vlaneseq
        %v1911 = vshrl.u32 %v1910, 7
        %v1912 = vsub.s32 0, %v1911
        %v1913 = vrot.slane %v1908, %v1912
        %v1914 = vlaneseq
        %v1915 = vshrl.u32 %v1914, 7
        %v1916 = vsub.s32 1, %v1915
        %v1917 = vrot.slane %v1908, %v1916
        %v1920 = vmul.f32 %v1872, %v1913
        %v1921 = vmul.f32 %v1879, %v1917
        %v1922 = vld [vmem:[%s18] sm:$0x3]
        %v1924 = vlaneseq
        %v1925 = vshrl.u32 %v1924, 7
        %v1926 = vsub.s32 0, %v1925
        %v1927 = vrot.slane %v1922, %v1926
        %v1928 = vlaneseq
        %v1929 = vshrl.u32 %v1928, 7
        %v1930 = vsub.s32 1, %v1929
        %v1931 = vrot.slane %v1922, %v1930
        %v1934 = vadd.f32 %v1920, %v1927
        %v1935 = vadd.f32 %v1921, %v1931
        %v1936 = vpack.c.bf16 %v1906, %v1906
        %v1937 = vpack.c.bf16 %v1907, %v1907
        %v1938 = vld [vmem:[%s19] sm:$0xf]
        %v1939 = vld [vmem:[%s19 + $0x4] sm:$0xf]
        %v1940 = vld [vmem:[%s19 + $0x8] sm:$0xf]
        %v1941 = vld [vmem:[%s19 + $0xc] sm:$0xf]
        %v1942 = vld [vmem:[%s19 + $0x10] sm:$0xf]
        %v1943 = vld [vmem:[%s19 + $0x14] sm:$0xf]
        %v1944 = vld [vmem:[%s19 + $0x18] sm:$0xf]
        %v1945 = vld [vmem:[%s19 + $0x1c] sm:$0xf]
        %v1946 = vld [vmem:[%s19 + $0x20] sm:$0xf]
        %v1947 = vld [vmem:[%s19 + $0x24] sm:$0xf]
        %v1948 = vld [vmem:[%s19 + $0x28] sm:$0xf]
        %v1949 = vld [vmem:[%s19 + $0x2c] sm:$0xf]
        %v1950 = vld [vmem:[%s19 + $0x30] sm:$0xf]
        %v1951 = vld [vmem:[%s19 + $0x34] sm:$0xf]
        %v1952 = vld [vmem:[%s19 + $0x38] sm:$0xf]
        %v1953 = vld [vmem:[%s19 + $0x3c] sm:$0xf]
        %v1954 = vld [vmem:[%s19 + $0x40] sm:$0xf]
        %v1955 = vld [vmem:[%s19 + $0x44] sm:$0xf]
        %v1956 = vld [vmem:[%s19 + $0x48] sm:$0xf]
        %v1957 = vld [vmem:[%s19 + $0x4c] sm:$0xf]
        %v1958 = vld [vmem:[%s19 + $0x50] sm:$0xf]
        %v1959 = vld [vmem:[%s19 + $0x54] sm:$0xf]
        %v1960 = vld [vmem:[%s19 + $0x58] sm:$0xf]
        %v1961 = vld [vmem:[%s19 + $0x5c] sm:$0xf]
        %v1962 = vpack.c.bf16 %v1934, %v1934
        %v1963 = vpack.c.bf16 %v1935, %v1935
        %v1964 = vld [vmem:[%s20] sm:$0xf]
        %v1965 = vld [vmem:[%s20 + $0x4] sm:$0xf]
        %v1966 = vld [vmem:[%s20 + $0x8] sm:$0xf]
        %v1967 = vld [vmem:[%s20 + $0xc] sm:$0xf]
        %v1968 = vld [vmem:[%s20 + $0x10] sm:$0xf]
        %v1969 = vld [vmem:[%s20 + $0x14] sm:$0xf]
        %v1970 = vld [vmem:[%s20 + $0x18] sm:$0xf]
        %v1971 = vld [vmem:[%s20 + $0x1c] sm:$0xf]
        %v1972 = vld [vmem:[%s20 + $0x20] sm:$0xf]
        %v1973 = vld [vmem:[%s20 + $0x24] sm:$0xf]
        %v1974 = vld [vmem:[%s20 + $0x28] sm:$0xf]
        %v1975 = vld [vmem:[%s20 + $0x2c] sm:$0xf]
        %v1976 = vld [vmem:[%s20 + $0x30] sm:$0xf]
        %v1977 = vld [vmem:[%s20 + $0x34] sm:$0xf]
        %v1978 = vld [vmem:[%s20 + $0x38] sm:$0xf]
        %v1979 = vld [vmem:[%s20 + $0x3c] sm:$0xf]
        %v1980 = vld [vmem:[%s20 + $0x40] sm:$0xf]
        %v1981 = vld [vmem:[%s20 + $0x44] sm:$0xf]
        %v1982 = vld [vmem:[%s20 + $0x48] sm:$0xf]
        %v1983 = vld [vmem:[%s20 + $0x4c] sm:$0xf]
        %v1984 = vld [vmem:[%s20 + $0x50] sm:$0xf]
        %v1985 = vld [vmem:[%s20 + $0x54] sm:$0xf]
        %v1986 = vld [vmem:[%s20 + $0x58] sm:$0xf]
        %v1987 = vld [vmem:[%s20 + $0x5c] sm:$0xf]
        %v2012 = vunpack.c.l.b16 %v1964
        %v2013 = vunpack.c.l.b16 %v1965
        %v2014 = vunpack.c.l.b16 %v1966
        %v2015 = vunpack.c.l.b16 %v1967
        %v2016 = vunpack.c.l.b16 %v1968
        %v2017 = vunpack.c.l.b16 %v1969
        %v2018 = vunpack.c.l.b16 %v1970
        %v2019 = vunpack.c.l.b16 %v1971
        %v2020 = vunpack.c.l.b16 %v1972
        %v2021 = vunpack.c.l.b16 %v1973
        %v2022 = vunpack.c.l.b16 %v1974
        %v2023 = vunpack.c.l.b16 %v1975
        %v2024 = vunpack.c.l.b16 %v1976
        %v2025 = vunpack.c.l.b16 %v1977
        %v2026 = vunpack.c.l.b16 %v1978
        %v2027 = vunpack.c.l.b16 %v1979
        %v2028 = vunpack.c.l.b16 %v1980
        %v2029 = vunpack.c.l.b16 %v1981
        %v2030 = vunpack.c.l.b16 %v1982
        %v2031 = vunpack.c.l.b16 %v1983
        %v2032 = vunpack.c.l.b16 %v1984
        %v2033 = vunpack.c.l.b16 %v1985
        %v2034 = vunpack.c.l.b16 %v1986
        %v2035 = vunpack.c.l.b16 %v1987
        %v2036 = vpack.c.b16 %v2013, %v2012
        %v2037 = vpack.c.b16 %v2015, %v2014
        %v2038 = vpack.c.b16 %v2017, %v2016
        %v2039 = vpack.c.b16 %v2019, %v2018
        %v2040 = vpack.c.b16 %v2021, %v2020
        %v2041 = vpack.c.b16 %v2023, %v2022
        %v2042 = vpack.c.b16 %v2025, %v2024
        %v2043 = vpack.c.b16 %v2027, %v2026
        %v2044 = vpack.c.b16 %v2029, %v2028
        %v2045 = vpack.c.b16 %v2031, %v2030
        %v2046 = vpack.c.b16 %v2033, %v2032
        %v2047 = vpack.c.b16 %v2035, %v2034
        %v2061 = vsel %vm841, %v1963, 0
        %2063 = vmatprep.subr.bf16.mxu0 0
        %2064 = vmatpush1.bf16.msra.mxu0 %v2036
        %2065 = vmatprep.subr.bf16.mxu0 0
        %2066 = vmatpush1.bf16.msra.mxu0 %v2037
        %2067 = vmatprep.subr.bf16.mxu0 0
        %2068 = vmatpush1.bf16.msra.mxu0 %v2038
        %2069 = vmatprep.subr.bf16.mxu0 0
        %2070 = vmatpush1.bf16.msra.mxu0 %v2039
        %2071 = vmatprep.subr.bf16.mxu0 0
        %2072 = vmatpush1.bf16.msra.mxu0 %v2040
        %2073 = vmatprep.subr.bf16.mxu0 0
        %2074 = vmatpush1.bf16.msra.mxu0 %v2041
        %2075 = vmatprep.subr.bf16.mxu0 0
        %2076 = vmatpush1.bf16.msra.mxu0 %v2042
        %2077 = vmatprep.subr.bf16.mxu0 0
        %2078 = vmatpush1.bf16.msra.mxu0 %v2043
        %2079 = vmatprep.subr.bf16.mxu0 0
        %2080 = vmatpush1.bf16.msra.mxu0 %v2044
        %2081 = vmatprep.subr.bf16.mxu0 0
        %2082 = vmatpush1.bf16.msra.mxu0 %v2045
        %2083 = vmatprep.subr.bf16.mxu0 0
        %2084 = vmatpush1.bf16.msra.mxu0 %v2046
        %2085 = vmatprep.subr.bf16.mxu0 0
        %2086 = vmatpush1.bf16.msra.mxu0 %v2047
        %2087 = vmatprep.subr.bf16.mxu0 0
        %2088 = vmatpush1.bf16.msra.mxu0 0
        %2089 = vmatprep.subr.bf16.mxu0 0
        %2090 = vmatpush1.bf16.msra.mxu0 0
        %2091 = vmatprep.subr.bf16.mxu0 0
        %2092 = vmatpush1.bf16.msra.mxu0 0
        %2093 = vmatprep.subr.bf16.mxu0 0
        %2094 = vmatpush1.bf16.msra.mxu0 0
        %2095 = vmatprep.mubr.bf16.mxu0 %v2061
        %2096 = vmatmul.mubr.bf16.gmra.mrb[0].mxu0 %v1962
        %v2097 = vpop.f32.mrb[0].mxu0
        %v2098 = vadd.f32 0.0, %v2097
        %v2099 = vpop.f32.mrb[0].mxu0
        %v2100 = vpop.f32.mrb[0].mxu0
        %v2101 = vpop.f32.mrb[0].mxu0
        %2102 = vdwg.mxu0
        %v2127 = vunpack.c.l.b16 %v1938
        %v2128 = vunpack.c.l.b16 %v1939
        %v2129 = vunpack.c.l.b16 %v1940
        %v2130 = vunpack.c.l.b16 %v1941
        %v2131 = vunpack.c.l.b16 %v1942
        %v2132 = vunpack.c.l.b16 %v1943
        %v2133 = vunpack.c.l.b16 %v1944
        %v2134 = vunpack.c.l.b16 %v1945
        %v2135 = vunpack.c.l.b16 %v1946
        %v2136 = vunpack.c.l.b16 %v1947
        %v2137 = vunpack.c.l.b16 %v1948
        %v2138 = vunpack.c.l.b16 %v1949
        %v2139 = vunpack.c.l.b16 %v1950
        %v2140 = vunpack.c.l.b16 %v1951
        %v2141 = vunpack.c.l.b16 %v1952
        %v2142 = vunpack.c.l.b16 %v1953
        %v2143 = vunpack.c.l.b16 %v1954
        %v2144 = vunpack.c.l.b16 %v1955
        %v2145 = vunpack.c.l.b16 %v1956
        %v2146 = vunpack.c.l.b16 %v1957
        %v2147 = vunpack.c.l.b16 %v1958
        %v2148 = vunpack.c.l.b16 %v1959
        %v2149 = vunpack.c.l.b16 %v1960
        %v2150 = vunpack.c.l.b16 %v1961
        %v2151 = vpack.c.b16 %v2128, %v2127
        %v2152 = vpack.c.b16 %v2130, %v2129
        %v2153 = vpack.c.b16 %v2132, %v2131
        %v2154 = vpack.c.b16 %v2134, %v2133
        %v2155 = vpack.c.b16 %v2136, %v2135
        %v2156 = vpack.c.b16 %v2138, %v2137
        %v2157 = vpack.c.b16 %v2140, %v2139
        %v2158 = vpack.c.b16 %v2142, %v2141
        %v2159 = vpack.c.b16 %v2144, %v2143
        %v2160 = vpack.c.b16 %v2146, %v2145
        %v2161 = vpack.c.b16 %v2148, %v2147
        %v2162 = vpack.c.b16 %v2150, %v2149
        %v2176 = vsel %vm841, %v1937, 0
        %2178 = vmatprep.subr.bf16.mxu0 0
        %2179 = vmatpush1.bf16.msra.mxu0 %v2151
        %2180 = vmatprep.subr.bf16.mxu0 0
        %2181 = vmatpush1.bf16.msra.mxu0 %v2152
        %2182 = vmatprep.subr.bf16.mxu0 0
        %2183 = vmatpush1.bf16.msra.mxu0 %v2153
        %2184 = vmatprep.subr.bf16.mxu0 0
        %2185 = vmatpush1.bf16.msra.mxu0 %v2154
        %2186 = vmatprep.subr.bf16.mxu0 0
        %2187 = vmatpush1.bf16.msra.mxu0 %v2155
        %2188 = vmatprep.subr.bf16.mxu0 0
        %2189 = vmatpush1.bf16.msra.mxu0 %v2156
        %2190 = vmatprep.subr.bf16.mxu0 0
        %2191 = vmatpush1.bf16.msra.mxu0 %v2157
        %2192 = vmatprep.subr.bf16.mxu0 0
        %2193 = vmatpush1.bf16.msra.mxu0 %v2158
        %2194 = vmatprep.subr.bf16.mxu0 0
        %2195 = vmatpush1.bf16.msra.mxu0 %v2159
        %2196 = vmatprep.subr.bf16.mxu0 0
        %2197 = vmatpush1.bf16.msra.mxu0 %v2160
        %2198 = vmatprep.subr.bf16.mxu0 0
        %2199 = vmatpush1.bf16.msra.mxu0 %v2161
        %2200 = vmatprep.subr.bf16.mxu0 0
        %2201 = vmatpush1.bf16.msra.mxu0 %v2162
        %2202 = vmatprep.subr.bf16.mxu0 0
        %2203 = vmatpush1.bf16.msra.mxu0 0
        %2204 = vmatprep.subr.bf16.mxu0 0
        %2205 = vmatpush1.bf16.msra.mxu0 0
        %2206 = vmatprep.subr.bf16.mxu0 0
        %2207 = vmatpush1.bf16.msra.mxu0 0
        %2208 = vmatprep.subr.bf16.mxu0 0
        %2209 = vmatpush1.bf16.msra.mxu0 0
        %2210 = vmatprep.mubr.bf16.mxu0 %v2176
        %2211 = vmatmul.mubr.bf16.gmra.mrb[0].mxu0 %v1936
        %v2212 = vpop.f32.mrb[0].mxu0
        %v2213 = vadd.f32 %v2098, %v2212
        %v2214 = vpop.f32.mrb[0].mxu0
        %v2215 = vpop.f32.mrb[0].mxu0
        %v2216 = vpop.f32.mrb[0].mxu0
        %2217 = vdwg.mxu0
        %v2218 = vld [vmem:[%s21] sm:$0x1]
        %v2219 = vadd.f32 %v2213, %v2218
        %v2220 = vld [vmem:[%s22] sm:$0x1]
        %v2221 = vmul.f32 %v2219, %v2220
        %v2222 = vld [vmem:[%s23] sm:$0x1]
        %v2223 = vadd.f32 %v2221, %v2222
        %vm2224 = vcmask 253952
        %2225 = vst.msk [vmem:[%s759] sm:$0x1] %vm2224, %v2223
        %s2226 = sand.u32 %s565, 1
        %s2227 = scalar_lea.sflag [#allocation3], %s2226
        %s2228 = sand.u32 %s565, 1
        %s2229 = scalar_lea.vmem [#allocation2], %s2228
        // Predicated region
        $region117: #{ecapa_forward.9} parent=115 // pred_check
          %p2230 = pneg %p575
        $region118: #{ecapa_forward.9} parent=115 // pred_check_branch
          %2232 = sbr.rel (%p2230) target = $region120
        $region119: #{ecapa_forward.9} parent=115 // pred_region
          %s2234 = ssub.s32 16, 16
          %2235 = vsyncadd %s2227, %s2234
          %s2236 = smul.addr %s38, 16
          %s2237 = scalar_lea.hbm %s24, %s2236
          %s2239 = sshll.u32 %s2229, 4
          %s2240 = int_to_ptr.vmem [resolvable:$true] %s2239
          %2242 = dma.vmem_to_hbm [thread:$0]  %s2240, 16, %s2237, %s2227
        $region120: #{ecapa_forward.9} parent=115 // pred_fallthru
          _
      $region116: #{ecapa_forward.9} parent=5 // pred_fallthru
        _
      %p2243 = scmp.le.s32.totalorder 2, %s33
      // Predicated region
      $region121: #{ecapa_forward.9} parent=5 // pred_check
        %p2244 = pneg %p2243
      $region122: #{ecapa_forward.9} parent=5 // pred_check_branch
        %2246 = sbr.rel (%p2244) target = $region124
      $region123: #{ecapa_forward.9} parent=5 // pred_region
        %s2247 = ssub.s32 %s33, 2
        // Predicated region
        $region125: #{ecapa_forward.9} parent=123 // pred_check
          %p2248 = pneg %p581
        $region126: #{ecapa_forward.9} parent=123 // pred_check_branch
          %2250 = sbr.rel (%p2248) target = $region128
        $region127: #{ecapa_forward.9} parent=123 // pred_region
          %s2251 = sand.u32 %s566, 1
          %s2252 = scalar_lea.sflag [#allocation3], %s2251
          %s2253 = sand.u32 %s566, 1
          %s2254 = scalar_lea.vmem [#allocation2], %s2253
          %2255 = dma.done %s2252, 16
        $region128: #{ecapa_forward.9} parent=123 // pred_fallthru
          _
      $region124: #{ecapa_forward.9} parent=5 // pred_fallthru
        _
    $region6: #{ecapa_forward.9} parent=1 // loop_footer
      %s37 = sadd.s32 1, %s33
    $region7: #{ecapa_forward.9} parent=1 // loop_footer_branch
      %32 = sbr.rel target = $region3
    $region8: #{ecapa_forward.9} parent=1 // loop_exit
      _
    %2256 = vsyncpa [#allocation3], 1
    %s2257 = scalar_lea.sflag [#allocation3], 1
    %2258 = vsyncpa %s2257, 1

</llo_original>
